<compile_context>
chip_gen: v5e
topology: v5e:2x2
jax: 0.10.0
libtpu: 0.0.40
codegen_flags: <defaults>
</compile_context>

<pallas_src>
import functools

import jax
import jax.numpy as jnp
from jax.experimental import pallas as pl
from jax.experimental.pallas import tpu as pltpu

LEAKY_SLOPE = 0.2
BN_EPS = 1e-5
LANE = 128
VMEM_LIMIT = 32 * 1024 * 1024  # explicit budget; safe on v5e/v6e/v7x scoped VMEM


def _round_up(x, m):
    return (x + m - 1) // m * m


def _largest_divisor_tile(dim, target):
    """Largest divisor of dim <= target, preferring multiples of 128, then 8."""
    if dim <= target:
        return dim
    best_8 = None
    best_any = None
    for t in range(target, 0, -1):
        if dim % t == 0:
            if t % 128 == 0:
                return t
            if t % 8 == 0 and best_8 is None:
                best_8 = t
            if best_any is None:
                best_any = t
    return best_8 if best_8 is not None else best_any


# ---------------------------------------------------------------------------
# GEMM kernel: (M, K) @ (K, N) tiled over (M, N, K) with f32 VMEM accumulator.
# Epilogue fuses bias + activation and (optionally) BN batch statistics.
# ---------------------------------------------------------------------------
def _gemm_kernel(x_ref, w_ref, b_ref, *refs, act, with_stats, m_true, bm):
    if with_stats:
        o_ref, sum_ref, sq_ref, acc_ref = refs
    else:
        o_ref, acc_ref = refs

    kk = pl.program_id(2)

    @pl.when(kk == 0)
    def _():
        acc_ref[...] = jnp.zeros_like(acc_ref)

    # bf16 operands, f32 accumulate on the MXU.
    acc_ref[...] += jnp.dot(x_ref[...], w_ref[...],
                            preferred_element_type=jnp.float32)

    @pl.when(kk == pl.num_programs(2) - 1)
    def _():
        y = acc_ref[...] + b_ref[...]          # f32 epilogue (v5e VPU has no bf16)
        if with_stats:
            # BatchNorm statistics are taken on the pre-activation conv output,
            # reduced in f32; zero-padded rows (if any) are masked out.
            if m_true is not None:
                row = (pl.program_id(0) * bm
                       + jax.lax.broadcasted_iota(jnp.int32, (bm, 1), 0))
                ym = jnp.where(row < m_true, y, 0.0)
            else:
                ym = y
            sum_ref[...] = jnp.sum(ym, axis=0, keepdims=True)[None]
            sq_ref[...] = jnp.sum(ym * ym, axis=0, keepdims=True)[None]
        if act == "leaky":
            y = jnp.where(y > 0, y, LEAKY_SLOPE * y)
        elif act == "sigmoid":
            y = jax.nn.sigmoid(y)
        o_ref[...] = y.astype(o_ref.dtype)


def conv_gemm(patches, w_mat, bias, *, act, out_dtype, with_stats,
              bm_target=1024, bn_cap=512, bk_target=1024):
    m_true, k = patches.shape
    n = w_mat.shape[1]

    # --- M tiling: big, sublane-aligned tiles; pad rows with zeros if needed.
    if m_true <= bm_target:
        bm, m_pad = m_true, m_true
    else:
        bm = bm_target                      # multiple of 16 (bf16 sublane friendly)
        m_pad = _round_up(m_true, bm)
    if m_pad != m_true:
        patches = jnp.pad(patches, ((0, m_pad - m_true), (0, 0)))

    # --- N tiling: lane-dense; full-N when small enough (patches read exactly once).
    bn = n if (bn_cap is None or n <= bn_cap) else bn_cap
    if n % bn:
        bn = _largest_divisor_tile(n, bn)

    # --- K tiling (K is always a multiple of 128 here: 16 * Cin_padded).
    bk = _largest_divisor_tile(k, bk_target)

    gm, gn, gk = m_pad // bm, n // bn, k // bk

    # Megacore: give both v7x TensorCores work when the parallel grid collapses to 1.
    if gm * gn == 1 and bm >= 16 and bm % 16 == 0:
        bm //= 2
        gm = 2

    kern = functools.partial(
        _gemm_kernel, act=act, with_stats=with_stats,
        m_true=(m_true if (with_stats and m_pad != m_true) else None), bm=bm)

    out_shape = jax.ShapeDtypeStruct((m_pad, n), out_dtype)
    out_spec = pl.BlockSpec((bm, bn), lambda i, j, kk: (i, j))
    if with_stats:
        # Per-M-block partial sums (race-free under 'parallel' M/N axes); the tiny
        # reduction over the gm axis happens in JAX.
        stat_shape = jax.ShapeDtypeStruct((gm, 1, n), jnp.float32)
        stat_spec = pl.BlockSpec((1, 1, bn), lambda i, j, kk: (i, 0, j))
        out_shapes = (out_shape, stat_shape, stat_shape)
        out_specs = (out_spec, stat_spec, stat_spec)
    else:
        out_shapes = out_shape
        out_specs = out_spec

    return pl.pallas_call(
        kern,
        out_shape=out_shapes,
        grid=(gm, gn, gk),
        in_specs=[
            pl.BlockSpec((bm, bk), lambda i, j, kk: (i, kk)),
            pl.BlockSpec((bk, bn), lambda i, j, kk: (kk, j)),
            pl.BlockSpec((1, bn), lambda i, j, kk: (0, j)),
        ],
        out_specs=out_specs,
        scratch_shapes=[pltpu.VMEM((bm, bn), jnp.float32)],
        compiler_params=pltpu.CompilerParams(
            dimension_semantics=("parallel", "parallel", "arbitrary"),
            vmem_limit_bytes=VMEM_LIMIT),
    )(patches, w_mat, bias)


# ---------------------------------------------------------------------------
# BatchNorm affine + LeakyReLU elementwise kernel (stats come from the GEMM).
# ---------------------------------------------------------------------------
def _affine_lrelu_kernel(x_ref, scale_ref, shift_ref, o_ref):
    y = x_ref[...].astype(jnp.float32) * scale_ref[...] + shift_ref[...]
    y = jnp.where(y > 0, y, LEAKY_SLOPE * y)
    o_ref[...] = y.astype(o_ref.dtype)


def bn_leaky(y, sum_blk, sq_blk, gamma_p, beta_p, m_true, out_dtype=jnp.bfloat16):
    """Training-mode BatchNorm2d (batch stats) + LeakyReLU(0.2)."""
    # TODO(synk): once the patch gather moves in-kernel, fuse this affine+leaky into
    # the next layer's GEMM prologue to drop one full HBM round-trip per BN layer.
    m_pad, c = y.shape
    s = jnp.sum(sum_blk, axis=(0, 1))
    sq = jnp.sum(sq_blk, axis=(0, 1))
    mean = s / m_true
    var = sq / m_true - mean * mean  # biased variance (PyTorch training-mode norm)
    inv_std = jax.lax.rsqrt(var + BN_EPS)
    scale = (gamma_p * inv_std).reshape(1, c).astype(jnp.float32)
    shift = (beta_p - mean * gamma_p * inv_std).reshape(1, c).astype(jnp.float32)

    bm = _largest_divisor_tile(m_pad, 2048)  # mem-bound pass: large lane-dense tiles
    return pl.pallas_call(
        _affine_lrelu_kernel,
        out_shape=jax.ShapeDtypeStruct((m_pad, c), out_dtype),
        grid=(m_pad // bm,),
        in_specs=[
            pl.BlockSpec((bm, c), lambda i: (i, 0)),
            pl.BlockSpec((1, c), lambda i: (0, 0)),
            pl.BlockSpec((1, c), lambda i: (0, 0)),
        ],
        out_specs=pl.BlockSpec((bm, c), lambda i: (i, 0)),
        compiler_params=pltpu.CompilerParams(
            dimension_semantics=("parallel",),
            vmem_limit_bytes=VMEM_LIMIT),
    )(y, scale, shift)


# ---------------------------------------------------------------------------
# JAX glue: im2col, weight/bias packing, parameters, forward pass
# ---------------------------------------------------------------------------
def im2col(x_nhwc, kh, kw, stride, pad):
    # TODO(synk): fold the 4x4 strided patch gather into the GEMM kernel via manual
    # DMA (pl.ds / Element index_map) to avoid materializing the 4x-duplicated
    # patches array in HBM for the bandwidth-bound early layers (biggest remaining
    # HBM-traffic win, especially on v5e).
    n, h, w, c = x_nhwc.shape
    xb = x_nhwc.astype(jnp.bfloat16)  # bf16 patches: half the HBM traffic + MXU-native
    xp = jnp.pad(xb, ((0, 0), (pad, pad), (pad, pad), (0, 0)))
    oh = (h + 2 * pad - kh) // stride + 1
    ow = (w + 2 * pad - kw) // stride + 1
    cols = []
    for i in range(kh):
        for j in range(kw):
            cols.append(xp[:, i:i + stride * oh:stride, j:j + stride * ow:stride, :])
    p = jnp.stack(cols, axis=3)  # (n, oh, ow, kh*kw, c), (i, j) then channel order
    return p.reshape(n * oh * ow, kh * kw * c), oh, ow


def pack_weight(w_oihw, cin_pad, cout_pad):
    # PyTorch Conv2d weight (Cout, Cin, KH, KW) -> zero-padded (KH*KW*Cin_p, Cout_p)
    # bf16 matrix matching the im2col column ordering.
    co, ci, kh, kw = w_oihw.shape
    w = jnp.transpose(w_oihw, (2, 3, 1, 0))  # (kh, kw, ci, co)
    w = jnp.pad(w, ((0, 0), (0, 0), (0, cin_pad - ci), (0, cout_pad - co)))
    return w.reshape(kh * kw * cin_pad, cout_pad).astype(jnp.bfloat16)


def init_params(key, d):
    keys = jax.random.split(key, 5)

    def conv_p(k, cin, cout, ksz=4):
        w = 0.02 * jax.random.normal(k, (cout, cin, ksz, ksz), jnp.float32)
        b = jnp.zeros((cout,), jnp.float32)
        return w, b

    p = {
        "conv1": conv_p(keys[0], 3, d),
        "conv2": conv_p(keys[1], d, 2 * d),
        "conv3": conv_p(keys[2], 2 * d, 4 * d),
        "conv4": conv_p(keys[3], 4 * d, 8 * d),
        "conv5": conv_p(keys[4], 8 * d, 1),
    }
    for name, c in (("bn2", 2 * d), ("bn3", 4 * d), ("bn4", 8 * d)):
        p[name] = (jnp.ones((c,), jnp.float32), jnp.zeros((c,), jnp.float32))
    return p


def discriminator_forward(params, x_nchw):
    x = jnp.transpose(x_nchw, (0, 2, 3, 1)).astype(jnp.float32)  # -> NHWC
    n = x.shape[0]

    def conv_layer(x_nhwc, wb, stride, pad, act, out_dtype, with_stats,
                   bm_target, bn_cap, bk_target):
        w, b = wb
        cin = x_nhwc.shape[-1]
        cin_p = _round_up(cin, 8)             # only the 3-channel input needs this pad
        cout_p = _round_up(w.shape[0], LANE)  # lane-dense output channels
        if cin_p != cin:
            x_nhwc = jnp.pad(x_nhwc, ((0, 0), (0, 0), (0, 0), (0, cin_p - cin)))
        patches, oh, ow = im2col(x_nhwc, 4, 4, stride, pad)
        m_true = patches.shape[0]
        w_mat = pack_weight(w, cin_p, cout_p)
        b_p = jnp.pad(b, (0, cout_p - b.shape[0])).reshape(1, cout_p).astype(jnp.float32)
        res = conv_gemm(patches, w_mat, b_p, act=act, out_dtype=out_dtype,
                        with_stats=with_stats, bm_target=bm_target,
                        bn_cap=bn_cap, bk_target=bk_target)
        return res, m_true, oh, ow, cout_p

    # conv1 -> leaky_relu (no BN); bf16 output feeds the next im2col directly.
    y, mt, oh, ow, cp = conv_layer(x, params["conv1"], 2, 1, "leaky",
                                   jnp.bfloat16, False, 4096, None, 2048)
    x = y[:mt].reshape(n, oh, ow, cp)

    # conv2/3/4 -> BN -> leaky_relu, with BN stats fused into the GEMM epilogue.
    # Per-layer tile targets: full-N where padded Cout <= 512, large bm for the
    # M-heavy early layers, large bk for the K-heavy late layers.
    layer_cfg = {
        "conv2": (2048, None, 1024),
        "conv3": (1024, None, 1024),
        "conv4": (1024, 512, 2048),
    }
    for conv_name, bn_name in (("conv2", "bn2"), ("conv3", "bn3"), ("conv4", "bn4")):
        bm_t, bn_c, bk_t = layer_cfg[conv_name]
        (y, s_blk, sq_blk), mt, oh, ow, cp = conv_layer(
            x, params[conv_name], 2, 1, "none", jnp.bfloat16, True, bm_t, bn_c, bk_t)
        gamma, beta = params[bn_name]
        cpad = cp - gamma.shape[0]
        gamma_p = jnp.pad(gamma, (0, cpad))   # zero gamma/beta on padded channels
        beta_p = jnp.pad(beta, (0, cpad))     # keeps them exactly zero downstream
        y = bn_leaky(y, s_blk, sq_blk, gamma_p, beta_p, mt)
        x = y[:mt].reshape(n, oh, ow, cp)

    # conv5 (4x4, stride 1, no pad) -> sigmoid; slice off the padded output channels.
    y, mt, oh, ow, cp = conv_layer(x, params["conv5"], 1, 0, "sigmoid",
                                   jnp.float32, False, 512, None, 4096)
    out = y[:mt, :1].reshape(n, oh, ow, 1)
    return jnp.transpose(out, (0, 3, 1, 2))  # back to NCHW: (N, 1, 1, 1)


if __name__ == "__main__":
    key = jax.random.PRNGKey(0)
    d = 16                      # small width for the test (module default is 128)
    n, h, w = 2, 64, 64         # 64x64 spatial is the minimum the 5-conv stack supports
    k_p, k_x = jax.random.split(key)
    params = init_params(k_p, d)
    x = jax.random.normal(k_x, (n, 3, h, w), jnp.float32)

    out = jax.jit(discriminator_forward)(params, x)
    out = jax.block_until_ready(out)

    assert out.shape == (n, 1, 1, 1), out.shape
    assert bool(jnp.all(jnp.isfinite(out)))
    assert bool(jnp.all((out >= 0.0) & (out <= 1.0)))  # sigmoid output range
    print("KERNEL_OK")
</pallas_src>

<mosaic_0001>
module attributes {stable_mosaic.version = 11 : i64} {
  func.func @_gemm_kernel(%arg0: i32, %arg1: i32, %arg2: i32, %arg3: memref<1024x128xbf16, #tpu.memory_space<vmem>>, %arg4: memref<128x128xbf16, #tpu.memory_space<vmem>>, %arg5: memref<1x128xf32, #tpu.memory_space<vmem>>, %arg6: memref<1024x128xbf16, #tpu.memory_space<vmem>>, %arg7: memref<1024x128xf32, #tpu.memory_space<vmem>>) attributes {dimension_semantics = [#tpu.dimension_semantics<parallel>, #tpu.dimension_semantics<parallel>, #tpu.dimension_semantics<arbitrary>], iteration_bounds = array<i64: 2, 1, 1>, scalar_prefetch = 0 : i64, scratch_operands = 1 : i64, tpu.core_type = #tpu.core_type<tc>, window_params = [{transform_indices = @transform_0, window_bounds = array<i64: 1024, 128>}, {transform_indices = @transform_1, window_bounds = array<i64: 128, 128>}, {transform_indices = @transform_2, window_bounds = array<i64: 1, 128>}, {transform_indices = @transform_3, window_bounds = array<i64: 1024, 128>}]} {
    %c0_i32 = arith.constant 0 : i32
    %0 = arith.cmpi eq, %arg2, %c0_i32 : i32
    %1 = arith.extui %0 : i1 to i32
    %c0_i32_0 = arith.constant 0 : i32
    %2 = arith.cmpi ne, %1, %c0_i32_0 : i32
    scf.if %2 {
      %cst_10 = arith.constant 0.000000e+00 : f32
      %12 = vector.broadcast %cst_10 : f32 to vector<1024x128xf32>
      %c0_11 = arith.constant 0 : index
      %c0_12 = arith.constant 0 : index
      %13 = vector.load %arg7[%c0_11, %c0_12] : memref<1024x128xf32, #tpu.memory_space<vmem>>, vector<1024x128xf32>
      tpu.vector_store %arg7[%c0_11, %c0_12], %12 {strides = array<i32>} : memref<1024x128xf32, #tpu.memory_space<vmem>>, vector<1024x128xf32>,
    } else {
    }
    %c0 = arith.constant 0 : index
    %c0_1 = arith.constant 0 : index
    %3 = vector.load %arg7[%c0, %c0_1] : memref<1024x128xf32, #tpu.memory_space<vmem>>, vector<1024x128xf32>
    %c0_2 = arith.constant 0 : index
    %c0_3 = arith.constant 0 : index
    %4 = vector.load %arg3[%c0_2, %c0_3] : memref<1024x128xbf16, #tpu.memory_space<vmem>>, vector<1024x128xbf16>
    %c0_4 = arith.constant 0 : index
    %c0_5 = arith.constant 0 : index
    %5 = vector.load %arg4[%c0_4, %c0_5] : memref<128x128xbf16, #tpu.memory_space<vmem>>, vector<128x128xbf16>
    %cst = arith.constant dense<0.000000e+00> : vector<1024x128xf32>
    %6 = tpu.matmul %4, %5, %cst {dimension_numbers = #tpu.dot_dimension_numbers<[1], [0], [0], [1], [0, 0, 1, 1], [], []>} : vector<1024x128xbf16>, vector<128x128xbf16>, vector<1024x128xf32> -> vector<1024x128xf32>
    %7 = arith.addf %3, %6 : vector<1024x128xf32>
    %c0_6 = arith.constant 0 : index
    %c0_7 = arith.constant 0 : index
    %8 = vector.load %arg7[%c0_6, %c0_7] : memref<1024x128xf32, #tpu.memory_space<vmem>>, vector<1024x128xf32>
    tpu.vector_store %arg7[%c0_6, %c0_7], %7 {strides = array<i32>} : memref<1024x128xf32, #tpu.memory_space<vmem>>, vector<1024x128xf32>,
    %c0_i32_8 = arith.constant 0 : i32
    %9 = arith.cmpi eq, %arg2, %c0_i32_8 : i32
    %10 = arith.extui %9 : i1 to i32
    %c0_i32_9 = arith.constant 0 : i32
    %11 = arith.cmpi ne, %10, %c0_i32_9 : i32
    scf.if %11 {
      %c0_10 = arith.constant 0 : index
      %c0_11 = arith.constant 0 : index
      %12 = vector.load %arg7[%c0_10, %c0_11] : memref<1024x128xf32, #tpu.memory_space<vmem>>, vector<1024x128xf32>
      %c0_12 = arith.constant 0 : index
      %c0_13 = arith.constant 0 : index
      %13 = vector.load %arg5[%c0_12, %c0_13] : memref<1x128xf32, #tpu.memory_space<vmem>>, vector<1x128xf32>
      %14 = vector.broadcast %13 : vector<1x128xf32> to vector<1024x128xf32>
      %15 = arith.addf %12, %14 : vector<1024x128xf32>
      %cst_14 = arith.constant 0.000000e+00 : f32
      %16 = vector.broadcast %cst_14 : f32 to vector<1024x128xf32>
      %17 = arith.cmpf ogt, %15, %16 : vector<1024x128xf32>
      %cst_15 = arith.constant 2.000000e-01 : f32
      %18 = vector.broadcast %cst_15 : f32 to vector<1024x128xf32>
      %19 = arith.mulf %18, %15 : vector<1024x128xf32>
      %20 = arith.select %17, %15, %19 : vector<1024x128xi1>, vector<1024x128xf32>
      %21 = arith.truncf %20 : vector<1024x128xf32> to vector<1024x128xbf16>
      %c0_16 = arith.constant 0 : index
      %c0_17 = arith.constant 0 : index
      %22 = vector.load %arg6[%c0_16, %c0_17] : memref<1024x128xbf16, #tpu.memory_space<vmem>>, vector<1024x128xbf16>
      tpu.vector_store %arg6[%c0_16, %c0_17], %21 {strides = array<i32>} : memref<1024x128xbf16, #tpu.memory_space<vmem>>, vector<1024x128xbf16>,
    } else {
    }
    return
  }
  func.func @transform_0(%arg0: i32, %arg1: i32, %arg2: i32) -> (i32, i32) {
    %c0_i32 = arith.constant 0 : i32
    return %arg0, %arg2 : i32, i32
  }
  func.func @transform_1(%arg0: i32, %arg1: i32, %arg2: i32) -> (i32, i32) {
    %c0_i32 = arith.constant 0 : i32
    return %arg2, %arg1 : i32, i32
  }
  func.func @transform_2(%arg0: i32, %arg1: i32, %arg2: i32) -> (i32, i32) {
    %c0_i32 = arith.constant 0 : i32
    %c0_i32_0 = arith.constant 0 : i32
    return %c0_i32, %arg1 : i32, i32
  }
  func.func @transform_3(%arg0: i32, %arg1: i32, %arg2: i32) -> (i32, i32) {
    %c0_i32 = arith.constant 0 : i32
    return %arg0, %arg1 : i32, i32
  }
}

module attributes {stable_mosaic.version = 11 : i64} {
  func.func @_gemm_kernel(%arg0: i32, %arg1: i32, %arg2: i32, %arg3: memref<256x1024xbf16, #tpu.memory_space<vmem>>, %arg4: memref<1024x128xbf16, #tpu.memory_space<vmem>>, %arg5: memref<1x128xf32, #tpu.memory_space<vmem>>, %arg6: memref<256x128xbf16, #tpu.memory_space<vmem>>, %arg7: memref<1x1x128xf32, #tpu.memory_space<vmem>>, %arg8: memref<1x1x128xf32, #tpu.memory_space<vmem>>, %arg9: memref<256x128xf32, #tpu.memory_space<vmem>>) attributes {dimension_semantics = [#tpu.dimension_semantics<parallel>, #tpu.dimension_semantics<parallel>, #tpu.dimension_semantics<arbitrary>], iteration_bounds = array<i64: 2, 1, 2>, scalar_prefetch = 0 : i64, scratch_operands = 1 : i64, tpu.core_type = #tpu.core_type<tc>, window_params = [{transform_indices = @transform_0, window_bounds = array<i64: 256, 1024>}, {transform_indices = @transform_1, window_bounds = array<i64: 1024, 128>}, {transform_indices = @transform_2, window_bounds = array<i64: 1, 128>}, {transform_indices = @transform_3, window_bounds = array<i64: 256, 128>}, {transform_indices = @transform_4, window_bounds = array<i64: 1, 1, 128>}, {transform_indices = @transform_5, window_bounds = array<i64: 1, 1, 128>}]} {
    %c0_i32 = arith.constant 0 : i32
    %0 = arith.cmpi eq, %arg2, %c0_i32 : i32
    %1 = arith.extui %0 : i1 to i32
    %c0_i32_0 = arith.constant 0 : i32
    %2 = arith.cmpi ne, %1, %c0_i32_0 : i32
    scf.if %2 {
      %cst_9 = arith.constant 0.000000e+00 : f32
      %12 = vector.broadcast %cst_9 : f32 to vector<256x128xf32>
      %c0_10 = arith.constant 0 : index
      %c0_11 = arith.constant 0 : index
      %13 = vector.load %arg9[%c0_10, %c0_11] : memref<256x128xf32, #tpu.memory_space<vmem>>, vector<256x128xf32>
      tpu.vector_store %arg9[%c0_10, %c0_11], %12 {strides = array<i32>} : memref<256x128xf32, #tpu.memory_space<vmem>>, vector<256x128xf32>,
    } else {
    }
    %c0 = arith.constant 0 : index
    %c0_1 = arith.constant 0 : index
    %3 = vector.load %arg9[%c0, %c0_1] : memref<256x128xf32, #tpu.memory_space<vmem>>, vector<256x128xf32>
    %c0_2 = arith.constant 0 : index
    %c0_3 = arith.constant 0 : index
    %4 = vector.load %arg3[%c0_2, %c0_3] : memref<256x1024xbf16, #tpu.memory_space<vmem>>, vector<256x1024xbf16>
    %c0_4 = arith.constant 0 : index
    %c0_5 = arith.constant 0 : index
    %5 = vector.load %arg4[%c0_4, %c0_5] : memref<1024x128xbf16, #tpu.memory_space<vmem>>, vector<1024x128xbf16>
    %cst = arith.constant dense<0.000000e+00> : vector<256x128xf32>
    %6 = tpu.matmul %4, %5, %cst {dimension_numbers = #tpu.dot_dimension_numbers<[1], [0], [0], [1], [0, 0, 1, 1], [], []>} : vector<256x1024xbf16>, vector<1024x128xbf16>, vector<256x128xf32> -> vector<256x128xf32>
    %7 = arith.addf %3, %6 : vector<256x128xf32>
    %c0_6 = arith.constant 0 : index
    %c0_7 = arith.constant 0 : index
    %8 = vector.load %arg9[%c0_6, %c0_7] : memref<256x128xf32, #tpu.memory_space<vmem>>, vector<256x128xf32>
    tpu.vector_store %arg9[%c0_6, %c0_7], %7 {strides = array<i32>} : memref<256x128xf32, #tpu.memory_space<vmem>>, vector<256x128xf32>,
    %c1_i32 = arith.constant 1 : i32
    %9 = arith.cmpi eq, %arg2, %c1_i32 : i32
    %10 = arith.extui %9 : i1 to i32
    %c0_i32_8 = arith.constant 0 : i32
    %11 = arith.cmpi ne, %10, %c0_i32_8 : i32
    scf.if %11 {
      %c0_9 = arith.constant 0 : index
      %c0_10 = arith.constant 0 : index
      %12 = vector.load %arg9[%c0_9, %c0_10] : memref<256x128xf32, #tpu.memory_space<vmem>>, vector<256x128xf32>
      %c0_11 = arith.constant 0 : index
      %c0_12 = arith.constant 0 : index
      %13 = vector.load %arg5[%c0_11, %c0_12] : memref<1x128xf32, #tpu.memory_space<vmem>>, vector<1x128xf32>
      %14 = vector.broadcast %13 : vector<1x128xf32> to vector<256x128xf32>
      %15 = arith.addf %12, %14 : vector<256x128xf32>
      %cst_13 = arith.constant dense<0.000000e+00> : vector<128xf32>
      %16 = vector.multi_reduction <add>, %15, %cst_13 [0] : vector<256x128xf32> to vector<128xf32>
      %17 = vector.shape_cast %16 : vector<128xf32> to vector<1x128xf32>
      %18 = vector.shape_cast %17 : vector<1x128xf32> to vector<1x1x128xf32>
      %c0_14 = arith.constant 0 : index
      %c0_15 = arith.constant 0 : index
      %c0_16 = arith.constant 0 : index
      %19 = vector.load %arg7[%c0_14, %c0_15, %c0_16] : memref<1x1x128xf32, #tpu.memory_space<vmem>>, vector<1x1x128xf32>
      tpu.vector_store %arg7[%c0_14, %c0_15, %c0_16], %18 {strides = array<i32>} : memref<1x1x128xf32, #tpu.memory_space<vmem>>, vector<1x1x128xf32>,
      %20 = arith.mulf %15, %15 : vector<256x128xf32>
      %cst_17 = arith.constant dense<0.000000e+00> : vector<128xf32>
      %21 = vector.multi_reduction <add>, %20, %cst_17 [0] : vector<256x128xf32> to vector<128xf32>
      %22 = vector.shape_cast %21 : vector<128xf32> to vector<1x128xf32>
      %23 = vector.shape_cast %22 : vector<1x128xf32> to vector<1x1x128xf32>
      %c0_18 = arith.constant 0 : index
      %c0_19 = arith.constant 0 : index
      %c0_20 = arith.constant 0 : index
      %24 = vector.load %arg8[%c0_18, %c0_19, %c0_20] : memref<1x1x128xf32, #tpu.memory_space<vmem>>, vector<1x1x128xf32>
      tpu.vector_store %arg8[%c0_18, %c0_19, %c0_20], %23 {strides = array<i32>} : memref<1x1x128xf32, #tpu.memory_space<vmem>>, vector<1x1x128xf32>,
      %25 = arith.truncf %15 : vector<256x128xf32> to vector<256x128xbf16>
      %c0_21 = arith.constant 0 : index
      %c0_22 = arith.constant 0 : index
      %26 = vector.load %arg6[%c0_21, %c0_22] : memref<256x128xbf16, #tpu.memory_space<vmem>>, vector<256x128xbf16>
      tpu.vector_store %arg6[%c0_21, %c0_22], %25 {strides = array<i32>} : memref<256x128xbf16, #tpu.memory_space<vmem>>, vector<256x128xbf16>,
    } else {
    }
    return
  }
  func.func @transform_0(%arg0: i32, %arg1: i32, %arg2: i32) -> (i32, i32) {
    %c0_i32 = arith.constant 0 : i32
    return %arg0, %arg2 : i32, i32
  }
  func.func @transform_1(%arg0: i32, %arg1: i32, %arg2: i32) -> (i32, i32) {
    %c0_i32 = arith.constant 0 : i32
    return %arg2, %arg1 : i32, i32
  }
  func.func @transform_2(%arg0: i32, %arg1: i32, %arg2: i32) -> (i32, i32) {
    %c0_i32 = arith.constant 0 : i32
    %c0_i32_0 = arith.constant 0 : i32
    return %c0_i32, %arg1 : i32, i32
  }
  func.func @transform_3(%arg0: i32, %arg1: i32, %arg2: i32) -> (i32, i32) {
    %c0_i32 = arith.constant 0 : i32
    return %arg0, %arg1 : i32, i32
  }
  func.func @transform_4(%arg0: i32, %arg1: i32, %arg2: i32) -> (i32, i32, i32) {
    %c0_i32 = arith.constant 0 : i32
    %c0_i32_0 = arith.constant 0 : i32
    return %arg0, %c0_i32, %arg1 : i32, i32, i32
  }
  func.func @transform_5(%arg0: i32, %arg1: i32, %arg2: i32) -> (i32, i32, i32) {
    %c0_i32 = arith.constant 0 : i32
    %c0_i32_0 = arith.constant 0 : i32
    return %arg0, %c0_i32, %arg1 : i32, i32, i32
  }
}

module attributes {stable_mosaic.version = 11 : i64} {
  func.func @_affine_lrelu_kernel(%arg0: i32, %arg1: memref<512x128xbf16, #tpu.memory_space<vmem>>, %arg2: memref<1x128xf32, #tpu.memory_space<vmem>>, %arg3: memref<1x128xf32, #tpu.memory_space<vmem>>, %arg4: memref<512x128xbf16, #tpu.memory_space<vmem>>) attributes {dimension_semantics = [#tpu.dimension_semantics<parallel>], iteration_bounds = array<i64: 1>, scalar_prefetch = 0 : i64, scratch_operands = 0 : i64, tpu.core_type = #tpu.core_type<tc>, window_params = [{transform_indices = @transform_0, window_bounds = array<i64: 512, 128>}, {pipeline_mode = #tpu.pipeline_mode<synchronous>, transform_indices = @transform_1, window_bounds = array<i64: 1, 128>}, {pipeline_mode = #tpu.pipeline_mode<synchronous>, transform_indices = @transform_2, window_bounds = array<i64: 1, 128>}, {transform_indices = @transform_3, window_bounds = array<i64: 512, 128>}]} {
    %c0 = arith.constant 0 : index
    %c0_0 = arith.constant 0 : index
    %0 = vector.load %arg1[%c0, %c0_0] : memref<512x128xbf16, #tpu.memory_space<vmem>>, vector<512x128xbf16>
    %1 = arith.extf %0 : vector<512x128xbf16> to vector<512x128xf32>
    %c0_1 = arith.constant 0 : index
    %c0_2 = arith.constant 0 : index
    %2 = vector.load %arg2[%c0_1, %c0_2] : memref<1x128xf32, #tpu.memory_space<vmem>>, vector<1x128xf32>
    %3 = vector.broadcast %2 : vector<1x128xf32> to vector<512x128xf32>
    %4 = arith.mulf %1, %3 : vector<512x128xf32>
    %c0_3 = arith.constant 0 : index
    %c0_4 = arith.constant 0 : index
    %5 = vector.load %arg3[%c0_3, %c0_4] : memref<1x128xf32, #tpu.memory_space<vmem>>, vector<1x128xf32>
    %6 = vector.broadcast %5 : vector<1x128xf32> to vector<512x128xf32>
    %7 = arith.addf %4, %6 : vector<512x128xf32>
    %cst = arith.constant 0.000000e+00 : f32
    %8 = vector.broadcast %cst : f32 to vector<512x128xf32>
    %9 = arith.cmpf ogt, %7, %8 : vector<512x128xf32>
    %cst_5 = arith.constant 2.000000e-01 : f32
    %10 = vector.broadcast %cst_5 : f32 to vector<512x128xf32>
    %11 = arith.mulf %10, %7 : vector<512x128xf32>
    %12 = arith.select %9, %7, %11 : vector<512x128xi1>, vector<512x128xf32>
    %13 = arith.truncf %12 : vector<512x128xf32> to vector<512x128xbf16>
    %c0_6 = arith.constant 0 : index
    %c0_7 = arith.constant 0 : index
    %14 = vector.load %arg4[%c0_6, %c0_7] : memref<512x128xbf16, #tpu.memory_space<vmem>>, vector<512x128xbf16>
    tpu.vector_store %arg4[%c0_6, %c0_7], %13 {strides = array<i32>} : memref<512x128xbf16, #tpu.memory_space<vmem>>, vector<512x128xbf16>,
    return
  }
  func.func @transform_0(%arg0: i32) -> (i32, i32) {
    %c0_i32 = arith.constant 0 : i32
    %c0_i32_0 = arith.constant 0 : i32
    return %arg0, %c0_i32 : i32, i32
  }
  func.func @transform_1(%arg0: i32) -> (i32, i32) {
    %c0_i32 = arith.constant 0 : i32
    %c0_i32_0 = arith.constant 0 : i32
    %c0_i32_1 = arith.constant 0 : i32
    return %c0_i32, %c0_i32_0 : i32, i32
  }
  func.func @transform_2(%arg0: i32) -> (i32, i32) {
    %c0_i32 = arith.constant 0 : i32
    %c0_i32_0 = arith.constant 0 : i32
    %c0_i32_1 = arith.constant 0 : i32
    return %c0_i32, %c0_i32_0 : i32, i32
  }
  func.func @transform_3(%arg0: i32) -> (i32, i32) {
    %c0_i32 = arith.constant 0 : i32
    %c0_i32_0 = arith.constant 0 : i32
    return %arg0, %c0_i32 : i32, i32
  }
}

module attributes {stable_mosaic.version = 11 : i64} {
  func.func @_gemm_kernel(%arg0: i32, %arg1: i32, %arg2: i32, %arg3: memref<64x1024xbf16, #tpu.memory_space<vmem>>, %arg4: memref<1024x128xbf16, #tpu.memory_space<vmem>>, %arg5: memref<1x128xf32, #tpu.memory_space<vmem>>, %arg6: memref<64x128xbf16, #tpu.memory_space<vmem>>, %arg7: memref<1x1x128xf32, #tpu.memory_space<vmem>>, %arg8: memref<1x1x128xf32, #tpu.memory_space<vmem>>, %arg9: memref<64x128xf32, #tpu.memory_space<vmem>>) attributes {dimension_semantics = [#tpu.dimension_semantics<parallel>, #tpu.dimension_semantics<parallel>, #tpu.dimension_semantics<arbitrary>], iteration_bounds = array<i64: 2, 1, 2>, scalar_prefetch = 0 : i64, scratch_operands = 1 : i64, tpu.core_type = #tpu.core_type<tc>, window_params = [{transform_indices = @transform_0, window_bounds = array<i64: 64, 1024>}, {transform_indices = @transform_1, window_bounds = array<i64: 1024, 128>}, {transform_indices = @transform_2, window_bounds = array<i64: 1, 128>}, {transform_indices = @transform_3, window_bounds = array<i64: 64, 128>}, {transform_indices = @transform_4, window_bounds = array<i64: 1, 1, 128>}, {transform_indices = @transform_5, window_bounds = array<i64: 1, 1, 128>}]} {
    %c0_i32 = arith.constant 0 : i32
    %0 = arith.cmpi eq, %arg2, %c0_i32 : i32
    %1 = arith.extui %0 : i1 to i32
    %c0_i32_0 = arith.constant 0 : i32
    %2 = arith.cmpi ne, %1, %c0_i32_0 : i32
    scf.if %2 {
      %cst_9 = arith.constant 0.000000e+00 : f32
      %12 = vector.broadcast %cst_9 : f32 to vector<64x128xf32>
      %c0_10 = arith.constant 0 : index
      %c0_11 = arith.constant 0 : index
      %13 = vector.load %arg9[%c0_10, %c0_11] : memref<64x128xf32, #tpu.memory_space<vmem>>, vector<64x128xf32>
      tpu.vector_store %arg9[%c0_10, %c0_11], %12 {strides = array<i32>} : memref<64x128xf32, #tpu.memory_space<vmem>>, vector<64x128xf32>,
    } else {
    }
    %c0 = arith.constant 0 : index
    %c0_1 = arith.constant 0 : index
    %3 = vector.load %arg9[%c0, %c0_1] : memref<64x128xf32, #tpu.memory_space<vmem>>, vector<64x128xf32>
    %c0_2 = arith.constant 0 : index
    %c0_3 = arith.constant 0 : index
    %4 = vector.load %arg3[%c0_2, %c0_3] : memref<64x1024xbf16, #tpu.memory_space<vmem>>, vector<64x1024xbf16>
    %c0_4 = arith.constant 0 : index
    %c0_5 = arith.constant 0 : index
    %5 = vector.load %arg4[%c0_4, %c0_5] : memref<1024x128xbf16, #tpu.memory_space<vmem>>, vector<1024x128xbf16>
    %cst = arith.constant dense<0.000000e+00> : vector<64x128xf32>
    %6 = tpu.matmul %4, %5, %cst {dimension_numbers = #tpu.dot_dimension_numbers<[1], [0], [0], [1], [0, 0, 1, 1], [], []>} : vector<64x1024xbf16>, vector<1024x128xbf16>, vector<64x128xf32> -> vector<64x128xf32>
    %7 = arith.addf %3, %6 : vector<64x128xf32>
    %c0_6 = arith.constant 0 : index
    %c0_7 = arith.constant 0 : index
    %8 = vector.load %arg9[%c0_6, %c0_7] : memref<64x128xf32, #tpu.memory_space<vmem>>, vector<64x128xf32>
    tpu.vector_store %arg9[%c0_6, %c0_7], %7 {strides = array<i32>} : memref<64x128xf32, #tpu.memory_space<vmem>>, vector<64x128xf32>,
    %c1_i32 = arith.constant 1 : i32
    %9 = arith.cmpi eq, %arg2, %c1_i32 : i32
    %10 = arith.extui %9 : i1 to i32
    %c0_i32_8 = arith.constant 0 : i32
    %11 = arith.cmpi ne, %10, %c0_i32_8 : i32
    scf.if %11 {
      %c0_9 = arith.constant 0 : index
      %c0_10 = arith.constant 0 : index
      %12 = vector.load %arg9[%c0_9, %c0_10] : memref<64x128xf32, #tpu.memory_space<vmem>>, vector<64x128xf32>
      %c0_11 = arith.constant 0 : index
      %c0_12 = arith.constant 0 : index
      %13 = vector.load %arg5[%c0_11, %c0_12] : memref<1x128xf32, #tpu.memory_space<vmem>>, vector<1x128xf32>
      %14 = vector.broadcast %13 : vector<1x128xf32> to vector<64x128xf32>
      %15 = arith.addf %12, %14 : vector<64x128xf32>
      %cst_13 = arith.constant dense<0.000000e+00> : vector<128xf32>
      %16 = vector.multi_reduction <add>, %15, %cst_13 [0] : vector<64x128xf32> to vector<128xf32>
      %17 = vector.shape_cast %16 : vector<128xf32> to vector<1x128xf32>
      %18 = vector.shape_cast %17 : vector<1x128xf32> to vector<1x1x128xf32>
      %c0_14 = arith.constant 0 : index
      %c0_15 = arith.constant 0 : index
      %c0_16 = arith.constant 0 : index
      %19 = vector.load %arg7[%c0_14, %c0_15, %c0_16] : memref<1x1x128xf32, #tpu.memory_space<vmem>>, vector<1x1x128xf32>
      tpu.vector_store %arg7[%c0_14, %c0_15, %c0_16], %18 {strides = array<i32>} : memref<1x1x128xf32, #tpu.memory_space<vmem>>, vector<1x1x128xf32>,
      %20 = arith.mulf %15, %15 : vector<64x128xf32>
      %cst_17 = arith.constant dense<0.000000e+00> : vector<128xf32>
      %21 = vector.multi_reduction <add>, %20, %cst_17 [0] : vector<64x128xf32> to vector<128xf32>
      %22 = vector.shape_cast %21 : vector<128xf32> to vector<1x128xf32>
      %23 = vector.shape_cast %22 : vector<1x128xf32> to vector<1x1x128xf32>
      %c0_18 = arith.constant 0 : index
      %c0_19 = arith.constant 0 : index
      %c0_20 = arith.constant 0 : index
      %24 = vector.load %arg8[%c0_18, %c0_19, %c0_20] : memref<1x1x128xf32, #tpu.memory_space<vmem>>, vector<1x1x128xf32>
      tpu.vector_store %arg8[%c0_18, %c0_19, %c0_20], %23 {strides = array<i32>} : memref<1x1x128xf32, #tpu.memory_space<vmem>>, vector<1x1x128xf32>,
      %25 = arith.truncf %15 : vector<64x128xf32> to vector<64x128xbf16>
      %c0_21 = arith.constant 0 : index
      %c0_22 = arith.constant 0 : index
      %26 = vector.load %arg6[%c0_21, %c0_22] : memref<64x128xbf16, #tpu.memory_space<vmem>>, vector<64x128xbf16>
      tpu.vector_store %arg6[%c0_21, %c0_22], %25 {strides = array<i32>} : memref<64x128xbf16, #tpu.memory_space<vmem>>, vector<64x128xbf16>,
    } else {
    }
    return
  }
  func.func @transform_0(%arg0: i32, %arg1: i32, %arg2: i32) -> (i32, i32) {
    %c0_i32 = arith.constant 0 : i32
    return %arg0, %arg2 : i32, i32
  }
  func.func @transform_1(%arg0: i32, %arg1: i32, %arg2: i32) -> (i32, i32) {
    %c0_i32 = arith.constant 0 : i32
    return %arg2, %arg1 : i32, i32
  }
  func.func @transform_2(%arg0: i32, %arg1: i32, %arg2: i32) -> (i32, i32) {
    %c0_i32 = arith.constant 0 : i32
    %c0_i32_0 = arith.constant 0 : i32
    return %c0_i32, %arg1 : i32, i32
  }
  func.func @transform_3(%arg0: i32, %arg1: i32, %arg2: i32) -> (i32, i32) {
    %c0_i32 = arith.constant 0 : i32
    return %arg0, %arg1 : i32, i32
  }
  func.func @transform_4(%arg0: i32, %arg1: i32, %arg2: i32) -> (i32, i32, i32) {
    %c0_i32 = arith.constant 0 : i32
    %c0_i32_0 = arith.constant 0 : i32
    return %arg0, %c0_i32, %arg1 : i32, i32, i32
  }
  func.func @transform_5(%arg0: i32, %arg1: i32, %arg2: i32) -> (i32, i32, i32) {
    %c0_i32 = arith.constant 0 : i32
    %c0_i32_0 = arith.constant 0 : i32
    return %arg0, %c0_i32, %arg1 : i32, i32, i32
  }
}

module attributes {stable_mosaic.version = 11 : i64} {
  func.func @_affine_lrelu_kernel(%arg0: i32, %arg1: memref<128x128xbf16, #tpu.memory_space<vmem>>, %arg2: memref<1x128xf32, #tpu.memory_space<vmem>>, %arg3: memref<1x128xf32, #tpu.memory_space<vmem>>, %arg4: memref<128x128xbf16, #tpu.memory_space<vmem>>) attributes {dimension_semantics = [#tpu.dimension_semantics<parallel>], iteration_bounds = array<i64: 1>, scalar_prefetch = 0 : i64, scratch_operands = 0 : i64, tpu.core_type = #tpu.core_type<tc>, window_params = [{transform_indices = @transform_0, window_bounds = array<i64: 128, 128>}, {pipeline_mode = #tpu.pipeline_mode<synchronous>, transform_indices = @transform_1, window_bounds = array<i64: 1, 128>}, {pipeline_mode = #tpu.pipeline_mode<synchronous>, transform_indices = @transform_2, window_bounds = array<i64: 1, 128>}, {transform_indices = @transform_3, window_bounds = array<i64: 128, 128>}]} {
    %c0 = arith.constant 0 : index
    %c0_0 = arith.constant 0 : index
    %0 = vector.load %arg1[%c0, %c0_0] : memref<128x128xbf16, #tpu.memory_space<vmem>>, vector<128x128xbf16>
    %1 = arith.extf %0 : vector<128x128xbf16> to vector<128x128xf32>
    %c0_1 = arith.constant 0 : index
    %c0_2 = arith.constant 0 : index
    %2 = vector.load %arg2[%c0_1, %c0_2] : memref<1x128xf32, #tpu.memory_space<vmem>>, vector<1x128xf32>
    %3 = vector.broadcast %2 : vector<1x128xf32> to vector<128x128xf32>
    %4 = arith.mulf %1, %3 : vector<128x128xf32>
    %c0_3 = arith.constant 0 : index
    %c0_4 = arith.constant 0 : index
    %5 = vector.load %arg3[%c0_3, %c0_4] : memref<1x128xf32, #tpu.memory_space<vmem>>, vector<1x128xf32>
    %6 = vector.broadcast %5 : vector<1x128xf32> to vector<128x128xf32>
    %7 = arith.addf %4, %6 : vector<128x128xf32>
    %cst = arith.constant 0.000000e+00 : f32
    %8 = vector.broadcast %cst : f32 to vector<128x128xf32>
    %9 = arith.cmpf ogt, %7, %8 : vector<128x128xf32>
    %cst_5 = arith.constant 2.000000e-01 : f32
    %10 = vector.broadcast %cst_5 : f32 to vector<128x128xf32>
    %11 = arith.mulf %10, %7 : vector<128x128xf32>
    %12 = arith.select %9, %7, %11 : vector<128x128xi1>, vector<128x128xf32>
    %13 = arith.truncf %12 : vector<128x128xf32> to vector<128x128xbf16>
    %c0_6 = arith.constant 0 : index
    %c0_7 = arith.constant 0 : index
    %14 = vector.load %arg4[%c0_6, %c0_7] : memref<128x128xbf16, #tpu.memory_space<vmem>>, vector<128x128xbf16>
    tpu.vector_store %arg4[%c0_6, %c0_7], %13 {strides = array<i32>} : memref<128x128xbf16, #tpu.memory_space<vmem>>, vector<128x128xbf16>,
    return
  }
  func.func @transform_0(%arg0: i32) -> (i32, i32) {
    %c0_i32 = arith.constant 0 : i32
    %c0_i32_0 = arith.constant 0 : i32
    return %arg0, %c0_i32 : i32, i32
  }
  func.func @transform_1(%arg0: i32) -> (i32, i32) {
    %c0_i32 = arith.constant 0 : i32
    %c0_i32_0 = arith.constant 0 : i32
    %c0_i32_1 = arith.constant 0 : i32
    return %c0_i32, %c0_i32_0 : i32, i32
  }
  func.func @transform_2(%arg0: i32) -> (i32, i32) {
    %c0_i32 = arith.constant 0 : i32
    %c0_i32_0 = arith.constant 0 : i32
    %c0_i32_1 = arith.constant 0 : i32
    return %c0_i32, %c0_i32_0 : i32, i32
  }
  func.func @transform_3(%arg0: i32) -> (i32, i32) {
    %c0_i32 = arith.constant 0 : i32
    %c0_i32_0 = arith.constant 0 : i32
    return %arg0, %c0_i32 : i32, i32
  }
}

module attributes {stable_mosaic.version = 11 : i64} {
  func.func @_affine_lrelu_kernel(%arg0: i32, %arg1: memref<32x128xbf16, #tpu.memory_space<vmem>>, %arg2: memref<1x128xf32, #tpu.memory_space<vmem>>, %arg3: memref<1x128xf32, #tpu.memory_space<vmem>>, %arg4: memref<32x128xbf16, #tpu.memory_space<vmem>>) attributes {dimension_semantics = [#tpu.dimension_semantics<parallel>], iteration_bounds = array<i64: 1>, scalar_prefetch = 0 : i64, scratch_operands = 0 : i64, tpu.core_type = #tpu.core_type<tc>, window_params = [{transform_indices = @transform_0, window_bounds = array<i64: 32, 128>}, {pipeline_mode = #tpu.pipeline_mode<synchronous>, transform_indices = @transform_1, window_bounds = array<i64: 1, 128>}, {pipeline_mode = #tpu.pipeline_mode<synchronous>, transform_indices = @transform_2, window_bounds = array<i64: 1, 128>}, {transform_indices = @transform_3, window_bounds = array<i64: 32, 128>}]} {
    %c0 = arith.constant 0 : index
    %c0_0 = arith.constant 0 : index
    %0 = vector.load %arg1[%c0, %c0_0] : memref<32x128xbf16, #tpu.memory_space<vmem>>, vector<32x128xbf16>
    %1 = arith.extf %0 : vector<32x128xbf16> to vector<32x128xf32>
    %c0_1 = arith.constant 0 : index
    %c0_2 = arith.constant 0 : index
    %2 = vector.load %arg2[%c0_1, %c0_2] : memref<1x128xf32, #tpu.memory_space<vmem>>, vector<1x128xf32>
    %3 = vector.broadcast %2 : vector<1x128xf32> to vector<32x128xf32>
    %4 = arith.mulf %1, %3 : vector<32x128xf32>
    %c0_3 = arith.constant 0 : index
    %c0_4 = arith.constant 0 : index
    %5 = vector.load %arg3[%c0_3, %c0_4] : memref<1x128xf32, #tpu.memory_space<vmem>>, vector<1x128xf32>
    %6 = vector.broadcast %5 : vector<1x128xf32> to vector<32x128xf32>
    %7 = arith.addf %4, %6 : vector<32x128xf32>
    %cst = arith.constant 0.000000e+00 : f32
    %8 = vector.broadcast %cst : f32 to vector<32x128xf32>
    %9 = arith.cmpf ogt, %7, %8 : vector<32x128xf32>
    %cst_5 = arith.constant 2.000000e-01 : f32
    %10 = vector.broadcast %cst_5 : f32 to vector<32x128xf32>
    %11 = arith.mulf %10, %7 : vector<32x128xf32>
    %12 = arith.select %9, %7, %11 : vector<32x128xi1>, vector<32x128xf32>
    %13 = arith.truncf %12 : vector<32x128xf32> to vector<32x128xbf16>
    %c0_6 = arith.constant 0 : index
    %c0_7 = arith.constant 0 : index
    %14 = vector.load %arg4[%c0_6, %c0_7] : memref<32x128xbf16, #tpu.memory_space<vmem>>, vector<32x128xbf16>
    tpu.vector_store %arg4[%c0_6, %c0_7], %13 {strides = array<i32>} : memref<32x128xbf16, #tpu.memory_space<vmem>>, vector<32x128xbf16>,
    return
  }
  func.func @transform_0(%arg0: i32) -> (i32, i32) {
    %c0_i32 = arith.constant 0 : i32
    %c0_i32_0 = arith.constant 0 : i32
    return %arg0, %c0_i32 : i32, i32
  }
  func.func @transform_1(%arg0: i32) -> (i32, i32) {
    %c0_i32 = arith.constant 0 : i32
    %c0_i32_0 = arith.constant 0 : i32
    %c0_i32_1 = arith.constant 0 : i32
    return %c0_i32, %c0_i32_0 : i32, i32
  }
  func.func @transform_2(%arg0: i32) -> (i32, i32) {
    %c0_i32 = arith.constant 0 : i32
    %c0_i32_0 = arith.constant 0 : i32
    %c0_i32_1 = arith.constant 0 : i32
    return %c0_i32, %c0_i32_0 : i32, i32
  }
  func.func @transform_3(%arg0: i32) -> (i32, i32) {
    %c0_i32 = arith.constant 0 : i32
    %c0_i32_0 = arith.constant 0 : i32
    return %arg0, %c0_i32 : i32, i32
  }
}

module attributes {stable_mosaic.version = 11 : i64} {
  func.func @_gemm_kernel(%arg0: i32, %arg1: i32, %arg2: i32, %arg3: memref<16x2048xbf16, #tpu.memory_space<vmem>>, %arg4: memref<2048x128xbf16, #tpu.memory_space<vmem>>, %arg5: memref<1x128xf32, #tpu.memory_space<vmem>>, %arg6: memref<16x128xbf16, #tpu.memory_space<vmem>>, %arg7: memref<1x1x128xf32, #tpu.memory_space<vmem>>, %arg8: memref<1x1x128xf32, #tpu.memory_space<vmem>>, %arg9: memref<16x128xf32, #tpu.memory_space<vmem>>) attributes {dimension_semantics = [#tpu.dimension_semantics<parallel>, #tpu.dimension_semantics<parallel>, #tpu.dimension_semantics<arbitrary>], iteration_bounds = array<i64: 2, 1, 1>, scalar_prefetch = 0 : i64, scratch_operands = 1 : i64, tpu.core_type = #tpu.core_type<tc>, window_params = [{transform_indices = @transform_0, window_bounds = array<i64: 16, 2048>}, {transform_indices = @transform_1, window_bounds = array<i64: 2048, 128>}, {transform_indices = @transform_2, window_bounds = array<i64: 1, 128>}, {transform_indices = @transform_3, window_bounds = array<i64: 16, 128>}, {transform_indices = @transform_4, window_bounds = array<i64: 1, 1, 128>}, {transform_indices = @transform_5, window_bounds = array<i64: 1, 1, 128>}]} {
    %c0_i32 = arith.constant 0 : i32
    %0 = arith.cmpi eq, %arg2, %c0_i32 : i32
    %1 = arith.extui %0 : i1 to i32
    %c0_i32_0 = arith.constant 0 : i32
    %2 = arith.cmpi ne, %1, %c0_i32_0 : i32
    scf.if %2 {
      %cst_10 = arith.constant 0.000000e+00 : f32
      %12 = vector.broadcast %cst_10 : f32 to vector<16x128xf32>
      %c0_11 = arith.constant 0 : index
      %c0_12 = arith.constant 0 : index
      %13 = vector.load %arg9[%c0_11, %c0_12] : memref<16x128xf32, #tpu.memory_space<vmem>>, vector<16x128xf32>
      tpu.vector_store %arg9[%c0_11, %c0_12], %12 {strides = array<i32>} : memref<16x128xf32, #tpu.memory_space<vmem>>, vector<16x128xf32>,
    } else {
    }
    %c0 = arith.constant 0 : index
    %c0_1 = arith.constant 0 : index
    %3 = vector.load %arg9[%c0, %c0_1] : memref<16x128xf32, #tpu.memory_space<vmem>>, vector<16x128xf32>
    %c0_2 = arith.constant 0 : index
    %c0_3 = arith.constant 0 : index
    %4 = vector.load %arg3[%c0_2, %c0_3] : memref<16x2048xbf16, #tpu.memory_space<vmem>>, vector<16x2048xbf16>
    %c0_4 = arith.constant 0 : index
    %c0_5 = arith.constant 0 : index
    %5 = vector.load %arg4[%c0_4, %c0_5] : memref<2048x128xbf16, #tpu.memory_space<vmem>>, vector<2048x128xbf16>
    %cst = arith.constant dense<0.000000e+00> : vector<16x128xf32>
    %6 = tpu.matmul %4, %5, %cst {dimension_numbers = #tpu.dot_dimension_numbers<[1], [0], [0], [1], [0, 0, 1, 1], [], []>} : vector<16x2048xbf16>, vector<2048x128xbf16>, vector<16x128xf32> -> vector<16x128xf32>
    %7 = arith.addf %3, %6 : vector<16x128xf32>
    %c0_6 = arith.constant 0 : index
    %c0_7 = arith.constant 0 : index
    %8 = vector.load %arg9[%c0_6, %c0_7] : memref<16x128xf32, #tpu.memory_space<vmem>>, vector<16x128xf32>
    tpu.vector_store %arg9[%c0_6, %c0_7], %7 {strides = array<i32>} : memref<16x128xf32, #tpu.memory_space<vmem>>, vector<16x128xf32>,
    %c0_i32_8 = arith.constant 0 : i32
    %9 = arith.cmpi eq, %arg2, %c0_i32_8 : i32
    %10 = arith.extui %9 : i1 to i32
    %c0_i32_9 = arith.constant 0 : i32
    %11 = arith.cmpi ne, %10, %c0_i32_9 : i32
    scf.if %11 {
      %c0_10 = arith.constant 0 : index
      %c0_11 = arith.constant 0 : index
      %12 = vector.load %arg9[%c0_10, %c0_11] : memref<16x128xf32, #tpu.memory_space<vmem>>, vector<16x128xf32>
      %c0_12 = arith.constant 0 : index
      %c0_13 = arith.constant 0 : index
      %13 = vector.load %arg5[%c0_12, %c0_13] : memref<1x128xf32, #tpu.memory_space<vmem>>, vector<1x128xf32>
      %14 = vector.broadcast %13 : vector<1x128xf32> to vector<16x128xf32>
      %15 = arith.addf %12, %14 : vector<16x128xf32>
      %cst_14 = arith.constant dense<0.000000e+00> : vector<128xf32>
      %16 = vector.multi_reduction <add>, %15, %cst_14 [0] : vector<16x128xf32> to vector<128xf32>
      %17 = vector.shape_cast %16 : vector<128xf32> to vector<1x128xf32>
      %18 = vector.shape_cast %17 : vector<1x128xf32> to vector<1x1x128xf32>
      %c0_15 = arith.constant 0 : index
      %c0_16 = arith.constant 0 : index
      %c0_17 = arith.constant 0 : index
      %19 = vector.load %arg7[%c0_15, %c0_16, %c0_17] : memref<1x1x128xf32, #tpu.memory_space<vmem>>, vector<1x1x128xf32>
      tpu.vector_store %arg7[%c0_15, %c0_16, %c0_17], %18 {strides = array<i32>} : memref<1x1x128xf32, #tpu.memory_space<vmem>>, vector<1x1x128xf32>,
      %20 = arith.mulf %15, %15 : vector<16x128xf32>
      %cst_18 = arith.constant dense<0.000000e+00> : vector<128xf32>
      %21 = vector.multi_reduction <add>, %20, %cst_18 [0] : vector<16x128xf32> to vector<128xf32>
      %22 = vector.shape_cast %21 : vector<128xf32> to vector<1x128xf32>
      %23 = vector.shape_cast %22 : vector<1x128xf32> to vector<1x1x128xf32>
      %c0_19 = arith.constant 0 : index
      %c0_20 = arith.constant 0 : index
      %c0_21 = arith.constant 0 : index
      %24 = vector.load %arg8[%c0_19, %c0_20, %c0_21] : memref<1x1x128xf32, #tpu.memory_space<vmem>>, vector<1x1x128xf32>
      tpu.vector_store %arg8[%c0_19, %c0_20, %c0_21], %23 {strides = array<i32>} : memref<1x1x128xf32, #tpu.memory_space<vmem>>, vector<1x1x128xf32>,
      %25 = arith.truncf %15 : vector<16x128xf32> to vector<16x128xbf16>
      %c0_22 = arith.constant 0 : index
      %c0_23 = arith.constant 0 : index
      %26 = vector.load %arg6[%c0_22, %c0_23] : memref<16x128xbf16, #tpu.memory_space<vmem>>, vector<16x128xbf16>
      tpu.vector_store %arg6[%c0_22, %c0_23], %25 {strides = array<i32>} : memref<16x128xbf16, #tpu.memory_space<vmem>>, vector<16x128xbf16>,
    } else {
    }
    return
  }
  func.func @transform_0(%arg0: i32, %arg1: i32, %arg2: i32) -> (i32, i32) {
    %c0_i32 = arith.constant 0 : i32
    return %arg0, %arg2 : i32, i32
  }
  func.func @transform_1(%arg0: i32, %arg1: i32, %arg2: i32) -> (i32, i32) {
    %c0_i32 = arith.constant 0 : i32
    return %arg2, %arg1 : i32, i32
  }
  func.func @transform_2(%arg0: i32, %arg1: i32, %arg2: i32) -> (i32, i32) {
    %c0_i32 = arith.constant 0 : i32
    %c0_i32_0 = arith.constant 0 : i32
    return %c0_i32, %arg1 : i32, i32
  }
  func.func @transform_3(%arg0: i32, %arg1: i32, %arg2: i32) -> (i32, i32) {
    %c0_i32 = arith.constant 0 : i32
    return %arg0, %arg1 : i32, i32
  }
  func.func @transform_4(%arg0: i32, %arg1: i32, %arg2: i32) -> (i32, i32, i32) {
    %c0_i32 = arith.constant 0 : i32
    %c0_i32_0 = arith.constant 0 : i32
    return %arg0, %c0_i32, %arg1 : i32, i32, i32
  }
  func.func @transform_5(%arg0: i32, %arg1: i32, %arg2: i32) -> (i32, i32, i32) {
    %c0_i32 = arith.constant 0 : i32
    %c0_i32_0 = arith.constant 0 : i32
    return %arg0, %c0_i32, %arg1 : i32, i32, i32
  }
}

module attributes {stable_mosaic.version = 11 : i64} {
  func.func @_gemm_kernel(%arg0: i32, %arg1: i32, %arg2: i32, %arg3: memref<2x2048xbf16, #tpu.memory_space<vmem>>, %arg4: memref<2048x128xbf16, #tpu.memory_space<vmem>>, %arg5: memref<1x128xf32, #tpu.memory_space<vmem>>, %arg6: memref<2x128xf32, #tpu.memory_space<vmem>>, %arg7: memref<2x128xf32, #tpu.memory_space<vmem>>) attributes {dimension_semantics = [#tpu.dimension_semantics<parallel>, #tpu.dimension_semantics<parallel>, #tpu.dimension_semantics<arbitrary>], iteration_bounds = array<i64: 1, 1, 1>, scalar_prefetch = 0 : i64, scratch_operands = 1 : i64, tpu.core_type = #tpu.core_type<tc>, window_params = [{transform_indices = @transform_0, window_bounds = array<i64: 2, 2048>}, {transform_indices = @transform_1, window_bounds = array<i64: 2048, 128>}, {transform_indices = @transform_2, window_bounds = array<i64: 1, 128>}, {transform_indices = @transform_3, window_bounds = array<i64: 2, 128>}]} {
    %c0_i32 = arith.constant 0 : i32
    %0 = arith.cmpi eq, %arg2, %c0_i32 : i32
    %1 = arith.extui %0 : i1 to i32
    %c0_i32_0 = arith.constant 0 : i32
    %2 = arith.cmpi ne, %1, %c0_i32_0 : i32
    scf.if %2 {
      %cst_10 = arith.constant 0.000000e+00 : f32
      %12 = vector.broadcast %cst_10 : f32 to vector<2x128xf32>
      %c0_11 = arith.constant 0 : index
      %c0_12 = arith.constant 0 : index
      %13 = vector.load %arg7[%c0_11, %c0_12] : memref<2x128xf32, #tpu.memory_space<vmem>>, vector<2x128xf32>
      tpu.vector_store %arg7[%c0_11, %c0_12], %12 {strides = array<i32>} : memref<2x128xf32, #tpu.memory_space<vmem>>, vector<2x128xf32>,
    } else {
    }
    %c0 = arith.constant 0 : index
    %c0_1 = arith.constant 0 : index
    %3 = vector.load %arg7[%c0, %c0_1] : memref<2x128xf32, #tpu.memory_space<vmem>>, vector<2x128xf32>
    %c0_2 = arith.constant 0 : index
    %c0_3 = arith.constant 0 : index
    %4 = vector.load %arg3[%c0_2, %c0_3] : memref<2x2048xbf16, #tpu.memory_space<vmem>>, vector<2x2048xbf16>
    %c0_4 = arith.constant 0 : index
    %c0_5 = arith.constant 0 : index
    %5 = vector.load %arg4[%c0_4, %c0_5] : memref<2048x128xbf16, #tpu.memory_space<vmem>>, vector<2048x128xbf16>
    %cst = arith.constant dense<0.000000e+00> : vector<2x128xf32>
    %6 = tpu.matmul %4, %5, %cst {dimension_numbers = #tpu.dot_dimension_numbers<[1], [0], [0], [1], [0, 0, 1, 1], [], []>} : vector<2x2048xbf16>, vector<2048x128xbf16>, vector<2x128xf32> -> vector<2x128xf32>
    %7 = arith.addf %3, %6 : vector<2x128xf32>
    %c0_6 = arith.constant 0 : index
    %c0_7 = arith.constant 0 : index
    %8 = vector.load %arg7[%c0_6, %c0_7] : memref<2x128xf32, #tpu.memory_space<vmem>>, vector<2x128xf32>
    tpu.vector_store %arg7[%c0_6, %c0_7], %7 {strides = array<i32>} : memref<2x128xf32, #tpu.memory_space<vmem>>, vector<2x128xf32>,
    %c0_i32_8 = arith.constant 0 : i32
    %9 = arith.cmpi eq, %arg2, %c0_i32_8 : i32
    %10 = arith.extui %9 : i1 to i32
    %c0_i32_9 = arith.constant 0 : i32
    %11 = arith.cmpi ne, %10, %c0_i32_9 : i32
    scf.if %11 {
      %c0_10 = arith.constant 0 : index
      %c0_11 = arith.constant 0 : index
      %12 = vector.load %arg7[%c0_10, %c0_11] : memref<2x128xf32, #tpu.memory_space<vmem>>, vector<2x128xf32>
      %c0_12 = arith.constant 0 : index
      %c0_13 = arith.constant 0 : index
      %13 = vector.load %arg5[%c0_12, %c0_13] : memref<1x128xf32, #tpu.memory_space<vmem>>, vector<1x128xf32>
      %14 = vector.broadcast %13 : vector<1x128xf32> to vector<2x128xf32>
      %15 = arith.addf %12, %14 : vector<2x128xf32>
      %16 = arith.negf %15 : vector<2x128xf32>
      %17 = math.exp %16 : vector<2x128xf32>
      %cst_14 = arith.constant 1.000000e+00 : f32
      %18 = vector.broadcast %cst_14 : f32 to vector<2x128xf32>
      %19 = arith.addf %18, %17 : vector<2x128xf32>
      %20 = arith.divf %18, %19 : vector<2x128xf32>
      %c0_15 = arith.constant 0 : index
      %c0_16 = arith.constant 0 : index
      %21 = vector.load %arg6[%c0_15, %c0_16] : memref<2x128xf32, #tpu.memory_space<vmem>>, vector<2x128xf32>
      tpu.vector_store %arg6[%c0_15, %c0_16], %20 {strides = array<i32>} : memref<2x128xf32, #tpu.memory_space<vmem>>, vector<2x128xf32>,
    } else {
    }
    return
  }
  func.func @transform_0(%arg0: i32, %arg1: i32, %arg2: i32) -> (i32, i32) {
    %c0_i32 = arith.constant 0 : i32
    return %arg0, %arg2 : i32, i32
  }
  func.func @transform_1(%arg0: i32, %arg1: i32, %arg2: i32) -> (i32, i32) {
    %c0_i32 = arith.constant 0 : i32
    return %arg2, %arg1 : i32, i32
  }
  func.func @transform_2(%arg0: i32, %arg1: i32, %arg2: i32) -> (i32, i32) {
    %c0_i32 = arith.constant 0 : i32
    %c0_i32_0 = arith.constant 0 : i32
    return %c0_i32, %arg1 : i32, i32
  }
  func.func @transform_3(%arg0: i32, %arg1: i32, %arg2: i32) -> (i32, i32) {
    %c0_i32 = arith.constant 0 : i32
    return %arg0, %arg1 : i32, i32
  }
}

</mosaic_0001>

<llo_original>
// kernel: discriminator_forward.8
$region0: #{discriminator_forward.8}
  #allocation0 [shape = 'u32[]', space=smem, size = 0x4, offset = 0x4, fixed_abs, tag = 'smem constant byte address 0x4 - core index']
  #allocation1 [shape = 'u32[72,128]{1,0:T(1,128)}', space=vmem, size = 0x9000, scoped, tag = 'internal scratch']
  #allocation2 [shape = 'f32[1024,128]{1,0:T(8,128)}', space=vmem, size = 0x80000, scoped, tag = 'scratch operand']
  %s0 = inlined_call_operand.vmem [shape: bf16[2048,128], index: 0, kind: input, shape index: {}]
  %s1 = inlined_call_operand.vmem [shape: bf16[128,128], index: 1, kind: input, shape index: {}]
  %s2 = inlined_call_operand.vmem [shape: f32[1,128], index: 2, kind: input, shape index: {}]
  %s3 = inlined_call_operand.vmem [shape: bf16[2048,128], index: 3, kind: output, shape index: {}]
  %s4 = sld [smem:[#allocation0]]
  $region53: #{discriminator_forward.8} parent=0
    _
  %s6 = ssub.s32 1, %s4
  %s7 = scalar_select 0, %s6, %s4
  loop: start=0, step=1, limit=4
  $region2: #{discriminator_forward.8} parent=0 // loop_pre_header
    _
  $region3: #{discriminator_forward.8} parent=0 // loop_header
    %s9 = sphi 0, %s13
    %p10 = scmp.ge.s32.totalorder %s9, 4
    %s16 = sphi 0, %s35
    %s17 = sphi 0, %s31
    %s18 = sphi 0, %s27
    %s19 = sphi 0, %s16
    %s20 = sphi 0, %s17
    %s21 = sphi 0, %s18
    %s22 = sphi 0, %s19
    %s23 = sphi 0, %s20
    %s24 = sphi 0, %s21
    %s40 = sphi 0, %s42
    %s43 = sphi 0, %s40
    %s44 = sphi 0, %s43
    %s60 = sphi 0, %s44
    %s68 = sphi 0, %s70
    %s71 = sphi 0, %s68
    %s72 = sphi 0, %s71
    %s88 = sphi 0, %s72
    %s94 = sphi 0, %s96
    %s97 = sphi 0, %s94
    %s98 = sphi 0, %s97
    %s114 = sphi 0, %s98
    %s122 = sphi 0, %s124
    %s125 = sphi 0, %s122
    %s126 = sphi 0, %s125
    %s142 = sphi 0, %s126
  $region4: #{discriminator_forward.8} parent=0 // loop_header_branch
    %12 = sbr.rel (%p10) target = $region8
  $region5: #{discriminator_forward.8} parent=0 // loop_body
    %s14 = ssub.s32 %s9, 1
    %s15 = ssub.s32 %s9, 2
    %s25 = sadd.s32 1, %s18
    %p26 = scmp.ge.s32.totalorder %s25, 1
    %s27 = scalar_select %p26, 0, %s25
    %s28 = sadd.s32 1, %s17
    %s29 = scalar_select %p26, %s28, %s17
    %p30 = scmp.ge.s32.totalorder %s29, 1
    %s31 = scalar_select %p30, 0, %s29
    %s32 = sadd.s32 1, %s16
    %s33 = scalar_select %p30, %s32, %s16
    %p34 = scmp.ge.s32.totalorder %s33, 2
    %s35 = scalar_select %p34, 0, %s33
    %s36 = ssub.s32 %s16, %s35
    %s37 = ssub.s32 %s18, %s27
    %s38 = sor.u32 %s36, %s37
    %p39 = scmp.eq.s32.totalorder %s38, 0
    %s41 = sadd.s32 %s40, 1
    %s42 = scalar_select %p39, %s40, %s41
    %p45 = pneg %p39
    %p46 = scmp.eq.s32.totalorder %s9, 1
    %p47 = por %p45, %p46
    %p48 = scmp.ne.s32.totalorder %s40, %s43
    %p49 = scmp.eq.s32.totalorder %s9, 0
    %p50 = por %p48, %p49
    %p51 = scmp.ne.s32.totalorder %s40, %s43
    %p52 = scmp.eq.s32.totalorder %s14, 1
    %p53 = por %p51, %p52
    %p54 = scmp.ne.s32.totalorder %s43, %s44
    %p55 = scmp.eq.s32.totalorder %s14, 0
    %p56 = por %p54, %p55
    %p57 = scmp.ne.s32.totalorder %s43, %s44
    %p58 = scmp.eq.s32.totalorder %s15, 1
    %p59 = por %p57, %p58
    %p61 = scmp.ne.s32.totalorder %s44, %s60
    %p62 = scmp.eq.s32.totalorder %s15, 0
    %p63 = por %p61, %p62
    %s64 = ssub.s32 %s18, %s27
    %s65 = ssub.s32 %s17, %s31
    %s66 = sor.u32 %s64, %s65
    %p67 = scmp.eq.s32.totalorder %s66, 0
    %s69 = sadd.s32 %s68, 1
    %s70 = scalar_select %p67, %s68, %s69
    %p73 = pneg %p67
    %p74 = scmp.eq.s32.totalorder %s9, 1
    %p75 = por %p73, %p74
    %p76 = scmp.ne.s32.totalorder %s68, %s71
    %p77 = scmp.eq.s32.totalorder %s9, 0
    %p78 = por %p76, %p77
    %p79 = scmp.ne.s32.totalorder %s68, %s71
    %p80 = scmp.eq.s32.totalorder %s14, 1
    %p81 = por %p79, %p80
    %p82 = scmp.ne.s32.totalorder %s71, %s72
    %p83 = scmp.eq.s32.totalorder %s14, 0
    %p84 = por %p82, %p83
    %p85 = scmp.ne.s32.totalorder %s71, %s72
    %p86 = scmp.eq.s32.totalorder %s15, 1
    %p87 = por %p85, %p86
    %p89 = scmp.ne.s32.totalorder %s72, %s88
    %p90 = scmp.eq.s32.totalorder %s15, 0
    %p91 = por %p89, %p90
    %s92 = ssub.s32 %s17, %s31
    %p93 = scmp.eq.s32.totalorder %s92, 0
    %s95 = sadd.s32 %s94, 1
    %s96 = scalar_select %p93, %s94, %s95
    %p99 = pneg %p93
    %p100 = scmp.eq.s32.totalorder %s9, 1
    %p101 = por %p99, %p100
    %p102 = scmp.ne.s32.totalorder %s94, %s97
    %p103 = scmp.eq.s32.totalorder %s9, 0
    %p104 = por %p102, %p103
    %p105 = scmp.ne.s32.totalorder %s94, %s97
    %p106 = scmp.eq.s32.totalorder %s14, 1
    %p107 = por %p105, %p106
    %p108 = scmp.ne.s32.totalorder %s97, %s98
    %p109 = scmp.eq.s32.totalorder %s14, 0
    %p110 = por %p108, %p109
    %p111 = scmp.ne.s32.totalorder %s97, %s98
    %p112 = scmp.eq.s32.totalorder %s15, 1
    %p113 = por %p111, %p112
    %p115 = scmp.ne.s32.totalorder %s98, %s114
    %p116 = scmp.eq.s32.totalorder %s15, 0
    %p117 = por %p115, %p116
    %s118 = ssub.s32 %s16, %s35
    %s119 = ssub.s32 %s17, %s31
    %s120 = sor.u32 %s118, %s119
    %p121 = scmp.eq.s32.totalorder %s120, 0
    %s123 = sadd.s32 %s122, 1
    %s124 = scalar_select %p121, %s122, %s123
    %p127 = pneg %p121
    %p128 = scmp.eq.s32.totalorder %s9, 1
    %p129 = por %p127, %p128
    %p130 = scmp.ne.s32.totalorder %s122, %s125
    %p131 = scmp.eq.s32.totalorder %s9, 0
    %p132 = por %p130, %p131
    %p133 = scmp.ne.s32.totalorder %s122, %s125
    %p134 = scmp.eq.s32.totalorder %s14, 1
    %p135 = por %p133, %p134
    %p136 = scmp.ne.s32.totalorder %s125, %s126
    %p137 = scmp.eq.s32.totalorder %s14, 0
    %p138 = por %p136, %p137
    %p139 = scmp.ne.s32.totalorder %s125, %s126
    %p140 = scmp.eq.s32.totalorder %s15, 1
    %p141 = por %p139, %p140
    %p143 = scmp.ne.s32.totalorder %s126, %s142
    %p144 = scmp.eq.s32.totalorder %s15, 0
    %p145 = por %p143, %p144
    %p146 = scmp.le.s32.totalorder 1, %s9
    %p147 = scmp.lt.s32.totalorder %s9, 3
    %p148 = pnand %p146, %p147
    %p149 = pneg %p148
    // Predicated region
    $region9: #{discriminator_forward.8} parent=5 // pred_check
      _
    $region10: #{discriminator_forward.8} parent=5 // pred_check_branch
      %151 = sbr.rel (%p148) target = $region12
    $region11: #{discriminator_forward.8} parent=5 // pred_region
      %s152 = ssub.s32 %s9, 1
      // Predicated region
      $region13: #{discriminator_forward.8} parent=11 // pred_check
        %p153 = pneg %p84
      $region14: #{discriminator_forward.8} parent=11 // pred_check_branch
        %155 = sbr.rel (%p153) target = $region16
      $region15: #{discriminator_forward.8} parent=11 // pred_region
        %s156 = smul.u32 16, %s21
        %p157 = scmp.lt.s32.totalorder %s156, 15
        %s158 = scalar_select %p157, %s156, 15
        %p159 = scmp.lt.s32.totalorder %s20, 0
        %s160 = scalar_select %p159, %s20, 0
        %s161 = sadd.s32 %s160, %s158
        %s162 = smul.addr %s161, 4
        %s163 = scalar_lea.vmem %s1, %s162
        %s164 = smul.u32 16, %s21
      $region16: #{discriminator_forward.8} parent=11 // pred_fallthru
        _
      // Predicated region
      $region17: #{discriminator_forward.8} parent=11 // pred_check
        %p165 = pneg %p110
      $region18: #{discriminator_forward.8} parent=11 // pred_check_branch
        %167 = sbr.rel (%p165) target = $region20
      $region19: #{discriminator_forward.8} parent=11 // pred_region
        %p168 = scmp.lt.s32.totalorder %s20, 0
        %s169 = scalar_select %p168, %s20, 0
        %s170 = scalar_lea.vmem %s2, %s169
      $region20: #{discriminator_forward.8} parent=11 // pred_fallthru
        _
    $region12: #{discriminator_forward.8} parent=5 // pred_fallthru
      _
    %p171 = scmp.lt.s32.totalorder %s9, 2
    // Predicated region
    $region21: #{discriminator_forward.8} parent=5 // pred_check
      %p172 = pneg %p171
    $region22: #{discriminator_forward.8} parent=5 // pred_check_branch
      %174 = sbr.rel (%p172) target = $region24
    $region23: #{discriminator_forward.8} parent=5 // pred_region
      // Predicated region
      $region25: #{discriminator_forward.8} parent=23 // pred_check
        %p175 = pneg %p50
      $region26: #{discriminator_forward.8} parent=23 // pred_check_branch
        %177 = sbr.rel (%p175) target = $region28
      $region27: #{discriminator_forward.8} parent=23 // pred_region
        %s178 = smul.u32 128, %s16
        %p179 = scmp.lt.s32.totalorder %s178, 255
        %s180 = scalar_select %p179, %s178, 255
        %p181 = scmp.lt.s32.totalorder %s18, 0
        %s182 = scalar_select %p181, %s18, 0
        %s183 = sadd.s32 %s182, %s180
        %s184 = smul.addr %s183, 4
        %s185 = scalar_lea.vmem %s0, %s184
        %s186 = smul.u32 128, %s16
      $region28: #{discriminator_forward.8} parent=23 // pred_fallthru
        _
    $region24: #{discriminator_forward.8} parent=5 // pred_fallthru
      _
    %p187 = scmp.le.s32.totalorder 1, %s9
    %p188 = scmp.lt.s32.totalorder %s9, 3
    %p189 = pnand %p187, %p188
    %p190 = pneg %p189
    // Predicated region
    $region29: #{discriminator_forward.8} parent=5 // pred_check
      _
    $region30: #{discriminator_forward.8} parent=5 // pred_check_branch
      %192 = sbr.rel (%p189) target = $region32
    $region31: #{discriminator_forward.8} parent=5 // pred_region
      %s193 = ssub.s32 %s9, 1
      %s194 = smul.u32 128, %s19
      %p195 = scmp.lt.s32.totalorder %s194, 255
      %s196 = scalar_select %p195, %s194, 255
      %p197 = scmp.lt.s32.totalorder %s21, 0
      %s198 = scalar_select %p197, %s21, 0
      %s199 = sadd.s32 %s198, %s196
      %s200 = smul.addr %s199, 4
      %s201 = scalar_lea.vmem %s0, %s200
      %p202 = pneg %p56
      %p203 = pneg %p53
      %s204 = smul.u32 16, %s21
      %p205 = scmp.lt.s32.totalorder %s204, 15
      %s206 = scalar_select %p205, %s204, 15
      %p207 = scmp.lt.s32.totalorder %s20, 0
      %s208 = scalar_select %p207, %s20, 0
      %s209 = sadd.s32 %s208, %s206
      %s210 = smul.addr %s209, 4
      %s211 = scalar_lea.vmem %s1, %s210
      %p212 = pneg %p84
      %p213 = pneg %p81
      %p214 = scmp.lt.s32.totalorder %s20, 0
      %s215 = scalar_select %p214, %s20, 0
      %s216 = scalar_lea.vmem %s2, %s215
      %p217 = pneg %p110
      %p218 = pneg %p107
      %p219 = pneg %p138
      %p220 = pneg %p135
      %s221 = smul.u32 128, %s19
      %p222 = scmp.lt.s32.totalorder %s221, 255
      %s223 = scalar_select %p222, %s221, 255
      %p224 = scmp.lt.s32.totalorder %s20, 0
      %s225 = scalar_select %p224, %s20, 0
      %s226 = sadd.s32 %s225, %s223
      %s227 = smul.addr %s226, 4
      %s228 = scalar_lea.vmem %s3, %s227
      %s229 = smul.u32 128, %s19
      %p230 = scmp.lt.s32.totalorder %s229, 255
      %s231 = scalar_select %p230, %s229, 255
      %p232 = scmp.lt.s32.totalorder %s21, 0
      %s233 = scalar_select %p232, %s21, 0
      %s234 = sadd.s32 %s233, %s231
      %s235 = smul.addr %s234, 4
      %s236 = scalar_lea.vmem %s0, %s235
      %s237 = smul.u32 128, %s19
      %s238 = smul.u32 16, %s21
      %p239 = scmp.lt.s32.totalorder %s238, 15
      %s240 = scalar_select %p239, %s238, 15
      %p241 = scmp.lt.s32.totalorder %s20, 0
      %s242 = scalar_select %p241, %s20, 0
      %s243 = sadd.s32 %s242, %s240
      %s244 = smul.addr %s243, 4
      %s245 = scalar_lea.vmem %s1, %s244
      %s246 = smul.u32 16, %s21
      %p247 = scmp.lt.s32.totalorder %s20, 0
      %s248 = scalar_select %p247, %s20, 0
      %s249 = scalar_lea.vmem %s2, %s248
      %s250 = smul.u32 128, %s19
      %p251 = scmp.lt.s32.totalorder %s250, 255
      %s252 = scalar_select %p251, %s250, 255
      %p253 = scmp.lt.s32.totalorder %s20, 0
      %s254 = scalar_select %p253, %s20, 0
      %s255 = sadd.s32 %s254, %s252
      %s256 = smul.addr %s255, 4
      %s257 = scalar_lea.vmem %s3, %s256
      %s258 = smul.u32 128, %s19
      %p259 = scmp.eq.s32.totalorder %s21, 0
      // Predicated region
      $region33: #{discriminator_forward.8} parent=31 // pred_check
        %p260 = pneg %p259
      $region34: #{discriminator_forward.8} parent=31 // pred_check_branch
        %262 = sbr.rel (%p260) target = $region36
      $region35: #{discriminator_forward.8} parent=31 // pred_region
        %263 = vst [vmem:[#allocation2] sm:$0xff] 0.0
        %264 = vst [vmem:[#allocation2 + $0x8] sm:$0xff] 0.0
        %265 = vst [vmem:[#allocation2 + $0x10] sm:$0xff] 0.0
        %266 = vst [vmem:[#allocation2 + $0x18] sm:$0xff] 0.0
        %267 = vst [vmem:[#allocation2 + $0x20] sm:$0xff] 0.0
        %268 = vst [vmem:[#allocation2 + $0x28] sm:$0xff] 0.0
        %269 = vst [vmem:[#allocation2 + $0x30] sm:$0xff] 0.0
        %270 = vst [vmem:[#allocation2 + $0x38] sm:$0xff] 0.0
        %271 = vst [vmem:[#allocation2 + $0x40] sm:$0xff] 0.0
        %272 = vst [vmem:[#allocation2 + $0x48] sm:$0xff] 0.0
        %273 = vst [vmem:[#allocation2 + $0x50] sm:$0xff] 0.0
        %274 = vst [vmem:[#allocation2 + $0x58] sm:$0xff] 0.0
        %275 = vst [vmem:[#allocation2 + $0x60] sm:$0xff] 0.0
        %276 = vst [vmem:[#allocation2 + $0x68] sm:$0xff] 0.0
        %277 = vst [vmem:[#allocation2 + $0x70] sm:$0xff] 0.0
        %278 = vst [vmem:[#allocation2 + $0x78] sm:$0xff] 0.0
        %279 = vst [vmem:[#allocation2 + $0x80] sm:$0xff] 0.0
        %280 = vst [vmem:[#allocation2 + $0x88] sm:$0xff] 0.0
        %281 = vst [vmem:[#allocation2 + $0x90] sm:$0xff] 0.0
        %282 = vst [vmem:[#allocation2 + $0x98] sm:$0xff] 0.0
        %283 = vst [vmem:[#allocation2 + $0xa0] sm:$0xff] 0.0
        %284 = vst [vmem:[#allocation2 + $0xa8] sm:$0xff] 0.0
        %285 = vst [vmem:[#allocation2 + $0xb0] sm:$0xff] 0.0
        %286 = vst [vmem:[#allocation2 + $0xb8] sm:$0xff] 0.0
        %287 = vst [vmem:[#allocation2 + $0xc0] sm:$0xff] 0.0
        %288 = vst [vmem:[#allocation2 + $0xc8] sm:$0xff] 0.0
        %289 = vst [vmem:[#allocation2 + $0xd0] sm:$0xff] 0.0
        %290 = vst [vmem:[#allocation2 + $0xd8] sm:$0xff] 0.0
        %291 = vst [vmem:[#allocation2 + $0xe0] sm:$0xff] 0.0
        %292 = vst [vmem:[#allocation2 + $0xe8] sm:$0xff] 0.0
        %293 = vst [vmem:[#allocation2 + $0xf0] sm:$0xff] 0.0
        %294 = vst [vmem:[#allocation2 + $0xf8] sm:$0xff] 0.0
        %295 = vst [vmem:[#allocation2 + $0x100] sm:$0xff] 0.0
        %296 = vst [vmem:[#allocation2 + $0x108] sm:$0xff] 0.0
        %297 = vst [vmem:[#allocation2 + $0x110] sm:$0xff] 0.0
        %298 = vst [vmem:[#allocation2 + $0x118] sm:$0xff] 0.0
        %299 = vst [vmem:[#allocation2 + $0x120] sm:$0xff] 0.0
        %300 = vst [vmem:[#allocation2 + $0x128] sm:$0xff] 0.0
        %301 = vst [vmem:[#allocation2 + $0x130] sm:$0xff] 0.0
        %302 = vst [vmem:[#allocation2 + $0x138] sm:$0xff] 0.0
        %303 = vst [vmem:[#allocation2 + $0x140] sm:$0xff] 0.0
        %304 = vst [vmem:[#allocation2 + $0x148] sm:$0xff] 0.0
        %305 = vst [vmem:[#allocation2 + $0x150] sm:$0xff] 0.0
        %306 = vst [vmem:[#allocation2 + $0x158] sm:$0xff] 0.0
        %307 = vst [vmem:[#allocation2 + $0x160] sm:$0xff] 0.0
        %308 = vst [vmem:[#allocation2 + $0x168] sm:$0xff] 0.0
        %309 = vst [vmem:[#allocation2 + $0x170] sm:$0xff] 0.0
        %310 = vst [vmem:[#allocation2 + $0x178] sm:$0xff] 0.0
        %311 = vst [vmem:[#allocation2 + $0x180] sm:$0xff] 0.0
        %312 = vst [vmem:[#allocation2 + $0x188] sm:$0xff] 0.0
        %313 = vst [vmem:[#allocation2 + $0x190] sm:$0xff] 0.0
        %314 = vst [vmem:[#allocation2 + $0x198] sm:$0xff] 0.0
        %315 = vst [vmem:[#allocation2 + $0x1a0] sm:$0xff] 0.0
        %316 = vst [vmem:[#allocation2 + $0x1a8] sm:$0xff] 0.0
        %317 = vst [vmem:[#allocation2 + $0x1b0] sm:$0xff] 0.0
        %318 = vst [vmem:[#allocation2 + $0x1b8] sm:$0xff] 0.0
        %319 = vst [vmem:[#allocation2 + $0x1c0] sm:$0xff] 0.0
        %320 = vst [vmem:[#allocation2 + $0x1c8] sm:$0xff] 0.0
        %321 = vst [vmem:[#allocation2 + $0x1d0] sm:$0xff] 0.0
        %322 = vst [vmem:[#allocation2 + $0x1d8] sm:$0xff] 0.0
        %323 = vst [vmem:[#allocation2 + $0x1e0] sm:$0xff] 0.0
        %324 = vst [vmem:[#allocation2 + $0x1e8] sm:$0xff] 0.0
        %325 = vst [vmem:[#allocation2 + $0x1f0] sm:$0xff] 0.0
        %326 = vst [vmem:[#allocation2 + $0x1f8] sm:$0xff] 0.0
        %327 = vst [vmem:[#allocation2 + $0x200] sm:$0xff] 0.0
        %328 = vst [vmem:[#allocation2 + $0x208] sm:$0xff] 0.0
        %329 = vst [vmem:[#allocation2 + $0x210] sm:$0xff] 0.0
        %330 = vst [vmem:[#allocation2 + $0x218] sm:$0xff] 0.0
        %331 = vst [vmem:[#allocation2 + $0x220] sm:$0xff] 0.0
        %332 = vst [vmem:[#allocation2 + $0x228] sm:$0xff] 0.0
        %333 = vst [vmem:[#allocation2 + $0x230] sm:$0xff] 0.0
        %334 = vst [vmem:[#allocation2 + $0x238] sm:$0xff] 0.0
        %335 = vst [vmem:[#allocation2 + $0x240] sm:$0xff] 0.0
        %336 = vst [vmem:[#allocation2 + $0x248] sm:$0xff] 0.0
        %337 = vst [vmem:[#allocation2 + $0x250] sm:$0xff] 0.0
        %338 = vst [vmem:[#allocation2 + $0x258] sm:$0xff] 0.0
        %339 = vst [vmem:[#allocation2 + $0x260] sm:$0xff] 0.0
        %340 = vst [vmem:[#allocation2 + $0x268] sm:$0xff] 0.0
        %341 = vst [vmem:[#allocation2 + $0x270] sm:$0xff] 0.0
        %342 = vst [vmem:[#allocation2 + $0x278] sm:$0xff] 0.0
        %343 = vst [vmem:[#allocation2 + $0x280] sm:$0xff] 0.0
        %344 = vst [vmem:[#allocation2 + $0x288] sm:$0xff] 0.0
        %345 = vst [vmem:[#allocation2 + $0x290] sm:$0xff] 0.0
        %346 = vst [vmem:[#allocation2 + $0x298] sm:$0xff] 0.0
        %347 = vst [vmem:[#allocation2 + $0x2a0] sm:$0xff] 0.0
        %348 = vst [vmem:[#allocation2 + $0x2a8] sm:$0xff] 0.0
        %349 = vst [vmem:[#allocation2 + $0x2b0] sm:$0xff] 0.0
        %350 = vst [vmem:[#allocation2 + $0x2b8] sm:$0xff] 0.0
        %351 = vst [vmem:[#allocation2 + $0x2c0] sm:$0xff] 0.0
        %352 = vst [vmem:[#allocation2 + $0x2c8] sm:$0xff] 0.0
        %353 = vst [vmem:[#allocation2 + $0x2d0] sm:$0xff] 0.0
        %354 = vst [vmem:[#allocation2 + $0x2d8] sm:$0xff] 0.0
        %355 = vst [vmem:[#allocation2 + $0x2e0] sm:$0xff] 0.0
        %356 = vst [vmem:[#allocation2 + $0x2e8] sm:$0xff] 0.0
        %357 = vst [vmem:[#allocation2 + $0x2f0] sm:$0xff] 0.0
        %358 = vst [vmem:[#allocation2 + $0x2f8] sm:$0xff] 0.0
        %359 = vst [vmem:[#allocation2 + $0x300] sm:$0xff] 0.0
        %360 = vst [vmem:[#allocation2 + $0x308] sm:$0xff] 0.0
        %361 = vst [vmem:[#allocation2 + $0x310] sm:$0xff] 0.0
        %362 = vst [vmem:[#allocation2 + $0x318] sm:$0xff] 0.0
        %363 = vst [vmem:[#allocation2 + $0x320] sm:$0xff] 0.0
        %364 = vst [vmem:[#allocation2 + $0x328] sm:$0xff] 0.0
        %365 = vst [vmem:[#allocation2 + $0x330] sm:$0xff] 0.0
        %366 = vst [vmem:[#allocation2 + $0x338] sm:$0xff] 0.0
        %367 = vst [vmem:[#allocation2 + $0x340] sm:$0xff] 0.0
        %368 = vst [vmem:[#allocation2 + $0x348] sm:$0xff] 0.0
        %369 = vst [vmem:[#allocation2 + $0x350] sm:$0xff] 0.0
        %370 = vst [vmem:[#allocation2 + $0x358] sm:$0xff] 0.0
        %371 = vst [vmem:[#allocation2 + $0x360] sm:$0xff] 0.0
        %372 = vst [vmem:[#allocation2 + $0x368] sm:$0xff] 0.0
        %373 = vst [vmem:[#allocation2 + $0x370] sm:$0xff] 0.0
        %374 = vst [vmem:[#allocation2 + $0x378] sm:$0xff] 0.0
        %375 = vst [vmem:[#allocation2 + $0x380] sm:$0xff] 0.0
        %376 = vst [vmem:[#allocation2 + $0x388] sm:$0xff] 0.0
        %377 = vst [vmem:[#allocation2 + $0x390] sm:$0xff] 0.0
        %378 = vst [vmem:[#allocation2 + $0x398] sm:$0xff] 0.0
        %379 = vst [vmem:[#allocation2 + $0x3a0] sm:$0xff] 0.0
        %380 = vst [vmem:[#allocation2 + $0x3a8] sm:$0xff] 0.0
        %381 = vst [vmem:[#allocation2 + $0x3b0] sm:$0xff] 0.0
        %382 = vst [vmem:[#allocation2 + $0x3b8] sm:$0xff] 0.0
        %383 = vst [vmem:[#allocation2 + $0x3c0] sm:$0xff] 0.0
        %384 = vst [vmem:[#allocation2 + $0x3c8] sm:$0xff] 0.0
        %385 = vst [vmem:[#allocation2 + $0x3d0] sm:$0xff] 0.0
        %386 = vst [vmem:[#allocation2 + $0x3d8] sm:$0xff] 0.0
        %387 = vst [vmem:[#allocation2 + $0x3e0] sm:$0xff] 0.0
        %388 = vst [vmem:[#allocation2 + $0x3e8] sm:$0xff] 0.0
        %389 = vst [vmem:[#allocation2 + $0x3f0] sm:$0xff] 0.0
        %390 = vst [vmem:[#allocation2 + $0x3f8] sm:$0xff] 0.0
      $region36: #{discriminator_forward.8} parent=31 // pred_fallthru
        _
      %v391 = vld [vmem:[#allocation2] sm:$0xff]
      %v392 = vld [vmem:[#allocation2 + $0x8] sm:$0xff]
      %v393 = vld [vmem:[#allocation2 + $0x10] sm:$0xff]
      %v394 = vld [vmem:[#allocation2 + $0x18] sm:$0xff]
      %v395 = vld [vmem:[#allocation2 + $0x20] sm:$0xff]
      %v396 = vld [vmem:[#allocation2 + $0x28] sm:$0xff]
      %v397 = vld [vmem:[#allocation2 + $0x30] sm:$0xff]
      %v398 = vld [vmem:[#allocation2 + $0x38] sm:$0xff]
      %v399 = vld [vmem:[#allocation2 + $0x40] sm:$0xff]
      %v400 = vld [vmem:[#allocation2 + $0x48] sm:$0xff]
      %v401 = vld [vmem:[#allocation2 + $0x50] sm:$0xff]
      %v402 = vld [vmem:[#allocation2 + $0x58] sm:$0xff]
      %v403 = vld [vmem:[#allocation2 + $0x60] sm:$0xff]
      %v404 = vld [vmem:[#allocation2 + $0x68] sm:$0xff]
      %v405 = vld [vmem:[#allocation2 + $0x70] sm:$0xff]
      %v406 = vld [vmem:[#allocation2 + $0x78] sm:$0xff]
      %v407 = vld [vmem:[#allocation2 + $0x80] sm:$0xff]
      %v408 = vld [vmem:[#allocation2 + $0x88] sm:$0xff]
      %v409 = vld [vmem:[#allocation2 + $0x90] sm:$0xff]
      %v410 = vld [vmem:[#allocation2 + $0x98] sm:$0xff]
      %v411 = vld [vmem:[#allocation2 + $0xa0] sm:$0xff]
      %v412 = vld [vmem:[#allocation2 + $0xa8] sm:$0xff]
      %v413 = vld [vmem:[#allocation2 + $0xb0] sm:$0xff]
      %v414 = vld [vmem:[#allocation2 + $0xb8] sm:$0xff]
      %v415 = vld [vmem:[#allocation2 + $0xc0] sm:$0xff]
      %v416 = vld [vmem:[#allocation2 + $0xc8] sm:$0xff]
      %v417 = vld [vmem:[#allocation2 + $0xd0] sm:$0xff]
      %v418 = vld [vmem:[#allocation2 + $0xd8] sm:$0xff]
      %v419 = vld [vmem:[#allocation2 + $0xe0] sm:$0xff]
      %v420 = vld [vmem:[#allocation2 + $0xe8] sm:$0xff]
      %v421 = vld [vmem:[#allocation2 + $0xf0] sm:$0xff]
      %v422 = vld [vmem:[#allocation2 + $0xf8] sm:$0xff]
      %v423 = vld [vmem:[#allocation2 + $0x100] sm:$0xff]
      %v424 = vld [vmem:[#allocation2 + $0x108] sm:$0xff]
      %v425 = vld [vmem:[#allocation2 + $0x110] sm:$0xff]
      %v426 = vld [vmem:[#allocation2 + $0x118] sm:$0xff]
      %v427 = vld [vmem:[#allocation2 + $0x120] sm:$0xff]
      %v428 = vld [vmem:[#allocation2 + $0x128] sm:$0xff]
      %v429 = vld [vmem:[#allocation2 + $0x130] sm:$0xff]
      %v430 = vld [vmem:[#allocation2 + $0x138] sm:$0xff]
      %v431 = vld [vmem:[#allocation2 + $0x140] sm:$0xff]
      %v432 = vld [vmem:[#allocation2 + $0x148] sm:$0xff]
      %v433 = vld [vmem:[#allocation2 + $0x150] sm:$0xff]
      %v434 = vld [vmem:[#allocation2 + $0x158] sm:$0xff]
      %v435 = vld [vmem:[#allocation2 + $0x160] sm:$0xff]
      %v436 = vld [vmem:[#allocation2 + $0x168] sm:$0xff]
      %v437 = vld [vmem:[#allocation2 + $0x170] sm:$0xff]
      %v438 = vld [vmem:[#allocation2 + $0x178] sm:$0xff]
      %v439 = vld [vmem:[#allocation2 + $0x180] sm:$0xff]
      %v440 = vld [vmem:[#allocation2 + $0x188] sm:$0xff]
      %v441 = vld [vmem:[#allocation2 + $0x190] sm:$0xff]
      %v442 = vld [vmem:[#allocation2 + $0x198] sm:$0xff]
      %v443 = vld [vmem:[#allocation2 + $0x1a0] sm:$0xff]
      %v444 = vld [vmem:[#allocation2 + $0x1a8] sm:$0xff]
      %v445 = vld [vmem:[#allocation2 + $0x1b0] sm:$0xff]
      %v446 = vld [vmem:[#allocation2 + $0x1b8] sm:$0xff]
      %v447 = vld [vmem:[#allocation2 + $0x1c0] sm:$0xff]
      %v448 = vld [vmem:[#allocation2 + $0x1c8] sm:$0xff]
      %v449 = vld [vmem:[#allocation2 + $0x1d0] sm:$0xff]
      %v450 = vld [vmem:[#allocation2 + $0x1d8] sm:$0xff]
      %v451 = vld [vmem:[#allocation2 + $0x1e0] sm:$0xff]
      %v452 = vld [vmem:[#allocation2 + $0x1e8] sm:$0xff]
      %v453 = vld [vmem:[#allocation2 + $0x1f0] sm:$0xff]
      %v454 = vld [vmem:[#allocation2 + $0x1f8] sm:$0xff]
      %v455 = vld [vmem:[#allocation2 + $0x200] sm:$0xff]
      %v456 = vld [vmem:[#allocation2 + $0x208] sm:$0xff]
      %v457 = vld [vmem:[#allocation2 + $0x210] sm:$0xff]
      %v458 = vld [vmem:[#allocation2 + $0x218] sm:$0xff]
      %v459 = vld [vmem:[#allocation2 + $0x220] sm:$0xff]
      %v460 = vld [vmem:[#allocation2 + $0x228] sm:$0xff]
      %v461 = vld [vmem:[#allocation2 + $0x230] sm:$0xff]
      %v462 = vld [vmem:[#allocation2 + $0x238] sm:$0xff]
      %v463 = vld [vmem:[#allocation2 + $0x240] sm:$0xff]
      %v464 = vld [vmem:[#allocation2 + $0x248] sm:$0xff]
      %v465 = vld [vmem:[#allocation2 + $0x250] sm:$0xff]
      %v466 = vld [vmem:[#allocation2 + $0x258] sm:$0xff]
      %v467 = vld [vmem:[#allocation2 + $0x260] sm:$0xff]
      %v468 = vld [vmem:[#allocation2 + $0x268] sm:$0xff]
      %v469 = vld [vmem:[#allocation2 + $0x270] sm:$0xff]
      %v470 = vld [vmem:[#allocation2 + $0x278] sm:$0xff]
      %v471 = vld [vmem:[#allocation2 + $0x280] sm:$0xff]
      %v472 = vld [vmem:[#allocation2 + $0x288] sm:$0xff]
      %v473 = vld [vmem:[#allocation2 + $0x290] sm:$0xff]
      %v474 = vld [vmem:[#allocation2 + $0x298] sm:$0xff]
      %v475 = vld [vmem:[#allocation2 + $0x2a0] sm:$0xff]
      %v476 = vld [vmem:[#allocation2 + $0x2a8] sm:$0xff]
      %v477 = vld [vmem:[#allocation2 + $0x2b0] sm:$0xff]
      %v478 = vld [vmem:[#allocation2 + $0x2b8] sm:$0xff]
      %v479 = vld [vmem:[#allocation2 + $0x2c0] sm:$0xff]
      %v480 = vld [vmem:[#allocation2 + $0x2c8] sm:$0xff]
      %v481 = vld [vmem:[#allocation2 + $0x2d0] sm:$0xff]
      %v482 = vld [vmem:[#allocation2 + $0x2d8] sm:$0xff]
      %v483 = vld [vmem:[#allocation2 + $0x2e0] sm:$0xff]
      %v484 = vld [vmem:[#allocation2 + $0x2e8] sm:$0xff]
      %v485 = vld [vmem:[#allocation2 + $0x2f0] sm:$0xff]
      %v486 = vld [vmem:[#allocation2 + $0x2f8] sm:$0xff]
      %v487 = vld [vmem:[#allocation2 + $0x300] sm:$0xff]
      %v488 = vld [vmem:[#allocation2 + $0x308] sm:$0xff]
      %v489 = vld [vmem:[#allocation2 + $0x310] sm:$0xff]
      %v490 = vld [vmem:[#allocation2 + $0x318] sm:$0xff]
      %v491 = vld [vmem:[#allocation2 + $0x320] sm:$0xff]
      %v492 = vld [vmem:[#allocation2 + $0x328] sm:$0xff]
      %v493 = vld [vmem:[#allocation2 + $0x330] sm:$0xff]
      %v494 = vld [vmem:[#allocation2 + $0x338] sm:$0xff]
      %v495 = vld [vmem:[#allocation2 + $0x340] sm:$0xff]
      %v496 = vld [vmem:[#allocation2 + $0x348] sm:$0xff]
      %v497 = vld [vmem:[#allocation2 + $0x350] sm:$0xff]
      %v498 = vld [vmem:[#allocation2 + $0x358] sm:$0xff]
      %v499 = vld [vmem:[#allocation2 + $0x360] sm:$0xff]
      %v500 = vld [vmem:[#allocation2 + $0x368] sm:$0xff]
      %v501 = vld [vmem:[#allocation2 + $0x370] sm:$0xff]
      %v502 = vld [vmem:[#allocation2 + $0x378] sm:$0xff]
      %v503 = vld [vmem:[#allocation2 + $0x380] sm:$0xff]
      %v504 = vld [vmem:[#allocation2 + $0x388] sm:$0xff]
      %v505 = vld [vmem:[#allocation2 + $0x390] sm:$0xff]
      %v506 = vld [vmem:[#allocation2 + $0x398] sm:$0xff]
      %v507 = vld [vmem:[#allocation2 + $0x3a0] sm:$0xff]
      %v508 = vld [vmem:[#allocation2 + $0x3a8] sm:$0xff]
      %v509 = vld [vmem:[#allocation2 + $0x3b0] sm:$0xff]
      %v510 = vld [vmem:[#allocation2 + $0x3b8] sm:$0xff]
      %v511 = vld [vmem:[#allocation2 + $0x3c0] sm:$0xff]
      %v512 = vld [vmem:[#allocation2 + $0x3c8] sm:$0xff]
      %v513 = vld [vmem:[#allocation2 + $0x3d0] sm:$0xff]
      %v514 = vld [vmem:[#allocation2 + $0x3d8] sm:$0xff]
      %v515 = vld [vmem:[#allocation2 + $0x3e0] sm:$0xff]
      %v516 = vld [vmem:[#allocation2 + $0x3e8] sm:$0xff]
      %v517 = vld [vmem:[#allocation2 + $0x3f0] sm:$0xff]
      %v518 = vld [vmem:[#allocation2 + $0x3f8] sm:$0xff]
      %v519 = vld [vmem:[%s236] sm:$0xf]
      %v520 = vld [vmem:[%s236 + $0x4] sm:$0xf]
      %v521 = vld [vmem:[%s236 + $0x8] sm:$0xf]
      %v522 = vld [vmem:[%s236 + $0xc] sm:$0xf]
      %v523 = vld [vmem:[%s236 + $0x10] sm:$0xf]
      %v524 = vld [vmem:[%s236 + $0x14] sm:$0xf]
      %v525 = vld [vmem:[%s236 + $0x18] sm:$0xf]
      %v526 = vld [vmem:[%s236 + $0x1c] sm:$0xf]
      %v527 = vld [vmem:[%s236 + $0x20] sm:$0xf]
      %v528 = vld [vmem:[%s236 + $0x24] sm:$0xf]
      %v529 = vld [vmem:[%s236 + $0x28] sm:$0xf]
      %v530 = vld [vmem:[%s236 + $0x2c] sm:$0xf]
      %v531 = vld [vmem:[%s236 + $0x30] sm:$0xf]
      %v532 = vld [vmem:[%s236 + $0x34] sm:$0xf]
      %v533 = vld [vmem:[%s236 + $0x38] sm:$0xf]
      %v534 = vld [vmem:[%s236 + $0x3c] sm:$0xf]
      %v535 = vld [vmem:[%s236 + $0x40] sm:$0xf]
      %v536 = vld [vmem:[%s236 + $0x44] sm:$0xf]
      %v537 = vld [vmem:[%s236 + $0x48] sm:$0xf]
      %v538 = vld [vmem:[%s236 + $0x4c] sm:$0xf]
      %v539 = vld [vmem:[%s236 + $0x50] sm:$0xf]
      %v540 = vld [vmem:[%s236 + $0x54] sm:$0xf]
      %v541 = vld [vmem:[%s236 + $0x58] sm:$0xf]
      %v542 = vld [vmem:[%s236 + $0x5c] sm:$0xf]
      %v543 = vld [vmem:[%s236 + $0x60] sm:$0xf]
      %v544 = vld [vmem:[%s236 + $0x64] sm:$0xf]
      %v545 = vld [vmem:[%s236 + $0x68] sm:$0xf]
      %v546 = vld [vmem:[%s236 + $0x6c] sm:$0xf]
      %v547 = vld [vmem:[%s236 + $0x70] sm:$0xf]
      %v548 = vld [vmem:[%s236 + $0x74] sm:$0xf]
      %v549 = vld [vmem:[%s236 + $0x78] sm:$0xf]
      %v550 = vld [vmem:[%s236 + $0x7c] sm:$0xf]
      %v551 = vld [vmem:[%s236 + $0x80] sm:$0xf]
      %v552 = vld [vmem:[%s236 + $0x84] sm:$0xf]
      %v553 = vld [vmem:[%s236 + $0x88] sm:$0xf]
      %v554 = vld [vmem:[%s236 + $0x8c] sm:$0xf]
      %v555 = vld [vmem:[%s236 + $0x90] sm:$0xf]
      %v556 = vld [vmem:[%s236 + $0x94] sm:$0xf]
      %v557 = vld [vmem:[%s236 + $0x98] sm:$0xf]
      %v558 = vld [vmem:[%s236 + $0x9c] sm:$0xf]
      %v559 = vld [vmem:[%s236 + $0xa0] sm:$0xf]
      %v560 = vld [vmem:[%s236 + $0xa4] sm:$0xf]
      %v561 = vld [vmem:[%s236 + $0xa8] sm:$0xf]
      %v562 = vld [vmem:[%s236 + $0xac] sm:$0xf]
      %v563 = vld [vmem:[%s236 + $0xb0] sm:$0xf]
      %v564 = vld [vmem:[%s236 + $0xb4] sm:$0xf]
      %v565 = vld [vmem:[%s236 + $0xb8] sm:$0xf]
      %v566 = vld [vmem:[%s236 + $0xbc] sm:$0xf]
      %v567 = vld [vmem:[%s236 + $0xc0] sm:$0xf]
      %v568 = vld [vmem:[%s236 + $0xc4] sm:$0xf]
      %v569 = vld [vmem:[%s236 + $0xc8] sm:$0xf]
      %v570 = vld [vmem:[%s236 + $0xcc] sm:$0xf]
      %v571 = vld [vmem:[%s236 + $0xd0] sm:$0xf]
      %v572 = vld [vmem:[%s236 + $0xd4] sm:$0xf]
      %v573 = vld [vmem:[%s236 + $0xd8] sm:$0xf]
      %v574 = vld [vmem:[%s236 + $0xdc] sm:$0xf]
      %v575 = vld [vmem:[%s236 + $0xe0] sm:$0xf]
      %v576 = vld [vmem:[%s236 + $0xe4] sm:$0xf]
      %v577 = vld [vmem:[%s236 + $0xe8] sm:$0xf]
      %v578 = vld [vmem:[%s236 + $0xec] sm:$0xf]
      %v579 = vld [vmem:[%s236 + $0xf0] sm:$0xf]
      %v580 = vld [vmem:[%s236 + $0xf4] sm:$0xf]
      %v581 = vld [vmem:[%s236 + $0xf8] sm:$0xf]
      %v582 = vld [vmem:[%s236 + $0xfc] sm:$0xf]
      %v583 = vld [vmem:[%s236 + $0x100] sm:$0xf]
      %v584 = vld [vmem:[%s236 + $0x104] sm:$0xf]
      %v585 = vld [vmem:[%s236 + $0x108] sm:$0xf]
      %v586 = vld [vmem:[%s236 + $0x10c] sm:$0xf]
      %v587 = vld [vmem:[%s236 + $0x110] sm:$0xf]
      %v588 = vld [vmem:[%s236 + $0x114] sm:$0xf]
      %v589 = vld [vmem:[%s236 + $0x118] sm:$0xf]
      %v590 = vld [vmem:[%s236 + $0x11c] sm:$0xf]
      %v591 = vld [vmem:[%s236 + $0x120] sm:$0xf]
      %v592 = vld [vmem:[%s236 + $0x124] sm:$0xf]
      %v593 = vld [vmem:[%s236 + $0x128] sm:$0xf]
      %v594 = vld [vmem:[%s236 + $0x12c] sm:$0xf]
      %v595 = vld [vmem:[%s236 + $0x130] sm:$0xf]
      %v596 = vld [vmem:[%s236 + $0x134] sm:$0xf]
      %v597 = vld [vmem:[%s236 + $0x138] sm:$0xf]
      %v598 = vld [vmem:[%s236 + $0x13c] sm:$0xf]
      %v599 = vld [vmem:[%s236 + $0x140] sm:$0xf]
      %v600 = vld [vmem:[%s236 + $0x144] sm:$0xf]
      %v601 = vld [vmem:[%s236 + $0x148] sm:$0xf]
      %v602 = vld [vmem:[%s236 + $0x14c] sm:$0xf]
      %v603 = vld [vmem:[%s236 + $0x150] sm:$0xf]
      %v604 = vld [vmem:[%s236 + $0x154] sm:$0xf]
      %v605 = vld [vmem:[%s236 + $0x158] sm:$0xf]
      %v606 = vld [vmem:[%s236 + $0x15c] sm:$0xf]
      %v607 = vld [vmem:[%s236 + $0x160] sm:$0xf]
      %v608 = vld [vmem:[%s236 + $0x164] sm:$0xf]
      %v609 = vld [vmem:[%s236 + $0x168] sm:$0xf]
      %v610 = vld [vmem:[%s236 + $0x16c] sm:$0xf]
      %v611 = vld [vmem:[%s236 + $0x170] sm:$0xf]
      %v612 = vld [vmem:[%s236 + $0x174] sm:$0xf]
      %v613 = vld [vmem:[%s236 + $0x178] sm:$0xf]
      %v614 = vld [vmem:[%s236 + $0x17c] sm:$0xf]
      %v615 = vld [vmem:[%s236 + $0x180] sm:$0xf]
      %v616 = vld [vmem:[%s236 + $0x184] sm:$0xf]
      %v617 = vld [vmem:[%s236 + $0x188] sm:$0xf]
      %v618 = vld [vmem:[%s236 + $0x18c] sm:$0xf]
      %v619 = vld [vmem:[%s236 + $0x190] sm:$0xf]
      %v620 = vld [vmem:[%s236 + $0x194] sm:$0xf]
      %v621 = vld [vmem:[%s236 + $0x198] sm:$0xf]
      %v622 = vld [vmem:[%s236 + $0x19c] sm:$0xf]
      %v623 = vld [vmem:[%s236 + $0x1a0] sm:$0xf]
      %v624 = vld [vmem:[%s236 + $0x1a4] sm:$0xf]
      %v625 = vld [vmem:[%s236 + $0x1a8] sm:$0xf]
      %v626 = vld [vmem:[%s236 + $0x1ac] sm:$0xf]
      %v627 = vld [vmem:[%s236 + $0x1b0] sm:$0xf]
      %v628 = vld [vmem:[%s236 + $0x1b4] sm:$0xf]
      %v629 = vld [vmem:[%s236 + $0x1b8] sm:$0xf]
      %v630 = vld [vmem:[%s236 + $0x1bc] sm:$0xf]
      %v631 = vld [vmem:[%s236 + $0x1c0] sm:$0xf]
      %v632 = vld [vmem:[%s236 + $0x1c4] sm:$0xf]
      %v633 = vld [vmem:[%s236 + $0x1c8] sm:$0xf]
      %v634 = vld [vmem:[%s236 + $0x1cc] sm:$0xf]
      %v635 = vld [vmem:[%s236 + $0x1d0] sm:$0xf]
      %v636 = vld [vmem:[%s236 + $0x1d4] sm:$0xf]
      %v637 = vld [vmem:[%s236 + $0x1d8] sm:$0xf]
      %v638 = vld [vmem:[%s236 + $0x1dc] sm:$0xf]
      %v639 = vld [vmem:[%s236 + $0x1e0] sm:$0xf]
      %v640 = vld [vmem:[%s236 + $0x1e4] sm:$0xf]
      %v641 = vld [vmem:[%s236 + $0x1e8] sm:$0xf]
      %v642 = vld [vmem:[%s236 + $0x1ec] sm:$0xf]
      %v643 = vld [vmem:[%s236 + $0x1f0] sm:$0xf]
      %v644 = vld [vmem:[%s236 + $0x1f4] sm:$0xf]
      %v645 = vld [vmem:[%s236 + $0x1f8] sm:$0xf]
      %v646 = vld [vmem:[%s236 + $0x1fc] sm:$0xf]
      %v647 = vld [vmem:[%s245] sm:$0xf]
      %v648 = vld [vmem:[%s245 + $0x4] sm:$0xf]
      %v649 = vld [vmem:[%s245 + $0x8] sm:$0xf]
      %v650 = vld [vmem:[%s245 + $0xc] sm:$0xf]
      %v651 = vld [vmem:[%s245 + $0x10] sm:$0xf]
      %v652 = vld [vmem:[%s245 + $0x14] sm:$0xf]
      %v653 = vld [vmem:[%s245 + $0x18] sm:$0xf]
      %v654 = vld [vmem:[%s245 + $0x1c] sm:$0xf]
      %v655 = vld [vmem:[%s245 + $0x20] sm:$0xf]
      %v656 = vld [vmem:[%s245 + $0x24] sm:$0xf]
      %v657 = vld [vmem:[%s245 + $0x28] sm:$0xf]
      %v658 = vld [vmem:[%s245 + $0x2c] sm:$0xf]
      %v659 = vld [vmem:[%s245 + $0x30] sm:$0xf]
      %v660 = vld [vmem:[%s245 + $0x34] sm:$0xf]
      %v661 = vld [vmem:[%s245 + $0x38] sm:$0xf]
      %v662 = vld [vmem:[%s245 + $0x3c] sm:$0xf]
      %v791 = vunpack.c.l.b16 %v519
      %v792 = vunpack.c.l.b16 %v520
      %v793 = vunpack.c.l.b16 %v521
      %v794 = vunpack.c.l.b16 %v522
      %v795 = vunpack.c.l.b16 %v523
      %v796 = vunpack.c.l.b16 %v524
      %v797 = vunpack.c.l.b16 %v525
      %v798 = vunpack.c.l.b16 %v526
      %v799 = vunpack.c.l.b16 %v527
      %v800 = vunpack.c.l.b16 %v528
      %v801 = vunpack.c.l.b16 %v529
      %v802 = vunpack.c.l.b16 %v530
      %v803 = vunpack.c.l.b16 %v531
      %v804 = vunpack.c.l.b16 %v532
      %v805 = vunpack.c.l.b16 %v533
      %v806 = vunpack.c.l.b16 %v534
      %v807 = vunpack.c.l.b16 %v535
      %v808 = vunpack.c.l.b16 %v536
      %v809 = vunpack.c.l.b16 %v537
      %v810 = vunpack.c.l.b16 %v538
      %v811 = vunpack.c.l.b16 %v539
      %v812 = vunpack.c.l.b16 %v540
      %v813 = vunpack.c.l.b16 %v541
      %v814 = vunpack.c.l.b16 %v542
      %v815 = vunpack.c.l.b16 %v543
      %v816 = vunpack.c.l.b16 %v544
      %v817 = vunpack.c.l.b16 %v545
      %v818 = vunpack.c.l.b16 %v546
      %v819 = vunpack.c.l.b16 %v547
      %v820 = vunpack.c.l.b16 %v548
      %v821 = vunpack.c.l.b16 %v549
      %v822 = vunpack.c.l.b16 %v550
      %v823 = vunpack.c.l.b16 %v551
      %v824 = vunpack.c.l.b16 %v552
      %v825 = vunpack.c.l.b16 %v553
      %v826 = vunpack.c.l.b16 %v554
      %v827 = vunpack.c.l.b16 %v555
      %v828 = vunpack.c.l.b16 %v556
      %v829 = vunpack.c.l.b16 %v557
      %v830 = vunpack.c.l.b16 %v558
      %v831 = vunpack.c.l.b16 %v559
      %v832 = vunpack.c.l.b16 %v560
      %v833 = vunpack.c.l.b16 %v561
      %v834 = vunpack.c.l.b16 %v562
      %v835 = vunpack.c.l.b16 %v563
      %v836 = vunpack.c.l.b16 %v564
      %v837 = vunpack.c.l.b16 %v565
      %v838 = vunpack.c.l.b16 %v566
      %v839 = vunpack.c.l.b16 %v567
      %v840 = vunpack.c.l.b16 %v568
      %v841 = vunpack.c.l.b16 %v569
      %v842 = vunpack.c.l.b16 %v570
      %v843 = vunpack.c.l.b16 %v571
      %v844 = vunpack.c.l.b16 %v572
      %v845 = vunpack.c.l.b16 %v573
      %v846 = vunpack.c.l.b16 %v574
      %v847 = vunpack.c.l.b16 %v575
      %v848 = vunpack.c.l.b16 %v576
      %v849 = vunpack.c.l.b16 %v577
      %v850 = vunpack.c.l.b16 %v578
      %v851 = vunpack.c.l.b16 %v579
      %v852 = vunpack.c.l.b16 %v580
      %v853 = vunpack.c.l.b16 %v581
      %v854 = vunpack.c.l.b16 %v582
      %v855 = vunpack.c.l.b16 %v583
      %v856 = vunpack.c.l.b16 %v584
      %v857 = vunpack.c.l.b16 %v585
      %v858 = vunpack.c.l.b16 %v586
      %v859 = vunpack.c.l.b16 %v587
      %v860 = vunpack.c.l.b16 %v588
      %v861 = vunpack.c.l.b16 %v589
      %v862 = vunpack.c.l.b16 %v590
      %v863 = vunpack.c.l.b16 %v591
      %v864 = vunpack.c.l.b16 %v592
      %v865 = vunpack.c.l.b16 %v593
      %v866 = vunpack.c.l.b16 %v594
      %v867 = vunpack.c.l.b16 %v595
      %v868 = vunpack.c.l.b16 %v596
      %v869 = vunpack.c.l.b16 %v597
      %v870 = vunpack.c.l.b16 %v598
      %v871 = vunpack.c.l.b16 %v599
      %v872 = vunpack.c.l.b16 %v600
      %v873 = vunpack.c.l.b16 %v601
      %v874 = vunpack.c.l.b16 %v602
      %v875 = vunpack.c.l.b16 %v603
      %v876 = vunpack.c.l.b16 %v604
      %v877 = vunpack.c.l.b16 %v605
      %v878 = vunpack.c.l.b16 %v606
      %v879 = vunpack.c.l.b16 %v607
      %v880 = vunpack.c.l.b16 %v608
      %v881 = vunpack.c.l.b16 %v609
      %v882 = vunpack.c.l.b16 %v610
      %v883 = vunpack.c.l.b16 %v611
      %v884 = vunpack.c.l.b16 %v612
      %v885 = vunpack.c.l.b16 %v613
      %v886 = vunpack.c.l.b16 %v614
      %v887 = vunpack.c.l.b16 %v615
      %v888 = vunpack.c.l.b16 %v616
      %v889 = vunpack.c.l.b16 %v617
      %v890 = vunpack.c.l.b16 %v618
      %v891 = vunpack.c.l.b16 %v619
      %v892 = vunpack.c.l.b16 %v620
      %v893 = vunpack.c.l.b16 %v621
      %v894 = vunpack.c.l.b16 %v622
      %v895 = vunpack.c.l.b16 %v623
      %v896 = vunpack.c.l.b16 %v624
      %v897 = vunpack.c.l.b16 %v625
      %v898 = vunpack.c.l.b16 %v626
      %v899 = vunpack.c.l.b16 %v627
      %v900 = vunpack.c.l.b16 %v628
      %v901 = vunpack.c.l.b16 %v629
      %v902 = vunpack.c.l.b16 %v630
      %v903 = vunpack.c.l.b16 %v631
      %v904 = vunpack.c.l.b16 %v632
      %v905 = vunpack.c.l.b16 %v633
      %v906 = vunpack.c.l.b16 %v634
      %v907 = vunpack.c.l.b16 %v635
      %v908 = vunpack.c.l.b16 %v636
      %v909 = vunpack.c.l.b16 %v637
      %v910 = vunpack.c.l.b16 %v638
      %v911 = vunpack.c.l.b16 %v639
      %v912 = vunpack.c.l.b16 %v640
      %v913 = vunpack.c.l.b16 %v641
      %v914 = vunpack.c.l.b16 %v642
      %v915 = vunpack.c.l.b16 %v643
      %v916 = vunpack.c.l.b16 %v644
      %v917 = vunpack.c.l.b16 %v645
      %v918 = vunpack.c.l.b16 %v646
      %v919 = vpack.c.b16 %v792, %v791
      %v920 = vpack.c.b16 %v794, %v793
      %v921 = vpack.c.b16 %v796, %v795
      %v922 = vpack.c.b16 %v798, %v797
      %v923 = vpack.c.b16 %v800, %v799
      %v924 = vpack.c.b16 %v802, %v801
      %v925 = vpack.c.b16 %v804, %v803
      %v926 = vpack.c.b16 %v806, %v805
      %v927 = vpack.c.b16 %v808, %v807
      %v928 = vpack.c.b16 %v810, %v809
      %v929 = vpack.c.b16 %v812, %v811
      %v930 = vpack.c.b16 %v814, %v813
      %v931 = vpack.c.b16 %v816, %v815
      %v932 = vpack.c.b16 %v818, %v817
      %v933 = vpack.c.b16 %v820, %v819
      %v934 = vpack.c.b16 %v822, %v821
      %v935 = vpack.c.b16 %v824, %v823
      %v936 = vpack.c.b16 %v826, %v825
      %v937 = vpack.c.b16 %v828, %v827
      %v938 = vpack.c.b16 %v830, %v829
      %v939 = vpack.c.b16 %v832, %v831
      %v940 = vpack.c.b16 %v834, %v833
      %v941 = vpack.c.b16 %v836, %v835
      %v942 = vpack.c.b16 %v838, %v837
      %v943 = vpack.c.b16 %v840, %v839
      %v944 = vpack.c.b16 %v842, %v841
      %v945 = vpack.c.b16 %v844, %v843
      %v946 = vpack.c.b16 %v846, %v845
      %v947 = vpack.c.b16 %v848, %v847
      %v948 = vpack.c.b16 %v850, %v849
      %v949 = vpack.c.b16 %v852, %v851
      %v950 = vpack.c.b16 %v854, %v853
      %v951 = vpack.c.b16 %v856, %v855
      %v952 = vpack.c.b16 %v858, %v857
      %v953 = vpack.c.b16 %v860, %v859
      %v954 = vpack.c.b16 %v862, %v861
      %v955 = vpack.c.b16 %v864, %v863
      %v956 = vpack.c.b16 %v866, %v865
      %v957 = vpack.c.b16 %v868, %v867
      %v958 = vpack.c.b16 %v870, %v869
      %v959 = vpack.c.b16 %v872, %v871
      %v960 = vpack.c.b16 %v874, %v873
      %v961 = vpack.c.b16 %v876, %v875
      %v962 = vpack.c.b16 %v878, %v877
      %v963 = vpack.c.b16 %v880, %v879
      %v964 = vpack.c.b16 %v882, %v881
      %v965 = vpack.c.b16 %v884, %v883
      %v966 = vpack.c.b16 %v886, %v885
      %v967 = vpack.c.b16 %v888, %v887
      %v968 = vpack.c.b16 %v890, %v889
      %v969 = vpack.c.b16 %v892, %v891
      %v970 = vpack.c.b16 %v894, %v893
      %v971 = vpack.c.b16 %v896, %v895
      %v972 = vpack.c.b16 %v898, %v897
      %v973 = vpack.c.b16 %v900, %v899
      %v974 = vpack.c.b16 %v902, %v901
      %v975 = vpack.c.b16 %v904, %v903
      %v976 = vpack.c.b16 %v906, %v905
      %v977 = vpack.c.b16 %v908, %v907
      %v978 = vpack.c.b16 %v910, %v909
      %v979 = vpack.c.b16 %v912, %v911
      %v980 = vpack.c.b16 %v914, %v913
      %v981 = vpack.c.b16 %v916, %v915
      %v982 = vpack.c.b16 %v918, %v917
      %v1063 = vunpack.c.l.b16 %v647
      %v1064 = vunpack.c.l.b16 %v648
      %v1065 = vunpack.c.l.b16 %v649
      %v1066 = vunpack.c.l.b16 %v650
      %v1067 = vunpack.c.l.b16 %v651
      %v1068 = vunpack.c.l.b16 %v652
      %v1069 = vunpack.c.l.b16 %v653
      %v1070 = vunpack.c.l.b16 %v654
      %v1071 = vunpack.c.l.b16 %v655
      %v1072 = vunpack.c.l.b16 %v656
      %v1073 = vunpack.c.l.b16 %v657
      %v1074 = vunpack.c.l.b16 %v658
      %v1075 = vunpack.c.l.b16 %v659
      %v1076 = vunpack.c.l.b16 %v660
      %v1077 = vunpack.c.l.b16 %v661
      %v1078 = vunpack.c.l.b16 %v662
      %v1079 = vpack.c.b16 %v1064, %v1063
      %v1080 = vpack.c.b16 %v1066, %v1065
      %v1081 = vpack.c.b16 %v1068, %v1067
      %v1082 = vpack.c.b16 %v1070, %v1069
      %v1083 = vpack.c.b16 %v1072, %v1071
      %v1084 = vpack.c.b16 %v1074, %v1073
      %v1085 = vpack.c.b16 %v1076, %v1075
      %v1086 = vpack.c.b16 %v1078, %v1077
      %1095 = vmatpush.bf16.msra.mxu0 %v1086
      %1096 = vmatpush.bf16.msra.mxu0 %v1085
      %1097 = vmatpush.bf16.msra.mxu0 %v1084
      %1098 = vmatpush.bf16.msra.mxu0 %v1083
      %1099 = vmatpush.bf16.msra.mxu0 %v1082
      %1100 = vmatpush.bf16.msra.mxu0 %v1081
      %1101 = vmatpush.bf16.msra.mxu0 %v1080
      %1102 = vmatpush.bf16.msra.mxu0 %v1079
      %1103 = vmatmul.bf16.gmra.mxu0 %v919
      %v1104 = vpop.f32.mrf.mxu0
      %v1105 = vadd.f32 0.0, %v1104
      %v1106 = vpop.f32.mrf.mxu0
      %v1107 = vadd.f32 0.0, %v1106
      %1108 = vmatmul.bf16.gmra.mxu0 %v920
      %v1109 = vpop.f32.mrf.mxu0
      %v1110 = vadd.f32 0.0, %v1109
      %v1111 = vpop.f32.mrf.mxu0
      %v1112 = vadd.f32 0.0, %v1111
      %1113 = vmatmul.bf16.gmra.mxu0 %v921
      %v1114 = vpop.f32.mrf.mxu0
      %v1115 = vadd.f32 0.0, %v1114
      %v1116 = vpop.f32.mrf.mxu0
      %v1117 = vadd.f32 0.0, %v1116
      %1118 = vmatmul.bf16.gmra.mxu0 %v922
      %v1119 = vpop.f32.mrf.mxu0
      %v1120 = vadd.f32 0.0, %v1119
      %v1121 = vpop.f32.mrf.mxu0
      %v1122 = vadd.f32 0.0, %v1121
      %1123 = vmatmul.bf16.gmra.mxu0 %v923
      %v1124 = vpop.f32.mrf.mxu0
      %v1125 = vadd.f32 0.0, %v1124
      %v1126 = vpop.f32.mrf.mxu0
      %v1127 = vadd.f32 0.0, %v1126
      %1128 = vmatmul.bf16.gmra.mxu0 %v924
      %v1129 = vpop.f32.mrf.mxu0
      %v1130 = vadd.f32 0.0, %v1129
      %v1131 = vpop.f32.mrf.mxu0
      %v1132 = vadd.f32 0.0, %v1131
      %1133 = vmatmul.bf16.gmra.mxu0 %v925
      %v1134 = vpop.f32.mrf.mxu0
      %v1135 = vadd.f32 0.0, %v1134
      %v1136 = vpop.f32.mrf.mxu0
      %v1137 = vadd.f32 0.0, %v1136
      %1138 = vmatmul.bf16.gmra.mxu0 %v926
      %v1139 = vpop.f32.mrf.mxu0
      %v1140 = vadd.f32 0.0, %v1139
      %v1141 = vpop.f32.mrf.mxu0
      %v1142 = vadd.f32 0.0, %v1141
      %1143 = vmatmul.bf16.gmra.mxu0 %v927
      %v1144 = vpop.f32.mrf.mxu0
      %v1145 = vadd.f32 0.0, %v1144
      %v1146 = vpop.f32.mrf.mxu0
      %v1147 = vadd.f32 0.0, %v1146
      %1148 = vmatmul.bf16.gmra.mxu0 %v928
      %v1149 = vpop.f32.mrf.mxu0
      %v1150 = vadd.f32 0.0, %v1149
      %v1151 = vpop.f32.mrf.mxu0
      %v1152 = vadd.f32 0.0, %v1151
      %1153 = vmatmul.bf16.gmra.mxu0 %v929
      %v1154 = vpop.f32.mrf.mxu0
      %v1155 = vadd.f32 0.0, %v1154
      %v1156 = vpop.f32.mrf.mxu0
      %v1157 = vadd.f32 0.0, %v1156
      %1158 = vmatmul.bf16.gmra.mxu0 %v930
      %v1159 = vpop.f32.mrf.mxu0
      %v1160 = vadd.f32 0.0, %v1159
      %v1161 = vpop.f32.mrf.mxu0
      %v1162 = vadd.f32 0.0, %v1161
      %1163 = vmatmul.bf16.gmra.mxu0 %v931
      %v1164 = vpop.f32.mrf.mxu0
      %v1165 = vadd.f32 0.0, %v1164
      %v1166 = vpop.f32.mrf.mxu0
      %v1167 = vadd.f32 0.0, %v1166
      %1168 = vmatmul.bf16.gmra.mxu0 %v932
      %v1169 = vpop.f32.mrf.mxu0
      %v1170 = vadd.f32 0.0, %v1169
      %v1171 = vpop.f32.mrf.mxu0
      %v1172 = vadd.f32 0.0, %v1171
      %1173 = vmatmul.bf16.gmra.mxu0 %v933
      %v1174 = vpop.f32.mrf.mxu0
      %v1175 = vadd.f32 0.0, %v1174
      %v1176 = vpop.f32.mrf.mxu0
      %v1177 = vadd.f32 0.0, %v1176
      %1178 = vmatmul.bf16.gmra.mxu0 %v934
      %v1179 = vpop.f32.mrf.mxu0
      %v1180 = vadd.f32 0.0, %v1179
      %v1181 = vpop.f32.mrf.mxu0
      %v1182 = vadd.f32 0.0, %v1181
      %1183 = vmatmul.bf16.gmra.mxu0 %v935
      %v1184 = vpop.f32.mrf.mxu0
      %v1185 = vadd.f32 0.0, %v1184
      %v1186 = vpop.f32.mrf.mxu0
      %v1187 = vadd.f32 0.0, %v1186
      %1188 = vmatmul.bf16.gmra.mxu0 %v936
      %v1189 = vpop.f32.mrf.mxu0
      %v1190 = vadd.f32 0.0, %v1189
      %v1191 = vpop.f32.mrf.mxu0
      %v1192 = vadd.f32 0.0, %v1191
      %1193 = vmatmul.bf16.gmra.mxu0 %v937
      %v1194 = vpop.f32.mrf.mxu0
      %v1195 = vadd.f32 0.0, %v1194
      %v1196 = vpop.f32.mrf.mxu0
      %v1197 = vadd.f32 0.0, %v1196
      %1198 = vmatmul.bf16.gmra.mxu0 %v938
      %v1199 = vpop.f32.mrf.mxu0
      %v1200 = vadd.f32 0.0, %v1199
      %v1201 = vpop.f32.mrf.mxu0
      %v1202 = vadd.f32 0.0, %v1201
      %1203 = vmatmul.bf16.gmra.mxu0 %v939
      %v1204 = vpop.f32.mrf.mxu0
      %v1205 = vadd.f32 0.0, %v1204
      %v1206 = vpop.f32.mrf.mxu0
      %v1207 = vadd.f32 0.0, %v1206
      %1208 = vmatmul.bf16.gmra.mxu0 %v940
      %v1209 = vpop.f32.mrf.mxu0
      %v1210 = vadd.f32 0.0, %v1209
      %v1211 = vpop.f32.mrf.mxu0
      %v1212 = vadd.f32 0.0, %v1211
      %1213 = vmatmul.bf16.gmra.mxu0 %v941
      %v1214 = vpop.f32.mrf.mxu0
      %v1215 = vadd.f32 0.0, %v1214
      %v1216 = vpop.f32.mrf.mxu0
      %v1217 = vadd.f32 0.0, %v1216
      %1218 = vmatmul.bf16.gmra.mxu0 %v942
      %v1219 = vpop.f32.mrf.mxu0
      %v1220 = vadd.f32 0.0, %v1219
      %v1221 = vpop.f32.mrf.mxu0
      %v1222 = vadd.f32 0.0, %v1221
      %1223 = vmatmul.bf16.gmra.mxu0 %v943
      %v1224 = vpop.f32.mrf.mxu0
      %v1225 = vadd.f32 0.0, %v1224
      %v1226 = vpop.f32.mrf.mxu0
      %v1227 = vadd.f32 0.0, %v1226
      %1228 = vmatmul.bf16.gmra.mxu0 %v944
      %v1229 = vpop.f32.mrf.mxu0
      %v1230 = vadd.f32 0.0, %v1229
      %v1231 = vpop.f32.mrf.mxu0
      %v1232 = vadd.f32 0.0, %v1231
      %1233 = vmatmul.bf16.gmra.mxu0 %v945
      %v1234 = vpop.f32.mrf.mxu0
      %v1235 = vadd.f32 0.0, %v1234
      %v1236 = vpop.f32.mrf.mxu0
      %v1237 = vadd.f32 0.0, %v1236
      %1238 = vmatmul.bf16.gmra.mxu0 %v946
      %v1239 = vpop.f32.mrf.mxu0
      %v1240 = vadd.f32 0.0, %v1239
      %v1241 = vpop.f32.mrf.mxu0
      %v1242 = vadd.f32 0.0, %v1241
      %1243 = vmatmul.bf16.gmra.mxu0 %v947
      %v1244 = vpop.f32.mrf.mxu0
      %v1245 = vadd.f32 0.0, %v1244
      %v1246 = vpop.f32.mrf.mxu0
      %v1247 = vadd.f32 0.0, %v1246
      %1248 = vmatmul.bf16.gmra.mxu0 %v948
      %v1249 = vpop.f32.mrf.mxu0
      %v1250 = vadd.f32 0.0, %v1249
      %v1251 = vpop.f32.mrf.mxu0
      %v1252 = vadd.f32 0.0, %v1251
      %1253 = vmatmul.bf16.gmra.mxu0 %v949
      %v1254 = vpop.f32.mrf.mxu0
      %v1255 = vadd.f32 0.0, %v1254
      %v1256 = vpop.f32.mrf.mxu0
      %v1257 = vadd.f32 0.0, %v1256
      %1258 = vmatmul.bf16.gmra.mxu0 %v950
      %v1259 = vpop.f32.mrf.mxu0
      %v1260 = vadd.f32 0.0, %v1259
      %v1261 = vpop.f32.mrf.mxu0
      %v1262 = vadd.f32 0.0, %v1261
      %1263 = vmatmul.bf16.gmra.mxu0 %v951
      %v1264 = vpop.f32.mrf.mxu0
      %v1265 = vadd.f32 0.0, %v1264
      %v1266 = vpop.f32.mrf.mxu0
      %v1267 = vadd.f32 0.0, %v1266
      %1268 = vmatmul.bf16.gmra.mxu0 %v952
      %v1269 = vpop.f32.mrf.mxu0
      %v1270 = vadd.f32 0.0, %v1269
      %v1271 = vpop.f32.mrf.mxu0
      %v1272 = vadd.f32 0.0, %v1271
      %1273 = vmatmul.bf16.gmra.mxu0 %v953
      %v1274 = vpop.f32.mrf.mxu0
      %v1275 = vadd.f32 0.0, %v1274
      %v1276 = vpop.f32.mrf.mxu0
      %v1277 = vadd.f32 0.0, %v1276
      %1278 = vmatmul.bf16.gmra.mxu0 %v954
      %v1279 = vpop.f32.mrf.mxu0
      %v1280 = vadd.f32 0.0, %v1279
      %v1281 = vpop.f32.mrf.mxu0
      %v1282 = vadd.f32 0.0, %v1281
      %1283 = vmatmul.bf16.gmra.mxu0 %v955
      %v1284 = vpop.f32.mrf.mxu0
      %v1285 = vadd.f32 0.0, %v1284
      %v1286 = vpop.f32.mrf.mxu0
      %v1287 = vadd.f32 0.0, %v1286
      %1288 = vmatmul.bf16.gmra.mxu0 %v956
      %v1289 = vpop.f32.mrf.mxu0
      %v1290 = vadd.f32 0.0, %v1289
      %v1291 = vpop.f32.mrf.mxu0
      %v1292 = vadd.f32 0.0, %v1291
      %1293 = vmatmul.bf16.gmra.mxu0 %v957
      %v1294 = vpop.f32.mrf.mxu0
      %v1295 = vadd.f32 0.0, %v1294
      %v1296 = vpop.f32.mrf.mxu0
      %v1297 = vadd.f32 0.0, %v1296
      %1298 = vmatmul.bf16.gmra.mxu0 %v958
      %v1299 = vpop.f32.mrf.mxu0
      %v1300 = vadd.f32 0.0, %v1299
      %v1301 = vpop.f32.mrf.mxu0
      %v1302 = vadd.f32 0.0, %v1301
      %1303 = vmatmul.bf16.gmra.mxu0 %v959
      %v1304 = vpop.f32.mrf.mxu0
      %v1305 = vadd.f32 0.0, %v1304
      %v1306 = vpop.f32.mrf.mxu0
      %v1307 = vadd.f32 0.0, %v1306
      %1308 = vmatmul.bf16.gmra.mxu0 %v960
      %v1309 = vpop.f32.mrf.mxu0
      %v1310 = vadd.f32 0.0, %v1309
      %v1311 = vpop.f32.mrf.mxu0
      %v1312 = vadd.f32 0.0, %v1311
      %1313 = vmatmul.bf16.gmra.mxu0 %v961
      %v1314 = vpop.f32.mrf.mxu0
      %v1315 = vadd.f32 0.0, %v1314
      %v1316 = vpop.f32.mrf.mxu0
      %v1317 = vadd.f32 0.0, %v1316
      %1318 = vmatmul.bf16.gmra.mxu0 %v962
      %v1319 = vpop.f32.mrf.mxu0
      %v1320 = vadd.f32 0.0, %v1319
      %v1321 = vpop.f32.mrf.mxu0
      %v1322 = vadd.f32 0.0, %v1321
      %1323 = vmatmul.bf16.gmra.mxu0 %v963
      %v1324 = vpop.f32.mrf.mxu0
      %v1325 = vadd.f32 0.0, %v1324
      %v1326 = vpop.f32.mrf.mxu0
      %v1327 = vadd.f32 0.0, %v1326
      %1328 = vmatmul.bf16.gmra.mxu0 %v964
      %v1329 = vpop.f32.mrf.mxu0
      %v1330 = vadd.f32 0.0, %v1329
      %v1331 = vpop.f32.mrf.mxu0
      %v1332 = vadd.f32 0.0, %v1331
      %1333 = vmatmul.bf16.gmra.mxu0 %v965
      %v1334 = vpop.f32.mrf.mxu0
      %v1335 = vadd.f32 0.0, %v1334
      %v1336 = vpop.f32.mrf.mxu0
      %v1337 = vadd.f32 0.0, %v1336
      %1338 = vmatmul.bf16.gmra.mxu0 %v966
      %v1339 = vpop.f32.mrf.mxu0
      %v1340 = vadd.f32 0.0, %v1339
      %v1341 = vpop.f32.mrf.mxu0
      %v1342 = vadd.f32 0.0, %v1341
      %1343 = vmatmul.bf16.gmra.mxu0 %v967
      %v1344 = vpop.f32.mrf.mxu0
      %v1345 = vadd.f32 0.0, %v1344
      %v1346 = vpop.f32.mrf.mxu0
      %v1347 = vadd.f32 0.0, %v1346
      %1348 = vmatmul.bf16.gmra.mxu0 %v968
      %v1349 = vpop.f32.mrf.mxu0
      %v1350 = vadd.f32 0.0, %v1349
      %v1351 = vpop.f32.mrf.mxu0
      %v1352 = vadd.f32 0.0, %v1351
      %1353 = vmatmul.bf16.gmra.mxu0 %v969
      %v1354 = vpop.f32.mrf.mxu0
      %v1355 = vadd.f32 0.0, %v1354
      %v1356 = vpop.f32.mrf.mxu0
      %v1357 = vadd.f32 0.0, %v1356
      %1358 = vmatmul.bf16.gmra.mxu0 %v970
      %v1359 = vpop.f32.mrf.mxu0
      %v1360 = vadd.f32 0.0, %v1359
      %v1361 = vpop.f32.mrf.mxu0
      %v1362 = vadd.f32 0.0, %v1361
      %1363 = vmatmul.bf16.gmra.mxu0 %v971
      %v1364 = vpop.f32.mrf.mxu0
      %v1365 = vadd.f32 0.0, %v1364
      %v1366 = vpop.f32.mrf.mxu0
      %v1367 = vadd.f32 0.0, %v1366
      %1368 = vmatmul.bf16.gmra.mxu0 %v972
      %v1369 = vpop.f32.mrf.mxu0
      %v1370 = vadd.f32 0.0, %v1369
      %v1371 = vpop.f32.mrf.mxu0
      %v1372 = vadd.f32 0.0, %v1371
      %1373 = vmatmul.bf16.gmra.mxu0 %v973
      %v1374 = vpop.f32.mrf.mxu0
      %v1375 = vadd.f32 0.0, %v1374
      %v1376 = vpop.f32.mrf.mxu0
      %v1377 = vadd.f32 0.0, %v1376
      %1378 = vmatmul.bf16.gmra.mxu0 %v974
      %v1379 = vpop.f32.mrf.mxu0
      %v1380 = vadd.f32 0.0, %v1379
      %v1381 = vpop.f32.mrf.mxu0
      %v1382 = vadd.f32 0.0, %v1381
      %1383 = vmatmul.bf16.gmra.mxu0 %v975
      %v1384 = vpop.f32.mrf.mxu0
      %v1385 = vadd.f32 0.0, %v1384
      %v1386 = vpop.f32.mrf.mxu0
      %v1387 = vadd.f32 0.0, %v1386
      %1388 = vmatmul.bf16.gmra.mxu0 %v976
      %v1389 = vpop.f32.mrf.mxu0
      %v1390 = vadd.f32 0.0, %v1389
      %v1391 = vpop.f32.mrf.mxu0
      %v1392 = vadd.f32 0.0, %v1391
      %1393 = vmatmul.bf16.gmra.mxu0 %v977
      %v1394 = vpop.f32.mrf.mxu0
      %v1395 = vadd.f32 0.0, %v1394
      %v1396 = vpop.f32.mrf.mxu0
      %v1397 = vadd.f32 0.0, %v1396
      %1398 = vmatmul.bf16.gmra.mxu0 %v978
      %v1399 = vpop.f32.mrf.mxu0
      %v1400 = vadd.f32 0.0, %v1399
      %v1401 = vpop.f32.mrf.mxu0
      %v1402 = vadd.f32 0.0, %v1401
      %1403 = vmatmul.bf16.gmra.mxu0 %v979
      %v1404 = vpop.f32.mrf.mxu0
      %v1405 = vadd.f32 0.0, %v1404
      %v1406 = vpop.f32.mrf.mxu0
      %v1407 = vadd.f32 0.0, %v1406
      %1408 = vmatmul.bf16.gmra.mxu0 %v980
      %v1409 = vpop.f32.mrf.mxu0
      %v1410 = vadd.f32 0.0, %v1409
      %v1411 = vpop.f32.mrf.mxu0
      %v1412 = vadd.f32 0.0, %v1411
      %1413 = vmatmul.bf16.gmra.mxu0 %v981
      %v1414 = vpop.f32.mrf.mxu0
      %v1415 = vadd.f32 0.0, %v1414
      %v1416 = vpop.f32.mrf.mxu0
      %v1417 = vadd.f32 0.0, %v1416
      %1418 = vmatmul.bf16.gmra.mxu0 %v982
      %v1419 = vpop.f32.mrf.mxu0
      %v1420 = vadd.f32 0.0, %v1419
      %v1421 = vpop.f32.mrf.mxu0
      %v1422 = vadd.f32 0.0, %v1421
      %1423 = vdwg.mxu0
      %v1424 = vadd.f32 %v391, %v1105
      %v1425 = vadd.f32 %v392, %v1107
      %v1426 = vadd.f32 %v393, %v1110
      %v1427 = vadd.f32 %v394, %v1112
      %v1428 = vadd.f32 %v395, %v1115
      %v1429 = vadd.f32 %v396, %v1117
      %v1430 = vadd.f32 %v397, %v1120
      %v1431 = vadd.f32 %v398, %v1122
      %v1432 = vadd.f32 %v399, %v1125
      %v1433 = vadd.f32 %v400, %v1127
      %v1434 = vadd.f32 %v401, %v1130
      %v1435 = vadd.f32 %v402, %v1132
      %v1436 = vadd.f32 %v403, %v1135
      %v1437 = vadd.f32 %v404, %v1137
      %v1438 = vadd.f32 %v405, %v1140
      %v1439 = vadd.f32 %v406, %v1142
      %v1440 = vadd.f32 %v407, %v1145
      %v1441 = vadd.f32 %v408, %v1147
      %v1442 = vadd.f32 %v409, %v1150
      %v1443 = vadd.f32 %v410, %v1152
      %v1444 = vadd.f32 %v411, %v1155
      %v1445 = vadd.f32 %v412, %v1157
      %v1446 = vadd.f32 %v413, %v1160
      %v1447 = vadd.f32 %v414, %v1162
      %v1448 = vadd.f32 %v415, %v1165
      %v1449 = vadd.f32 %v416, %v1167
      %v1450 = vadd.f32 %v417, %v1170
      %v1451 = vadd.f32 %v418, %v1172
      %v1452 = vadd.f32 %v419, %v1175
      %v1453 = vadd.f32 %v420, %v1177
      %v1454 = vadd.f32 %v421, %v1180
      %v1455 = vadd.f32 %v422, %v1182
      %v1456 = vadd.f32 %v423, %v1185
      %v1457 = vadd.f32 %v424, %v1187
      %v1458 = vadd.f32 %v425, %v1190
      %v1459 = vadd.f32 %v426, %v1192
      %v1460 = vadd.f32 %v427, %v1195
      %v1461 = vadd.f32 %v428, %v1197
      %v1462 = vadd.f32 %v429, %v1200
      %v1463 = vadd.f32 %v430, %v1202
      %v1464 = vadd.f32 %v431, %v1205
      %v1465 = vadd.f32 %v432, %v1207
      %v1466 = vadd.f32 %v433, %v1210
      %v1467 = vadd.f32 %v434, %v1212
      %v1468 = vadd.f32 %v435, %v1215
      %v1469 = vadd.f32 %v436, %v1217
      %v1470 = vadd.f32 %v437, %v1220
      %v1471 = vadd.f32 %v438, %v1222
      %v1472 = vadd.f32 %v439, %v1225
      %v1473 = vadd.f32 %v440, %v1227
      %v1474 = vadd.f32 %v441, %v1230
      %v1475 = vadd.f32 %v442, %v1232
      %v1476 = vadd.f32 %v443, %v1235
      %v1477 = vadd.f32 %v444, %v1237
      %v1478 = vadd.f32 %v445, %v1240
      %v1479 = vadd.f32 %v446, %v1242
      %v1480 = vadd.f32 %v447, %v1245
      %v1481 = vadd.f32 %v448, %v1247
      %v1482 = vadd.f32 %v449, %v1250
      %v1483 = vadd.f32 %v450, %v1252
      %v1484 = vadd.f32 %v451, %v1255
      %v1485 = vadd.f32 %v452, %v1257
      %v1486 = vadd.f32 %v453, %v1260
      %v1487 = vadd.f32 %v454, %v1262
      %v1488 = vadd.f32 %v455, %v1265
      %v1489 = vadd.f32 %v456, %v1267
      %v1490 = vadd.f32 %v457, %v1270
      %v1491 = vadd.f32 %v458, %v1272
      %v1492 = vadd.f32 %v459, %v1275
      %v1493 = vadd.f32 %v460, %v1277
      %v1494 = vadd.f32 %v461, %v1280
      %v1495 = vadd.f32 %v462, %v1282
      %v1496 = vadd.f32 %v463, %v1285
      %v1497 = vadd.f32 %v464, %v1287
      %v1498 = vadd.f32 %v465, %v1290
      %v1499 = vadd.f32 %v466, %v1292
      %v1500 = vadd.f32 %v467, %v1295
      %v1501 = vadd.f32 %v468, %v1297
      %v1502 = vadd.f32 %v469, %v1300
      %v1503 = vadd.f32 %v470, %v1302
      %v1504 = vadd.f32 %v471, %v1305
      %v1505 = vadd.f32 %v472, %v1307
      %v1506 = vadd.f32 %v473, %v1310
      %v1507 = vadd.f32 %v474, %v1312
      %v1508 = vadd.f32 %v475, %v1315
      %v1509 = vadd.f32 %v476, %v1317
      %v1510 = vadd.f32 %v477, %v1320
      %v1511 = vadd.f32 %v478, %v1322
      %v1512 = vadd.f32 %v479, %v1325
      %v1513 = vadd.f32 %v480, %v1327
      %v1514 = vadd.f32 %v481, %v1330
      %v1515 = vadd.f32 %v482, %v1332
      %v1516 = vadd.f32 %v483, %v1335
      %v1517 = vadd.f32 %v484, %v1337
      %v1518 = vadd.f32 %v485, %v1340
      %v1519 = vadd.f32 %v486, %v1342
      %v1520 = vadd.f32 %v487, %v1345
      %v1521 = vadd.f32 %v488, %v1347
      %v1522 = vadd.f32 %v489, %v1350
      %v1523 = vadd.f32 %v490, %v1352
      %v1524 = vadd.f32 %v491, %v1355
      %v1525 = vadd.f32 %v492, %v1357
      %v1526 = vadd.f32 %v493, %v1360
      %v1527 = vadd.f32 %v494, %v1362
      %v1528 = vadd.f32 %v495, %v1365
      %v1529 = vadd.f32 %v496, %v1367
      %v1530 = vadd.f32 %v497, %v1370
      %v1531 = vadd.f32 %v498, %v1372
      %v1532 = vadd.f32 %v499, %v1375
      %v1533 = vadd.f32 %v500, %v1377
      %v1534 = vadd.f32 %v501, %v1380
      %v1535 = vadd.f32 %v502, %v1382
      %v1536 = vadd.f32 %v503, %v1385
      %v1537 = vadd.f32 %v504, %v1387
      %v1538 = vadd.f32 %v505, %v1390
      %v1539 = vadd.f32 %v506, %v1392
      %v1540 = vadd.f32 %v507, %v1395
      %v1541 = vadd.f32 %v508, %v1397
      %v1542 = vadd.f32 %v509, %v1400
      %v1543 = vadd.f32 %v510, %v1402
      %v1544 = vadd.f32 %v511, %v1405
      %v1545 = vadd.f32 %v512, %v1407
      %v1546 = vadd.f32 %v513, %v1410
      %v1547 = vadd.f32 %v514, %v1412
      %v1548 = vadd.f32 %v515, %v1415
      %v1549 = vadd.f32 %v516, %v1417
      %v1550 = vadd.f32 %v517, %v1420
      %v1551 = vadd.f32 %v518, %v1422
      %1552 = vst [vmem:[#allocation2] sm:$0xff] %v1424
      %1553 = vst [vmem:[#allocation2 + $0x8] sm:$0xff] %v1425
      %1554 = vst [vmem:[#allocation2 + $0x10] sm:$0xff] %v1426
      %1555 = vst [vmem:[#allocation2 + $0x18] sm:$0xff] %v1427
      %1556 = vst [vmem:[#allocation2 + $0x20] sm:$0xff] %v1428
      %1557 = vst [vmem:[#allocation2 + $0x28] sm:$0xff] %v1429
      %1558 = vst [vmem:[#allocation2 + $0x30] sm:$0xff] %v1430
      %1559 = vst [vmem:[#allocation2 + $0x38] sm:$0xff] %v1431
      %1560 = vst [vmem:[#allocation2 + $0x40] sm:$0xff] %v1432
      %1561 = vst [vmem:[#allocation2 + $0x48] sm:$0xff] %v1433
      %1562 = vst [vmem:[#allocation2 + $0x50] sm:$0xff] %v1434
      %1563 = vst [vmem:[#allocation2 + $0x58] sm:$0xff] %v1435
      %1564 = vst [vmem:[#allocation2 + $0x60] sm:$0xff] %v1436
      %1565 = vst [vmem:[#allocation2 + $0x68] sm:$0xff] %v1437
      %1566 = vst [vmem:[#allocation2 + $0x70] sm:$0xff] %v1438
      %1567 = vst [vmem:[#allocation2 + $0x78] sm:$0xff] %v1439
      %1568 = vst [vmem:[#allocation2 + $0x80] sm:$0xff] %v1440
      %1569 = vst [vmem:[#allocation2 + $0x88] sm:$0xff] %v1441
      %1570 = vst [vmem:[#allocation2 + $0x90] sm:$0xff] %v1442
      %1571 = vst [vmem:[#allocation2 + $0x98] sm:$0xff] %v1443
      %1572 = vst [vmem:[#allocation2 + $0xa0] sm:$0xff] %v1444
      %1573 = vst [vmem:[#allocation2 + $0xa8] sm:$0xff] %v1445
      %1574 = vst [vmem:[#allocation2 + $0xb0] sm:$0xff] %v1446
      %1575 = vst [vmem:[#allocation2 + $0xb8] sm:$0xff] %v1447
      %1576 = vst [vmem:[#allocation2 + $0xc0] sm:$0xff] %v1448
      %1577 = vst [vmem:[#allocation2 + $0xc8] sm:$0xff] %v1449
      %1578 = vst [vmem:[#allocation2 + $0xd0] sm:$0xff] %v1450
      %1579 = vst [vmem:[#allocation2 + $0xd8] sm:$0xff] %v1451
      %1580 = vst [vmem:[#allocation2 + $0xe0] sm:$0xff] %v1452
      %1581 = vst [vmem:[#allocation2 + $0xe8] sm:$0xff] %v1453
      %1582 = vst [vmem:[#allocation2 + $0xf0] sm:$0xff] %v1454
      %1583 = vst [vmem:[#allocation2 + $0xf8] sm:$0xff] %v1455
      %1584 = vst [vmem:[#allocation2 + $0x100] sm:$0xff] %v1456
      %1585 = vst [vmem:[#allocation2 + $0x108] sm:$0xff] %v1457
      %1586 = vst [vmem:[#allocation2 + $0x110] sm:$0xff] %v1458
      %1587 = vst [vmem:[#allocation2 + $0x118] sm:$0xff] %v1459
      %1588 = vst [vmem:[#allocation2 + $0x120] sm:$0xff] %v1460
      %1589 = vst [vmem:[#allocation2 + $0x128] sm:$0xff] %v1461
      %1590 = vst [vmem:[#allocation2 + $0x130] sm:$0xff] %v1462
      %1591 = vst [vmem:[#allocation2 + $0x138] sm:$0xff] %v1463
      %1592 = vst [vmem:[#allocation2 + $0x140] sm:$0xff] %v1464
      %1593 = vst [vmem:[#allocation2 + $0x148] sm:$0xff] %v1465
      %1594 = vst [vmem:[#allocation2 + $0x150] sm:$0xff] %v1466
      %1595 = vst [vmem:[#allocation2 + $0x158] sm:$0xff] %v1467
      %1596 = vst [vmem:[#allocation2 + $0x160] sm:$0xff] %v1468
      %1597 = vst [vmem:[#allocation2 + $0x168] sm:$0xff] %v1469
      %1598 = vst [vmem:[#allocation2 + $0x170] sm:$0xff] %v1470
      %1599 = vst [vmem:[#allocation2 + $0x178] sm:$0xff] %v1471
      %1600 = vst [vmem:[#allocation2 + $0x180] sm:$0xff] %v1472
      %1601 = vst [vmem:[#allocation2 + $0x188] sm:$0xff] %v1473
      %1602 = vst [vmem:[#allocation2 + $0x190] sm:$0xff] %v1474
      %1603 = vst [vmem:[#allocation2 + $0x198] sm:$0xff] %v1475
      %1604 = vst [vmem:[#allocation2 + $0x1a0] sm:$0xff] %v1476
      %1605 = vst [vmem:[#allocation2 + $0x1a8] sm:$0xff] %v1477
      %1606 = vst [vmem:[#allocation2 + $0x1b0] sm:$0xff] %v1478
      %1607 = vst [vmem:[#allocation2 + $0x1b8] sm:$0xff] %v1479
      %1608 = vst [vmem:[#allocation2 + $0x1c0] sm:$0xff] %v1480
      %1609 = vst [vmem:[#allocation2 + $0x1c8] sm:$0xff] %v1481
      %1610 = vst [vmem:[#allocation2 + $0x1d0] sm:$0xff] %v1482
      %1611 = vst [vmem:[#allocation2 + $0x1d8] sm:$0xff] %v1483
      %1612 = vst [vmem:[#allocation2 + $0x1e0] sm:$0xff] %v1484
      %1613 = vst [vmem:[#allocation2 + $0x1e8] sm:$0xff] %v1485
      %1614 = vst [vmem:[#allocation2 + $0x1f0] sm:$0xff] %v1486
      %1615 = vst [vmem:[#allocation2 + $0x1f8] sm:$0xff] %v1487
      %1616 = vst [vmem:[#allocation2 + $0x200] sm:$0xff] %v1488
      %1617 = vst [vmem:[#allocation2 + $0x208] sm:$0xff] %v1489
      %1618 = vst [vmem:[#allocation2 + $0x210] sm:$0xff] %v1490
      %1619 = vst [vmem:[#allocation2 + $0x218] sm:$0xff] %v1491
      %1620 = vst [vmem:[#allocation2 + $0x220] sm:$0xff] %v1492
      %1621 = vst [vmem:[#allocation2 + $0x228] sm:$0xff] %v1493
      %1622 = vst [vmem:[#allocation2 + $0x230] sm:$0xff] %v1494
      %1623 = vst [vmem:[#allocation2 + $0x238] sm:$0xff] %v1495
      %1624 = vst [vmem:[#allocation2 + $0x240] sm:$0xff] %v1496
      %1625 = vst [vmem:[#allocation2 + $0x248] sm:$0xff] %v1497
      %1626 = vst [vmem:[#allocation2 + $0x250] sm:$0xff] %v1498
      %1627 = vst [vmem:[#allocation2 + $0x258] sm:$0xff] %v1499
      %1628 = vst [vmem:[#allocation2 + $0x260] sm:$0xff] %v1500
      %1629 = vst [vmem:[#allocation2 + $0x268] sm:$0xff] %v1501
      %1630 = vst [vmem:[#allocation2 + $0x270] sm:$0xff] %v1502
      %1631 = vst [vmem:[#allocation2 + $0x278] sm:$0xff] %v1503
      %1632 = vst [vmem:[#allocation2 + $0x280] sm:$0xff] %v1504
      %1633 = vst [vmem:[#allocation2 + $0x288] sm:$0xff] %v1505
      %1634 = vst [vmem:[#allocation2 + $0x290] sm:$0xff] %v1506
      %1635 = vst [vmem:[#allocation2 + $0x298] sm:$0xff] %v1507
      %1636 = vst [vmem:[#allocation2 + $0x2a0] sm:$0xff] %v1508
      %1637 = vst [vmem:[#allocation2 + $0x2a8] sm:$0xff] %v1509
      %1638 = vst [vmem:[#allocation2 + $0x2b0] sm:$0xff] %v1510
      %1639 = vst [vmem:[#allocation2 + $0x2b8] sm:$0xff] %v1511
      %1640 = vst [vmem:[#allocation2 + $0x2c0] sm:$0xff] %v1512
      %1641 = vst [vmem:[#allocation2 + $0x2c8] sm:$0xff] %v1513
      %1642 = vst [vmem:[#allocation2 + $0x2d0] sm:$0xff] %v1514
      %1643 = vst [vmem:[#allocation2 + $0x2d8] sm:$0xff] %v1515
      %1644 = vst [vmem:[#allocation2 + $0x2e0] sm:$0xff] %v1516
      %1645 = vst [vmem:[#allocation2 + $0x2e8] sm:$0xff] %v1517
      %1646 = vst [vmem:[#allocation2 + $0x2f0] sm:$0xff] %v1518
      %1647 = vst [vmem:[#allocation2 + $0x2f8] sm:$0xff] %v1519
      %1648 = vst [vmem:[#allocation2 + $0x300] sm:$0xff] %v1520
      %1649 = vst [vmem:[#allocation2 + $0x308] sm:$0xff] %v1521
      %1650 = vst [vmem:[#allocation2 + $0x310] sm:$0xff] %v1522
      %1651 = vst [vmem:[#allocation2 + $0x318] sm:$0xff] %v1523
      %1652 = vst [vmem:[#allocation2 + $0x320] sm:$0xff] %v1524
      %1653 = vst [vmem:[#allocation2 + $0x328] sm:$0xff] %v1525
      %1654 = vst [vmem:[#allocation2 + $0x330] sm:$0xff] %v1526
      %1655 = vst [vmem:[#allocation2 + $0x338] sm:$0xff] %v1527
      %1656 = vst [vmem:[#allocation2 + $0x340] sm:$0xff] %v1528
      %1657 = vst [vmem:[#allocation2 + $0x348] sm:$0xff] %v1529
      %1658 = vst [vmem:[#allocation2 + $0x350] sm:$0xff] %v1530
      %1659 = vst [vmem:[#allocation2 + $0x358] sm:$0xff] %v1531
      %1660 = vst [vmem:[#allocation2 + $0x360] sm:$0xff] %v1532
      %1661 = vst [vmem:[#allocation2 + $0x368] sm:$0xff] %v1533
      %1662 = vst [vmem:[#allocation2 + $0x370] sm:$0xff] %v1534
      %1663 = vst [vmem:[#allocation2 + $0x378] sm:$0xff] %v1535
      %1664 = vst [vmem:[#allocation2 + $0x380] sm:$0xff] %v1536
      %1665 = vst [vmem:[#allocation2 + $0x388] sm:$0xff] %v1537
      %1666 = vst [vmem:[#allocation2 + $0x390] sm:$0xff] %v1538
      %1667 = vst [vmem:[#allocation2 + $0x398] sm:$0xff] %v1539
      %1668 = vst [vmem:[#allocation2 + $0x3a0] sm:$0xff] %v1540
      %1669 = vst [vmem:[#allocation2 + $0x3a8] sm:$0xff] %v1541
      %1670 = vst [vmem:[#allocation2 + $0x3b0] sm:$0xff] %v1542
      %1671 = vst [vmem:[#allocation2 + $0x3b8] sm:$0xff] %v1543
      %1672 = vst [vmem:[#allocation2 + $0x3c0] sm:$0xff] %v1544
      %1673 = vst [vmem:[#allocation2 + $0x3c8] sm:$0xff] %v1545
      %1674 = vst [vmem:[#allocation2 + $0x3d0] sm:$0xff] %v1546
      %1675 = vst [vmem:[#allocation2 + $0x3d8] sm:$0xff] %v1547
      %1676 = vst [vmem:[#allocation2 + $0x3e0] sm:$0xff] %v1548
      %1677 = vst [vmem:[#allocation2 + $0x3e8] sm:$0xff] %v1549
      %1678 = vst [vmem:[#allocation2 + $0x3f0] sm:$0xff] %v1550
      %1679 = vst [vmem:[#allocation2 + $0x3f8] sm:$0xff] %v1551
      // Predicated region
      $region37: #{discriminator_forward.8} parent=31 // pred_check
        %p1680 = pneg %p259
      $region38: #{discriminator_forward.8} parent=31 // pred_check_branch
        %1682 = sbr.rel (%p1680) target = $region40
      $region39: #{discriminator_forward.8} parent=31 // pred_region
        %v1683 = vld [vmem:[#allocation2] sm:$0xff]
        %v1684 = vld [vmem:[#allocation2 + $0x8] sm:$0xff]
        %v1685 = vld [vmem:[#allocation2 + $0x10] sm:$0xff]
        %v1686 = vld [vmem:[#allocation2 + $0x18] sm:$0xff]
        %v1687 = vld [vmem:[#allocation2 + $0x20] sm:$0xff]
        %v1688 = vld [vmem:[#allocation2 + $0x28] sm:$0xff]
        %v1689 = vld [vmem:[#allocation2 + $0x30] sm:$0xff]
        %v1690 = vld [vmem:[#allocation2 + $0x38] sm:$0xff]
        %v1691 = vld [vmem:[#allocation2 + $0x40] sm:$0xff]
        %v1692 = vld [vmem:[#allocation2 + $0x48] sm:$0xff]
        %v1693 = vld [vmem:[#allocation2 + $0x50] sm:$0xff]
        %v1694 = vld [vmem:[#allocation2 + $0x58] sm:$0xff]
        %v1695 = vld [vmem:[#allocation2 + $0x60] sm:$0xff]
        %v1696 = vld [vmem:[#allocation2 + $0x68] sm:$0xff]
        %v1697 = vld [vmem:[#allocation2 + $0x70] sm:$0xff]
        %v1698 = vld [vmem:[#allocation2 + $0x78] sm:$0xff]
        %v1699 = vld [vmem:[#allocation2 + $0x80] sm:$0xff]
        %v1700 = vld [vmem:[#allocation2 + $0x88] sm:$0xff]
        %v1701 = vld [vmem:[#allocation2 + $0x90] sm:$0xff]
        %v1702 = vld [vmem:[#allocation2 + $0x98] sm:$0xff]
        %v1703 = vld [vmem:[#allocation2 + $0xa0] sm:$0xff]
        %v1704 = vld [vmem:[#allocation2 + $0xa8] sm:$0xff]
        %v1705 = vld [vmem:[#allocation2 + $0xb0] sm:$0xff]
        %v1706 = vld [vmem:[#allocation2 + $0xb8] sm:$0xff]
        %v1707 = vld [vmem:[#allocation2 + $0xc0] sm:$0xff]
        %v1708 = vld [vmem:[#allocation2 + $0xc8] sm:$0xff]
        %v1709 = vld [vmem:[#allocation2 + $0xd0] sm:$0xff]
        %v1710 = vld [vmem:[#allocation2 + $0xd8] sm:$0xff]
        %v1711 = vld [vmem:[#allocation2 + $0xe0] sm:$0xff]
        %v1712 = vld [vmem:[#allocation2 + $0xe8] sm:$0xff]
        %v1713 = vld [vmem:[#allocation2 + $0xf0] sm:$0xff]
        %v1714 = vld [vmem:[#allocation2 + $0xf8] sm:$0xff]
        %v1715 = vld [vmem:[#allocation2 + $0x100] sm:$0xff]
        %v1716 = vld [vmem:[#allocation2 + $0x108] sm:$0xff]
        %v1717 = vld [vmem:[#allocation2 + $0x110] sm:$0xff]
        %v1718 = vld [vmem:[#allocation2 + $0x118] sm:$0xff]
        %v1719 = vld [vmem:[#allocation2 + $0x120] sm:$0xff]
        %v1720 = vld [vmem:[#allocation2 + $0x128] sm:$0xff]
        %v1721 = vld [vmem:[#allocation2 + $0x130] sm:$0xff]
        %v1722 = vld [vmem:[#allocation2 + $0x138] sm:$0xff]
        %v1723 = vld [vmem:[#allocation2 + $0x140] sm:$0xff]
        %v1724 = vld [vmem:[#allocation2 + $0x148] sm:$0xff]
        %v1725 = vld [vmem:[#allocation2 + $0x150] sm:$0xff]
        %v1726 = vld [vmem:[#allocation2 + $0x158] sm:$0xff]
        %v1727 = vld [vmem:[#allocation2 + $0x160] sm:$0xff]
        %v1728 = vld [vmem:[#allocation2 + $0x168] sm:$0xff]
        %v1729 = vld [vmem:[#allocation2 + $0x170] sm:$0xff]
        %v1730 = vld [vmem:[#allocation2 + $0x178] sm:$0xff]
        %v1731 = vld [vmem:[#allocation2 + $0x180] sm:$0xff]
        %v1732 = vld [vmem:[#allocation2 + $0x188] sm:$0xff]
        %v1733 = vld [vmem:[#allocation2 + $0x190] sm:$0xff]
        %v1734 = vld [vmem:[#allocation2 + $0x198] sm:$0xff]
        %v1735 = vld [vmem:[#allocation2 + $0x1a0] sm:$0xff]
        %v1736 = vld [vmem:[#allocation2 + $0x1a8] sm:$0xff]
        %v1737 = vld [vmem:[#allocation2 + $0x1b0] sm:$0xff]
        %v1738 = vld [vmem:[#allocation2 + $0x1b8] sm:$0xff]
        %v1739 = vld [vmem:[#allocation2 + $0x1c0] sm:$0xff]
        %v1740 = vld [vmem:[#allocation2 + $0x1c8] sm:$0xff]
        %v1741 = vld [vmem:[#allocation2 + $0x1d0] sm:$0xff]
        %v1742 = vld [vmem:[#allocation2 + $0x1d8] sm:$0xff]
        %v1743 = vld [vmem:[#allocation2 + $0x1e0] sm:$0xff]
        %v1744 = vld [vmem:[#allocation2 + $0x1e8] sm:$0xff]
        %v1745 = vld [vmem:[#allocation2 + $0x1f0] sm:$0xff]
        %v1746 = vld [vmem:[#allocation2 + $0x1f8] sm:$0xff]
        %v1747 = vld [vmem:[#allocation2 + $0x200] sm:$0xff]
        %v1748 = vld [vmem:[#allocation2 + $0x208] sm:$0xff]
        %v1749 = vld [vmem:[#allocation2 + $0x210] sm:$0xff]
        %v1750 = vld [vmem:[#allocation2 + $0x218] sm:$0xff]
        %v1751 = vld [vmem:[#allocation2 + $0x220] sm:$0xff]
        %v1752 = vld [vmem:[#allocation2 + $0x228] sm:$0xff]
        %v1753 = vld [vmem:[#allocation2 + $0x230] sm:$0xff]
        %v1754 = vld [vmem:[#allocation2 + $0x238] sm:$0xff]
        %v1755 = vld [vmem:[#allocation2 + $0x240] sm:$0xff]
        %v1756 = vld [vmem:[#allocation2 + $0x248] sm:$0xff]
        %v1757 = vld [vmem:[#allocation2 + $0x250] sm:$0xff]
        %v1758 = vld [vmem:[#allocation2 + $0x258] sm:$0xff]
        %v1759 = vld [vmem:[#allocation2 + $0x260] sm:$0xff]
        %v1760 = vld [vmem:[#allocation2 + $0x268] sm:$0xff]
        %v1761 = vld [vmem:[#allocation2 + $0x270] sm:$0xff]
        %v1762 = vld [vmem:[#allocation2 + $0x278] sm:$0xff]
        %v1763 = vld [vmem:[#allocation2 + $0x280] sm:$0xff]
        %v1764 = vld [vmem:[#allocation2 + $0x288] sm:$0xff]
        %v1765 = vld [vmem:[#allocation2 + $0x290] sm:$0xff]
        %v1766 = vld [vmem:[#allocation2 + $0x298] sm:$0xff]
        %v1767 = vld [vmem:[#allocation2 + $0x2a0] sm:$0xff]
        %v1768 = vld [vmem:[#allocation2 + $0x2a8] sm:$0xff]
        %v1769 = vld [vmem:[#allocation2 + $0x2b0] sm:$0xff]
        %v1770 = vld [vmem:[#allocation2 + $0x2b8] sm:$0xff]
        %v1771 = vld [vmem:[#allocation2 + $0x2c0] sm:$0xff]
        %v1772 = vld [vmem:[#allocation2 + $0x2c8] sm:$0xff]
        %v1773 = vld [vmem:[#allocation2 + $0x2d0] sm:$0xff]
        %v1774 = vld [vmem:[#allocation2 + $0x2d8] sm:$0xff]
        %v1775 = vld [vmem:[#allocation2 + $0x2e0] sm:$0xff]
        %v1776 = vld [vmem:[#allocation2 + $0x2e8] sm:$0xff]
        %v1777 = vld [vmem:[#allocation2 + $0x2f0] sm:$0xff]
        %v1778 = vld [vmem:[#allocation2 + $0x2f8] sm:$0xff]
        %v1779 = vld [vmem:[#allocation2 + $0x300] sm:$0xff]
        %v1780 = vld [vmem:[#allocation2 + $0x308] sm:$0xff]
        %v1781 = vld [vmem:[#allocation2 + $0x310] sm:$0xff]
        %v1782 = vld [vmem:[#allocation2 + $0x318] sm:$0xff]
        %v1783 = vld [vmem:[#allocation2 + $0x320] sm:$0xff]
        %v1784 = vld [vmem:[#allocation2 + $0x328] sm:$0xff]
        %v1785 = vld [vmem:[#allocation2 + $0x330] sm:$0xff]
        %v1786 = vld [vmem:[#allocation2 + $0x338] sm:$0xff]
        %v1787 = vld [vmem:[#allocation2 + $0x340] sm:$0xff]
        %v1788 = vld [vmem:[#allocation2 + $0x348] sm:$0xff]
        %v1789 = vld [vmem:[#allocation2 + $0x350] sm:$0xff]
        %v1790 = vld [vmem:[#allocation2 + $0x358] sm:$0xff]
        %v1791 = vld [vmem:[#allocation2 + $0x360] sm:$0xff]
        %v1792 = vld [vmem:[#allocation2 + $0x368] sm:$0xff]
        %v1793 = vld [vmem:[#allocation2 + $0x370] sm:$0xff]
        %v1794 = vld [vmem:[#allocation2 + $0x378] sm:$0xff]
        %v1795 = vld [vmem:[#allocation2 + $0x380] sm:$0xff]
        %v1796 = vld [vmem:[#allocation2 + $0x388] sm:$0xff]
        %v1797 = vld [vmem:[#allocation2 + $0x390] sm:$0xff]
        %v1798 = vld [vmem:[#allocation2 + $0x398] sm:$0xff]
        %v1799 = vld [vmem:[#allocation2 + $0x3a0] sm:$0xff]
        %v1800 = vld [vmem:[#allocation2 + $0x3a8] sm:$0xff]
        %v1801 = vld [vmem:[#allocation2 + $0x3b0] sm:$0xff]
        %v1802 = vld [vmem:[#allocation2 + $0x3b8] sm:$0xff]
        %v1803 = vld [vmem:[#allocation2 + $0x3c0] sm:$0xff]
        %v1804 = vld [vmem:[#allocation2 + $0x3c8] sm:$0xff]
        %v1805 = vld [vmem:[#allocation2 + $0x3d0] sm:$0xff]
        %v1806 = vld [vmem:[#allocation2 + $0x3d8] sm:$0xff]
        %v1807 = vld [vmem:[#allocation2 + $0x3e0] sm:$0xff]
        %v1808 = vld [vmem:[#allocation2 + $0x3e8] sm:$0xff]
        %v1809 = vld [vmem:[#allocation2 + $0x3f0] sm:$0xff]
        %v1810 = vld [vmem:[#allocation2 + $0x3f8] sm:$0xff]
        %v1811 = vld [vmem:[%s249] sm:$0x1]
        %v1813 = vperm.slane %v1811, 0
        %v1815 = vadd.f32 %v1683, %v1813
        %v1816 = vadd.f32 %v1684, %v1813
        %v1817 = vadd.f32 %v1685, %v1813
        %v1818 = vadd.f32 %v1686, %v1813
        %v1819 = vadd.f32 %v1687, %v1813
        %v1820 = vadd.f32 %v1688, %v1813
        %v1821 = vadd.f32 %v1689, %v1813
        %v1822 = vadd.f32 %v1690, %v1813
        %v1823 = vadd.f32 %v1691, %v1813
        %v1824 = vadd.f32 %v1692, %v1813
        %v1825 = vadd.f32 %v1693, %v1813
        %v1826 = vadd.f32 %v1694, %v1813
        %v1827 = vadd.f32 %v1695, %v1813
        %v1828 = vadd.f32 %v1696, %v1813
        %v1829 = vadd.f32 %v1697, %v1813
        %v1830 = vadd.f32 %v1698, %v1813
        %v1831 = vadd.f32 %v1699, %v1813
        %v1832 = vadd.f32 %v1700, %v1813
        %v1833 = vadd.f32 %v1701, %v1813
        %v1834 = vadd.f32 %v1702, %v1813
        %v1835 = vadd.f32 %v1703, %v1813
        %v1836 = vadd.f32 %v1704, %v1813
        %v1837 = vadd.f32 %v1705, %v1813
        %v1838 = vadd.f32 %v1706, %v1813
        %v1839 = vadd.f32 %v1707, %v1813
        %v1840 = vadd.f32 %v1708, %v1813
        %v1841 = vadd.f32 %v1709, %v1813
        %v1842 = vadd.f32 %v1710, %v1813
        %v1843 = vadd.f32 %v1711, %v1813
        %v1844 = vadd.f32 %v1712, %v1813
        %v1845 = vadd.f32 %v1713, %v1813
        %v1846 = vadd.f32 %v1714, %v1813
        %v1847 = vadd.f32 %v1715, %v1813
        %v1848 = vadd.f32 %v1716, %v1813
        %v1849 = vadd.f32 %v1717, %v1813
        %v1850 = vadd.f32 %v1718, %v1813
        %v1851 = vadd.f32 %v1719, %v1813
        %v1852 = vadd.f32 %v1720, %v1813
        %v1853 = vadd.f32 %v1721, %v1813
        %v1854 = vadd.f32 %v1722, %v1813
        %v1855 = vadd.f32 %v1723, %v1813
        %v1856 = vadd.f32 %v1724, %v1813
        %v1857 = vadd.f32 %v1725, %v1813
        %v1858 = vadd.f32 %v1726, %v1813
        %v1859 = vadd.f32 %v1727, %v1813
        %v1860 = vadd.f32 %v1728, %v1813
        %v1861 = vadd.f32 %v1729, %v1813
        %v1862 = vadd.f32 %v1730, %v1813
        %v1863 = vadd.f32 %v1731, %v1813
        %v1864 = vadd.f32 %v1732, %v1813
        %v1865 = vadd.f32 %v1733, %v1813
        %v1866 = vadd.f32 %v1734, %v1813
        %v1867 = vadd.f32 %v1735, %v1813
        %v1868 = vadd.f32 %v1736, %v1813
        %v1869 = vadd.f32 %v1737, %v1813
        %v1870 = vadd.f32 %v1738, %v1813
        %v1871 = vadd.f32 %v1739, %v1813
        %v1872 = vadd.f32 %v1740, %v1813
        %v1873 = vadd.f32 %v1741, %v1813
        %v1874 = vadd.f32 %v1742, %v1813
        %v1875 = vadd.f32 %v1743, %v1813
        %v1876 = vadd.f32 %v1744, %v1813
        %v1877 = vadd.f32 %v1745, %v1813
        %v1878 = vadd.f32 %v1746, %v1813
        %v1879 = vadd.f32 %v1747, %v1813
        %v1880 = vadd.f32 %v1748, %v1813
        %v1881 = vadd.f32 %v1749, %v1813
        %v1882 = vadd.f32 %v1750, %v1813
        %v1883 = vadd.f32 %v1751, %v1813
        %v1884 = vadd.f32 %v1752, %v1813
        %v1885 = vadd.f32 %v1753, %v1813
        %v1886 = vadd.f32 %v1754, %v1813
        %v1887 = vadd.f32 %v1755, %v1813
        %v1888 = vadd.f32 %v1756, %v1813
        %v1889 = vadd.f32 %v1757, %v1813
        %v1890 = vadd.f32 %v1758, %v1813
        %v1891 = vadd.f32 %v1759, %v1813
        %v1892 = vadd.f32 %v1760, %v1813
        %v1893 = vadd.f32 %v1761, %v1813
        %v1894 = vadd.f32 %v1762, %v1813
        %v1895 = vadd.f32 %v1763, %v1813
        %v1896 = vadd.f32 %v1764, %v1813
        %v1897 = vadd.f32 %v1765, %v1813
        %v1898 = vadd.f32 %v1766, %v1813
        %v1899 = vadd.f32 %v1767, %v1813
        %v1900 = vadd.f32 %v1768, %v1813
        %v1901 = vadd.f32 %v1769, %v1813
        %v1902 = vadd.f32 %v1770, %v1813
        %v1903 = vadd.f32 %v1771, %v1813
        %v1904 = vadd.f32 %v1772, %v1813
        %v1905 = vadd.f32 %v1773, %v1813
        %v1906 = vadd.f32 %v1774, %v1813
        %v1907 = vadd.f32 %v1775, %v1813
        %v1908 = vadd.f32 %v1776, %v1813
        %v1909 = vadd.f32 %v1777, %v1813
        %v1910 = vadd.f32 %v1778, %v1813
        %v1911 = vadd.f32 %v1779, %v1813
        %v1912 = vadd.f32 %v1780, %v1813
        %v1913 = vadd.f32 %v1781, %v1813
        %v1914 = vadd.f32 %v1782, %v1813
        %v1915 = vadd.f32 %v1783, %v1813
        %v1916 = vadd.f32 %v1784, %v1813
        %v1917 = vadd.f32 %v1785, %v1813
        %v1918 = vadd.f32 %v1786, %v1813
        %v1919 = vadd.f32 %v1787, %v1813
        %v1920 = vadd.f32 %v1788, %v1813
        %v1921 = vadd.f32 %v1789, %v1813
        %v1922 = vadd.f32 %v1790, %v1813
        %v1923 = vadd.f32 %v1791, %v1813
        %v1924 = vadd.f32 %v1792, %v1813
        %v1925 = vadd.f32 %v1793, %v1813
        %v1926 = vadd.f32 %v1794, %v1813
        %v1927 = vadd.f32 %v1795, %v1813
        %v1928 = vadd.f32 %v1796, %v1813
        %v1929 = vadd.f32 %v1797, %v1813
        %v1930 = vadd.f32 %v1798, %v1813
        %v1931 = vadd.f32 %v1799, %v1813
        %v1932 = vadd.f32 %v1800, %v1813
        %v1933 = vadd.f32 %v1801, %v1813
        %v1934 = vadd.f32 %v1802, %v1813
        %v1935 = vadd.f32 %v1803, %v1813
        %v1936 = vadd.f32 %v1804, %v1813
        %v1937 = vadd.f32 %v1805, %v1813
        %v1938 = vadd.f32 %v1806, %v1813
        %v1939 = vadd.f32 %v1807, %v1813
        %v1940 = vadd.f32 %v1808, %v1813
        %v1941 = vadd.f32 %v1809, %v1813
        %v1942 = vadd.f32 %v1810, %v1813
        %vm1943 = vcmp.gt.f32.partialorder %v1815, 0.0
        %vm1944 = vcmp.gt.f32.partialorder %v1816, 0.0
        %vm1945 = vcmp.gt.f32.partialorder %v1817, 0.0
        %vm1946 = vcmp.gt.f32.partialorder %v1818, 0.0
        %vm1947 = vcmp.gt.f32.partialorder %v1819, 0.0
        %vm1948 = vcmp.gt.f32.partialorder %v1820, 0.0
        %vm1949 = vcmp.gt.f32.partialorder %v1821, 0.0
        %vm1950 = vcmp.gt.f32.partialorder %v1822, 0.0
        %vm1951 = vcmp.gt.f32.partialorder %v1823, 0.0
        %vm1952 = vcmp.gt.f32.partialorder %v1824, 0.0
        %vm1953 = vcmp.gt.f32.partialorder %v1825, 0.0
        %vm1954 = vcmp.gt.f32.partialorder %v1826, 0.0
        %vm1955 = vcmp.gt.f32.partialorder %v1827, 0.0
        %vm1956 = vcmp.gt.f32.partialorder %v1828, 0.0
        %vm1957 = vcmp.gt.f32.partialorder %v1829, 0.0
        %vm1958 = vcmp.gt.f32.partialorder %v1830, 0.0
        %vm1959 = vcmp.gt.f32.partialorder %v1831, 0.0
        %vm1960 = vcmp.gt.f32.partialorder %v1832, 0.0
        %vm1961 = vcmp.gt.f32.partialorder %v1833, 0.0
        %vm1962 = vcmp.gt.f32.partialorder %v1834, 0.0
        %vm1963 = vcmp.gt.f32.partialorder %v1835, 0.0
        %vm1964 = vcmp.gt.f32.partialorder %v1836, 0.0
        %vm1965 = vcmp.gt.f32.partialorder %v1837, 0.0
        %vm1966 = vcmp.gt.f32.partialorder %v1838, 0.0
        %vm1967 = vcmp.gt.f32.partialorder %v1839, 0.0
        %vm1968 = vcmp.gt.f32.partialorder %v1840, 0.0
        %vm1969 = vcmp.gt.f32.partialorder %v1841, 0.0
        %vm1970 = vcmp.gt.f32.partialorder %v1842, 0.0
        %vm1971 = vcmp.gt.f32.partialorder %v1843, 0.0
        %vm1972 = vcmp.gt.f32.partialorder %v1844, 0.0
        %vm1973 = vcmp.gt.f32.partialorder %v1845, 0.0
        %vm1974 = vcmp.gt.f32.partialorder %v1846, 0.0
        %vm1975 = vcmp.gt.f32.partialorder %v1847, 0.0
        %vm1976 = vcmp.gt.f32.partialorder %v1848, 0.0
        %vm1977 = vcmp.gt.f32.partialorder %v1849, 0.0
        %vm1978 = vcmp.gt.f32.partialorder %v1850, 0.0
        %vm1979 = vcmp.gt.f32.partialorder %v1851, 0.0
        %vm1980 = vcmp.gt.f32.partialorder %v1852, 0.0
        %vm1981 = vcmp.gt.f32.partialorder %v1853, 0.0
        %vm1982 = vcmp.gt.f32.partialorder %v1854, 0.0
        %vm1983 = vcmp.gt.f32.partialorder %v1855, 0.0
        %vm1984 = vcmp.gt.f32.partialorder %v1856, 0.0
        %vm1985 = vcmp.gt.f32.partialorder %v1857, 0.0
        %vm1986 = vcmp.gt.f32.partialorder %v1858, 0.0
        %vm1987 = vcmp.gt.f32.partialorder %v1859, 0.0
        %vm1988 = vcmp.gt.f32.partialorder %v1860, 0.0
        %vm1989 = vcmp.gt.f32.partialorder %v1861, 0.0
        %vm1990 = vcmp.gt.f32.partialorder %v1862, 0.0
        %vm1991 = vcmp.gt.f32.partialorder %v1863, 0.0
        %vm1992 = vcmp.gt.f32.partialorder %v1864, 0.0
        %vm1993 = vcmp.gt.f32.partialorder %v1865, 0.0
        %vm1994 = vcmp.gt.f32.partialorder %v1866, 0.0
        %vm1995 = vcmp.gt.f32.partialorder %v1867, 0.0
        %vm1996 = vcmp.gt.f32.partialorder %v1868, 0.0
        %vm1997 = vcmp.gt.f32.partialorder %v1869, 0.0
        %vm1998 = vcmp.gt.f32.partialorder %v1870, 0.0
        %vm1999 = vcmp.gt.f32.partialorder %v1871, 0.0
        %vm2000 = vcmp.gt.f32.partialorder %v1872, 0.0
        %vm2001 = vcmp.gt.f32.partialorder %v1873, 0.0
        %vm2002 = vcmp.gt.f32.partialorder %v1874, 0.0
        %vm2003 = vcmp.gt.f32.partialorder %v1875, 0.0
        %vm2004 = vcmp.gt.f32.partialorder %v1876, 0.0
        %vm2005 = vcmp.gt.f32.partialorder %v1877, 0.0
        %vm2006 = vcmp.gt.f32.partialorder %v1878, 0.0
        %vm2007 = vcmp.gt.f32.partialorder %v1879, 0.0
        %vm2008 = vcmp.gt.f32.partialorder %v1880, 0.0
        %vm2009 = vcmp.gt.f32.partialorder %v1881, 0.0
        %vm2010 = vcmp.gt.f32.partialorder %v1882, 0.0
        %vm2011 = vcmp.gt.f32.partialorder %v1883, 0.0
        %vm2012 = vcmp.gt.f32.partialorder %v1884, 0.0
        %vm2013 = vcmp.gt.f32.partialorder %v1885, 0.0
        %vm2014 = vcmp.gt.f32.partialorder %v1886, 0.0
        %vm2015 = vcmp.gt.f32.partialorder %v1887, 0.0
        %vm2016 = vcmp.gt.f32.partialorder %v1888, 0.0
        %vm2017 = vcmp.gt.f32.partialorder %v1889, 0.0
        %vm2018 = vcmp.gt.f32.partialorder %v1890, 0.0
        %vm2019 = vcmp.gt.f32.partialorder %v1891, 0.0
        %vm2020 = vcmp.gt.f32.partialorder %v1892, 0.0
        %vm2021 = vcmp.gt.f32.partialorder %v1893, 0.0
        %vm2022 = vcmp.gt.f32.partialorder %v1894, 0.0
        %vm2023 = vcmp.gt.f32.partialorder %v1895, 0.0
        %vm2024 = vcmp.gt.f32.partialorder %v1896, 0.0
        %vm2025 = vcmp.gt.f32.partialorder %v1897, 0.0
        %vm2026 = vcmp.gt.f32.partialorder %v1898, 0.0
        %vm2027 = vcmp.gt.f32.partialorder %v1899, 0.0
        %vm2028 = vcmp.gt.f32.partialorder %v1900, 0.0
        %vm2029 = vcmp.gt.f32.partialorder %v1901, 0.0
        %vm2030 = vcmp.gt.f32.partialorder %v1902, 0.0
        %vm2031 = vcmp.gt.f32.partialorder %v1903, 0.0
        %vm2032 = vcmp.gt.f32.partialorder %v1904, 0.0
        %vm2033 = vcmp.gt.f32.partialorder %v1905, 0.0
        %vm2034 = vcmp.gt.f32.partialorder %v1906, 0.0
        %vm2035 = vcmp.gt.f32.partialorder %v1907, 0.0
        %vm2036 = vcmp.gt.f32.partialorder %v1908, 0.0
        %vm2037 = vcmp.gt.f32.partialorder %v1909, 0.0
        %vm2038 = vcmp.gt.f32.partialorder %v1910, 0.0
        %vm2039 = vcmp.gt.f32.partialorder %v1911, 0.0
        %vm2040 = vcmp.gt.f32.partialorder %v1912, 0.0
        %vm2041 = vcmp.gt.f32.partialorder %v1913, 0.0
        %vm2042 = vcmp.gt.f32.partialorder %v1914, 0.0
        %vm2043 = vcmp.gt.f32.partialorder %v1915, 0.0
        %vm2044 = vcmp.gt.f32.partialorder %v1916, 0.0
        %vm2045 = vcmp.gt.f32.partialorder %v1917, 0.0
        %vm2046 = vcmp.gt.f32.partialorder %v1918, 0.0
        %vm2047 = vcmp.gt.f32.partialorder %v1919, 0.0
        %vm2048 = vcmp.gt.f32.partialorder %v1920, 0.0
        %vm2049 = vcmp.gt.f32.partialorder %v1921, 0.0
        %vm2050 = vcmp.gt.f32.partialorder %v1922, 0.0
        %vm2051 = vcmp.gt.f32.partialorder %v1923, 0.0
        %vm2052 = vcmp.gt.f32.partialorder %v1924, 0.0
        %vm2053 = vcmp.gt.f32.partialorder %v1925, 0.0
        %vm2054 = vcmp.gt.f32.partialorder %v1926, 0.0
        %vm2055 = vcmp.gt.f32.partialorder %v1927, 0.0
        %vm2056 = vcmp.gt.f32.partialorder %v1928, 0.0
        %vm2057 = vcmp.gt.f32.partialorder %v1929, 0.0
        %vm2058 = vcmp.gt.f32.partialorder %v1930, 0.0
        %vm2059 = vcmp.gt.f32.partialorder %v1931, 0.0
        %vm2060 = vcmp.gt.f32.partialorder %v1932, 0.0
        %vm2061 = vcmp.gt.f32.partialorder %v1933, 0.0
        %vm2062 = vcmp.gt.f32.partialorder %v1934, 0.0
        %vm2063 = vcmp.gt.f32.partialorder %v1935, 0.0
        %vm2064 = vcmp.gt.f32.partialorder %v1936, 0.0
        %vm2065 = vcmp.gt.f32.partialorder %v1937, 0.0
        %vm2066 = vcmp.gt.f32.partialorder %v1938, 0.0
        %vm2067 = vcmp.gt.f32.partialorder %v1939, 0.0
        %vm2068 = vcmp.gt.f32.partialorder %v1940, 0.0
        %vm2069 = vcmp.gt.f32.partialorder %v1941, 0.0
        %vm2070 = vcmp.gt.f32.partialorder %v1942, 0.0
        %v2071 = vmul.f32 %v1815, 0.2
        %v2072 = vmul.f32 %v1816, 0.2
        %v2073 = vmul.f32 %v1817, 0.2
        %v2074 = vmul.f32 %v1818, 0.2
        %v2075 = vmul.f32 %v1819, 0.2
        %v2076 = vmul.f32 %v1820, 0.2
        %v2077 = vmul.f32 %v1821, 0.2
        %v2078 = vmul.f32 %v1822, 0.2
        %v2079 = vmul.f32 %v1823, 0.2
        %v2080 = vmul.f32 %v1824, 0.2
        %v2081 = vmul.f32 %v1825, 0.2
        %v2082 = vmul.f32 %v1826, 0.2
        %v2083 = vmul.f32 %v1827, 0.2
        %v2084 = vmul.f32 %v1828, 0.2
        %v2085 = vmul.f32 %v1829, 0.2
        %v2086 = vmul.f32 %v1830, 0.2
        %v2087 = vmul.f32 %v1831, 0.2
        %v2088 = vmul.f32 %v1832, 0.2
        %v2089 = vmul.f32 %v1833, 0.2
        %v2090 = vmul.f32 %v1834, 0.2
        %v2091 = vmul.f32 %v1835, 0.2
        %v2092 = vmul.f32 %v1836, 0.2
        %v2093 = vmul.f32 %v1837, 0.2
        %v2094 = vmul.f32 %v1838, 0.2
        %v2095 = vmul.f32 %v1839, 0.2
        %v2096 = vmul.f32 %v1840, 0.2
        %v2097 = vmul.f32 %v1841, 0.2
        %v2098 = vmul.f32 %v1842, 0.2
        %v2099 = vmul.f32 %v1843, 0.2
        %v2100 = vmul.f32 %v1844, 0.2
        %v2101 = vmul.f32 %v1845, 0.2
        %v2102 = vmul.f32 %v1846, 0.2
        %v2103 = vmul.f32 %v1847, 0.2
        %v2104 = vmul.f32 %v1848, 0.2
        %v2105 = vmul.f32 %v1849, 0.2
        %v2106 = vmul.f32 %v1850, 0.2
        %v2107 = vmul.f32 %v1851, 0.2
        %v2108 = vmul.f32 %v1852, 0.2
        %v2109 = vmul.f32 %v1853, 0.2
        %v2110 = vmul.f32 %v1854, 0.2
        %v2111 = vmul.f32 %v1855, 0.2
        %v2112 = vmul.f32 %v1856, 0.2
        %v2113 = vmul.f32 %v1857, 0.2
        %v2114 = vmul.f32 %v1858, 0.2
        %v2115 = vmul.f32 %v1859, 0.2
        %v2116 = vmul.f32 %v1860, 0.2
        %v2117 = vmul.f32 %v1861, 0.2
        %v2118 = vmul.f32 %v1862, 0.2
        %v2119 = vmul.f32 %v1863, 0.2
        %v2120 = vmul.f32 %v1864, 0.2
        %v2121 = vmul.f32 %v1865, 0.2
        %v2122 = vmul.f32 %v1866, 0.2
        %v2123 = vmul.f32 %v1867, 0.2
        %v2124 = vmul.f32 %v1868, 0.2
        %v2125 = vmul.f32 %v1869, 0.2
        %v2126 = vmul.f32 %v1870, 0.2
        %v2127 = vmul.f32 %v1871, 0.2
        %v2128 = vmul.f32 %v1872, 0.2
        %v2129 = vmul.f32 %v1873, 0.2
        %v2130 = vmul.f32 %v1874, 0.2
        %v2131 = vmul.f32 %v1875, 0.2
        %v2132 = vmul.f32 %v1876, 0.2
        %v2133 = vmul.f32 %v1877, 0.2
        %v2134 = vmul.f32 %v1878, 0.2
        %v2135 = vmul.f32 %v1879, 0.2
        %v2136 = vmul.f32 %v1880, 0.2
        %v2137 = vmul.f32 %v1881, 0.2
        %v2138 = vmul.f32 %v1882, 0.2
        %v2139 = vmul.f32 %v1883, 0.2
        %v2140 = vmul.f32 %v1884, 0.2
        %v2141 = vmul.f32 %v1885, 0.2
        %v2142 = vmul.f32 %v1886, 0.2
        %v2143 = vmul.f32 %v1887, 0.2
        %v2144 = vmul.f32 %v1888, 0.2
        %v2145 = vmul.f32 %v1889, 0.2
        %v2146 = vmul.f32 %v1890, 0.2
        %v2147 = vmul.f32 %v1891, 0.2
        %v2148 = vmul.f32 %v1892, 0.2
        %v2149 = vmul.f32 %v1893, 0.2
        %v2150 = vmul.f32 %v1894, 0.2
        %v2151 = vmul.f32 %v1895, 0.2
        %v2152 = vmul.f32 %v1896, 0.2
        %v2153 = vmul.f32 %v1897, 0.2
        %v2154 = vmul.f32 %v1898, 0.2
        %v2155 = vmul.f32 %v1899, 0.2
        %v2156 = vmul.f32 %v1900, 0.2
        %v2157 = vmul.f32 %v1901, 0.2
        %v2158 = vmul.f32 %v1902, 0.2
        %v2159 = vmul.f32 %v1903, 0.2
        %v2160 = vmul.f32 %v1904, 0.2
        %v2161 = vmul.f32 %v1905, 0.2
        %v2162 = vmul.f32 %v1906, 0.2
        %v2163 = vmul.f32 %v1907, 0.2
        %v2164 = vmul.f32 %v1908, 0.2
        %v2165 = vmul.f32 %v1909, 0.2
        %v2166 = vmul.f32 %v1910, 0.2
        %v2167 = vmul.f32 %v1911, 0.2
        %v2168 = vmul.f32 %v1912, 0.2
        %v2169 = vmul.f32 %v1913, 0.2
        %v2170 = vmul.f32 %v1914, 0.2
        %v2171 = vmul.f32 %v1915, 0.2
        %v2172 = vmul.f32 %v1916, 0.2
        %v2173 = vmul.f32 %v1917, 0.2
        %v2174 = vmul.f32 %v1918, 0.2
        %v2175 = vmul.f32 %v1919, 0.2
        %v2176 = vmul.f32 %v1920, 0.2
        %v2177 = vmul.f32 %v1921, 0.2
        %v2178 = vmul.f32 %v1922, 0.2
        %v2179 = vmul.f32 %v1923, 0.2
        %v2180 = vmul.f32 %v1924, 0.2
        %v2181 = vmul.f32 %v1925, 0.2
        %v2182 = vmul.f32 %v1926, 0.2
        %v2183 = vmul.f32 %v1927, 0.2
        %v2184 = vmul.f32 %v1928, 0.2
        %v2185 = vmul.f32 %v1929, 0.2
        %v2186 = vmul.f32 %v1930, 0.2
        %v2187 = vmul.f32 %v1931, 0.2
        %v2188 = vmul.f32 %v1932, 0.2
        %v2189 = vmul.f32 %v1933, 0.2
        %v2190 = vmul.f32 %v1934, 0.2
        %v2191 = vmul.f32 %v1935, 0.2
        %v2192 = vmul.f32 %v1936, 0.2
        %v2193 = vmul.f32 %v1937, 0.2
        %v2194 = vmul.f32 %v1938, 0.2
        %v2195 = vmul.f32 %v1939, 0.2
        %v2196 = vmul.f32 %v1940, 0.2
        %v2197 = vmul.f32 %v1941, 0.2
        %v2198 = vmul.f32 %v1942, 0.2
        %v2199 = vsel %vm1943, %v1815, %v2071
        %v2200 = vsel %vm1944, %v1816, %v2072
        %v2201 = vsel %vm1945, %v1817, %v2073
        %v2202 = vsel %vm1946, %v1818, %v2074
        %v2203 = vsel %vm1947, %v1819, %v2075
        %v2204 = vsel %vm1948, %v1820, %v2076
        %v2205 = vsel %vm1949, %v1821, %v2077
        %v2206 = vsel %vm1950, %v1822, %v2078
        %v2207 = vsel %vm1951, %v1823, %v2079
        %v2208 = vsel %vm1952, %v1824, %v2080
        %v2209 = vsel %vm1953, %v1825, %v2081
        %v2210 = vsel %vm1954, %v1826, %v2082
        %v2211 = vsel %vm1955, %v1827, %v2083
        %v2212 = vsel %vm1956, %v1828, %v2084
        %v2213 = vsel %vm1957, %v1829, %v2085
        %v2214 = vsel %vm1958, %v1830, %v2086
        %v2215 = vsel %vm1959, %v1831, %v2087
        %v2216 = vsel %vm1960, %v1832, %v2088
        %v2217 = vsel %vm1961, %v1833, %v2089
        %v2218 = vsel %vm1962, %v1834, %v2090
        %v2219 = vsel %vm1963, %v1835, %v2091
        %v2220 = vsel %vm1964, %v1836, %v2092
        %v2221 = vsel %vm1965, %v1837, %v2093
        %v2222 = vsel %vm1966, %v1838, %v2094
        %v2223 = vsel %vm1967, %v1839, %v2095
        %v2224 = vsel %vm1968, %v1840, %v2096
        %v2225 = vsel %vm1969, %v1841, %v2097
        %v2226 = vsel %vm1970, %v1842, %v2098
        %v2227 = vsel %vm1971, %v1843, %v2099
        %v2228 = vsel %vm1972, %v1844, %v2100
        %v2229 = vsel %vm1973, %v1845, %v2101
        %v2230 = vsel %vm1974, %v1846, %v2102
        %v2231 = vsel %vm1975, %v1847, %v2103
        %v2232 = vsel %vm1976, %v1848, %v2104
        %v2233 = vsel %vm1977, %v1849, %v2105
        %v2234 = vsel %vm1978, %v1850, %v2106
        %v2235 = vsel %vm1979, %v1851, %v2107
        %v2236 = vsel %vm1980, %v1852, %v2108
        %v2237 = vsel %vm1981, %v1853, %v2109
        %v2238 = vsel %vm1982, %v1854, %v2110
        %v2239 = vsel %vm1983, %v1855, %v2111
        %v2240 = vsel %vm1984, %v1856, %v2112
        %v2241 = vsel %vm1985, %v1857, %v2113
        %v2242 = vsel %vm1986, %v1858, %v2114
        %v2243 = vsel %vm1987, %v1859, %v2115
        %v2244 = vsel %vm1988, %v1860, %v2116
        %v2245 = vsel %vm1989, %v1861, %v2117
        %v2246 = vsel %vm1990, %v1862, %v2118
        %v2247 = vsel %vm1991, %v1863, %v2119
        %v2248 = vsel %vm1992, %v1864, %v2120
        %v2249 = vsel %vm1993, %v1865, %v2121
        %v2250 = vsel %vm1994, %v1866, %v2122
        %v2251 = vsel %vm1995, %v1867, %v2123
        %v2252 = vsel %vm1996, %v1868, %v2124
        %v2253 = vsel %vm1997, %v1869, %v2125
        %v2254 = vsel %vm1998, %v1870, %v2126
        %v2255 = vsel %vm1999, %v1871, %v2127
        %v2256 = vsel %vm2000, %v1872, %v2128
        %v2257 = vsel %vm2001, %v1873, %v2129
        %v2258 = vsel %vm2002, %v1874, %v2130
        %v2259 = vsel %vm2003, %v1875, %v2131
        %v2260 = vsel %vm2004, %v1876, %v2132
        %v2261 = vsel %vm2005, %v1877, %v2133
        %v2262 = vsel %vm2006, %v1878, %v2134
        %v2263 = vsel %vm2007, %v1879, %v2135
        %v2264 = vsel %vm2008, %v1880, %v2136
        %v2265 = vsel %vm2009, %v1881, %v2137
        %v2266 = vsel %vm2010, %v1882, %v2138
        %v2267 = vsel %vm2011, %v1883, %v2139
        %v2268 = vsel %vm2012, %v1884, %v2140
        %v2269 = vsel %vm2013, %v1885, %v2141
        %v2270 = vsel %vm2014, %v1886, %v2142
        %v2271 = vsel %vm2015, %v1887, %v2143
        %v2272 = vsel %vm2016, %v1888, %v2144
        %v2273 = vsel %vm2017, %v1889, %v2145
        %v2274 = vsel %vm2018, %v1890, %v2146
        %v2275 = vsel %vm2019, %v1891, %v2147
        %v2276 = vsel %vm2020, %v1892, %v2148
        %v2277 = vsel %vm2021, %v1893, %v2149
        %v2278 = vsel %vm2022, %v1894, %v2150
        %v2279 = vsel %vm2023, %v1895, %v2151
        %v2280 = vsel %vm2024, %v1896, %v2152
        %v2281 = vsel %vm2025, %v1897, %v2153
        %v2282 = vsel %vm2026, %v1898, %v2154
        %v2283 = vsel %vm2027, %v1899, %v2155
        %v2284 = vsel %vm2028, %v1900, %v2156
        %v2285 = vsel %vm2029, %v1901, %v2157
        %v2286 = vsel %vm2030, %v1902, %v2158
        %v2287 = vsel %vm2031, %v1903, %v2159
        %v2288 = vsel %vm2032, %v1904, %v2160
        %v2289 = vsel %vm2033, %v1905, %v2161
        %v2290 = vsel %vm2034, %v1906, %v2162
        %v2291 = vsel %vm2035, %v1907, %v2163
        %v2292 = vsel %vm2036, %v1908, %v2164
        %v2293 = vsel %vm2037, %v1909, %v2165
        %v2294 = vsel %vm2038, %v1910, %v2166
        %v2295 = vsel %vm2039, %v1911, %v2167
        %v2296 = vsel %vm2040, %v1912, %v2168
        %v2297 = vsel %vm2041, %v1913, %v2169
        %v2298 = vsel %vm2042, %v1914, %v2170
        %v2299 = vsel %vm2043, %v1915, %v2171
        %v2300 = vsel %vm2044, %v1916, %v2172
        %v2301 = vsel %vm2045, %v1917, %v2173
        %v2302 = vsel %vm2046, %v1918, %v2174
        %v2303 = vsel %vm2047, %v1919, %v2175
        %v2304 = vsel %vm2048, %v1920, %v2176
        %v2305 = vsel %vm2049, %v1921, %v2177
        %v2306 = vsel %vm2050, %v1922, %v2178
        %v2307 = vsel %vm2051, %v1923, %v2179
        %v2308 = vsel %vm2052, %v1924, %v2180
        %v2309 = vsel %vm2053, %v1925, %v2181
        %v2310 = vsel %vm2054, %v1926, %v2182
        %v2311 = vsel %vm2055, %v1927, %v2183
        %v2312 = vsel %vm2056, %v1928, %v2184
        %v2313 = vsel %vm2057, %v1929, %v2185
        %v2314 = vsel %vm2058, %v1930, %v2186
        %v2315 = vsel %vm2059, %v1931, %v2187
        %v2316 = vsel %vm2060, %v1932, %v2188
        %v2317 = vsel %vm2061, %v1933, %v2189
        %v2318 = vsel %vm2062, %v1934, %v2190
        %v2319 = vsel %vm2063, %v1935, %v2191
        %v2320 = vsel %vm2064, %v1936, %v2192
        %v2321 = vsel %vm2065, %v1937, %v2193
        %v2322 = vsel %vm2066, %v1938, %v2194
        %v2323 = vsel %vm2067, %v1939, %v2195
        %v2324 = vsel %vm2068, %v1940, %v2196
        %v2325 = vsel %vm2069, %v1941, %v2197
        %v2326 = vsel %vm2070, %v1942, %v2198
        %v2327 = vpack.c.bf16 %v2199, %v2199
        %v2328 = vpack.c.bf16 %v2200, %v2200
        %v2329 = vpack.c.bf16 %v2201, %v2201
        %v2330 = vpack.c.bf16 %v2202, %v2202
        %v2331 = vpack.c.bf16 %v2203, %v2203
        %v2332 = vpack.c.bf16 %v2204, %v2204
        %v2333 = vpack.c.bf16 %v2205, %v2205
        %v2334 = vpack.c.bf16 %v2206, %v2206
        %v2335 = vpack.c.bf16 %v2207, %v2207
        %v2336 = vpack.c.bf16 %v2208, %v2208
        %v2337 = vpack.c.bf16 %v2209, %v2209
        %v2338 = vpack.c.bf16 %v2210, %v2210
        %v2339 = vpack.c.bf16 %v2211, %v2211
        %v2340 = vpack.c.bf16 %v2212, %v2212
        %v2341 = vpack.c.bf16 %v2213, %v2213
        %v2342 = vpack.c.bf16 %v2214, %v2214
        %v2343 = vpack.c.bf16 %v2215, %v2215
        %v2344 = vpack.c.bf16 %v2216, %v2216
        %v2345 = vpack.c.bf16 %v2217, %v2217
        %v2346 = vpack.c.bf16 %v2218, %v2218
        %v2347 = vpack.c.bf16 %v2219, %v2219
        %v2348 = vpack.c.bf16 %v2220, %v2220
        %v2349 = vpack.c.bf16 %v2221, %v2221
        %v2350 = vpack.c.bf16 %v2222, %v2222
        %v2351 = vpack.c.bf16 %v2223, %v2223
        %v2352 = vpack.c.bf16 %v2224, %v2224
        %v2353 = vpack.c.bf16 %v2225, %v2225
        %v2354 = vpack.c.bf16 %v2226, %v2226
        %v2355 = vpack.c.bf16 %v2227, %v2227
        %v2356 = vpack.c.bf16 %v2228, %v2228
        %v2357 = vpack.c.bf16 %v2229, %v2229
        %v2358 = vpack.c.bf16 %v2230, %v2230
        %v2359 = vpack.c.bf16 %v2231, %v2231
        %v2360 = vpack.c.bf16 %v2232, %v2232
        %v2361 = vpack.c.bf16 %v2233, %v2233
        %v2362 = vpack.c.bf16 %v2234, %v2234
        %v2363 = vpack.c.bf16 %v2235, %v2235
        %v2364 = vpack.c.bf16 %v2236, %v2236
        %v2365 = vpack.c.bf16 %v2237, %v2237
        %v2366 = vpack.c.bf16 %v2238, %v2238
        %v2367 = vpack.c.bf16 %v2239, %v2239
        %v2368 = vpack.c.bf16 %v2240, %v2240
        %v2369 = vpack.c.bf16 %v2241, %v2241
        %v2370 = vpack.c.bf16 %v2242, %v2242
        %v2371 = vpack.c.bf16 %v2243, %v2243
        %v2372 = vpack.c.bf16 %v2244, %v2244
        %v2373 = vpack.c.bf16 %v2245, %v2245
        %v2374 = vpack.c.bf16 %v2246, %v2246
        %v2375 = vpack.c.bf16 %v2247, %v2247
        %v2376 = vpack.c.bf16 %v2248, %v2248
        %v2377 = vpack.c.bf16 %v2249, %v2249
        %v2378 = vpack.c.bf16 %v2250, %v2250
        %v2379 = vpack.c.bf16 %v2251, %v2251
        %v2380 = vpack.c.bf16 %v2252, %v2252
        %v2381 = vpack.c.bf16 %v2253, %v2253
        %v2382 = vpack.c.bf16 %v2254, %v2254
        %v2383 = vpack.c.bf16 %v2255, %v2255
        %v2384 = vpack.c.bf16 %v2256, %v2256
        %v2385 = vpack.c.bf16 %v2257, %v2257
        %v2386 = vpack.c.bf16 %v2258, %v2258
        %v2387 = vpack.c.bf16 %v2259, %v2259
        %v2388 = vpack.c.bf16 %v2260, %v2260
        %v2389 = vpack.c.bf16 %v2261, %v2261
        %v2390 = vpack.c.bf16 %v2262, %v2262
        %v2391 = vpack.c.bf16 %v2263, %v2263
        %v2392 = vpack.c.bf16 %v2264, %v2264
        %v2393 = vpack.c.bf16 %v2265, %v2265
        %v2394 = vpack.c.bf16 %v2266, %v2266
        %v2395 = vpack.c.bf16 %v2267, %v2267
        %v2396 = vpack.c.bf16 %v2268, %v2268
        %v2397 = vpack.c.bf16 %v2269, %v2269
        %v2398 = vpack.c.bf16 %v2270, %v2270
        %v2399 = vpack.c.bf16 %v2271, %v2271
        %v2400 = vpack.c.bf16 %v2272, %v2272
        %v2401 = vpack.c.bf16 %v2273, %v2273
        %v2402 = vpack.c.bf16 %v2274, %v2274
        %v2403 = vpack.c.bf16 %v2275, %v2275
        %v2404 = vpack.c.bf16 %v2276, %v2276
        %v2405 = vpack.c.bf16 %v2277, %v2277
        %v2406 = vpack.c.bf16 %v2278, %v2278
        %v2407 = vpack.c.bf16 %v2279, %v2279
        %v2408 = vpack.c.bf16 %v2280, %v2280
        %v2409 = vpack.c.bf16 %v2281, %v2281
        %v2410 = vpack.c.bf16 %v2282, %v2282
        %v2411 = vpack.c.bf16 %v2283, %v2283
        %v2412 = vpack.c.bf16 %v2284, %v2284
        %v2413 = vpack.c.bf16 %v2285, %v2285
        %v2414 = vpack.c.bf16 %v2286, %v2286
        %v2415 = vpack.c.bf16 %v2287, %v2287
        %v2416 = vpack.c.bf16 %v2288, %v2288
        %v2417 = vpack.c.bf16 %v2289, %v2289
        %v2418 = vpack.c.bf16 %v2290, %v2290
        %v2419 = vpack.c.bf16 %v2291, %v2291
        %v2420 = vpack.c.bf16 %v2292, %v2292
        %v2421 = vpack.c.bf16 %v2293, %v2293
        %v2422 = vpack.c.bf16 %v2294, %v2294
        %v2423 = vpack.c.bf16 %v2295, %v2295
        %v2424 = vpack.c.bf16 %v2296, %v2296
        %v2425 = vpack.c.bf16 %v2297, %v2297
        %v2426 = vpack.c.bf16 %v2298, %v2298
        %v2427 = vpack.c.bf16 %v2299, %v2299
        %v2428 = vpack.c.bf16 %v2300, %v2300
        %v2429 = vpack.c.bf16 %v2301, %v2301
        %v2430 = vpack.c.bf16 %v2302, %v2302
        %v2431 = vpack.c.bf16 %v2303, %v2303
        %v2432 = vpack.c.bf16 %v2304, %v2304
        %v2433 = vpack.c.bf16 %v2305, %v2305
        %v2434 = vpack.c.bf16 %v2306, %v2306
        %v2435 = vpack.c.bf16 %v2307, %v2307
        %v2436 = vpack.c.bf16 %v2308, %v2308
        %v2437 = vpack.c.bf16 %v2309, %v2309
        %v2438 = vpack.c.bf16 %v2310, %v2310
        %v2439 = vpack.c.bf16 %v2311, %v2311
        %v2440 = vpack.c.bf16 %v2312, %v2312
        %v2441 = vpack.c.bf16 %v2313, %v2313
        %v2442 = vpack.c.bf16 %v2314, %v2314
        %v2443 = vpack.c.bf16 %v2315, %v2315
        %v2444 = vpack.c.bf16 %v2316, %v2316
        %v2445 = vpack.c.bf16 %v2317, %v2317
        %v2446 = vpack.c.bf16 %v2318, %v2318
        %v2447 = vpack.c.bf16 %v2319, %v2319
        %v2448 = vpack.c.bf16 %v2320, %v2320
        %v2449 = vpack.c.bf16 %v2321, %v2321
        %v2450 = vpack.c.bf16 %v2322, %v2322
        %v2451 = vpack.c.bf16 %v2323, %v2323
        %v2452 = vpack.c.bf16 %v2324, %v2324
        %v2453 = vpack.c.bf16 %v2325, %v2325
        %v2454 = vpack.c.bf16 %v2326, %v2326
        %2455 = vst [vmem:[%s257] sm:$0xf] %v2327
        %2456 = vst [vmem:[%s257 + $0x4] sm:$0xf] %v2328
        %2457 = vst [vmem:[%s257 + $0x8] sm:$0xf] %v2329
        %2458 = vst [vmem:[%s257 + $0xc] sm:$0xf] %v2330
        %2459 = vst [vmem:[%s257 + $0x10] sm:$0xf] %v2331
        %2460 = vst [vmem:[%s257 + $0x14] sm:$0xf] %v2332
        %2461 = vst [vmem:[%s257 + $0x18] sm:$0xf] %v2333
        %2462 = vst [vmem:[%s257 + $0x1c] sm:$0xf] %v2334
        %2463 = vst [vmem:[%s257 + $0x20] sm:$0xf] %v2335
        %2464 = vst [vmem:[%s257 + $0x24] sm:$0xf] %v2336
        %2465 = vst [vmem:[%s257 + $0x28] sm:$0xf] %v2337
        %2466 = vst [vmem:[%s257 + $0x2c] sm:$0xf] %v2338
        %2467 = vst [vmem:[%s257 + $0x30] sm:$0xf] %v2339
        %2468 = vst [vmem:[%s257 + $0x34] sm:$0xf] %v2340
        %2469 = vst [vmem:[%s257 + $0x38] sm:$0xf] %v2341
        %2470 = vst [vmem:[%s257 + $0x3c] sm:$0xf] %v2342
        %2471 = vst [vmem:[%s257 + $0x40] sm:$0xf] %v2343
        %2472 = vst [vmem:[%s257 + $0x44] sm:$0xf] %v2344
        %2473 = vst [vmem:[%s257 + $0x48] sm:$0xf] %v2345
        %2474 = vst [vmem:[%s257 + $0x4c] sm:$0xf] %v2346
        %2475 = vst [vmem:[%s257 + $0x50] sm:$0xf] %v2347
        %2476 = vst [vmem:[%s257 + $0x54] sm:$0xf] %v2348
        %2477 = vst [vmem:[%s257 + $0x58] sm:$0xf] %v2349
        %2478 = vst [vmem:[%s257 + $0x5c] sm:$0xf] %v2350
        %2479 = vst [vmem:[%s257 + $0x60] sm:$0xf] %v2351
        %2480 = vst [vmem:[%s257 + $0x64] sm:$0xf] %v2352
        %2481 = vst [vmem:[%s257 + $0x68] sm:$0xf] %v2353
        %2482 = vst [vmem:[%s257 + $0x6c] sm:$0xf] %v2354
        %2483 = vst [vmem:[%s257 + $0x70] sm:$0xf] %v2355
        %2484 = vst [vmem:[%s257 + $0x74] sm:$0xf] %v2356
        %2485 = vst [vmem:[%s257 + $0x78] sm:$0xf] %v2357
        %2486 = vst [vmem:[%s257 + $0x7c] sm:$0xf] %v2358
        %2487 = vst [vmem:[%s257 + $0x80] sm:$0xf] %v2359
        %2488 = vst [vmem:[%s257 + $0x84] sm:$0xf] %v2360
        %2489 = vst [vmem:[%s257 + $0x88] sm:$0xf] %v2361
        %2490 = vst [vmem:[%s257 + $0x8c] sm:$0xf] %v2362
        %2491 = vst [vmem:[%s257 + $0x90] sm:$0xf] %v2363
        %2492 = vst [vmem:[%s257 + $0x94] sm:$0xf] %v2364
        %2493 = vst [vmem:[%s257 + $0x98] sm:$0xf] %v2365
        %2494 = vst [vmem:[%s257 + $0x9c] sm:$0xf] %v2366
        %2495 = vst [vmem:[%s257 + $0xa0] sm:$0xf] %v2367
        %2496 = vst [vmem:[%s257 + $0xa4] sm:$0xf] %v2368
        %2497 = vst [vmem:[%s257 + $0xa8] sm:$0xf] %v2369
        %2498 = vst [vmem:[%s257 + $0xac] sm:$0xf] %v2370
        %2499 = vst [vmem:[%s257 + $0xb0] sm:$0xf] %v2371
        %2500 = vst [vmem:[%s257 + $0xb4] sm:$0xf] %v2372
        %2501 = vst [vmem:[%s257 + $0xb8] sm:$0xf] %v2373
        %2502 = vst [vmem:[%s257 + $0xbc] sm:$0xf] %v2374
        %2503 = vst [vmem:[%s257 + $0xc0] sm:$0xf] %v2375
        %2504 = vst [vmem:[%s257 + $0xc4] sm:$0xf] %v2376
        %2505 = vst [vmem:[%s257 + $0xc8] sm:$0xf] %v2377
        %2506 = vst [vmem:[%s257 + $0xcc] sm:$0xf] %v2378
        %2507 = vst [vmem:[%s257 + $0xd0] sm:$0xf] %v2379
        %2508 = vst [vmem:[%s257 + $0xd4] sm:$0xf] %v2380
        %2509 = vst [vmem:[%s257 + $0xd8] sm:$0xf] %v2381
        %2510 = vst [vmem:[%s257 + $0xdc] sm:$0xf] %v2382
        %2511 = vst [vmem:[%s257 + $0xe0] sm:$0xf] %v2383
        %2512 = vst [vmem:[%s257 + $0xe4] sm:$0xf] %v2384
        %2513 = vst [vmem:[%s257 + $0xe8] sm:$0xf] %v2385
        %2514 = vst [vmem:[%s257 + $0xec] sm:$0xf] %v2386
        %2515 = vst [vmem:[%s257 + $0xf0] sm:$0xf] %v2387
        %2516 = vst [vmem:[%s257 + $0xf4] sm:$0xf] %v2388
        %2517 = vst [vmem:[%s257 + $0xf8] sm:$0xf] %v2389
        %2518 = vst [vmem:[%s257 + $0xfc] sm:$0xf] %v2390
        %2519 = vst [vmem:[%s257 + $0x100] sm:$0xf] %v2391
        %2520 = vst [vmem:[%s257 + $0x104] sm:$0xf] %v2392
        %2521 = vst [vmem:[%s257 + $0x108] sm:$0xf] %v2393
        %2522 = vst [vmem:[%s257 + $0x10c] sm:$0xf] %v2394
        %2523 = vst [vmem:[%s257 + $0x110] sm:$0xf] %v2395
        %2524 = vst [vmem:[%s257 + $0x114] sm:$0xf] %v2396
        %2525 = vst [vmem:[%s257 + $0x118] sm:$0xf] %v2397
        %2526 = vst [vmem:[%s257 + $0x11c] sm:$0xf] %v2398
        %2527 = vst [vmem:[%s257 + $0x120] sm:$0xf] %v2399
        %2528 = vst [vmem:[%s257 + $0x124] sm:$0xf] %v2400
        %2529 = vst [vmem:[%s257 + $0x128] sm:$0xf] %v2401
        %2530 = vst [vmem:[%s257 + $0x12c] sm:$0xf] %v2402
        %2531 = vst [vmem:[%s257 + $0x130] sm:$0xf] %v2403
        %2532 = vst [vmem:[%s257 + $0x134] sm:$0xf] %v2404
        %2533 = vst [vmem:[%s257 + $0x138] sm:$0xf] %v2405
        %2534 = vst [vmem:[%s257 + $0x13c] sm:$0xf] %v2406
        %2535 = vst [vmem:[%s257 + $0x140] sm:$0xf] %v2407
        %2536 = vst [vmem:[%s257 + $0x144] sm:$0xf] %v2408
        %2537 = vst [vmem:[%s257 + $0x148] sm:$0xf] %v2409
        %2538 = vst [vmem:[%s257 + $0x14c] sm:$0xf] %v2410
        %2539 = vst [vmem:[%s257 + $0x150] sm:$0xf] %v2411
        %2540 = vst [vmem:[%s257 + $0x154] sm:$0xf] %v2412
        %2541 = vst [vmem:[%s257 + $0x158] sm:$0xf] %v2413
        %2542 = vst [vmem:[%s257 + $0x15c] sm:$0xf] %v2414
        %2543 = vst [vmem:[%s257 + $0x160] sm:$0xf] %v2415
        %2544 = vst [vmem:[%s257 + $0x164] sm:$0xf] %v2416
        %2545 = vst [vmem:[%s257 + $0x168] sm:$0xf] %v2417
        %2546 = vst [vmem:[%s257 + $0x16c] sm:$0xf] %v2418
        %2547 = vst [vmem:[%s257 + $0x170] sm:$0xf] %v2419
        %2548 = vst [vmem:[%s257 + $0x174] sm:$0xf] %v2420
        %2549 = vst [vmem:[%s257 + $0x178] sm:$0xf] %v2421
        %2550 = vst [vmem:[%s257 + $0x17c] sm:$0xf] %v2422
        %2551 = vst [vmem:[%s257 + $0x180] sm:$0xf] %v2423
        %2552 = vst [vmem:[%s257 + $0x184] sm:$0xf] %v2424
        %2553 = vst [vmem:[%s257 + $0x188] sm:$0xf] %v2425
        %2554 = vst [vmem:[%s257 + $0x18c] sm:$0xf] %v2426
        %2555 = vst [vmem:[%s257 + $0x190] sm:$0xf] %v2427
        %2556 = vst [vmem:[%s257 + $0x194] sm:$0xf] %v2428
        %2557 = vst [vmem:[%s257 + $0x198] sm:$0xf] %v2429
        %2558 = vst [vmem:[%s257 + $0x19c] sm:$0xf] %v2430
        %2559 = vst [vmem:[%s257 + $0x1a0] sm:$0xf] %v2431
        %2560 = vst [vmem:[%s257 + $0x1a4] sm:$0xf] %v2432
        %2561 = vst [vmem:[%s257 + $0x1a8] sm:$0xf] %v2433
        %2562 = vst [vmem:[%s257 + $0x1ac] sm:$0xf] %v2434
        %2563 = vst [vmem:[%s257 + $0x1b0] sm:$0xf] %v2435
        %2564 = vst [vmem:[%s257 + $0x1b4] sm:$0xf] %v2436
        %2565 = vst [vmem:[%s257 + $0x1b8] sm:$0xf] %v2437
        %2566 = vst [vmem:[%s257 + $0x1bc] sm:$0xf] %v2438
        %2567 = vst [vmem:[%s257 + $0x1c0] sm:$0xf] %v2439
        %2568 = vst [vmem:[%s257 + $0x1c4] sm:$0xf] %v2440
        %2569 = vst [vmem:[%s257 + $0x1c8] sm:$0xf] %v2441
        %2570 = vst [vmem:[%s257 + $0x1cc] sm:$0xf] %v2442
        %2571 = vst [vmem:[%s257 + $0x1d0] sm:$0xf] %v2443
        %2572 = vst [vmem:[%s257 + $0x1d4] sm:$0xf] %v2444
        %2573 = vst [vmem:[%s257 + $0x1d8] sm:$0xf] %v2445
        %2574 = vst [vmem:[%s257 + $0x1dc] sm:$0xf] %v2446
        %2575 = vst [vmem:[%s257 + $0x1e0] sm:$0xf] %v2447
        %2576 = vst [vmem:[%s257 + $0x1e4] sm:$0xf] %v2448
        %2577 = vst [vmem:[%s257 + $0x1e8] sm:$0xf] %v2449
        %2578 = vst [vmem:[%s257 + $0x1ec] sm:$0xf] %v2450
        %2579 = vst [vmem:[%s257 + $0x1f0] sm:$0xf] %v2451
        %2580 = vst [vmem:[%s257 + $0x1f4] sm:$0xf] %v2452
        %2581 = vst [vmem:[%s257 + $0x1f8] sm:$0xf] %v2453
        %2582 = vst [vmem:[%s257 + $0x1fc] sm:$0xf] %v2454
      $region40: #{discriminator_forward.8} parent=31 // pred_fallthru
        _
      %s2583 = smul.u32 128, %s19
      %p2584 = scmp.lt.s32.totalorder %s2583, 255
      %s2585 = scalar_select %p2584, %s2583, 255
      %p2586 = scmp.lt.s32.totalorder %s20, 0
      %s2587 = scalar_select %p2586, %s20, 0
      %s2588 = sadd.s32 %s2587, %s2585
      %s2589 = smul.addr %s2588, 4
      %s2590 = scalar_lea.vmem %s3, %s2589
      // Predicated region
      $region41: #{discriminator_forward.8} parent=31 // pred_check
        %p2591 = pneg %p135
      $region42: #{discriminator_forward.8} parent=31 // pred_check_branch
        %2593 = sbr.rel (%p2591) target = $region44
      $region43: #{discriminator_forward.8} parent=31 // pred_region
        %s2594 = smul.u32 128, %s19
      $region44: #{discriminator_forward.8} parent=31 // pred_fallthru
        _
    $region32: #{discriminator_forward.8} parent=5 // pred_fallthru
      _
    %p2595 = scmp.le.s32.totalorder 2, %s9
    // Predicated region
    $region45: #{discriminator_forward.8} parent=5 // pred_check
      %p2596 = pneg %p2595
    $region46: #{discriminator_forward.8} parent=5 // pred_check_branch
      %2598 = sbr.rel (%p2596) target = $region48
    $region47: #{discriminator_forward.8} parent=5 // pred_region
      %s2599 = ssub.s32 %s9, 2
      // Predicated region
      $region49: #{discriminator_forward.8} parent=47 // pred_check
        %p2600 = pneg %p141
      $region50: #{discriminator_forward.8} parent=47 // pred_check_branch
        %2602 = sbr.rel (%p2600) target = $region52
      $region51: #{discriminator_forward.8} parent=47 // pred_region
        %s2603 = smul.u32 128, %s22
        %p2604 = scmp.lt.s32.totalorder %s2603, 255
        %s2605 = scalar_select %p2604, %s2603, 255
        %p2606 = scmp.lt.s32.totalorder %s23, 0
        %s2607 = scalar_select %p2606, %s23, 0
        %s2608 = sadd.s32 %s2607, %s2605
        %s2609 = smul.addr %s2608, 4
        %s2610 = scalar_lea.vmem %s3, %s2609
      $region52: #{discriminator_forward.8} parent=47 // pred_fallthru
        _
    $region48: #{discriminator_forward.8} parent=5 // pred_fallthru
      _
  $region6: #{discriminator_forward.8} parent=0 // loop_footer
    %s13 = sadd.s32 1, %s9
  $region7: #{discriminator_forward.8} parent=0 // loop_footer_branch
    %8 = sbr.rel target = $region3
  $region8: #{discriminator_forward.8} parent=0 // loop_exit
    _

// kernel: discriminator_forward.9
$region0: #{discriminator_forward.9}
  #allocation0 [shape = 'u32[]', space=smem, size = 0x4, offset = 0x4, fixed_abs, tag = 'smem constant byte address 0x4 - core index']
  #allocation1 [shape = 'u32[72,128]{1,0:T(1,128)}', space=vmem, size = 0x9000, scoped, tag = 'internal scratch']
  #allocation2 [shape = 'f32[256,128]{1,0:T(8,128)}', space=vmem, size = 0x20000, scoped, tag = 'scratch operand']
  %s0 = inlined_call_operand.vmem [shape: bf16[512,2048], index: 0, kind: input, shape index: {}]
  %s1 = inlined_call_operand.vmem [shape: bf16[2048,128], index: 1, kind: input, shape index: {}]
  %s2 = inlined_call_operand.vmem [shape: f32[1,128], index: 2, kind: input, shape index: {}]
  %s3 = inlined_call_operand.vmem [shape: bf16[512,128], index: 3, kind: output, shape index: {0}]
  %s4 = inlined_call_operand.vmem [shape: f32[2,1,128], index: 4, kind: output, shape index: {1}]
  %s5 = inlined_call_operand.vmem [shape: f32[2,1,128], index: 5, kind: output, shape index: {2}]
  %6 = xla_tuple %s3, %s4, %s5
  %s7 = sld [smem:[#allocation0]]
  $region92: #{discriminator_forward.9} parent=0
    _
  %s9 = ssub.s32 1, %s7
  %s10 = scalar_select 0, %s9, %s7
  $region1: #{discriminator_forward.9} parent=0
    #allocation3 [shape = 'u8[1048576]{0}', space=vmem, size = 0x100000, scoped, tag = 'input window, operand 0']
    loop: start=0, step=1, limit=6
    $region2: #{discriminator_forward.9} parent=1 // loop_pre_header
      _
    $region3: #{discriminator_forward.9} parent=1 // loop_header
      %s12 = sphi 0, %s16
      %p13 = scmp.ge.s32.totalorder %s12, 6
      %s19 = sphi 0, %s38
      %s20 = sphi 0, %s34
      %s21 = sphi 0, %s30
      %s22 = sphi 0, %s19
      %s23 = sphi 0, %s20
      %s24 = sphi 0, %s21
      %s25 = sphi 0, %s22
      %s26 = sphi 0, %s23
      %s27 = sphi 0, %s24
      %s43 = sphi 0, %s45
      %s46 = sphi 0, %s43
      %s47 = sphi 0, %s46
      %s63 = sphi 0, %s47
      %s71 = sphi 0, %s73
      %s74 = sphi 0, %s71
      %s75 = sphi 0, %s74
      %s91 = sphi 0, %s75
      %s97 = sphi 0, %s99
      %s100 = sphi 0, %s97
      %s101 = sphi 0, %s100
      %s117 = sphi 0, %s101
      %s125 = sphi 0, %s127
      %s128 = sphi 0, %s125
      %s129 = sphi 0, %s128
      %s145 = sphi 0, %s129
      %s153 = sphi 0, %s155
      %s156 = sphi 0, %s153
      %s157 = sphi 0, %s156
      %s173 = sphi 0, %s157
      %s181 = sphi 0, %s183
      %s184 = sphi 0, %s181
      %s185 = sphi 0, %s184
      %s201 = sphi 0, %s185
    $region4: #{discriminator_forward.9} parent=1 // loop_header_branch
      %15 = sbr.rel (%p13) target = $region8
    $region5: #{discriminator_forward.9} parent=1 // loop_body
      %s17 = ssub.s32 %s12, 1
      %s18 = ssub.s32 %s12, 2
      %s28 = sadd.s32 1, %s21
      %p29 = scmp.ge.s32.totalorder %s28, 2
      %s30 = scalar_select %p29, 0, %s28
      %s31 = sadd.s32 1, %s20
      %s32 = scalar_select %p29, %s31, %s20
      %p33 = scmp.ge.s32.totalorder %s32, 1
      %s34 = scalar_select %p33, 0, %s32
      %s35 = sadd.s32 1, %s19
      %s36 = scalar_select %p33, %s35, %s19
      %p37 = scmp.ge.s32.totalorder %s36, 2
      %s38 = scalar_select %p37, 0, %s36
      %s39 = ssub.s32 %s19, %s38
      %s40 = ssub.s32 %s21, %s30
      %s41 = sor.u32 %s39, %s40
      %p42 = scmp.eq.s32.totalorder %s41, 0
      %s44 = sadd.s32 %s43, 1
      %s45 = scalar_select %p42, %s43, %s44
      %p48 = pneg %p42
      %p49 = scmp.eq.s32.totalorder %s12, 3
      %p50 = por %p48, %p49
      %p51 = scmp.ne.s32.totalorder %s43, %s46
      %p52 = scmp.eq.s32.totalorder %s12, 0
      %p53 = por %p51, %p52
      %p54 = scmp.ne.s32.totalorder %s43, %s46
      %p55 = scmp.eq.s32.totalorder %s17, 3
      %p56 = por %p54, %p55
      %p57 = scmp.ne.s32.totalorder %s46, %s47
      %p58 = scmp.eq.s32.totalorder %s17, 0
      %p59 = por %p57, %p58
      %p60 = scmp.ne.s32.totalorder %s46, %s47
      %p61 = scmp.eq.s32.totalorder %s18, 3
      %p62 = por %p60, %p61
      %p64 = scmp.ne.s32.totalorder %s47, %s63
      %p65 = scmp.eq.s32.totalorder %s18, 0
      %p66 = por %p64, %p65
      %s67 = ssub.s32 %s21, %s30
      %s68 = ssub.s32 %s20, %s34
      %s69 = sor.u32 %s67, %s68
      %p70 = scmp.eq.s32.totalorder %s69, 0
      %s72 = sadd.s32 %s71, 1
      %s73 = scalar_select %p70, %s71, %s72
      %p76 = pneg %p70
      %p77 = scmp.eq.s32.totalorder %s12, 3
      %p78 = por %p76, %p77
      %p79 = scmp.ne.s32.totalorder %s71, %s74
      %p80 = scmp.eq.s32.totalorder %s12, 0
      %p81 = por %p79, %p80
      %p82 = scmp.ne.s32.totalorder %s71, %s74
      %p83 = scmp.eq.s32.totalorder %s17, 3
      %p84 = por %p82, %p83
      %p85 = scmp.ne.s32.totalorder %s74, %s75
      %p86 = scmp.eq.s32.totalorder %s17, 0
      %p87 = por %p85, %p86
      %p88 = scmp.ne.s32.totalorder %s74, %s75
      %p89 = scmp.eq.s32.totalorder %s18, 3
      %p90 = por %p88, %p89
      %p92 = scmp.ne.s32.totalorder %s75, %s91
      %p93 = scmp.eq.s32.totalorder %s18, 0
      %p94 = por %p92, %p93
      %s95 = ssub.s32 %s20, %s34
      %p96 = scmp.eq.s32.totalorder %s95, 0
      %s98 = sadd.s32 %s97, 1
      %s99 = scalar_select %p96, %s97, %s98
      %p102 = pneg %p96
      %p103 = scmp.eq.s32.totalorder %s12, 3
      %p104 = por %p102, %p103
      %p105 = scmp.ne.s32.totalorder %s97, %s100
      %p106 = scmp.eq.s32.totalorder %s12, 0
      %p107 = por %p105, %p106
      %p108 = scmp.ne.s32.totalorder %s97, %s100
      %p109 = scmp.eq.s32.totalorder %s17, 3
      %p110 = por %p108, %p109
      %p111 = scmp.ne.s32.totalorder %s100, %s101
      %p112 = scmp.eq.s32.totalorder %s17, 0
      %p113 = por %p111, %p112
      %p114 = scmp.ne.s32.totalorder %s100, %s101
      %p115 = scmp.eq.s32.totalorder %s18, 3
      %p116 = por %p114, %p115
      %p118 = scmp.ne.s32.totalorder %s101, %s117
      %p119 = scmp.eq.s32.totalorder %s18, 0
      %p120 = por %p118, %p119
      %s121 = ssub.s32 %s19, %s38
      %s122 = ssub.s32 %s20, %s34
      %s123 = sor.u32 %s121, %s122
      %p124 = scmp.eq.s32.totalorder %s123, 0
      %s126 = sadd.s32 %s125, 1
      %s127 = scalar_select %p124, %s125, %s126
      %p130 = pneg %p124
      %p131 = scmp.eq.s32.totalorder %s12, 3
      %p132 = por %p130, %p131
      %p133 = scmp.ne.s32.totalorder %s125, %s128
      %p134 = scmp.eq.s32.totalorder %s12, 0
      %p135 = por %p133, %p134
      %p136 = scmp.ne.s32.totalorder %s125, %s128
      %p137 = scmp.eq.s32.totalorder %s17, 3
      %p138 = por %p136, %p137
      %p139 = scmp.ne.s32.totalorder %s128, %s129
      %p140 = scmp.eq.s32.totalorder %s17, 0
      %p141 = por %p139, %p140
      %p142 = scmp.ne.s32.totalorder %s128, %s129
      %p143 = scmp.eq.s32.totalorder %s18, 3
      %p144 = por %p142, %p143
      %p146 = scmp.ne.s32.totalorder %s129, %s145
      %p147 = scmp.eq.s32.totalorder %s18, 0
      %p148 = por %p146, %p147
      %s149 = ssub.s32 %s19, %s38
      %s150 = ssub.s32 %s20, %s34
      %s151 = sor.u32 %s149, %s150
      %p152 = scmp.eq.s32.totalorder %s151, 0
      %s154 = sadd.s32 %s153, 1
      %s155 = scalar_select %p152, %s153, %s154
      %p158 = pneg %p152
      %p159 = scmp.eq.s32.totalorder %s12, 3
      %p160 = por %p158, %p159
      %p161 = scmp.ne.s32.totalorder %s153, %s156
      %p162 = scmp.eq.s32.totalorder %s12, 0
      %p163 = por %p161, %p162
      %p164 = scmp.ne.s32.totalorder %s153, %s156
      %p165 = scmp.eq.s32.totalorder %s17, 3
      %p166 = por %p164, %p165
      %p167 = scmp.ne.s32.totalorder %s156, %s157
      %p168 = scmp.eq.s32.totalorder %s17, 0
      %p169 = por %p167, %p168
      %p170 = scmp.ne.s32.totalorder %s156, %s157
      %p171 = scmp.eq.s32.totalorder %s18, 3
      %p172 = por %p170, %p171
      %p174 = scmp.ne.s32.totalorder %s157, %s173
      %p175 = scmp.eq.s32.totalorder %s18, 0
      %p176 = por %p174, %p175
      %s177 = ssub.s32 %s19, %s38
      %s178 = ssub.s32 %s20, %s34
      %s179 = sor.u32 %s177, %s178
      %p180 = scmp.eq.s32.totalorder %s179, 0
      %s182 = sadd.s32 %s181, 1
      %s183 = scalar_select %p180, %s181, %s182
      %p186 = pneg %p180
      %p187 = scmp.eq.s32.totalorder %s12, 3
      %p188 = por %p186, %p187
      %p189 = scmp.ne.s32.totalorder %s181, %s184
      %p190 = scmp.eq.s32.totalorder %s12, 0
      %p191 = por %p189, %p190
      %p192 = scmp.ne.s32.totalorder %s181, %s184
      %p193 = scmp.eq.s32.totalorder %s17, 3
      %p194 = por %p192, %p193
      %p195 = scmp.ne.s32.totalorder %s184, %s185
      %p196 = scmp.eq.s32.totalorder %s17, 0
      %p197 = por %p195, %p196
      %p198 = scmp.ne.s32.totalorder %s184, %s185
      %p199 = scmp.eq.s32.totalorder %s18, 3
      %p200 = por %p198, %p199
      %p202 = scmp.ne.s32.totalorder %s185, %s201
      %p203 = scmp.eq.s32.totalorder %s18, 0
      %p204 = por %p202, %p203
      %p205 = scmp.le.s32.totalorder 1, %s12
      %p206 = scmp.lt.s32.totalorder %s12, 5
      %p207 = pnand %p205, %p206
      %p208 = pneg %p207
      // Predicated region
      $region9: #{discriminator_forward.9} parent=5 // pred_check
        _
      $region10: #{discriminator_forward.9} parent=5 // pred_check_branch
        %210 = sbr.rel (%p207) target = $region12
      $region11: #{discriminator_forward.9} parent=5 // pred_region
        %s211 = ssub.s32 %s12, 1
        // Predicated region
        $region13: #{discriminator_forward.9} parent=11 // pred_check
          %p212 = pneg %p113
        $region14: #{discriminator_forward.9} parent=11 // pred_check_branch
          %214 = sbr.rel (%p212) target = $region16
        $region15: #{discriminator_forward.9} parent=11 // pred_region
          %p215 = scmp.lt.s32.totalorder %s23, 0
          %s216 = scalar_select %p215, %s23, 0
          %s217 = scalar_lea.vmem %s2, %s216
        $region16: #{discriminator_forward.9} parent=11 // pred_fallthru
          _
      $region12: #{discriminator_forward.9} parent=5 // pred_fallthru
        _
      %p218 = scmp.lt.s32.totalorder %s12, 4
      // Predicated region
      $region17: #{discriminator_forward.9} parent=5 // pred_check
        %p219 = pneg %p218
      $region18: #{discriminator_forward.9} parent=5 // pred_check_branch
        %221 = sbr.rel (%p219) target = $region20
      $region19: #{discriminator_forward.9} parent=5 // pred_region
        // Predicated region
        $region21: #{discriminator_forward.9} parent=19 // pred_check
          %p222 = pneg %p53
        $region22: #{discriminator_forward.9} parent=19 // pred_check_branch
          %224 = sbr.rel (%p222) target = $region24
        $region23: #{discriminator_forward.9} parent=19 // pred_region
          %s225 = sand.u32 %s43, 1
          %s226 = sand.u32 %s43, 1
          %s227 = smul.addr %s226, 1024
          %s228 = scalar_lea.vmem [#allocation3], %s227
          %s229 = smul.u32 32, %s19
          %s230 = smul.u32 8, %s21
          %s231 = smul.addr %s229, 16
          %s232 = sadd.s32 %s230, %s231
          %s233 = smul.addr %s232, 4
          %s234 = scalar_lea.vmem %s0, %s233
          // Predicated region
          $region25: #{discriminator_forward.9} parent=23 // pred_check
            _
          $region26: #{discriminator_forward.9} parent=23 // pred_check_branch
            %236 = sbr.rel (0) target = $region28
          $region27: #{discriminator_forward.9} parent=23 // pred_region
            // Predicated region
            $region29: #{discriminator_forward.9} parent=27 // pred_check
              _
            $region30: #{discriminator_forward.9} parent=27 // pred_check_branch
              %238 = sbr.rel (0) target = $region32
            $region31: #{discriminator_forward.9} parent=27 // pred_region
              loop: start=0, step=1, limit=1
              $region33: #{discriminator_forward.9} parent=31 // loop_pre_header
                _
              $region34: #{discriminator_forward.9} parent=31 // loop_header
                %s240 = sphi 0, %s244
                %p241 = scmp.ge.s32.totalorder %s240, 1
                %s245 = sphi %s234, %s234
                %s246 = sphi %s228, %s228
              $region35: #{discriminator_forward.9} parent=31 // loop_header_branch
                %243 = sbr.rel (%p241) target = $region39
              $region36: #{discriminator_forward.9} parent=31 // loop_body
                %v247 = vld [vmem:[%s245] sm:$0xff]
                %248 = vst [vmem:[%s246] sm:$0xff] %v247
                %v249 = vld [vmem:[%s245 + $0x8] sm:$0xff]
                %250 = vst [vmem:[%s246 + $0x8] sm:$0xff] %v249
                %v251 = vld [vmem:[%s245 + $0x10] sm:$0xff]
                %252 = vst [vmem:[%s246 + $0x10] sm:$0xff] %v251
                %v253 = vld [vmem:[%s245 + $0x18] sm:$0xff]
                %254 = vst [vmem:[%s246 + $0x18] sm:$0xff] %v253
                %v255 = vld [vmem:[%s245 + $0x40] sm:$0xff]
                %256 = vst [vmem:[%s246 + $0x20] sm:$0xff] %v255
                %v257 = vld [vmem:[%s245 + $0x48] sm:$0xff]
                %258 = vst [vmem:[%s246 + $0x28] sm:$0xff] %v257
                %v259 = vld [vmem:[%s245 + $0x50] sm:$0xff]
                %260 = vst [vmem:[%s246 + $0x30] sm:$0xff] %v259
                %v261 = vld [vmem:[%s245 + $0x58] sm:$0xff]
                %262 = vst [vmem:[%s246 + $0x38] sm:$0xff] %v261
                %v263 = vld [vmem:[%s245 + $0x80] sm:$0xff]
                %264 = vst [vmem:[%s246 + $0x40] sm:$0xff] %v263
                %v265 = vld [vmem:[%s245 + $0x88] sm:$0xff]
                %266 = vst [vmem:[%s246 + $0x48] sm:$0xff] %v265
                %v267 = vld [vmem:[%s245 + $0x90] sm:$0xff]
                %268 = vst [vmem:[%s246 + $0x50] sm:$0xff] %v267
                %v269 = vld [vmem:[%s245 + $0x98] sm:$0xff]
                %270 = vst [vmem:[%s246 + $0x58] sm:$0xff] %v269
                %v271 = vld [vmem:[%s245 + $0xc0] sm:$0xff]
                %272 = vst [vmem:[%s246 + $0x60] sm:$0xff] %v271
                %v273 = vld [vmem:[%s245 + $0xc8] sm:$0xff]
                %274 = vst [vmem:[%s246 + $0x68] sm:$0xff] %v273
                %v275 = vld [vmem:[%s245 + $0xd0] sm:$0xff]
                %276 = vst [vmem:[%s246 + $0x70] sm:$0xff] %v275
                %v277 = vld [vmem:[%s245 + $0xd8] sm:$0xff]
                %278 = vst [vmem:[%s246 + $0x78] sm:$0xff] %v277
                %v279 = vld [vmem:[%s245 + $0x100] sm:$0xff]
                %280 = vst [vmem:[%s246 + $0x80] sm:$0xff] %v279
                %v281 = vld [vmem:[%s245 + $0x108] sm:$0xff]
                %282 = vst [vmem:[%s246 + $0x88] sm:$0xff] %v281
                %v283 = vld [vmem:[%s245 + $0x110] sm:$0xff]
                %284 = vst [vmem:[%s246 + $0x90] sm:$0xff] %v283
                %v285 = vld [vmem:[%s245 + $0x118] sm:$0xff]
                %286 = vst [vmem:[%s246 + $0x98] sm:$0xff] %v285
                %v287 = vld [vmem:[%s245 + $0x140] sm:$0xff]
                %288 = vst [vmem:[%s246 + $0xa0] sm:$0xff] %v287
                %v289 = vld [vmem:[%s245 + $0x148] sm:$0xff]
                %290 = vst [vmem:[%s246 + $0xa8] sm:$0xff] %v289
                %v291 = vld [vmem:[%s245 + $0x150] sm:$0xff]
                %292 = vst [vmem:[%s246 + $0xb0] sm:$0xff] %v291
                %v293 = vld [vmem:[%s245 + $0x158] sm:$0xff]
                %294 = vst [vmem:[%s246 + $0xb8] sm:$0xff] %v293
                %v295 = vld [vmem:[%s245 + $0x180] sm:$0xff]
                %296 = vst [vmem:[%s246 + $0xc0] sm:$0xff] %v295
                %v297 = vld [vmem:[%s245 + $0x188] sm:$0xff]
                %298 = vst [vmem:[%s246 + $0xc8] sm:$0xff] %v297
                %v299 = vld [vmem:[%s245 + $0x190] sm:$0xff]
                %300 = vst [vmem:[%s246 + $0xd0] sm:$0xff] %v299
                %v301 = vld [vmem:[%s245 + $0x198] sm:$0xff]
                %302 = vst [vmem:[%s246 + $0xd8] sm:$0xff] %v301
                %v303 = vld [vmem:[%s245 + $0x1c0] sm:$0xff]
                %304 = vst [vmem:[%s246 + $0xe0] sm:$0xff] %v303
                %v305 = vld [vmem:[%s245 + $0x1c8] sm:$0xff]
                %306 = vst [vmem:[%s246 + $0xe8] sm:$0xff] %v305
                %v307 = vld [vmem:[%s245 + $0x1d0] sm:$0xff]
                %308 = vst [vmem:[%s246 + $0xf0] sm:$0xff] %v307
                %v309 = vld [vmem:[%s245 + $0x1d8] sm:$0xff]
                %310 = vst [vmem:[%s246 + $0xf8] sm:$0xff] %v309
                %v311 = vld [vmem:[%s245 + $0x200] sm:$0xff]
                %312 = vst [vmem:[%s246 + $0x100] sm:$0xff] %v311
                %v313 = vld [vmem:[%s245 + $0x208] sm:$0xff]
                %314 = vst [vmem:[%s246 + $0x108] sm:$0xff] %v313
                %v315 = vld [vmem:[%s245 + $0x210] sm:$0xff]
                %316 = vst [vmem:[%s246 + $0x110] sm:$0xff] %v315
                %v317 = vld [vmem:[%s245 + $0x218] sm:$0xff]
                %318 = vst [vmem:[%s246 + $0x118] sm:$0xff] %v317
                %v319 = vld [vmem:[%s245 + $0x240] sm:$0xff]
                %320 = vst [vmem:[%s246 + $0x120] sm:$0xff] %v319
                %v321 = vld [vmem:[%s245 + $0x248] sm:$0xff]
                %322 = vst [vmem:[%s246 + $0x128] sm:$0xff] %v321
                %v323 = vld [vmem:[%s245 + $0x250] sm:$0xff]
                %324 = vst [vmem:[%s246 + $0x130] sm:$0xff] %v323
                %v325 = vld [vmem:[%s245 + $0x258] sm:$0xff]
                %326 = vst [vmem:[%s246 + $0x138] sm:$0xff] %v325
                %v327 = vld [vmem:[%s245 + $0x280] sm:$0xff]
                %328 = vst [vmem:[%s246 + $0x140] sm:$0xff] %v327
                %v329 = vld [vmem:[%s245 + $0x288] sm:$0xff]
                %330 = vst [vmem:[%s246 + $0x148] sm:$0xff] %v329
                %v331 = vld [vmem:[%s245 + $0x290] sm:$0xff]
                %332 = vst [vmem:[%s246 + $0x150] sm:$0xff] %v331
                %v333 = vld [vmem:[%s245 + $0x298] sm:$0xff]
                %334 = vst [vmem:[%s246 + $0x158] sm:$0xff] %v333
                %v335 = vld [vmem:[%s245 + $0x2c0] sm:$0xff]
                %336 = vst [vmem:[%s246 + $0x160] sm:$0xff] %v335
                %v337 = vld [vmem:[%s245 + $0x2c8] sm:$0xff]
                %338 = vst [vmem:[%s246 + $0x168] sm:$0xff] %v337
                %v339 = vld [vmem:[%s245 + $0x2d0] sm:$0xff]
                %340 = vst [vmem:[%s246 + $0x170] sm:$0xff] %v339
                %v341 = vld [vmem:[%s245 + $0x2d8] sm:$0xff]
                %342 = vst [vmem:[%s246 + $0x178] sm:$0xff] %v341
                %v343 = vld [vmem:[%s245 + $0x300] sm:$0xff]
                %344 = vst [vmem:[%s246 + $0x180] sm:$0xff] %v343
                %v345 = vld [vmem:[%s245 + $0x308] sm:$0xff]
                %346 = vst [vmem:[%s246 + $0x188] sm:$0xff] %v345
                %v347 = vld [vmem:[%s245 + $0x310] sm:$0xff]
                %348 = vst [vmem:[%s246 + $0x190] sm:$0xff] %v347
                %v349 = vld [vmem:[%s245 + $0x318] sm:$0xff]
                %350 = vst [vmem:[%s246 + $0x198] sm:$0xff] %v349
                %v351 = vld [vmem:[%s245 + $0x340] sm:$0xff]
                %352 = vst [vmem:[%s246 + $0x1a0] sm:$0xff] %v351
                %v353 = vld [vmem:[%s245 + $0x348] sm:$0xff]
                %354 = vst [vmem:[%s246 + $0x1a8] sm:$0xff] %v353
                %v355 = vld [vmem:[%s245 + $0x350] sm:$0xff]
                %356 = vst [vmem:[%s246 + $0x1b0] sm:$0xff] %v355
                %v357 = vld [vmem:[%s245 + $0x358] sm:$0xff]
                %358 = vst [vmem:[%s246 + $0x1b8] sm:$0xff] %v357
                %v359 = vld [vmem:[%s245 + $0x380] sm:$0xff]
                %360 = vst [vmem:[%s246 + $0x1c0] sm:$0xff] %v359
                %v361 = vld [vmem:[%s245 + $0x388] sm:$0xff]
                %362 = vst [vmem:[%s246 + $0x1c8] sm:$0xff] %v361
                %v363 = vld [vmem:[%s245 + $0x390] sm:$0xff]
                %364 = vst [vmem:[%s246 + $0x1d0] sm:$0xff] %v363
                %v365 = vld [vmem:[%s245 + $0x398] sm:$0xff]
                %366 = vst [vmem:[%s246 + $0x1d8] sm:$0xff] %v365
                %v367 = vld [vmem:[%s245 + $0x3c0] sm:$0xff]
                %368 = vst [vmem:[%s246 + $0x1e0] sm:$0xff] %v367
                %v369 = vld [vmem:[%s245 + $0x3c8] sm:$0xff]
                %370 = vst [vmem:[%s246 + $0x1e8] sm:$0xff] %v369
                %v371 = vld [vmem:[%s245 + $0x3d0] sm:$0xff]
                %372 = vst [vmem:[%s246 + $0x1f0] sm:$0xff] %v371
                %v373 = vld [vmem:[%s245 + $0x3d8] sm:$0xff]
                %374 = vst [vmem:[%s246 + $0x1f8] sm:$0xff] %v373
                %v375 = vld [vmem:[%s245 + $0x400] sm:$0xff]
                %376 = vst [vmem:[%s246 + $0x200] sm:$0xff] %v375
                %v377 = vld [vmem:[%s245 + $0x408] sm:$0xff]
                %378 = vst [vmem:[%s246 + $0x208] sm:$0xff] %v377
                %v379 = vld [vmem:[%s245 + $0x410] sm:$0xff]
                %380 = vst [vmem:[%s246 + $0x210] sm:$0xff] %v379
                %v381 = vld [vmem:[%s245 + $0x418] sm:$0xff]
                %382 = vst [vmem:[%s246 + $0x218] sm:$0xff] %v381
                %v383 = vld [vmem:[%s245 + $0x440] sm:$0xff]
                %384 = vst [vmem:[%s246 + $0x220] sm:$0xff] %v383
                %v385 = vld [vmem:[%s245 + $0x448] sm:$0xff]
                %386 = vst [vmem:[%s246 + $0x228] sm:$0xff] %v385
                %v387 = vld [vmem:[%s245 + $0x450] sm:$0xff]
                %388 = vst [vmem:[%s246 + $0x230] sm:$0xff] %v387
                %v389 = vld [vmem:[%s245 + $0x458] sm:$0xff]
                %390 = vst [vmem:[%s246 + $0x238] sm:$0xff] %v389
                %v391 = vld [vmem:[%s245 + $0x480] sm:$0xff]
                %392 = vst [vmem:[%s246 + $0x240] sm:$0xff] %v391
                %v393 = vld [vmem:[%s245 + $0x488] sm:$0xff]
                %394 = vst [vmem:[%s246 + $0x248] sm:$0xff] %v393
                %v395 = vld [vmem:[%s245 + $0x490] sm:$0xff]
                %396 = vst [vmem:[%s246 + $0x250] sm:$0xff] %v395
                %v397 = vld [vmem:[%s245 + $0x498] sm:$0xff]
                %398 = vst [vmem:[%s246 + $0x258] sm:$0xff] %v397
                %v399 = vld [vmem:[%s245 + $0x4c0] sm:$0xff]
                %400 = vst [vmem:[%s246 + $0x260] sm:$0xff] %v399
                %v401 = vld [vmem:[%s245 + $0x4c8] sm:$0xff]
                %402 = vst [vmem:[%s246 + $0x268] sm:$0xff] %v401
                %v403 = vld [vmem:[%s245 + $0x4d0] sm:$0xff]
                %404 = vst [vmem:[%s246 + $0x270] sm:$0xff] %v403
                %v405 = vld [vmem:[%s245 + $0x4d8] sm:$0xff]
                %406 = vst [vmem:[%s246 + $0x278] sm:$0xff] %v405
                %v407 = vld [vmem:[%s245 + $0x500] sm:$0xff]
                %408 = vst [vmem:[%s246 + $0x280] sm:$0xff] %v407
                %v409 = vld [vmem:[%s245 + $0x508] sm:$0xff]
                %410 = vst [vmem:[%s246 + $0x288] sm:$0xff] %v409
                %v411 = vld [vmem:[%s245 + $0x510] sm:$0xff]
                %412 = vst [vmem:[%s246 + $0x290] sm:$0xff] %v411
                %v413 = vld [vmem:[%s245 + $0x518] sm:$0xff]
                %414 = vst [vmem:[%s246 + $0x298] sm:$0xff] %v413
                %v415 = vld [vmem:[%s245 + $0x540] sm:$0xff]
                %416 = vst [vmem:[%s246 + $0x2a0] sm:$0xff] %v415
                %v417 = vld [vmem:[%s245 + $0x548] sm:$0xff]
                %418 = vst [vmem:[%s246 + $0x2a8] sm:$0xff] %v417
                %v419 = vld [vmem:[%s245 + $0x550] sm:$0xff]
                %420 = vst [vmem:[%s246 + $0x2b0] sm:$0xff] %v419
                %v421 = vld [vmem:[%s245 + $0x558] sm:$0xff]
                %422 = vst [vmem:[%s246 + $0x2b8] sm:$0xff] %v421
                %v423 = vld [vmem:[%s245 + $0x580] sm:$0xff]
                %424 = vst [vmem:[%s246 + $0x2c0] sm:$0xff] %v423
                %v425 = vld [vmem:[%s245 + $0x588] sm:$0xff]
                %426 = vst [vmem:[%s246 + $0x2c8] sm:$0xff] %v425
                %v427 = vld [vmem:[%s245 + $0x590] sm:$0xff]
                %428 = vst [vmem:[%s246 + $0x2d0] sm:$0xff] %v427
                %v429 = vld [vmem:[%s245 + $0x598] sm:$0xff]
                %430 = vst [vmem:[%s246 + $0x2d8] sm:$0xff] %v429
                %v431 = vld [vmem:[%s245 + $0x5c0] sm:$0xff]
                %432 = vst [vmem:[%s246 + $0x2e0] sm:$0xff] %v431
                %v433 = vld [vmem:[%s245 + $0x5c8] sm:$0xff]
                %434 = vst [vmem:[%s246 + $0x2e8] sm:$0xff] %v433
                %v435 = vld [vmem:[%s245 + $0x5d0] sm:$0xff]
                %436 = vst [vmem:[%s246 + $0x2f0] sm:$0xff] %v435
                %v437 = vld [vmem:[%s245 + $0x5d8] sm:$0xff]
                %438 = vst [vmem:[%s246 + $0x2f8] sm:$0xff] %v437
                %v439 = vld [vmem:[%s245 + $0x600] sm:$0xff]
                %440 = vst [vmem:[%s246 + $0x300] sm:$0xff] %v439
                %v441 = vld [vmem:[%s245 + $0x608] sm:$0xff]
                %442 = vst [vmem:[%s246 + $0x308] sm:$0xff] %v441
                %v443 = vld [vmem:[%s245 + $0x610] sm:$0xff]
                %444 = vst [vmem:[%s246 + $0x310] sm:$0xff] %v443
                %v445 = vld [vmem:[%s245 + $0x618] sm:$0xff]
                %446 = vst [vmem:[%s246 + $0x318] sm:$0xff] %v445
                %v447 = vld [vmem:[%s245 + $0x640] sm:$0xff]
                %448 = vst [vmem:[%s246 + $0x320] sm:$0xff] %v447
                %v449 = vld [vmem:[%s245 + $0x648] sm:$0xff]
                %450 = vst [vmem:[%s246 + $0x328] sm:$0xff] %v449
                %v451 = vld [vmem:[%s245 + $0x650] sm:$0xff]
                %452 = vst [vmem:[%s246 + $0x330] sm:$0xff] %v451
                %v453 = vld [vmem:[%s245 + $0x658] sm:$0xff]
                %454 = vst [vmem:[%s246 + $0x338] sm:$0xff] %v453
                %v455 = vld [vmem:[%s245 + $0x680] sm:$0xff]
                %456 = vst [vmem:[%s246 + $0x340] sm:$0xff] %v455
                %v457 = vld [vmem:[%s245 + $0x688] sm:$0xff]
                %458 = vst [vmem:[%s246 + $0x348] sm:$0xff] %v457
                %v459 = vld [vmem:[%s245 + $0x690] sm:$0xff]
                %460 = vst [vmem:[%s246 + $0x350] sm:$0xff] %v459
                %v461 = vld [vmem:[%s245 + $0x698] sm:$0xff]
                %462 = vst [vmem:[%s246 + $0x358] sm:$0xff] %v461
                %v463 = vld [vmem:[%s245 + $0x6c0] sm:$0xff]
                %464 = vst [vmem:[%s246 + $0x360] sm:$0xff] %v463
                %v465 = vld [vmem:[%s245 + $0x6c8] sm:$0xff]
                %466 = vst [vmem:[%s246 + $0x368] sm:$0xff] %v465
                %v467 = vld [vmem:[%s245 + $0x6d0] sm:$0xff]
                %468 = vst [vmem:[%s246 + $0x370] sm:$0xff] %v467
                %v469 = vld [vmem:[%s245 + $0x6d8] sm:$0xff]
                %470 = vst [vmem:[%s246 + $0x378] sm:$0xff] %v469
                %v471 = vld [vmem:[%s245 + $0x700] sm:$0xff]
                %472 = vst [vmem:[%s246 + $0x380] sm:$0xff] %v471
                %v473 = vld [vmem:[%s245 + $0x708] sm:$0xff]
                %474 = vst [vmem:[%s246 + $0x388] sm:$0xff] %v473
                %v475 = vld [vmem:[%s245 + $0x710] sm:$0xff]
                %476 = vst [vmem:[%s246 + $0x390] sm:$0xff] %v475
                %v477 = vld [vmem:[%s245 + $0x718] sm:$0xff]
                %478 = vst [vmem:[%s246 + $0x398] sm:$0xff] %v477
                %v479 = vld [vmem:[%s245 + $0x740] sm:$0xff]
                %480 = vst [vmem:[%s246 + $0x3a0] sm:$0xff] %v479
                %v481 = vld [vmem:[%s245 + $0x748] sm:$0xff]
                %482 = vst [vmem:[%s246 + $0x3a8] sm:$0xff] %v481
                %v483 = vld [vmem:[%s245 + $0x750] sm:$0xff]
                %484 = vst [vmem:[%s246 + $0x3b0] sm:$0xff] %v483
                %v485 = vld [vmem:[%s245 + $0x758] sm:$0xff]
                %486 = vst [vmem:[%s246 + $0x3b8] sm:$0xff] %v485
                %v487 = vld [vmem:[%s245 + $0x780] sm:$0xff]
                %488 = vst [vmem:[%s246 + $0x3c0] sm:$0xff] %v487
                %v489 = vld [vmem:[%s245 + $0x788] sm:$0xff]
                %490 = vst [vmem:[%s246 + $0x3c8] sm:$0xff] %v489
                %v491 = vld [vmem:[%s245 + $0x790] sm:$0xff]
                %492 = vst [vmem:[%s246 + $0x3d0] sm:$0xff] %v491
                %v493 = vld [vmem:[%s245 + $0x798] sm:$0xff]
                %494 = vst [vmem:[%s246 + $0x3d8] sm:$0xff] %v493
                %v495 = vld [vmem:[%s245 + $0x7c0] sm:$0xff]
                %496 = vst [vmem:[%s246 + $0x3e0] sm:$0xff] %v495
                %v497 = vld [vmem:[%s245 + $0x7c8] sm:$0xff]
                %498 = vst [vmem:[%s246 + $0x3e8] sm:$0xff] %v497
                %v499 = vld [vmem:[%s245 + $0x7d0] sm:$0xff]
                %500 = vst [vmem:[%s246 + $0x3f0] sm:$0xff] %v499
                %v501 = vld [vmem:[%s245 + $0x7d8] sm:$0xff]
                %502 = vst [vmem:[%s246 + $0x3f8] sm:$0xff] %v501
              $region37: #{discriminator_forward.9} parent=31 // loop_footer
                %s244 = sadd.s32 1, %s240
              $region38: #{discriminator_forward.9} parent=31 // loop_footer_branch
                %239 = sbr.rel target = $region34
              $region39: #{discriminator_forward.9} parent=31 // loop_exit
                _
            $region32: #{discriminator_forward.9} parent=27 // pred_fallthru
              _
            // Predicated region
            $region40: #{discriminator_forward.9} parent=27 // pred_check
              _
            $region41: #{discriminator_forward.9} parent=27 // pred_check_branch
              %504 = sbr.rel target = $region43
            $region42: #{discriminator_forward.9} parent=27 // pred_region
              _
            $region43: #{discriminator_forward.9} parent=27 // pred_fallthru
              _
          $region28: #{discriminator_forward.9} parent=23 // pred_fallthru
            _
          %505 = vnop
        $region24: #{discriminator_forward.9} parent=19 // pred_fallthru
          _
        // Predicated region
        $region44: #{discriminator_forward.9} parent=19 // pred_check
          %p506 = pneg %p81
        $region45: #{discriminator_forward.9} parent=19 // pred_check_branch
          %508 = sbr.rel (%p506) target = $region47
        $region46: #{discriminator_forward.9} parent=19 // pred_region
          %s509 = smul.u32 128, %s21
          %p510 = scmp.lt.s32.totalorder %s509, 255
          %s511 = scalar_select %p510, %s509, 255
          %p512 = scmp.lt.s32.totalorder %s20, 0
          %s513 = scalar_select %p512, %s20, 0
          %s514 = sadd.s32 %s513, %s511
          %s515 = smul.addr %s514, 4
          %s516 = scalar_lea.vmem %s1, %s515
          %s517 = smul.u32 128, %s21
        $region47: #{discriminator_forward.9} parent=19 // pred_fallthru
          _
      $region20: #{discriminator_forward.9} parent=5 // pred_fallthru
        _
      %p518 = scmp.le.s32.totalorder 1, %s12
      %p519 = scmp.lt.s32.totalorder %s12, 5
      %p520 = pnand %p518, %p519
      %p521 = pneg %p520
      // Predicated region
      $region48: #{discriminator_forward.9} parent=5 // pred_check
        _
      $region49: #{discriminator_forward.9} parent=5 // pred_check_branch
        %523 = sbr.rel (%p520) target = $region51
      $region50: #{discriminator_forward.9} parent=5 // pred_region
        %s524 = ssub.s32 %s12, 1
        %s525 = sand.u32 %s46, 1
        %s526 = sand.u32 %s46, 1
        %s527 = smul.addr %s526, 1024
        %s528 = scalar_lea.vmem [#allocation3], %s527
        // Predicated region
        $region52: #{discriminator_forward.9} parent=50 // pred_check
          %p529 = pneg %p59
        $region53: #{discriminator_forward.9} parent=50 // pred_check_branch
          %531 = sbr.rel (%p529) target = $region55
        $region54: #{discriminator_forward.9} parent=50 // pred_region
          _
        $region55: #{discriminator_forward.9} parent=50 // pred_fallthru
          _
        %s532 = sand.u32 %s46, 1
        %s533 = sand.u32 %s46, 1
        %s534 = smul.addr %s533, 1024
        %s535 = scalar_lea.vmem [#allocation3], %s534
        %p536 = pneg %p59
        %p537 = pneg %p56
        %s538 = smul.u32 128, %s24
        %p539 = scmp.lt.s32.totalorder %s538, 255
        %s540 = scalar_select %p539, %s538, 255
        %p541 = scmp.lt.s32.totalorder %s23, 0
        %s542 = scalar_select %p541, %s23, 0
        %s543 = sadd.s32 %s542, %s540
        %s544 = smul.addr %s543, 4
        %s545 = scalar_lea.vmem %s1, %s544
        %p546 = pneg %p87
        %p547 = pneg %p84
        %p548 = scmp.lt.s32.totalorder %s23, 0
        %s549 = scalar_select %p548, %s23, 0
        %s550 = scalar_lea.vmem %s2, %s549
        %p551 = pneg %p113
        %p552 = pneg %p110
        %p553 = pneg %p141
        %p554 = pneg %p138
        %s555 = smul.u32 32, %s22
        %p556 = scmp.lt.s32.totalorder %s555, 63
        %s557 = scalar_select %p556, %s555, 63
        %p558 = scmp.lt.s32.totalorder %s23, 0
        %s559 = scalar_select %p558, %s23, 0
        %s560 = sadd.s32 %s559, %s557
        %s561 = smul.addr %s560, 4
        %s562 = scalar_lea.vmem %s3, %s561
        %p563 = pneg %p169
        %p564 = pneg %p166
        %p565 = scmp.lt.s32.totalorder %s22, 1
        %s566 = scalar_select %p565, %s22, 1
        %p567 = scmp.lt.s32.totalorder %s23, 0
        %s568 = scalar_select %p567, %s23, 0
        %s569 = sadd.s32 %s568, %s566
        %s570 = scalar_lea.vmem %s4, %s569
        %p571 = pneg %p197
        %p572 = pneg %p194
        %p573 = scmp.lt.s32.totalorder %s22, 1
        %s574 = scalar_select %p573, %s22, 1
        %p575 = scmp.lt.s32.totalorder %s23, 0
        %s576 = scalar_select %p575, %s23, 0
        %s577 = sadd.s32 %s576, %s574
        %s578 = scalar_lea.vmem %s5, %s577
        %s579 = smul.u32 32, %s22
        %s580 = smul.u32 8, %s24
        %s581 = smul.u32 128, %s24
        %p582 = scmp.lt.s32.totalorder %s581, 255
        %s583 = scalar_select %p582, %s581, 255
        %p584 = scmp.lt.s32.totalorder %s23, 0
        %s585 = scalar_select %p584, %s23, 0
        %s586 = sadd.s32 %s585, %s583
        %s587 = smul.addr %s586, 4
        %s588 = scalar_lea.vmem %s1, %s587
        %s589 = smul.u32 128, %s24
        %p590 = scmp.lt.s32.totalorder %s23, 0
        %s591 = scalar_select %p590, %s23, 0
        %s592 = scalar_lea.vmem %s2, %s591
        %s593 = smul.u32 32, %s22
        %p594 = scmp.lt.s32.totalorder %s593, 63
        %s595 = scalar_select %p594, %s593, 63
        %p596 = scmp.lt.s32.totalorder %s23, 0
        %s597 = scalar_select %p596, %s23, 0
        %s598 = sadd.s32 %s597, %s595
        %s599 = smul.addr %s598, 4
        %s600 = scalar_lea.vmem %s3, %s599
        %s601 = smul.u32 32, %s22
        %p602 = scmp.lt.s32.totalorder %s22, 1
        %s603 = scalar_select %p602, %s22, 1
        %p604 = scmp.lt.s32.totalorder %s23, 0
        %s605 = scalar_select %p604, %s23, 0
        %s606 = sadd.s32 %s605, %s603
        %s607 = scalar_lea.vmem %s4, %s606
        %p608 = scmp.lt.s32.totalorder %s22, 1
        %s609 = scalar_select %p608, %s22, 1
        %p610 = scmp.lt.s32.totalorder %s23, 0
        %s611 = scalar_select %p610, %s23, 0
        %s612 = sadd.s32 %s611, %s609
        %s613 = scalar_lea.vmem %s5, %s612
        %p614 = scmp.eq.s32.totalorder %s24, 0
        // Predicated region
        $region56: #{discriminator_forward.9} parent=50 // pred_check
          %p615 = pneg %p614
        $region57: #{discriminator_forward.9} parent=50 // pred_check_branch
          %617 = sbr.rel (%p615) target = $region59
        $region58: #{discriminator_forward.9} parent=50 // pred_region
          %618 = vst [vmem:[#allocation2] sm:$0xff] 0.0
          %619 = vst [vmem:[#allocation2 + $0x8] sm:$0xff] 0.0
          %620 = vst [vmem:[#allocation2 + $0x10] sm:$0xff] 0.0
          %621 = vst [vmem:[#allocation2 + $0x18] sm:$0xff] 0.0
          %622 = vst [vmem:[#allocation2 + $0x20] sm:$0xff] 0.0
          %623 = vst [vmem:[#allocation2 + $0x28] sm:$0xff] 0.0
          %624 = vst [vmem:[#allocation2 + $0x30] sm:$0xff] 0.0
          %625 = vst [vmem:[#allocation2 + $0x38] sm:$0xff] 0.0
          %626 = vst [vmem:[#allocation2 + $0x40] sm:$0xff] 0.0
          %627 = vst [vmem:[#allocation2 + $0x48] sm:$0xff] 0.0
          %628 = vst [vmem:[#allocation2 + $0x50] sm:$0xff] 0.0
          %629 = vst [vmem:[#allocation2 + $0x58] sm:$0xff] 0.0
          %630 = vst [vmem:[#allocation2 + $0x60] sm:$0xff] 0.0
          %631 = vst [vmem:[#allocation2 + $0x68] sm:$0xff] 0.0
          %632 = vst [vmem:[#allocation2 + $0x70] sm:$0xff] 0.0
          %633 = vst [vmem:[#allocation2 + $0x78] sm:$0xff] 0.0
          %634 = vst [vmem:[#allocation2 + $0x80] sm:$0xff] 0.0
          %635 = vst [vmem:[#allocation2 + $0x88] sm:$0xff] 0.0
          %636 = vst [vmem:[#allocation2 + $0x90] sm:$0xff] 0.0
          %637 = vst [vmem:[#allocation2 + $0x98] sm:$0xff] 0.0
          %638 = vst [vmem:[#allocation2 + $0xa0] sm:$0xff] 0.0
          %639 = vst [vmem:[#allocation2 + $0xa8] sm:$0xff] 0.0
          %640 = vst [vmem:[#allocation2 + $0xb0] sm:$0xff] 0.0
          %641 = vst [vmem:[#allocation2 + $0xb8] sm:$0xff] 0.0
          %642 = vst [vmem:[#allocation2 + $0xc0] sm:$0xff] 0.0
          %643 = vst [vmem:[#allocation2 + $0xc8] sm:$0xff] 0.0
          %644 = vst [vmem:[#allocation2 + $0xd0] sm:$0xff] 0.0
          %645 = vst [vmem:[#allocation2 + $0xd8] sm:$0xff] 0.0
          %646 = vst [vmem:[#allocation2 + $0xe0] sm:$0xff] 0.0
          %647 = vst [vmem:[#allocation2 + $0xe8] sm:$0xff] 0.0
          %648 = vst [vmem:[#allocation2 + $0xf0] sm:$0xff] 0.0
          %649 = vst [vmem:[#allocation2 + $0xf8] sm:$0xff] 0.0
        $region59: #{discriminator_forward.9} parent=50 // pred_fallthru
          _
        %v650 = vld [vmem:[#allocation2] sm:$0xff]
        %v651 = vld [vmem:[#allocation2 + $0x8] sm:$0xff]
        %v652 = vld [vmem:[#allocation2 + $0x10] sm:$0xff]
        %v653 = vld [vmem:[#allocation2 + $0x18] sm:$0xff]
        %v654 = vld [vmem:[#allocation2 + $0x20] sm:$0xff]
        %v655 = vld [vmem:[#allocation2 + $0x28] sm:$0xff]
        %v656 = vld [vmem:[#allocation2 + $0x30] sm:$0xff]
        %v657 = vld [vmem:[#allocation2 + $0x38] sm:$0xff]
        %v658 = vld [vmem:[#allocation2 + $0x40] sm:$0xff]
        %v659 = vld [vmem:[#allocation2 + $0x48] sm:$0xff]
        %v660 = vld [vmem:[#allocation2 + $0x50] sm:$0xff]
        %v661 = vld [vmem:[#allocation2 + $0x58] sm:$0xff]
        %v662 = vld [vmem:[#allocation2 + $0x60] sm:$0xff]
        %v663 = vld [vmem:[#allocation2 + $0x68] sm:$0xff]
        %v664 = vld [vmem:[#allocation2 + $0x70] sm:$0xff]
        %v665 = vld [vmem:[#allocation2 + $0x78] sm:$0xff]
        %v666 = vld [vmem:[#allocation2 + $0x80] sm:$0xff]
        %v667 = vld [vmem:[#allocation2 + $0x88] sm:$0xff]
        %v668 = vld [vmem:[#allocation2 + $0x90] sm:$0xff]
        %v669 = vld [vmem:[#allocation2 + $0x98] sm:$0xff]
        %v670 = vld [vmem:[#allocation2 + $0xa0] sm:$0xff]
        %v671 = vld [vmem:[#allocation2 + $0xa8] sm:$0xff]
        %v672 = vld [vmem:[#allocation2 + $0xb0] sm:$0xff]
        %v673 = vld [vmem:[#allocation2 + $0xb8] sm:$0xff]
        %v674 = vld [vmem:[#allocation2 + $0xc0] sm:$0xff]
        %v675 = vld [vmem:[#allocation2 + $0xc8] sm:$0xff]
        %v676 = vld [vmem:[#allocation2 + $0xd0] sm:$0xff]
        %v677 = vld [vmem:[#allocation2 + $0xd8] sm:$0xff]
        %v678 = vld [vmem:[#allocation2 + $0xe0] sm:$0xff]
        %v679 = vld [vmem:[#allocation2 + $0xe8] sm:$0xff]
        %v680 = vld [vmem:[#allocation2 + $0xf0] sm:$0xff]
        %v681 = vld [vmem:[#allocation2 + $0xf8] sm:$0xff]
        %v682 = vld [vmem:[%s528] sm:$0xff]
        %v683 = vld [vmem:[%s528 + $0x8] sm:$0xff]
        %v684 = vld [vmem:[%s528 + $0x10] sm:$0xff]
        %v685 = vld [vmem:[%s528 + $0x18] sm:$0xff]
        %v686 = vld [vmem:[%s528 + $0x20] sm:$0xff]
        %v687 = vld [vmem:[%s528 + $0x28] sm:$0xff]
        %v688 = vld [vmem:[%s528 + $0x30] sm:$0xff]
        %v689 = vld [vmem:[%s528 + $0x38] sm:$0xff]
        %v690 = vld [vmem:[%s528 + $0x40] sm:$0xff]
        %v691 = vld [vmem:[%s528 + $0x48] sm:$0xff]
        %v692 = vld [vmem:[%s528 + $0x50] sm:$0xff]
        %v693 = vld [vmem:[%s528 + $0x58] sm:$0xff]
        %v694 = vld [vmem:[%s528 + $0x60] sm:$0xff]
        %v695 = vld [vmem:[%s528 + $0x68] sm:$0xff]
        %v696 = vld [vmem:[%s528 + $0x70] sm:$0xff]
        %v697 = vld [vmem:[%s528 + $0x78] sm:$0xff]
        %v698 = vld [vmem:[%s528 + $0x80] sm:$0xff]
        %v699 = vld [vmem:[%s528 + $0x88] sm:$0xff]
        %v700 = vld [vmem:[%s528 + $0x90] sm:$0xff]
        %v701 = vld [vmem:[%s528 + $0x98] sm:$0xff]
        %v702 = vld [vmem:[%s528 + $0xa0] sm:$0xff]
        %v703 = vld [vmem:[%s528 + $0xa8] sm:$0xff]
        %v704 = vld [vmem:[%s528 + $0xb0] sm:$0xff]
        %v705 = vld [vmem:[%s528 + $0xb8] sm:$0xff]
        %v706 = vld [vmem:[%s528 + $0xc0] sm:$0xff]
        %v707 = vld [vmem:[%s528 + $0xc8] sm:$0xff]
        %v708 = vld [vmem:[%s528 + $0xd0] sm:$0xff]
        %v709 = vld [vmem:[%s528 + $0xd8] sm:$0xff]
        %v710 = vld [vmem:[%s528 + $0xe0] sm:$0xff]
        %v711 = vld [vmem:[%s528 + $0xe8] sm:$0xff]
        %v712 = vld [vmem:[%s528 + $0xf0] sm:$0xff]
        %v713 = vld [vmem:[%s528 + $0xf8] sm:$0xff]
        %v714 = vld [vmem:[%s528 + $0x100] sm:$0xff]
        %v715 = vld [vmem:[%s528 + $0x108] sm:$0xff]
        %v716 = vld [vmem:[%s528 + $0x110] sm:$0xff]
        %v717 = vld [vmem:[%s528 + $0x118] sm:$0xff]
        %v718 = vld [vmem:[%s528 + $0x120] sm:$0xff]
        %v719 = vld [vmem:[%s528 + $0x128] sm:$0xff]
        %v720 = vld [vmem:[%s528 + $0x130] sm:$0xff]
        %v721 = vld [vmem:[%s528 + $0x138] sm:$0xff]
        %v722 = vld [vmem:[%s528 + $0x140] sm:$0xff]
        %v723 = vld [vmem:[%s528 + $0x148] sm:$0xff]
        %v724 = vld [vmem:[%s528 + $0x150] sm:$0xff]
        %v725 = vld [vmem:[%s528 + $0x158] sm:$0xff]
        %v726 = vld [vmem:[%s528 + $0x160] sm:$0xff]
        %v727 = vld [vmem:[%s528 + $0x168] sm:$0xff]
        %v728 = vld [vmem:[%s528 + $0x170] sm:$0xff]
        %v729 = vld [vmem:[%s528 + $0x178] sm:$0xff]
        %v730 = vld [vmem:[%s528 + $0x180] sm:$0xff]
        %v731 = vld [vmem:[%s528 + $0x188] sm:$0xff]
        %v732 = vld [vmem:[%s528 + $0x190] sm:$0xff]
        %v733 = vld [vmem:[%s528 + $0x198] sm:$0xff]
        %v734 = vld [vmem:[%s528 + $0x1a0] sm:$0xff]
        %v735 = vld [vmem:[%s528 + $0x1a8] sm:$0xff]
        %v736 = vld [vmem:[%s528 + $0x1b0] sm:$0xff]
        %v737 = vld [vmem:[%s528 + $0x1b8] sm:$0xff]
        %v738 = vld [vmem:[%s528 + $0x1c0] sm:$0xff]
        %v739 = vld [vmem:[%s528 + $0x1c8] sm:$0xff]
        %v740 = vld [vmem:[%s528 + $0x1d0] sm:$0xff]
        %v741 = vld [vmem:[%s528 + $0x1d8] sm:$0xff]
        %v742 = vld [vmem:[%s528 + $0x1e0] sm:$0xff]
        %v743 = vld [vmem:[%s528 + $0x1e8] sm:$0xff]
        %v744 = vld [vmem:[%s528 + $0x1f0] sm:$0xff]
        %v745 = vld [vmem:[%s528 + $0x1f8] sm:$0xff]
        %v746 = vld [vmem:[%s528 + $0x200] sm:$0xff]
        %v747 = vld [vmem:[%s528 + $0x208] sm:$0xff]
        %v748 = vld [vmem:[%s528 + $0x210] sm:$0xff]
        %v749 = vld [vmem:[%s528 + $0x218] sm:$0xff]
        %v750 = vld [vmem:[%s528 + $0x220] sm:$0xff]
        %v751 = vld [vmem:[%s528 + $0x228] sm:$0xff]
        %v752 = vld [vmem:[%s528 + $0x230] sm:$0xff]
        %v753 = vld [vmem:[%s528 + $0x238] sm:$0xff]
        %v754 = vld [vmem:[%s528 + $0x240] sm:$0xff]
        %v755 = vld [vmem:[%s528 + $0x248] sm:$0xff]
        %v756 = vld [vmem:[%s528 + $0x250] sm:$0xff]
        %v757 = vld [vmem:[%s528 + $0x258] sm:$0xff]
        %v758 = vld [vmem:[%s528 + $0x260] sm:$0xff]
        %v759 = vld [vmem:[%s528 + $0x268] sm:$0xff]
        %v760 = vld [vmem:[%s528 + $0x270] sm:$0xff]
        %v761 = vld [vmem:[%s528 + $0x278] sm:$0xff]
        %v762 = vld [vmem:[%s528 + $0x280] sm:$0xff]
        %v763 = vld [vmem:[%s528 + $0x288] sm:$0xff]
        %v764 = vld [vmem:[%s528 + $0x290] sm:$0xff]
        %v765 = vld [vmem:[%s528 + $0x298] sm:$0xff]
        %v766 = vld [vmem:[%s528 + $0x2a0] sm:$0xff]
        %v767 = vld [vmem:[%s528 + $0x2a8] sm:$0xff]
        %v768 = vld [vmem:[%s528 + $0x2b0] sm:$0xff]
        %v769 = vld [vmem:[%s528 + $0x2b8] sm:$0xff]
        %v770 = vld [vmem:[%s528 + $0x2c0] sm:$0xff]
        %v771 = vld [vmem:[%s528 + $0x2c8] sm:$0xff]
        %v772 = vld [vmem:[%s528 + $0x2d0] sm:$0xff]
        %v773 = vld [vmem:[%s528 + $0x2d8] sm:$0xff]
        %v774 = vld [vmem:[%s528 + $0x2e0] sm:$0xff]
        %v775 = vld [vmem:[%s528 + $0x2e8] sm:$0xff]
        %v776 = vld [vmem:[%s528 + $0x2f0] sm:$0xff]
        %v777 = vld [vmem:[%s528 + $0x2f8] sm:$0xff]
        %v778 = vld [vmem:[%s528 + $0x300] sm:$0xff]
        %v779 = vld [vmem:[%s528 + $0x308] sm:$0xff]
        %v780 = vld [vmem:[%s528 + $0x310] sm:$0xff]
        %v781 = vld [vmem:[%s528 + $0x318] sm:$0xff]
        %v782 = vld [vmem:[%s528 + $0x320] sm:$0xff]
        %v783 = vld [vmem:[%s528 + $0x328] sm:$0xff]
        %v784 = vld [vmem:[%s528 + $0x330] sm:$0xff]
        %v785 = vld [vmem:[%s528 + $0x338] sm:$0xff]
        %v786 = vld [vmem:[%s528 + $0x340] sm:$0xff]
        %v787 = vld [vmem:[%s528 + $0x348] sm:$0xff]
        %v788 = vld [vmem:[%s528 + $0x350] sm:$0xff]
        %v789 = vld [vmem:[%s528 + $0x358] sm:$0xff]
        %v790 = vld [vmem:[%s528 + $0x360] sm:$0xff]
        %v791 = vld [vmem:[%s528 + $0x368] sm:$0xff]
        %v792 = vld [vmem:[%s528 + $0x370] sm:$0xff]
        %v793 = vld [vmem:[%s528 + $0x378] sm:$0xff]
        %v794 = vld [vmem:[%s528 + $0x380] sm:$0xff]
        %v795 = vld [vmem:[%s528 + $0x388] sm:$0xff]
        %v796 = vld [vmem:[%s528 + $0x390] sm:$0xff]
        %v797 = vld [vmem:[%s528 + $0x398] sm:$0xff]
        %v798 = vld [vmem:[%s528 + $0x3a0] sm:$0xff]
        %v799 = vld [vmem:[%s528 + $0x3a8] sm:$0xff]
        %v800 = vld [vmem:[%s528 + $0x3b0] sm:$0xff]
        %v801 = vld [vmem:[%s528 + $0x3b8] sm:$0xff]
        %v802 = vld [vmem:[%s528 + $0x3c0] sm:$0xff]
        %v803 = vld [vmem:[%s528 + $0x3c8] sm:$0xff]
        %v804 = vld [vmem:[%s528 + $0x3d0] sm:$0xff]
        %v805 = vld [vmem:[%s528 + $0x3d8] sm:$0xff]
        %v806 = vld [vmem:[%s528 + $0x3e0] sm:$0xff]
        %v807 = vld [vmem:[%s528 + $0x3e8] sm:$0xff]
        %v808 = vld [vmem:[%s528 + $0x3f0] sm:$0xff]
        %v809 = vld [vmem:[%s528 + $0x3f8] sm:$0xff]
        %v810 = vld [vmem:[%s588] sm:$0xf]
        %v811 = vld [vmem:[%s588 + $0x4] sm:$0xf]
        %v812 = vld [vmem:[%s588 + $0x8] sm:$0xf]
        %v813 = vld [vmem:[%s588 + $0xc] sm:$0xf]
        %v814 = vld [vmem:[%s588 + $0x10] sm:$0xf]
        %v815 = vld [vmem:[%s588 + $0x14] sm:$0xf]
        %v816 = vld [vmem:[%s588 + $0x18] sm:$0xf]
        %v817 = vld [vmem:[%s588 + $0x1c] sm:$0xf]
        %v818 = vld [vmem:[%s588 + $0x20] sm:$0xf]
        %v819 = vld [vmem:[%s588 + $0x24] sm:$0xf]
        %v820 = vld [vmem:[%s588 + $0x28] sm:$0xf]
        %v821 = vld [vmem:[%s588 + $0x2c] sm:$0xf]
        %v822 = vld [vmem:[%s588 + $0x30] sm:$0xf]
        %v823 = vld [vmem:[%s588 + $0x34] sm:$0xf]
        %v824 = vld [vmem:[%s588 + $0x38] sm:$0xf]
        %v825 = vld [vmem:[%s588 + $0x3c] sm:$0xf]
        %v826 = vld [vmem:[%s588 + $0x40] sm:$0xf]
        %v827 = vld [vmem:[%s588 + $0x44] sm:$0xf]
        %v828 = vld [vmem:[%s588 + $0x48] sm:$0xf]
        %v829 = vld [vmem:[%s588 + $0x4c] sm:$0xf]
        %v830 = vld [vmem:[%s588 + $0x50] sm:$0xf]
        %v831 = vld [vmem:[%s588 + $0x54] sm:$0xf]
        %v832 = vld [vmem:[%s588 + $0x58] sm:$0xf]
        %v833 = vld [vmem:[%s588 + $0x5c] sm:$0xf]
        %v834 = vld [vmem:[%s588 + $0x60] sm:$0xf]
        %v835 = vld [vmem:[%s588 + $0x64] sm:$0xf]
        %v836 = vld [vmem:[%s588 + $0x68] sm:$0xf]
        %v837 = vld [vmem:[%s588 + $0x6c] sm:$0xf]
        %v838 = vld [vmem:[%s588 + $0x70] sm:$0xf]
        %v839 = vld [vmem:[%s588 + $0x74] sm:$0xf]
        %v840 = vld [vmem:[%s588 + $0x78] sm:$0xf]
        %v841 = vld [vmem:[%s588 + $0x7c] sm:$0xf]
        %v842 = vld [vmem:[%s588 + $0x80] sm:$0xf]
        %v843 = vld [vmem:[%s588 + $0x84] sm:$0xf]
        %v844 = vld [vmem:[%s588 + $0x88] sm:$0xf]
        %v845 = vld [vmem:[%s588 + $0x8c] sm:$0xf]
        %v846 = vld [vmem:[%s588 + $0x90] sm:$0xf]
        %v847 = vld [vmem:[%s588 + $0x94] sm:$0xf]
        %v848 = vld [vmem:[%s588 + $0x98] sm:$0xf]
        %v849 = vld [vmem:[%s588 + $0x9c] sm:$0xf]
        %v850 = vld [vmem:[%s588 + $0xa0] sm:$0xf]
        %v851 = vld [vmem:[%s588 + $0xa4] sm:$0xf]
        %v852 = vld [vmem:[%s588 + $0xa8] sm:$0xf]
        %v853 = vld [vmem:[%s588 + $0xac] sm:$0xf]
        %v854 = vld [vmem:[%s588 + $0xb0] sm:$0xf]
        %v855 = vld [vmem:[%s588 + $0xb4] sm:$0xf]
        %v856 = vld [vmem:[%s588 + $0xb8] sm:$0xf]
        %v857 = vld [vmem:[%s588 + $0xbc] sm:$0xf]
        %v858 = vld [vmem:[%s588 + $0xc0] sm:$0xf]
        %v859 = vld [vmem:[%s588 + $0xc4] sm:$0xf]
        %v860 = vld [vmem:[%s588 + $0xc8] sm:$0xf]
        %v861 = vld [vmem:[%s588 + $0xcc] sm:$0xf]
        %v862 = vld [vmem:[%s588 + $0xd0] sm:$0xf]
        %v863 = vld [vmem:[%s588 + $0xd4] sm:$0xf]
        %v864 = vld [vmem:[%s588 + $0xd8] sm:$0xf]
        %v865 = vld [vmem:[%s588 + $0xdc] sm:$0xf]
        %v866 = vld [vmem:[%s588 + $0xe0] sm:$0xf]
        %v867 = vld [vmem:[%s588 + $0xe4] sm:$0xf]
        %v868 = vld [vmem:[%s588 + $0xe8] sm:$0xf]
        %v869 = vld [vmem:[%s588 + $0xec] sm:$0xf]
        %v870 = vld [vmem:[%s588 + $0xf0] sm:$0xf]
        %v871 = vld [vmem:[%s588 + $0xf4] sm:$0xf]
        %v872 = vld [vmem:[%s588 + $0xf8] sm:$0xf]
        %v873 = vld [vmem:[%s588 + $0xfc] sm:$0xf]
        %v874 = vld [vmem:[%s588 + $0x100] sm:$0xf]
        %v875 = vld [vmem:[%s588 + $0x104] sm:$0xf]
        %v876 = vld [vmem:[%s588 + $0x108] sm:$0xf]
        %v877 = vld [vmem:[%s588 + $0x10c] sm:$0xf]
        %v878 = vld [vmem:[%s588 + $0x110] sm:$0xf]
        %v879 = vld [vmem:[%s588 + $0x114] sm:$0xf]
        %v880 = vld [vmem:[%s588 + $0x118] sm:$0xf]
        %v881 = vld [vmem:[%s588 + $0x11c] sm:$0xf]
        %v882 = vld [vmem:[%s588 + $0x120] sm:$0xf]
        %v883 = vld [vmem:[%s588 + $0x124] sm:$0xf]
        %v884 = vld [vmem:[%s588 + $0x128] sm:$0xf]
        %v885 = vld [vmem:[%s588 + $0x12c] sm:$0xf]
        %v886 = vld [vmem:[%s588 + $0x130] sm:$0xf]
        %v887 = vld [vmem:[%s588 + $0x134] sm:$0xf]
        %v888 = vld [vmem:[%s588 + $0x138] sm:$0xf]
        %v889 = vld [vmem:[%s588 + $0x13c] sm:$0xf]
        %v890 = vld [vmem:[%s588 + $0x140] sm:$0xf]
        %v891 = vld [vmem:[%s588 + $0x144] sm:$0xf]
        %v892 = vld [vmem:[%s588 + $0x148] sm:$0xf]
        %v893 = vld [vmem:[%s588 + $0x14c] sm:$0xf]
        %v894 = vld [vmem:[%s588 + $0x150] sm:$0xf]
        %v895 = vld [vmem:[%s588 + $0x154] sm:$0xf]
        %v896 = vld [vmem:[%s588 + $0x158] sm:$0xf]
        %v897 = vld [vmem:[%s588 + $0x15c] sm:$0xf]
        %v898 = vld [vmem:[%s588 + $0x160] sm:$0xf]
        %v899 = vld [vmem:[%s588 + $0x164] sm:$0xf]
        %v900 = vld [vmem:[%s588 + $0x168] sm:$0xf]
        %v901 = vld [vmem:[%s588 + $0x16c] sm:$0xf]
        %v902 = vld [vmem:[%s588 + $0x170] sm:$0xf]
        %v903 = vld [vmem:[%s588 + $0x174] sm:$0xf]
        %v904 = vld [vmem:[%s588 + $0x178] sm:$0xf]
        %v905 = vld [vmem:[%s588 + $0x17c] sm:$0xf]
        %v906 = vld [vmem:[%s588 + $0x180] sm:$0xf]
        %v907 = vld [vmem:[%s588 + $0x184] sm:$0xf]
        %v908 = vld [vmem:[%s588 + $0x188] sm:$0xf]
        %v909 = vld [vmem:[%s588 + $0x18c] sm:$0xf]
        %v910 = vld [vmem:[%s588 + $0x190] sm:$0xf]
        %v911 = vld [vmem:[%s588 + $0x194] sm:$0xf]
        %v912 = vld [vmem:[%s588 + $0x198] sm:$0xf]
        %v913 = vld [vmem:[%s588 + $0x19c] sm:$0xf]
        %v914 = vld [vmem:[%s588 + $0x1a0] sm:$0xf]
        %v915 = vld [vmem:[%s588 + $0x1a4] sm:$0xf]
        %v916 = vld [vmem:[%s588 + $0x1a8] sm:$0xf]
        %v917 = vld [vmem:[%s588 + $0x1ac] sm:$0xf]
        %v918 = vld [vmem:[%s588 + $0x1b0] sm:$0xf]
        %v919 = vld [vmem:[%s588 + $0x1b4] sm:$0xf]
        %v920 = vld [vmem:[%s588 + $0x1b8] sm:$0xf]
        %v921 = vld [vmem:[%s588 + $0x1bc] sm:$0xf]
        %v922 = vld [vmem:[%s588 + $0x1c0] sm:$0xf]
        %v923 = vld [vmem:[%s588 + $0x1c4] sm:$0xf]
        %v924 = vld [vmem:[%s588 + $0x1c8] sm:$0xf]
        %v925 = vld [vmem:[%s588 + $0x1cc] sm:$0xf]
        %v926 = vld [vmem:[%s588 + $0x1d0] sm:$0xf]
        %v927 = vld [vmem:[%s588 + $0x1d4] sm:$0xf]
        %v928 = vld [vmem:[%s588 + $0x1d8] sm:$0xf]
        %v929 = vld [vmem:[%s588 + $0x1dc] sm:$0xf]
        %v930 = vld [vmem:[%s588 + $0x1e0] sm:$0xf]
        %v931 = vld [vmem:[%s588 + $0x1e4] sm:$0xf]
        %v932 = vld [vmem:[%s588 + $0x1e8] sm:$0xf]
        %v933 = vld [vmem:[%s588 + $0x1ec] sm:$0xf]
        %v934 = vld [vmem:[%s588 + $0x1f0] sm:$0xf]
        %v935 = vld [vmem:[%s588 + $0x1f4] sm:$0xf]
        %v936 = vld [vmem:[%s588 + $0x1f8] sm:$0xf]
        %v937 = vld [vmem:[%s588 + $0x1fc] sm:$0xf]
        %v1066 = vunpack.c.l.b16 %v682
        %v1067 = vunpack.c.h.b16 %v682
        %v1068 = vunpack.c.l.b16 %v683
        %v1069 = vunpack.c.h.b16 %v683
        %v1070 = vunpack.c.l.b16 %v684
        %v1071 = vunpack.c.h.b16 %v684
        %v1072 = vunpack.c.l.b16 %v685
        %v1073 = vunpack.c.h.b16 %v685
        %v1074 = vunpack.c.l.b16 %v686
        %v1075 = vunpack.c.h.b16 %v686
        %v1076 = vunpack.c.l.b16 %v687
        %v1077 = vunpack.c.h.b16 %v687
        %v1078 = vunpack.c.l.b16 %v688
        %v1079 = vunpack.c.h.b16 %v688
        %v1080 = vunpack.c.l.b16 %v689
        %v1081 = vunpack.c.h.b16 %v689
        %v1082 = vunpack.c.l.b16 %v690
        %v1083 = vunpack.c.h.b16 %v690
        %v1084 = vunpack.c.l.b16 %v691
        %v1085 = vunpack.c.h.b16 %v691
        %v1086 = vunpack.c.l.b16 %v692
        %v1087 = vunpack.c.h.b16 %v692
        %v1088 = vunpack.c.l.b16 %v693
        %v1089 = vunpack.c.h.b16 %v693
        %v1090 = vunpack.c.l.b16 %v694
        %v1091 = vunpack.c.h.b16 %v694
        %v1092 = vunpack.c.l.b16 %v695
        %v1093 = vunpack.c.h.b16 %v695
        %v1094 = vunpack.c.l.b16 %v696
        %v1095 = vunpack.c.h.b16 %v696
        %v1096 = vunpack.c.l.b16 %v697
        %v1097 = vunpack.c.h.b16 %v697
        %v1098 = vunpack.c.l.b16 %v698
        %v1099 = vunpack.c.h.b16 %v698
        %v1100 = vunpack.c.l.b16 %v699
        %v1101 = vunpack.c.h.b16 %v699
        %v1102 = vunpack.c.l.b16 %v700
        %v1103 = vunpack.c.h.b16 %v700
        %v1104 = vunpack.c.l.b16 %v701
        %v1105 = vunpack.c.h.b16 %v701
        %v1106 = vunpack.c.l.b16 %v702
        %v1107 = vunpack.c.h.b16 %v702
        %v1108 = vunpack.c.l.b16 %v703
        %v1109 = vunpack.c.h.b16 %v703
        %v1110 = vunpack.c.l.b16 %v704
        %v1111 = vunpack.c.h.b16 %v704
        %v1112 = vunpack.c.l.b16 %v705
        %v1113 = vunpack.c.h.b16 %v705
        %v1114 = vunpack.c.l.b16 %v706
        %v1115 = vunpack.c.h.b16 %v706
        %v1116 = vunpack.c.l.b16 %v707
        %v1117 = vunpack.c.h.b16 %v707
        %v1118 = vunpack.c.l.b16 %v708
        %v1119 = vunpack.c.h.b16 %v708
        %v1120 = vunpack.c.l.b16 %v709
        %v1121 = vunpack.c.h.b16 %v709
        %v1122 = vunpack.c.l.b16 %v710
        %v1123 = vunpack.c.h.b16 %v710
        %v1124 = vunpack.c.l.b16 %v711
        %v1125 = vunpack.c.h.b16 %v711
        %v1126 = vunpack.c.l.b16 %v712
        %v1127 = vunpack.c.h.b16 %v712
        %v1128 = vunpack.c.l.b16 %v713
        %v1129 = vunpack.c.h.b16 %v713
        %v1130 = vunpack.c.l.b16 %v714
        %v1131 = vunpack.c.h.b16 %v714
        %v1132 = vunpack.c.l.b16 %v715
        %v1133 = vunpack.c.h.b16 %v715
        %v1134 = vunpack.c.l.b16 %v716
        %v1135 = vunpack.c.h.b16 %v716
        %v1136 = vunpack.c.l.b16 %v717
        %v1137 = vunpack.c.h.b16 %v717
        %v1138 = vunpack.c.l.b16 %v718
        %v1139 = vunpack.c.h.b16 %v718
        %v1140 = vunpack.c.l.b16 %v719
        %v1141 = vunpack.c.h.b16 %v719
        %v1142 = vunpack.c.l.b16 %v720
        %v1143 = vunpack.c.h.b16 %v720
        %v1144 = vunpack.c.l.b16 %v721
        %v1145 = vunpack.c.h.b16 %v721
        %v1146 = vunpack.c.l.b16 %v722
        %v1147 = vunpack.c.h.b16 %v722
        %v1148 = vunpack.c.l.b16 %v723
        %v1149 = vunpack.c.h.b16 %v723
        %v1150 = vunpack.c.l.b16 %v724
        %v1151 = vunpack.c.h.b16 %v724
        %v1152 = vunpack.c.l.b16 %v725
        %v1153 = vunpack.c.h.b16 %v725
        %v1154 = vunpack.c.l.b16 %v726
        %v1155 = vunpack.c.h.b16 %v726
        %v1156 = vunpack.c.l.b16 %v727
        %v1157 = vunpack.c.h.b16 %v727
        %v1158 = vunpack.c.l.b16 %v728
        %v1159 = vunpack.c.h.b16 %v728
        %v1160 = vunpack.c.l.b16 %v729
        %v1161 = vunpack.c.h.b16 %v729
        %v1162 = vunpack.c.l.b16 %v730
        %v1163 = vunpack.c.h.b16 %v730
        %v1164 = vunpack.c.l.b16 %v731
        %v1165 = vunpack.c.h.b16 %v731
        %v1166 = vunpack.c.l.b16 %v732
        %v1167 = vunpack.c.h.b16 %v732
        %v1168 = vunpack.c.l.b16 %v733
        %v1169 = vunpack.c.h.b16 %v733
        %v1170 = vunpack.c.l.b16 %v734
        %v1171 = vunpack.c.h.b16 %v734
        %v1172 = vunpack.c.l.b16 %v735
        %v1173 = vunpack.c.h.b16 %v735
        %v1174 = vunpack.c.l.b16 %v736
        %v1175 = vunpack.c.h.b16 %v736
        %v1176 = vunpack.c.l.b16 %v737
        %v1177 = vunpack.c.h.b16 %v737
        %v1178 = vunpack.c.l.b16 %v738
        %v1179 = vunpack.c.h.b16 %v738
        %v1180 = vunpack.c.l.b16 %v739
        %v1181 = vunpack.c.h.b16 %v739
        %v1182 = vunpack.c.l.b16 %v740
        %v1183 = vunpack.c.h.b16 %v740
        %v1184 = vunpack.c.l.b16 %v741
        %v1185 = vunpack.c.h.b16 %v741
        %v1186 = vunpack.c.l.b16 %v742
        %v1187 = vunpack.c.h.b16 %v742
        %v1188 = vunpack.c.l.b16 %v743
        %v1189 = vunpack.c.h.b16 %v743
        %v1190 = vunpack.c.l.b16 %v744
        %v1191 = vunpack.c.h.b16 %v744
        %v1192 = vunpack.c.l.b16 %v745
        %v1193 = vunpack.c.h.b16 %v745
        %v1194 = vunpack.c.l.b16 %v746
        %v1195 = vunpack.c.h.b16 %v746
        %v1196 = vunpack.c.l.b16 %v747
        %v1197 = vunpack.c.h.b16 %v747
        %v1198 = vunpack.c.l.b16 %v748
        %v1199 = vunpack.c.h.b16 %v748
        %v1200 = vunpack.c.l.b16 %v749
        %v1201 = vunpack.c.h.b16 %v749
        %v1202 = vunpack.c.l.b16 %v750
        %v1203 = vunpack.c.h.b16 %v750
        %v1204 = vunpack.c.l.b16 %v751
        %v1205 = vunpack.c.h.b16 %v751
        %v1206 = vunpack.c.l.b16 %v752
        %v1207 = vunpack.c.h.b16 %v752
        %v1208 = vunpack.c.l.b16 %v753
        %v1209 = vunpack.c.h.b16 %v753
        %v1210 = vunpack.c.l.b16 %v754
        %v1211 = vunpack.c.h.b16 %v754
        %v1212 = vunpack.c.l.b16 %v755
        %v1213 = vunpack.c.h.b16 %v755
        %v1214 = vunpack.c.l.b16 %v756
        %v1215 = vunpack.c.h.b16 %v756
        %v1216 = vunpack.c.l.b16 %v757
        %v1217 = vunpack.c.h.b16 %v757
        %v1218 = vunpack.c.l.b16 %v758
        %v1219 = vunpack.c.h.b16 %v758
        %v1220 = vunpack.c.l.b16 %v759
        %v1221 = vunpack.c.h.b16 %v759
        %v1222 = vunpack.c.l.b16 %v760
        %v1223 = vunpack.c.h.b16 %v760
        %v1224 = vunpack.c.l.b16 %v761
        %v1225 = vunpack.c.h.b16 %v761
        %v1226 = vunpack.c.l.b16 %v762
        %v1227 = vunpack.c.h.b16 %v762
        %v1228 = vunpack.c.l.b16 %v763
        %v1229 = vunpack.c.h.b16 %v763
        %v1230 = vunpack.c.l.b16 %v764
        %v1231 = vunpack.c.h.b16 %v764
        %v1232 = vunpack.c.l.b16 %v765
        %v1233 = vunpack.c.h.b16 %v765
        %v1234 = vunpack.c.l.b16 %v766
        %v1235 = vunpack.c.h.b16 %v766
        %v1236 = vunpack.c.l.b16 %v767
        %v1237 = vunpack.c.h.b16 %v767
        %v1238 = vunpack.c.l.b16 %v768
        %v1239 = vunpack.c.h.b16 %v768
        %v1240 = vunpack.c.l.b16 %v769
        %v1241 = vunpack.c.h.b16 %v769
        %v1242 = vunpack.c.l.b16 %v770
        %v1243 = vunpack.c.h.b16 %v770
        %v1244 = vunpack.c.l.b16 %v771
        %v1245 = vunpack.c.h.b16 %v771
        %v1246 = vunpack.c.l.b16 %v772
        %v1247 = vunpack.c.h.b16 %v772
        %v1248 = vunpack.c.l.b16 %v773
        %v1249 = vunpack.c.h.b16 %v773
        %v1250 = vunpack.c.l.b16 %v774
        %v1251 = vunpack.c.h.b16 %v774
        %v1252 = vunpack.c.l.b16 %v775
        %v1253 = vunpack.c.h.b16 %v775
        %v1254 = vunpack.c.l.b16 %v776
        %v1255 = vunpack.c.h.b16 %v776
        %v1256 = vunpack.c.l.b16 %v777
        %v1257 = vunpack.c.h.b16 %v777
        %v1258 = vunpack.c.l.b16 %v778
        %v1259 = vunpack.c.h.b16 %v778
        %v1260 = vunpack.c.l.b16 %v779
        %v1261 = vunpack.c.h.b16 %v779
        %v1262 = vunpack.c.l.b16 %v780
        %v1263 = vunpack.c.h.b16 %v780
        %v1264 = vunpack.c.l.b16 %v781
        %v1265 = vunpack.c.h.b16 %v781
        %v1266 = vunpack.c.l.b16 %v782
        %v1267 = vunpack.c.h.b16 %v782
        %v1268 = vunpack.c.l.b16 %v783
        %v1269 = vunpack.c.h.b16 %v783
        %v1270 = vunpack.c.l.b16 %v784
        %v1271 = vunpack.c.h.b16 %v784
        %v1272 = vunpack.c.l.b16 %v785
        %v1273 = vunpack.c.h.b16 %v785
        %v1274 = vunpack.c.l.b16 %v786
        %v1275 = vunpack.c.h.b16 %v786
        %v1276 = vunpack.c.l.b16 %v787
        %v1277 = vunpack.c.h.b16 %v787
        %v1278 = vunpack.c.l.b16 %v788
        %v1279 = vunpack.c.h.b16 %v788
        %v1280 = vunpack.c.l.b16 %v789
        %v1281 = vunpack.c.h.b16 %v789
        %v1282 = vunpack.c.l.b16 %v790
        %v1283 = vunpack.c.h.b16 %v790
        %v1284 = vunpack.c.l.b16 %v791
        %v1285 = vunpack.c.h.b16 %v791
        %v1286 = vunpack.c.l.b16 %v792
        %v1287 = vunpack.c.h.b16 %v792
        %v1288 = vunpack.c.l.b16 %v793
        %v1289 = vunpack.c.h.b16 %v793
        %v1290 = vunpack.c.l.b16 %v794
        %v1291 = vunpack.c.h.b16 %v794
        %v1292 = vunpack.c.l.b16 %v795
        %v1293 = vunpack.c.h.b16 %v795
        %v1294 = vunpack.c.l.b16 %v796
        %v1295 = vunpack.c.h.b16 %v796
        %v1296 = vunpack.c.l.b16 %v797
        %v1297 = vunpack.c.h.b16 %v797
        %v1298 = vunpack.c.l.b16 %v798
        %v1299 = vunpack.c.h.b16 %v798
        %v1300 = vunpack.c.l.b16 %v799
        %v1301 = vunpack.c.h.b16 %v799
        %v1302 = vunpack.c.l.b16 %v800
        %v1303 = vunpack.c.h.b16 %v800
        %v1304 = vunpack.c.l.b16 %v801
        %v1305 = vunpack.c.h.b16 %v801
        %v1306 = vunpack.c.l.b16 %v802
        %v1307 = vunpack.c.h.b16 %v802
        %v1308 = vunpack.c.l.b16 %v803
        %v1309 = vunpack.c.h.b16 %v803
        %v1310 = vunpack.c.l.b16 %v804
        %v1311 = vunpack.c.h.b16 %v804
        %v1312 = vunpack.c.l.b16 %v805
        %v1313 = vunpack.c.h.b16 %v805
        %v1314 = vunpack.c.l.b16 %v806
        %v1315 = vunpack.c.h.b16 %v806
        %v1316 = vunpack.c.l.b16 %v807
        %v1317 = vunpack.c.h.b16 %v807
        %v1318 = vunpack.c.l.b16 %v808
        %v1319 = vunpack.c.h.b16 %v808
        %v1320 = vunpack.c.l.b16 %v809
        %v1321 = vunpack.c.h.b16 %v809
        %v1322 = vpack.c.b16 %v1074, %v1066
        %v1323 = vpack.c.b16 %v1075, %v1067
        %v1324 = vpack.c.b16 %v1076, %v1068
        %v1325 = vpack.c.b16 %v1077, %v1069
        %v1326 = vpack.c.b16 %v1078, %v1070
        %v1327 = vpack.c.b16 %v1079, %v1071
        %v1328 = vpack.c.b16 %v1080, %v1072
        %v1329 = vpack.c.b16 %v1081, %v1073
        %v1330 = vpack.c.b16 %v1090, %v1082
        %v1331 = vpack.c.b16 %v1091, %v1083
        %v1332 = vpack.c.b16 %v1092, %v1084
        %v1333 = vpack.c.b16 %v1093, %v1085
        %v1334 = vpack.c.b16 %v1094, %v1086
        %v1335 = vpack.c.b16 %v1095, %v1087
        %v1336 = vpack.c.b16 %v1096, %v1088
        %v1337 = vpack.c.b16 %v1097, %v1089
        %v1338 = vpack.c.b16 %v1106, %v1098
        %v1339 = vpack.c.b16 %v1107, %v1099
        %v1340 = vpack.c.b16 %v1108, %v1100
        %v1341 = vpack.c.b16 %v1109, %v1101
        %v1342 = vpack.c.b16 %v1110, %v1102
        %v1343 = vpack.c.b16 %v1111, %v1103
        %v1344 = vpack.c.b16 %v1112, %v1104
        %v1345 = vpack.c.b16 %v1113, %v1105
        %v1346 = vpack.c.b16 %v1122, %v1114
        %v1347 = vpack.c.b16 %v1123, %v1115
        %v1348 = vpack.c.b16 %v1124, %v1116
        %v1349 = vpack.c.b16 %v1125, %v1117
        %v1350 = vpack.c.b16 %v1126, %v1118
        %v1351 = vpack.c.b16 %v1127, %v1119
        %v1352 = vpack.c.b16 %v1128, %v1120
        %v1353 = vpack.c.b16 %v1129, %v1121
        %v1354 = vpack.c.b16 %v1138, %v1130
        %v1355 = vpack.c.b16 %v1139, %v1131
        %v1356 = vpack.c.b16 %v1140, %v1132
        %v1357 = vpack.c.b16 %v1141, %v1133
        %v1358 = vpack.c.b16 %v1142, %v1134
        %v1359 = vpack.c.b16 %v1143, %v1135
        %v1360 = vpack.c.b16 %v1144, %v1136
        %v1361 = vpack.c.b16 %v1145, %v1137
        %v1362 = vpack.c.b16 %v1154, %v1146
        %v1363 = vpack.c.b16 %v1155, %v1147
        %v1364 = vpack.c.b16 %v1156, %v1148
        %v1365 = vpack.c.b16 %v1157, %v1149
        %v1366 = vpack.c.b16 %v1158, %v1150
        %v1367 = vpack.c.b16 %v1159, %v1151
        %v1368 = vpack.c.b16 %v1160, %v1152
        %v1369 = vpack.c.b16 %v1161, %v1153
        %v1370 = vpack.c.b16 %v1170, %v1162
        %v1371 = vpack.c.b16 %v1171, %v1163
        %v1372 = vpack.c.b16 %v1172, %v1164
        %v1373 = vpack.c.b16 %v1173, %v1165
        %v1374 = vpack.c.b16 %v1174, %v1166
        %v1375 = vpack.c.b16 %v1175, %v1167
        %v1376 = vpack.c.b16 %v1176, %v1168
        %v1377 = vpack.c.b16 %v1177, %v1169
        %v1378 = vpack.c.b16 %v1186, %v1178
        %v1379 = vpack.c.b16 %v1187, %v1179
        %v1380 = vpack.c.b16 %v1188, %v1180
        %v1381 = vpack.c.b16 %v1189, %v1181
        %v1382 = vpack.c.b16 %v1190, %v1182
        %v1383 = vpack.c.b16 %v1191, %v1183
        %v1384 = vpack.c.b16 %v1192, %v1184
        %v1385 = vpack.c.b16 %v1193, %v1185
        %v1386 = vpack.c.b16 %v1202, %v1194
        %v1387 = vpack.c.b16 %v1203, %v1195
        %v1388 = vpack.c.b16 %v1204, %v1196
        %v1389 = vpack.c.b16 %v1205, %v1197
        %v1390 = vpack.c.b16 %v1206, %v1198
        %v1391 = vpack.c.b16 %v1207, %v1199
        %v1392 = vpack.c.b16 %v1208, %v1200
        %v1393 = vpack.c.b16 %v1209, %v1201
        %v1394 = vpack.c.b16 %v1218, %v1210
        %v1395 = vpack.c.b16 %v1219, %v1211
        %v1396 = vpack.c.b16 %v1220, %v1212
        %v1397 = vpack.c.b16 %v1221, %v1213
        %v1398 = vpack.c.b16 %v1222, %v1214
        %v1399 = vpack.c.b16 %v1223, %v1215
        %v1400 = vpack.c.b16 %v1224, %v1216
        %v1401 = vpack.c.b16 %v1225, %v1217
        %v1402 = vpack.c.b16 %v1234, %v1226
        %v1403 = vpack.c.b16 %v1235, %v1227
        %v1404 = vpack.c.b16 %v1236, %v1228
        %v1405 = vpack.c.b16 %v1237, %v1229
        %v1406 = vpack.c.b16 %v1238, %v1230
        %v1407 = vpack.c.b16 %v1239, %v1231
        %v1408 = vpack.c.b16 %v1240, %v1232
        %v1409 = vpack.c.b16 %v1241, %v1233
        %v1410 = vpack.c.b16 %v1250, %v1242
        %v1411 = vpack.c.b16 %v1251, %v1243
        %v1412 = vpack.c.b16 %v1252, %v1244
        %v1413 = vpack.c.b16 %v1253, %v1245
        %v1414 = vpack.c.b16 %v1254, %v1246
        %v1415 = vpack.c.b16 %v1255, %v1247
        %v1416 = vpack.c.b16 %v1256, %v1248
        %v1417 = vpack.c.b16 %v1257, %v1249
        %v1418 = vpack.c.b16 %v1266, %v1258
        %v1419 = vpack.c.b16 %v1267, %v1259
        %v1420 = vpack.c.b16 %v1268, %v1260
        %v1421 = vpack.c.b16 %v1269, %v1261
        %v1422 = vpack.c.b16 %v1270, %v1262
        %v1423 = vpack.c.b16 %v1271, %v1263
        %v1424 = vpack.c.b16 %v1272, %v1264
        %v1425 = vpack.c.b16 %v1273, %v1265
        %v1426 = vpack.c.b16 %v1282, %v1274
        %v1427 = vpack.c.b16 %v1283, %v1275
        %v1428 = vpack.c.b16 %v1284, %v1276
        %v1429 = vpack.c.b16 %v1285, %v1277
        %v1430 = vpack.c.b16 %v1286, %v1278
        %v1431 = vpack.c.b16 %v1287, %v1279
        %v1432 = vpack.c.b16 %v1288, %v1280
        %v1433 = vpack.c.b16 %v1289, %v1281
        %v1434 = vpack.c.b16 %v1298, %v1290
        %v1435 = vpack.c.b16 %v1299, %v1291
        %v1436 = vpack.c.b16 %v1300, %v1292
        %v1437 = vpack.c.b16 %v1301, %v1293
        %v1438 = vpack.c.b16 %v1302, %v1294
        %v1439 = vpack.c.b16 %v1303, %v1295
        %v1440 = vpack.c.b16 %v1304, %v1296
        %v1441 = vpack.c.b16 %v1305, %v1297
        %v1442 = vpack.c.b16 %v1314, %v1306
        %v1443 = vpack.c.b16 %v1315, %v1307
        %v1444 = vpack.c.b16 %v1316, %v1308
        %v1445 = vpack.c.b16 %v1317, %v1309
        %v1446 = vpack.c.b16 %v1318, %v1310
        %v1447 = vpack.c.b16 %v1319, %v1311
        %v1448 = vpack.c.b16 %v1320, %v1312
        %v1449 = vpack.c.b16 %v1321, %v1313
        %v1706 = vunpack.c.l.b16 %v810
        %v1707 = vunpack.c.l.b16 %v811
        %v1708 = vunpack.c.l.b16 %v812
        %v1709 = vunpack.c.l.b16 %v813
        %v1710 = vunpack.c.l.b16 %v814
        %v1711 = vunpack.c.l.b16 %v815
        %v1712 = vunpack.c.l.b16 %v816
        %v1713 = vunpack.c.l.b16 %v817
        %v1714 = vunpack.c.l.b16 %v818
        %v1715 = vunpack.c.l.b16 %v819
        %v1716 = vunpack.c.l.b16 %v820
        %v1717 = vunpack.c.l.b16 %v821
        %v1718 = vunpack.c.l.b16 %v822
        %v1719 = vunpack.c.l.b16 %v823
        %v1720 = vunpack.c.l.b16 %v824
        %v1721 = vunpack.c.l.b16 %v825
        %v1722 = vunpack.c.l.b16 %v826
        %v1723 = vunpack.c.l.b16 %v827
        %v1724 = vunpack.c.l.b16 %v828
        %v1725 = vunpack.c.l.b16 %v829
        %v1726 = vunpack.c.l.b16 %v830
        %v1727 = vunpack.c.l.b16 %v831
        %v1728 = vunpack.c.l.b16 %v832
        %v1729 = vunpack.c.l.b16 %v833
        %v1730 = vunpack.c.l.b16 %v834
        %v1731 = vunpack.c.l.b16 %v835
        %v1732 = vunpack.c.l.b16 %v836
        %v1733 = vunpack.c.l.b16 %v837
        %v1734 = vunpack.c.l.b16 %v838
        %v1735 = vunpack.c.l.b16 %v839
        %v1736 = vunpack.c.l.b16 %v840
        %v1737 = vunpack.c.l.b16 %v841
        %v1738 = vunpack.c.l.b16 %v842
        %v1739 = vunpack.c.l.b16 %v843
        %v1740 = vunpack.c.l.b16 %v844
        %v1741 = vunpack.c.l.b16 %v845
        %v1742 = vunpack.c.l.b16 %v846
        %v1743 = vunpack.c.l.b16 %v847
        %v1744 = vunpack.c.l.b16 %v848
        %v1745 = vunpack.c.l.b16 %v849
        %v1746 = vunpack.c.l.b16 %v850
        %v1747 = vunpack.c.l.b16 %v851
        %v1748 = vunpack.c.l.b16 %v852
        %v1749 = vunpack.c.l.b16 %v853
        %v1750 = vunpack.c.l.b16 %v854
        %v1751 = vunpack.c.l.b16 %v855
        %v1752 = vunpack.c.l.b16 %v856
        %v1753 = vunpack.c.l.b16 %v857
        %v1754 = vunpack.c.l.b16 %v858
        %v1755 = vunpack.c.l.b16 %v859
        %v1756 = vunpack.c.l.b16 %v860
        %v1757 = vunpack.c.l.b16 %v861
        %v1758 = vunpack.c.l.b16 %v862
        %v1759 = vunpack.c.l.b16 %v863
        %v1760 = vunpack.c.l.b16 %v864
        %v1761 = vunpack.c.l.b16 %v865
        %v1762 = vunpack.c.l.b16 %v866
        %v1763 = vunpack.c.l.b16 %v867
        %v1764 = vunpack.c.l.b16 %v868
        %v1765 = vunpack.c.l.b16 %v869
        %v1766 = vunpack.c.l.b16 %v870
        %v1767 = vunpack.c.l.b16 %v871
        %v1768 = vunpack.c.l.b16 %v872
        %v1769 = vunpack.c.l.b16 %v873
        %v1770 = vunpack.c.l.b16 %v874
        %v1771 = vunpack.c.l.b16 %v875
        %v1772 = vunpack.c.l.b16 %v876
        %v1773 = vunpack.c.l.b16 %v877
        %v1774 = vunpack.c.l.b16 %v878
        %v1775 = vunpack.c.l.b16 %v879
        %v1776 = vunpack.c.l.b16 %v880
        %v1777 = vunpack.c.l.b16 %v881
        %v1778 = vunpack.c.l.b16 %v882
        %v1779 = vunpack.c.l.b16 %v883
        %v1780 = vunpack.c.l.b16 %v884
        %v1781 = vunpack.c.l.b16 %v885
        %v1782 = vunpack.c.l.b16 %v886
        %v1783 = vunpack.c.l.b16 %v887
        %v1784 = vunpack.c.l.b16 %v888
        %v1785 = vunpack.c.l.b16 %v889
        %v1786 = vunpack.c.l.b16 %v890
        %v1787 = vunpack.c.l.b16 %v891
        %v1788 = vunpack.c.l.b16 %v892
        %v1789 = vunpack.c.l.b16 %v893
        %v1790 = vunpack.c.l.b16 %v894
        %v1791 = vunpack.c.l.b16 %v895
        %v1792 = vunpack.c.l.b16 %v896
        %v1793 = vunpack.c.l.b16 %v897
        %v1794 = vunpack.c.l.b16 %v898
        %v1795 = vunpack.c.l.b16 %v899
        %v1796 = vunpack.c.l.b16 %v900
        %v1797 = vunpack.c.l.b16 %v901
        %v1798 = vunpack.c.l.b16 %v902
        %v1799 = vunpack.c.l.b16 %v903
        %v1800 = vunpack.c.l.b16 %v904
        %v1801 = vunpack.c.l.b16 %v905
        %v1802 = vunpack.c.l.b16 %v906
        %v1803 = vunpack.c.l.b16 %v907
        %v1804 = vunpack.c.l.b16 %v908
        %v1805 = vunpack.c.l.b16 %v909
        %v1806 = vunpack.c.l.b16 %v910
        %v1807 = vunpack.c.l.b16 %v911
        %v1808 = vunpack.c.l.b16 %v912
        %v1809 = vunpack.c.l.b16 %v913
        %v1810 = vunpack.c.l.b16 %v914
        %v1811 = vunpack.c.l.b16 %v915
        %v1812 = vunpack.c.l.b16 %v916
        %v1813 = vunpack.c.l.b16 %v917
        %v1814 = vunpack.c.l.b16 %v918
        %v1815 = vunpack.c.l.b16 %v919
        %v1816 = vunpack.c.l.b16 %v920
        %v1817 = vunpack.c.l.b16 %v921
        %v1818 = vunpack.c.l.b16 %v922
        %v1819 = vunpack.c.l.b16 %v923
        %v1820 = vunpack.c.l.b16 %v924
        %v1821 = vunpack.c.l.b16 %v925
        %v1822 = vunpack.c.l.b16 %v926
        %v1823 = vunpack.c.l.b16 %v927
        %v1824 = vunpack.c.l.b16 %v928
        %v1825 = vunpack.c.l.b16 %v929
        %v1826 = vunpack.c.l.b16 %v930
        %v1827 = vunpack.c.l.b16 %v931
        %v1828 = vunpack.c.l.b16 %v932
        %v1829 = vunpack.c.l.b16 %v933
        %v1830 = vunpack.c.l.b16 %v934
        %v1831 = vunpack.c.l.b16 %v935
        %v1832 = vunpack.c.l.b16 %v936
        %v1833 = vunpack.c.l.b16 %v937
        %v1834 = vpack.c.b16 %v1707, %v1706
        %v1835 = vpack.c.b16 %v1709, %v1708
        %v1836 = vpack.c.b16 %v1711, %v1710
        %v1837 = vpack.c.b16 %v1713, %v1712
        %v1838 = vpack.c.b16 %v1715, %v1714
        %v1839 = vpack.c.b16 %v1717, %v1716
        %v1840 = vpack.c.b16 %v1719, %v1718
        %v1841 = vpack.c.b16 %v1721, %v1720
        %v1842 = vpack.c.b16 %v1723, %v1722
        %v1843 = vpack.c.b16 %v1725, %v1724
        %v1844 = vpack.c.b16 %v1727, %v1726
        %v1845 = vpack.c.b16 %v1729, %v1728
        %v1846 = vpack.c.b16 %v1731, %v1730
        %v1847 = vpack.c.b16 %v1733, %v1732
        %v1848 = vpack.c.b16 %v1735, %v1734
        %v1849 = vpack.c.b16 %v1737, %v1736
        %v1850 = vpack.c.b16 %v1739, %v1738
        %v1851 = vpack.c.b16 %v1741, %v1740
        %v1852 = vpack.c.b16 %v1743, %v1742
        %v1853 = vpack.c.b16 %v1745, %v1744
        %v1854 = vpack.c.b16 %v1747, %v1746
        %v1855 = vpack.c.b16 %v1749, %v1748
        %v1856 = vpack.c.b16 %v1751, %v1750
        %v1857 = vpack.c.b16 %v1753, %v1752
        %v1858 = vpack.c.b16 %v1755, %v1754
        %v1859 = vpack.c.b16 %v1757, %v1756
        %v1860 = vpack.c.b16 %v1759, %v1758
        %v1861 = vpack.c.b16 %v1761, %v1760
        %v1862 = vpack.c.b16 %v1763, %v1762
        %v1863 = vpack.c.b16 %v1765, %v1764
        %v1864 = vpack.c.b16 %v1767, %v1766
        %v1865 = vpack.c.b16 %v1769, %v1768
        %v1866 = vpack.c.b16 %v1771, %v1770
        %v1867 = vpack.c.b16 %v1773, %v1772
        %v1868 = vpack.c.b16 %v1775, %v1774
        %v1869 = vpack.c.b16 %v1777, %v1776
        %v1870 = vpack.c.b16 %v1779, %v1778
        %v1871 = vpack.c.b16 %v1781, %v1780
        %v1872 = vpack.c.b16 %v1783, %v1782
        %v1873 = vpack.c.b16 %v1785, %v1784
        %v1874 = vpack.c.b16 %v1787, %v1786
        %v1875 = vpack.c.b16 %v1789, %v1788
        %v1876 = vpack.c.b16 %v1791, %v1790
        %v1877 = vpack.c.b16 %v1793, %v1792
        %v1878 = vpack.c.b16 %v1795, %v1794
        %v1879 = vpack.c.b16 %v1797, %v1796
        %v1880 = vpack.c.b16 %v1799, %v1798
        %v1881 = vpack.c.b16 %v1801, %v1800
        %v1882 = vpack.c.b16 %v1803, %v1802
        %v1883 = vpack.c.b16 %v1805, %v1804
        %v1884 = vpack.c.b16 %v1807, %v1806
        %v1885 = vpack.c.b16 %v1809, %v1808
        %v1886 = vpack.c.b16 %v1811, %v1810
        %v1887 = vpack.c.b16 %v1813, %v1812
        %v1888 = vpack.c.b16 %v1815, %v1814
        %v1889 = vpack.c.b16 %v1817, %v1816
        %v1890 = vpack.c.b16 %v1819, %v1818
        %v1891 = vpack.c.b16 %v1821, %v1820
        %v1892 = vpack.c.b16 %v1823, %v1822
        %v1893 = vpack.c.b16 %v1825, %v1824
        %v1894 = vpack.c.b16 %v1827, %v1826
        %v1895 = vpack.c.b16 %v1829, %v1828
        %v1896 = vpack.c.b16 %v1831, %v1830
        %v1897 = vpack.c.b16 %v1833, %v1832
        %1962 = vmatpush.bf16.msra.mxu0 %v1841
        %1963 = vmatpush.bf16.msra.mxu0 %v1840
        %1964 = vmatpush.bf16.msra.mxu0 %v1839
        %1965 = vmatpush.bf16.msra.mxu0 %v1838
        %1966 = vmatpush.bf16.msra.mxu0 %v1837
        %1967 = vmatpush.bf16.msra.mxu0 %v1836
        %1968 = vmatpush.bf16.msra.mxu0 %v1835
        %1969 = vmatpush.bf16.msra.mxu0 %v1834
        %1970 = vmatmul.bf16.gmra.mxu0 %v1322
        %v1971 = vpop.f32.mrf.mxu0
        %v1972 = vadd.f32 0.0, %v1971
        %v1973 = vpop.f32.mrf.mxu0
        %v1974 = vadd.f32 0.0, %v1973
        %1975 = vmatmul.bf16.gmra.mxu0 %v1330
        %v1976 = vpop.f32.mrf.mxu0
        %v1977 = vadd.f32 0.0, %v1976
        %v1978 = vpop.f32.mrf.mxu0
        %v1979 = vadd.f32 0.0, %v1978
        %1980 = vmatmul.bf16.gmra.mxu0 %v1338
        %v1981 = vpop.f32.mrf.mxu0
        %v1982 = vadd.f32 0.0, %v1981
        %v1983 = vpop.f32.mrf.mxu0
        %v1984 = vadd.f32 0.0, %v1983
        %1985 = vmatmul.bf16.gmra.mxu0 %v1346
        %v1986 = vpop.f32.mrf.mxu0
        %v1987 = vadd.f32 0.0, %v1986
        %v1988 = vpop.f32.mrf.mxu0
        %v1989 = vadd.f32 0.0, %v1988
        %1990 = vmatmul.bf16.gmra.mxu0 %v1354
        %v1991 = vpop.f32.mrf.mxu0
        %v1992 = vadd.f32 0.0, %v1991
        %v1993 = vpop.f32.mrf.mxu0
        %v1994 = vadd.f32 0.0, %v1993
        %1995 = vmatmul.bf16.gmra.mxu0 %v1362
        %v1996 = vpop.f32.mrf.mxu0
        %v1997 = vadd.f32 0.0, %v1996
        %v1998 = vpop.f32.mrf.mxu0
        %v1999 = vadd.f32 0.0, %v1998
        %2000 = vmatmul.bf16.gmra.mxu0 %v1370
        %v2001 = vpop.f32.mrf.mxu0
        %v2002 = vadd.f32 0.0, %v2001
        %v2003 = vpop.f32.mrf.mxu0
        %v2004 = vadd.f32 0.0, %v2003
        %2005 = vmatmul.bf16.gmra.mxu0 %v1378
        %v2006 = vpop.f32.mrf.mxu0
        %v2007 = vadd.f32 0.0, %v2006
        %v2008 = vpop.f32.mrf.mxu0
        %v2009 = vadd.f32 0.0, %v2008
        %2010 = vmatmul.bf16.gmra.mxu0 %v1386
        %v2011 = vpop.f32.mrf.mxu0
        %v2012 = vadd.f32 0.0, %v2011
        %v2013 = vpop.f32.mrf.mxu0
        %v2014 = vadd.f32 0.0, %v2013
        %2015 = vmatmul.bf16.gmra.mxu0 %v1394
        %v2016 = vpop.f32.mrf.mxu0
        %v2017 = vadd.f32 0.0, %v2016
        %v2018 = vpop.f32.mrf.mxu0
        %v2019 = vadd.f32 0.0, %v2018
        %2020 = vmatmul.bf16.gmra.mxu0 %v1402
        %v2021 = vpop.f32.mrf.mxu0
        %v2022 = vadd.f32 0.0, %v2021
        %v2023 = vpop.f32.mrf.mxu0
        %v2024 = vadd.f32 0.0, %v2023
        %2025 = vmatmul.bf16.gmra.mxu0 %v1410
        %v2026 = vpop.f32.mrf.mxu0
        %v2027 = vadd.f32 0.0, %v2026
        %v2028 = vpop.f32.mrf.mxu0
        %v2029 = vadd.f32 0.0, %v2028
        %2030 = vmatmul.bf16.gmra.mxu0 %v1418
        %v2031 = vpop.f32.mrf.mxu0
        %v2032 = vadd.f32 0.0, %v2031
        %v2033 = vpop.f32.mrf.mxu0
        %v2034 = vadd.f32 0.0, %v2033
        %2035 = vmatmul.bf16.gmra.mxu0 %v1426
        %v2036 = vpop.f32.mrf.mxu0
        %v2037 = vadd.f32 0.0, %v2036
        %v2038 = vpop.f32.mrf.mxu0
        %v2039 = vadd.f32 0.0, %v2038
        %2040 = vmatmul.bf16.gmra.mxu0 %v1434
        %v2041 = vpop.f32.mrf.mxu0
        %v2042 = vadd.f32 0.0, %v2041
        %v2043 = vpop.f32.mrf.mxu0
        %v2044 = vadd.f32 0.0, %v2043
        %2045 = vmatmul.bf16.gmra.mxu0 %v1442
        %v2046 = vpop.f32.mrf.mxu0
        %v2047 = vadd.f32 0.0, %v2046
        %v2048 = vpop.f32.mrf.mxu0
        %v2049 = vadd.f32 0.0, %v2048
        %2050 = vdwg.mxu0
        %2051 = vmatpush.bf16.msra.mxu0 %v1849
        %2052 = vmatpush.bf16.msra.mxu0 %v1848
        %2053 = vmatpush.bf16.msra.mxu0 %v1847
        %2054 = vmatpush.bf16.msra.mxu0 %v1846
        %2055 = vmatpush.bf16.msra.mxu0 %v1845
        %2056 = vmatpush.bf16.msra.mxu0 %v1844
        %2057 = vmatpush.bf16.msra.mxu0 %v1843
        %2058 = vmatpush.bf16.msra.mxu0 %v1842
        %2059 = vmatmul.bf16.gmra.mxu0 %v1323
        %v2060 = vpop.f32.mrf.mxu0
        %v2061 = vadd.f32 %v1972, %v2060
        %v2062 = vpop.f32.mrf.mxu0
        %v2063 = vadd.f32 %v1974, %v2062
        %2064 = vmatmul.bf16.gmra.mxu0 %v1331
        %v2065 = vpop.f32.mrf.mxu0
        %v2066 = vadd.f32 %v1977, %v2065
        %v2067 = vpop.f32.mrf.mxu0
        %v2068 = vadd.f32 %v1979, %v2067
        %2069 = vmatmul.bf16.gmra.mxu0 %v1339
        %v2070 = vpop.f32.mrf.mxu0
        %v2071 = vadd.f32 %v1982, %v2070
        %v2072 = vpop.f32.mrf.mxu0
        %v2073 = vadd.f32 %v1984, %v2072
        %2074 = vmatmul.bf16.gmra.mxu0 %v1347
        %v2075 = vpop.f32.mrf.mxu0
        %v2076 = vadd.f32 %v1987, %v2075
        %v2077 = vpop.f32.mrf.mxu0
        %v2078 = vadd.f32 %v1989, %v2077
        %2079 = vmatmul.bf16.gmra.mxu0 %v1355
        %v2080 = vpop.f32.mrf.mxu0
        %v2081 = vadd.f32 %v1992, %v2080
        %v2082 = vpop.f32.mrf.mxu0
        %v2083 = vadd.f32 %v1994, %v2082
        %2084 = vmatmul.bf16.gmra.mxu0 %v1363
        %v2085 = vpop.f32.mrf.mxu0
        %v2086 = vadd.f32 %v1997, %v2085
        %v2087 = vpop.f32.mrf.mxu0
        %v2088 = vadd.f32 %v1999, %v2087
        %2089 = vmatmul.bf16.gmra.mxu0 %v1371
        %v2090 = vpop.f32.mrf.mxu0
        %v2091 = vadd.f32 %v2002, %v2090
        %v2092 = vpop.f32.mrf.mxu0
        %v2093 = vadd.f32 %v2004, %v2092
        %2094 = vmatmul.bf16.gmra.mxu0 %v1379
        %v2095 = vpop.f32.mrf.mxu0
        %v2096 = vadd.f32 %v2007, %v2095
        %v2097 = vpop.f32.mrf.mxu0
        %v2098 = vadd.f32 %v2009, %v2097
        %2099 = vmatmul.bf16.gmra.mxu0 %v1387
        %v2100 = vpop.f32.mrf.mxu0
        %v2101 = vadd.f32 %v2012, %v2100
        %v2102 = vpop.f32.mrf.mxu0
        %v2103 = vadd.f32 %v2014, %v2102
        %2104 = vmatmul.bf16.gmra.mxu0 %v1395
        %v2105 = vpop.f32.mrf.mxu0
        %v2106 = vadd.f32 %v2017, %v2105
        %v2107 = vpop.f32.mrf.mxu0
        %v2108 = vadd.f32 %v2019, %v2107
        %2109 = vmatmul.bf16.gmra.mxu0 %v1403
        %v2110 = vpop.f32.mrf.mxu0
        %v2111 = vadd.f32 %v2022, %v2110
        %v2112 = vpop.f32.mrf.mxu0
        %v2113 = vadd.f32 %v2024, %v2112
        %2114 = vmatmul.bf16.gmra.mxu0 %v1411
        %v2115 = vpop.f32.mrf.mxu0
        %v2116 = vadd.f32 %v2027, %v2115
        %v2117 = vpop.f32.mrf.mxu0
        %v2118 = vadd.f32 %v2029, %v2117
        %2119 = vmatmul.bf16.gmra.mxu0 %v1419
        %v2120 = vpop.f32.mrf.mxu0
        %v2121 = vadd.f32 %v2032, %v2120
        %v2122 = vpop.f32.mrf.mxu0
        %v2123 = vadd.f32 %v2034, %v2122
        %2124 = vmatmul.bf16.gmra.mxu0 %v1427
        %v2125 = vpop.f32.mrf.mxu0
        %v2126 = vadd.f32 %v2037, %v2125
        %v2127 = vpop.f32.mrf.mxu0
        %v2128 = vadd.f32 %v2039, %v2127
        %2129 = vmatmul.bf16.gmra.mxu0 %v1435
        %v2130 = vpop.f32.mrf.mxu0
        %v2131 = vadd.f32 %v2042, %v2130
        %v2132 = vpop.f32.mrf.mxu0
        %v2133 = vadd.f32 %v2044, %v2132
        %2134 = vmatmul.bf16.gmra.mxu0 %v1443
        %v2135 = vpop.f32.mrf.mxu0
        %v2136 = vadd.f32 %v2047, %v2135
        %v2137 = vpop.f32.mrf.mxu0
        %v2138 = vadd.f32 %v2049, %v2137
        %2139 = vdwg.mxu0
        %2140 = vmatpush.bf16.msra.mxu0 %v1857
        %2141 = vmatpush.bf16.msra.mxu0 %v1856
        %2142 = vmatpush.bf16.msra.mxu0 %v1855
        %2143 = vmatpush.bf16.msra.mxu0 %v1854
        %2144 = vmatpush.bf16.msra.mxu0 %v1853
        %2145 = vmatpush.bf16.msra.mxu0 %v1852
        %2146 = vmatpush.bf16.msra.mxu0 %v1851
        %2147 = vmatpush.bf16.msra.mxu0 %v1850
        %2148 = vmatmul.bf16.gmra.mxu0 %v1324
        %v2149 = vpop.f32.mrf.mxu0
        %v2150 = vadd.f32 %v2061, %v2149
        %v2151 = vpop.f32.mrf.mxu0
        %v2152 = vadd.f32 %v2063, %v2151
        %2153 = vmatmul.bf16.gmra.mxu0 %v1332
        %v2154 = vpop.f32.mrf.mxu0
        %v2155 = vadd.f32 %v2066, %v2154
        %v2156 = vpop.f32.mrf.mxu0
        %v2157 = vadd.f32 %v2068, %v2156
        %2158 = vmatmul.bf16.gmra.mxu0 %v1340
        %v2159 = vpop.f32.mrf.mxu0
        %v2160 = vadd.f32 %v2071, %v2159
        %v2161 = vpop.f32.mrf.mxu0
        %v2162 = vadd.f32 %v2073, %v2161
        %2163 = vmatmul.bf16.gmra.mxu0 %v1348
        %v2164 = vpop.f32.mrf.mxu0
        %v2165 = vadd.f32 %v2076, %v2164
        %v2166 = vpop.f32.mrf.mxu0
        %v2167 = vadd.f32 %v2078, %v2166
        %2168 = vmatmul.bf16.gmra.mxu0 %v1356
        %v2169 = vpop.f32.mrf.mxu0
        %v2170 = vadd.f32 %v2081, %v2169
        %v2171 = vpop.f32.mrf.mxu0
        %v2172 = vadd.f32 %v2083, %v2171
        %2173 = vmatmul.bf16.gmra.mxu0 %v1364
        %v2174 = vpop.f32.mrf.mxu0
        %v2175 = vadd.f32 %v2086, %v2174
        %v2176 = vpop.f32.mrf.mxu0
        %v2177 = vadd.f32 %v2088, %v2176
        %2178 = vmatmul.bf16.gmra.mxu0 %v1372
        %v2179 = vpop.f32.mrf.mxu0
        %v2180 = vadd.f32 %v2091, %v2179
        %v2181 = vpop.f32.mrf.mxu0
        %v2182 = vadd.f32 %v2093, %v2181
        %2183 = vmatmul.bf16.gmra.mxu0 %v1380
        %v2184 = vpop.f32.mrf.mxu0
        %v2185 = vadd.f32 %v2096, %v2184
        %v2186 = vpop.f32.mrf.mxu0
        %v2187 = vadd.f32 %v2098, %v2186
        %2188 = vmatmul.bf16.gmra.mxu0 %v1388
        %v2189 = vpop.f32.mrf.mxu0
        %v2190 = vadd.f32 %v2101, %v2189
        %v2191 = vpop.f32.mrf.mxu0
        %v2192 = vadd.f32 %v2103, %v2191
        %2193 = vmatmul.bf16.gmra.mxu0 %v1396
        %v2194 = vpop.f32.mrf.mxu0
        %v2195 = vadd.f32 %v2106, %v2194
        %v2196 = vpop.f32.mrf.mxu0
        %v2197 = vadd.f32 %v2108, %v2196
        %2198 = vmatmul.bf16.gmra.mxu0 %v1404
        %v2199 = vpop.f32.mrf.mxu0
        %v2200 = vadd.f32 %v2111, %v2199
        %v2201 = vpop.f32.mrf.mxu0
        %v2202 = vadd.f32 %v2113, %v2201
        %2203 = vmatmul.bf16.gmra.mxu0 %v1412
        %v2204 = vpop.f32.mrf.mxu0
        %v2205 = vadd.f32 %v2116, %v2204
        %v2206 = vpop.f32.mrf.mxu0
        %v2207 = vadd.f32 %v2118, %v2206
        %2208 = vmatmul.bf16.gmra.mxu0 %v1420
        %v2209 = vpop.f32.mrf.mxu0
        %v2210 = vadd.f32 %v2121, %v2209
        %v2211 = vpop.f32.mrf.mxu0
        %v2212 = vadd.f32 %v2123, %v2211
        %2213 = vmatmul.bf16.gmra.mxu0 %v1428
        %v2214 = vpop.f32.mrf.mxu0
        %v2215 = vadd.f32 %v2126, %v2214
        %v2216 = vpop.f32.mrf.mxu0
        %v2217 = vadd.f32 %v2128, %v2216
        %2218 = vmatmul.bf16.gmra.mxu0 %v1436
        %v2219 = vpop.f32.mrf.mxu0
        %v2220 = vadd.f32 %v2131, %v2219
        %v2221 = vpop.f32.mrf.mxu0
        %v2222 = vadd.f32 %v2133, %v2221
        %2223 = vmatmul.bf16.gmra.mxu0 %v1444
        %v2224 = vpop.f32.mrf.mxu0
        %v2225 = vadd.f32 %v2136, %v2224
        %v2226 = vpop.f32.mrf.mxu0
        %v2227 = vadd.f32 %v2138, %v2226
        %2228 = vdwg.mxu0
        %2229 = vmatpush.bf16.msra.mxu0 %v1865
        %2230 = vmatpush.bf16.msra.mxu0 %v1864
        %2231 = vmatpush.bf16.msra.mxu0 %v1863
        %2232 = vmatpush.bf16.msra.mxu0 %v1862
        %2233 = vmatpush.bf16.msra.mxu0 %v1861
        %2234 = vmatpush.bf16.msra.mxu0 %v1860
        %2235 = vmatpush.bf16.msra.mxu0 %v1859
        %2236 = vmatpush.bf16.msra.mxu0 %v1858
        %2237 = vmatmul.bf16.gmra.mxu0 %v1325
        %v2238 = vpop.f32.mrf.mxu0
        %v2239 = vadd.f32 %v2150, %v2238
        %v2240 = vpop.f32.mrf.mxu0
        %v2241 = vadd.f32 %v2152, %v2240
        %2242 = vmatmul.bf16.gmra.mxu0 %v1333
        %v2243 = vpop.f32.mrf.mxu0
        %v2244 = vadd.f32 %v2155, %v2243
        %v2245 = vpop.f32.mrf.mxu0
        %v2246 = vadd.f32 %v2157, %v2245
        %2247 = vmatmul.bf16.gmra.mxu0 %v1341
        %v2248 = vpop.f32.mrf.mxu0
        %v2249 = vadd.f32 %v2160, %v2248
        %v2250 = vpop.f32.mrf.mxu0
        %v2251 = vadd.f32 %v2162, %v2250
        %2252 = vmatmul.bf16.gmra.mxu0 %v1349
        %v2253 = vpop.f32.mrf.mxu0
        %v2254 = vadd.f32 %v2165, %v2253
        %v2255 = vpop.f32.mrf.mxu0
        %v2256 = vadd.f32 %v2167, %v2255
        %2257 = vmatmul.bf16.gmra.mxu0 %v1357
        %v2258 = vpop.f32.mrf.mxu0
        %v2259 = vadd.f32 %v2170, %v2258
        %v2260 = vpop.f32.mrf.mxu0
        %v2261 = vadd.f32 %v2172, %v2260
        %2262 = vmatmul.bf16.gmra.mxu0 %v1365
        %v2263 = vpop.f32.mrf.mxu0
        %v2264 = vadd.f32 %v2175, %v2263
        %v2265 = vpop.f32.mrf.mxu0
        %v2266 = vadd.f32 %v2177, %v2265
        %2267 = vmatmul.bf16.gmra.mxu0 %v1373
        %v2268 = vpop.f32.mrf.mxu0
        %v2269 = vadd.f32 %v2180, %v2268
        %v2270 = vpop.f32.mrf.mxu0
        %v2271 = vadd.f32 %v2182, %v2270
        %2272 = vmatmul.bf16.gmra.mxu0 %v1381
        %v2273 = vpop.f32.mrf.mxu0
        %v2274 = vadd.f32 %v2185, %v2273
        %v2275 = vpop.f32.mrf.mxu0
        %v2276 = vadd.f32 %v2187, %v2275
        %2277 = vmatmul.bf16.gmra.mxu0 %v1389
        %v2278 = vpop.f32.mrf.mxu0
        %v2279 = vadd.f32 %v2190, %v2278
        %v2280 = vpop.f32.mrf.mxu0
        %v2281 = vadd.f32 %v2192, %v2280
        %2282 = vmatmul.bf16.gmra.mxu0 %v1397
        %v2283 = vpop.f32.mrf.mxu0
        %v2284 = vadd.f32 %v2195, %v2283
        %v2285 = vpop.f32.mrf.mxu0
        %v2286 = vadd.f32 %v2197, %v2285
        %2287 = vmatmul.bf16.gmra.mxu0 %v1405
        %v2288 = vpop.f32.mrf.mxu0
        %v2289 = vadd.f32 %v2200, %v2288
        %v2290 = vpop.f32.mrf.mxu0
        %v2291 = vadd.f32 %v2202, %v2290
        %2292 = vmatmul.bf16.gmra.mxu0 %v1413
        %v2293 = vpop.f32.mrf.mxu0
        %v2294 = vadd.f32 %v2205, %v2293
        %v2295 = vpop.f32.mrf.mxu0
        %v2296 = vadd.f32 %v2207, %v2295
        %2297 = vmatmul.bf16.gmra.mxu0 %v1421
        %v2298 = vpop.f32.mrf.mxu0
        %v2299 = vadd.f32 %v2210, %v2298
        %v2300 = vpop.f32.mrf.mxu0
        %v2301 = vadd.f32 %v2212, %v2300
        %2302 = vmatmul.bf16.gmra.mxu0 %v1429
        %v2303 = vpop.f32.mrf.mxu0
        %v2304 = vadd.f32 %v2215, %v2303
        %v2305 = vpop.f32.mrf.mxu0
        %v2306 = vadd.f32 %v2217, %v2305
        %2307 = vmatmul.bf16.gmra.mxu0 %v1437
        %v2308 = vpop.f32.mrf.mxu0
        %v2309 = vadd.f32 %v2220, %v2308
        %v2310 = vpop.f32.mrf.mxu0
        %v2311 = vadd.f32 %v2222, %v2310
        %2312 = vmatmul.bf16.gmra.mxu0 %v1445
        %v2313 = vpop.f32.mrf.mxu0
        %v2314 = vadd.f32 %v2225, %v2313
        %v2315 = vpop.f32.mrf.mxu0
        %v2316 = vadd.f32 %v2227, %v2315
        %2317 = vdwg.mxu0
        %2318 = vmatpush.bf16.msra.mxu0 %v1873
        %2319 = vmatpush.bf16.msra.mxu0 %v1872
        %2320 = vmatpush.bf16.msra.mxu0 %v1871
        %2321 = vmatpush.bf16.msra.mxu0 %v1870
        %2322 = vmatpush.bf16.msra.mxu0 %v1869
        %2323 = vmatpush.bf16.msra.mxu0 %v1868
        %2324 = vmatpush.bf16.msra.mxu0 %v1867
        %2325 = vmatpush.bf16.msra.mxu0 %v1866
        %2326 = vmatmul.bf16.gmra.mxu0 %v1326
        %v2327 = vpop.f32.mrf.mxu0
        %v2328 = vadd.f32 %v2239, %v2327
        %v2329 = vpop.f32.mrf.mxu0
        %v2330 = vadd.f32 %v2241, %v2329
        %2331 = vmatmul.bf16.gmra.mxu0 %v1334
        %v2332 = vpop.f32.mrf.mxu0
        %v2333 = vadd.f32 %v2244, %v2332
        %v2334 = vpop.f32.mrf.mxu0
        %v2335 = vadd.f32 %v2246, %v2334
        %2336 = vmatmul.bf16.gmra.mxu0 %v1342
        %v2337 = vpop.f32.mrf.mxu0
        %v2338 = vadd.f32 %v2249, %v2337
        %v2339 = vpop.f32.mrf.mxu0
        %v2340 = vadd.f32 %v2251, %v2339
        %2341 = vmatmul.bf16.gmra.mxu0 %v1350
        %v2342 = vpop.f32.mrf.mxu0
        %v2343 = vadd.f32 %v2254, %v2342
        %v2344 = vpop.f32.mrf.mxu0
        %v2345 = vadd.f32 %v2256, %v2344
        %2346 = vmatmul.bf16.gmra.mxu0 %v1358
        %v2347 = vpop.f32.mrf.mxu0
        %v2348 = vadd.f32 %v2259, %v2347
        %v2349 = vpop.f32.mrf.mxu0
        %v2350 = vadd.f32 %v2261, %v2349
        %2351 = vmatmul.bf16.gmra.mxu0 %v1366
        %v2352 = vpop.f32.mrf.mxu0
        %v2353 = vadd.f32 %v2264, %v2352
        %v2354 = vpop.f32.mrf.mxu0
        %v2355 = vadd.f32 %v2266, %v2354
        %2356 = vmatmul.bf16.gmra.mxu0 %v1374
        %v2357 = vpop.f32.mrf.mxu0
        %v2358 = vadd.f32 %v2269, %v2357
        %v2359 = vpop.f32.mrf.mxu0
        %v2360 = vadd.f32 %v2271, %v2359
        %2361 = vmatmul.bf16.gmra.mxu0 %v1382
        %v2362 = vpop.f32.mrf.mxu0
        %v2363 = vadd.f32 %v2274, %v2362
        %v2364 = vpop.f32.mrf.mxu0
        %v2365 = vadd.f32 %v2276, %v2364
        %2366 = vmatmul.bf16.gmra.mxu0 %v1390
        %v2367 = vpop.f32.mrf.mxu0
        %v2368 = vadd.f32 %v2279, %v2367
        %v2369 = vpop.f32.mrf.mxu0
        %v2370 = vadd.f32 %v2281, %v2369
        %2371 = vmatmul.bf16.gmra.mxu0 %v1398
        %v2372 = vpop.f32.mrf.mxu0
        %v2373 = vadd.f32 %v2284, %v2372
        %v2374 = vpop.f32.mrf.mxu0
        %v2375 = vadd.f32 %v2286, %v2374
        %2376 = vmatmul.bf16.gmra.mxu0 %v1406
        %v2377 = vpop.f32.mrf.mxu0
        %v2378 = vadd.f32 %v2289, %v2377
        %v2379 = vpop.f32.mrf.mxu0
        %v2380 = vadd.f32 %v2291, %v2379
        %2381 = vmatmul.bf16.gmra.mxu0 %v1414
        %v2382 = vpop.f32.mrf.mxu0
        %v2383 = vadd.f32 %v2294, %v2382
        %v2384 = vpop.f32.mrf.mxu0
        %v2385 = vadd.f32 %v2296, %v2384
        %2386 = vmatmul.bf16.gmra.mxu0 %v1422
        %v2387 = vpop.f32.mrf.mxu0
        %v2388 = vadd.f32 %v2299, %v2387
        %v2389 = vpop.f32.mrf.mxu0
        %v2390 = vadd.f32 %v2301, %v2389
        %2391 = vmatmul.bf16.gmra.mxu0 %v1430
        %v2392 = vpop.f32.mrf.mxu0
        %v2393 = vadd.f32 %v2304, %v2392
        %v2394 = vpop.f32.mrf.mxu0
        %v2395 = vadd.f32 %v2306, %v2394
        %2396 = vmatmul.bf16.gmra.mxu0 %v1438
        %v2397 = vpop.f32.mrf.mxu0
        %v2398 = vadd.f32 %v2309, %v2397
        %v2399 = vpop.f32.mrf.mxu0
        %v2400 = vadd.f32 %v2311, %v2399
        %2401 = vmatmul.bf16.gmra.mxu0 %v1446
        %v2402 = vpop.f32.mrf.mxu0
        %v2403 = vadd.f32 %v2314, %v2402
        %v2404 = vpop.f32.mrf.mxu0
        %v2405 = vadd.f32 %v2316, %v2404
        %2406 = vdwg.mxu0
        %2407 = vmatpush.bf16.msra.mxu0 %v1881
        %2408 = vmatpush.bf16.msra.mxu0 %v1880
        %2409 = vmatpush.bf16.msra.mxu0 %v1879
        %2410 = vmatpush.bf16.msra.mxu0 %v1878
        %2411 = vmatpush.bf16.msra.mxu0 %v1877
        %2412 = vmatpush.bf16.msra.mxu0 %v1876
        %2413 = vmatpush.bf16.msra.mxu0 %v1875
        %2414 = vmatpush.bf16.msra.mxu0 %v1874
        %2415 = vmatmul.bf16.gmra.mxu0 %v1327
        %v2416 = vpop.f32.mrf.mxu0
        %v2417 = vadd.f32 %v2328, %v2416
        %v2418 = vpop.f32.mrf.mxu0
        %v2419 = vadd.f32 %v2330, %v2418
        %2420 = vmatmul.bf16.gmra.mxu0 %v1335
        %v2421 = vpop.f32.mrf.mxu0
        %v2422 = vadd.f32 %v2333, %v2421
        %v2423 = vpop.f32.mrf.mxu0
        %v2424 = vadd.f32 %v2335, %v2423
        %2425 = vmatmul.bf16.gmra.mxu0 %v1343
        %v2426 = vpop.f32.mrf.mxu0
        %v2427 = vadd.f32 %v2338, %v2426
        %v2428 = vpop.f32.mrf.mxu0
        %v2429 = vadd.f32 %v2340, %v2428
        %2430 = vmatmul.bf16.gmra.mxu0 %v1351
        %v2431 = vpop.f32.mrf.mxu0
        %v2432 = vadd.f32 %v2343, %v2431
        %v2433 = vpop.f32.mrf.mxu0
        %v2434 = vadd.f32 %v2345, %v2433
        %2435 = vmatmul.bf16.gmra.mxu0 %v1359
        %v2436 = vpop.f32.mrf.mxu0
        %v2437 = vadd.f32 %v2348, %v2436
        %v2438 = vpop.f32.mrf.mxu0
        %v2439 = vadd.f32 %v2350, %v2438
        %2440 = vmatmul.bf16.gmra.mxu0 %v1367
        %v2441 = vpop.f32.mrf.mxu0
        %v2442 = vadd.f32 %v2353, %v2441
        %v2443 = vpop.f32.mrf.mxu0
        %v2444 = vadd.f32 %v2355, %v2443
        %2445 = vmatmul.bf16.gmra.mxu0 %v1375
        %v2446 = vpop.f32.mrf.mxu0
        %v2447 = vadd.f32 %v2358, %v2446
        %v2448 = vpop.f32.mrf.mxu0
        %v2449 = vadd.f32 %v2360, %v2448
        %2450 = vmatmul.bf16.gmra.mxu0 %v1383
        %v2451 = vpop.f32.mrf.mxu0
        %v2452 = vadd.f32 %v2363, %v2451
        %v2453 = vpop.f32.mrf.mxu0
        %v2454 = vadd.f32 %v2365, %v2453
        %2455 = vmatmul.bf16.gmra.mxu0 %v1391
        %v2456 = vpop.f32.mrf.mxu0
        %v2457 = vadd.f32 %v2368, %v2456
        %v2458 = vpop.f32.mrf.mxu0
        %v2459 = vadd.f32 %v2370, %v2458
        %2460 = vmatmul.bf16.gmra.mxu0 %v1399
        %v2461 = vpop.f32.mrf.mxu0
        %v2462 = vadd.f32 %v2373, %v2461
        %v2463 = vpop.f32.mrf.mxu0
        %v2464 = vadd.f32 %v2375, %v2463
        %2465 = vmatmul.bf16.gmra.mxu0 %v1407
        %v2466 = vpop.f32.mrf.mxu0
        %v2467 = vadd.f32 %v2378, %v2466
        %v2468 = vpop.f32.mrf.mxu0
        %v2469 = vadd.f32 %v2380, %v2468
        %2470 = vmatmul.bf16.gmra.mxu0 %v1415
        %v2471 = vpop.f32.mrf.mxu0
        %v2472 = vadd.f32 %v2383, %v2471
        %v2473 = vpop.f32.mrf.mxu0
        %v2474 = vadd.f32 %v2385, %v2473
        %2475 = vmatmul.bf16.gmra.mxu0 %v1423
        %v2476 = vpop.f32.mrf.mxu0
        %v2477 = vadd.f32 %v2388, %v2476
        %v2478 = vpop.f32.mrf.mxu0
        %v2479 = vadd.f32 %v2390, %v2478
        %2480 = vmatmul.bf16.gmra.mxu0 %v1431
        %v2481 = vpop.f32.mrf.mxu0
        %v2482 = vadd.f32 %v2393, %v2481
        %v2483 = vpop.f32.mrf.mxu0
        %v2484 = vadd.f32 %v2395, %v2483
        %2485 = vmatmul.bf16.gmra.mxu0 %v1439
        %v2486 = vpop.f32.mrf.mxu0
        %v2487 = vadd.f32 %v2398, %v2486
        %v2488 = vpop.f32.mrf.mxu0
        %v2489 = vadd.f32 %v2400, %v2488
        %2490 = vmatmul.bf16.gmra.mxu0 %v1447
        %v2491 = vpop.f32.mrf.mxu0
        %v2492 = vadd.f32 %v2403, %v2491
        %v2493 = vpop.f32.mrf.mxu0
        %v2494 = vadd.f32 %v2405, %v2493
        %2495 = vdwg.mxu0
        %2496 = vmatpush.bf16.msra.mxu0 %v1889
        %2497 = vmatpush.bf16.msra.mxu0 %v1888
        %2498 = vmatpush.bf16.msra.mxu0 %v1887
        %2499 = vmatpush.bf16.msra.mxu0 %v1886
        %2500 = vmatpush.bf16.msra.mxu0 %v1885
        %2501 = vmatpush.bf16.msra.mxu0 %v1884
        %2502 = vmatpush.bf16.msra.mxu0 %v1883
        %2503 = vmatpush.bf16.msra.mxu0 %v1882
        %2504 = vmatmul.bf16.gmra.mxu0 %v1328
        %v2505 = vpop.f32.mrf.mxu0
        %v2506 = vadd.f32 %v2417, %v2505
        %v2507 = vpop.f32.mrf.mxu0
        %v2508 = vadd.f32 %v2419, %v2507
        %2509 = vmatmul.bf16.gmra.mxu0 %v1336
        %v2510 = vpop.f32.mrf.mxu0
        %v2511 = vadd.f32 %v2422, %v2510
        %v2512 = vpop.f32.mrf.mxu0
        %v2513 = vadd.f32 %v2424, %v2512
        %2514 = vmatmul.bf16.gmra.mxu0 %v1344
        %v2515 = vpop.f32.mrf.mxu0
        %v2516 = vadd.f32 %v2427, %v2515
        %v2517 = vpop.f32.mrf.mxu0
        %v2518 = vadd.f32 %v2429, %v2517
        %2519 = vmatmul.bf16.gmra.mxu0 %v1352
        %v2520 = vpop.f32.mrf.mxu0
        %v2521 = vadd.f32 %v2432, %v2520
        %v2522 = vpop.f32.mrf.mxu0
        %v2523 = vadd.f32 %v2434, %v2522
        %2524 = vmatmul.bf16.gmra.mxu0 %v1360
        %v2525 = vpop.f32.mrf.mxu0
        %v2526 = vadd.f32 %v2437, %v2525
        %v2527 = vpop.f32.mrf.mxu0
        %v2528 = vadd.f32 %v2439, %v2527
        %2529 = vmatmul.bf16.gmra.mxu0 %v1368
        %v2530 = vpop.f32.mrf.mxu0
        %v2531 = vadd.f32 %v2442, %v2530
        %v2532 = vpop.f32.mrf.mxu0
        %v2533 = vadd.f32 %v2444, %v2532
        %2534 = vmatmul.bf16.gmra.mxu0 %v1376
        %v2535 = vpop.f32.mrf.mxu0
        %v2536 = vadd.f32 %v2447, %v2535
        %v2537 = vpop.f32.mrf.mxu0
        %v2538 = vadd.f32 %v2449, %v2537
        %2539 = vmatmul.bf16.gmra.mxu0 %v1384
        %v2540 = vpop.f32.mrf.mxu0
        %v2541 = vadd.f32 %v2452, %v2540
        %v2542 = vpop.f32.mrf.mxu0
        %v2543 = vadd.f32 %v2454, %v2542
        %2544 = vmatmul.bf16.gmra.mxu0 %v1392
        %v2545 = vpop.f32.mrf.mxu0
        %v2546 = vadd.f32 %v2457, %v2545
        %v2547 = vpop.f32.mrf.mxu0
        %v2548 = vadd.f32 %v2459, %v2547
        %2549 = vmatmul.bf16.gmra.mxu0 %v1400
        %v2550 = vpop.f32.mrf.mxu0
        %v2551 = vadd.f32 %v2462, %v2550
        %v2552 = vpop.f32.mrf.mxu0
        %v2553 = vadd.f32 %v2464, %v2552
        %2554 = vmatmul.bf16.gmra.mxu0 %v1408
        %v2555 = vpop.f32.mrf.mxu0
        %v2556 = vadd.f32 %v2467, %v2555
        %v2557 = vpop.f32.mrf.mxu0
        %v2558 = vadd.f32 %v2469, %v2557
        %2559 = vmatmul.bf16.gmra.mxu0 %v1416
        %v2560 = vpop.f32.mrf.mxu0
        %v2561 = vadd.f32 %v2472, %v2560
        %v2562 = vpop.f32.mrf.mxu0
        %v2563 = vadd.f32 %v2474, %v2562
        %2564 = vmatmul.bf16.gmra.mxu0 %v1424
        %v2565 = vpop.f32.mrf.mxu0
        %v2566 = vadd.f32 %v2477, %v2565
        %v2567 = vpop.f32.mrf.mxu0
        %v2568 = vadd.f32 %v2479, %v2567
        %2569 = vmatmul.bf16.gmra.mxu0 %v1432
        %v2570 = vpop.f32.mrf.mxu0
        %v2571 = vadd.f32 %v2482, %v2570
        %v2572 = vpop.f32.mrf.mxu0
        %v2573 = vadd.f32 %v2484, %v2572
        %2574 = vmatmul.bf16.gmra.mxu0 %v1440
        %v2575 = vpop.f32.mrf.mxu0
        %v2576 = vadd.f32 %v2487, %v2575
        %v2577 = vpop.f32.mrf.mxu0
        %v2578 = vadd.f32 %v2489, %v2577
        %2579 = vmatmul.bf16.gmra.mxu0 %v1448
        %v2580 = vpop.f32.mrf.mxu0
        %v2581 = vadd.f32 %v2492, %v2580
        %v2582 = vpop.f32.mrf.mxu0
        %v2583 = vadd.f32 %v2494, %v2582
        %2584 = vdwg.mxu0
        %2585 = vmatpush.bf16.msra.mxu0 %v1897
        %2586 = vmatpush.bf16.msra.mxu0 %v1896
        %2587 = vmatpush.bf16.msra.mxu0 %v1895
        %2588 = vmatpush.bf16.msra.mxu0 %v1894
        %2589 = vmatpush.bf16.msra.mxu0 %v1893
        %2590 = vmatpush.bf16.msra.mxu0 %v1892
        %2591 = vmatpush.bf16.msra.mxu0 %v1891
        %2592 = vmatpush.bf16.msra.mxu0 %v1890
        %2593 = vmatmul.bf16.gmra.mxu0 %v1329
        %v2594 = vpop.f32.mrf.mxu0
        %v2595 = vadd.f32 %v2506, %v2594
        %v2596 = vpop.f32.mrf.mxu0
        %v2597 = vadd.f32 %v2508, %v2596
        %2598 = vmatmul.bf16.gmra.mxu0 %v1337
        %v2599 = vpop.f32.mrf.mxu0
        %v2600 = vadd.f32 %v2511, %v2599
        %v2601 = vpop.f32.mrf.mxu0
        %v2602 = vadd.f32 %v2513, %v2601
        %2603 = vmatmul.bf16.gmra.mxu0 %v1345
        %v2604 = vpop.f32.mrf.mxu0
        %v2605 = vadd.f32 %v2516, %v2604
        %v2606 = vpop.f32.mrf.mxu0
        %v2607 = vadd.f32 %v2518, %v2606
        %2608 = vmatmul.bf16.gmra.mxu0 %v1353
        %v2609 = vpop.f32.mrf.mxu0
        %v2610 = vadd.f32 %v2521, %v2609
        %v2611 = vpop.f32.mrf.mxu0
        %v2612 = vadd.f32 %v2523, %v2611
        %2613 = vmatmul.bf16.gmra.mxu0 %v1361
        %v2614 = vpop.f32.mrf.mxu0
        %v2615 = vadd.f32 %v2526, %v2614
        %v2616 = vpop.f32.mrf.mxu0
        %v2617 = vadd.f32 %v2528, %v2616
        %2618 = vmatmul.bf16.gmra.mxu0 %v1369
        %v2619 = vpop.f32.mrf.mxu0
        %v2620 = vadd.f32 %v2531, %v2619
        %v2621 = vpop.f32.mrf.mxu0
        %v2622 = vadd.f32 %v2533, %v2621
        %2623 = vmatmul.bf16.gmra.mxu0 %v1377
        %v2624 = vpop.f32.mrf.mxu0
        %v2625 = vadd.f32 %v2536, %v2624
        %v2626 = vpop.f32.mrf.mxu0
        %v2627 = vadd.f32 %v2538, %v2626
        %2628 = vmatmul.bf16.gmra.mxu0 %v1385
        %v2629 = vpop.f32.mrf.mxu0
        %v2630 = vadd.f32 %v2541, %v2629
        %v2631 = vpop.f32.mrf.mxu0
        %v2632 = vadd.f32 %v2543, %v2631
        %2633 = vmatmul.bf16.gmra.mxu0 %v1393
        %v2634 = vpop.f32.mrf.mxu0
        %v2635 = vadd.f32 %v2546, %v2634
        %v2636 = vpop.f32.mrf.mxu0
        %v2637 = vadd.f32 %v2548, %v2636
        %2638 = vmatmul.bf16.gmra.mxu0 %v1401
        %v2639 = vpop.f32.mrf.mxu0
        %v2640 = vadd.f32 %v2551, %v2639
        %v2641 = vpop.f32.mrf.mxu0
        %v2642 = vadd.f32 %v2553, %v2641
        %2643 = vmatmul.bf16.gmra.mxu0 %v1409
        %v2644 = vpop.f32.mrf.mxu0
        %v2645 = vadd.f32 %v2556, %v2644
        %v2646 = vpop.f32.mrf.mxu0
        %v2647 = vadd.f32 %v2558, %v2646
        %2648 = vmatmul.bf16.gmra.mxu0 %v1417
        %v2649 = vpop.f32.mrf.mxu0
        %v2650 = vadd.f32 %v2561, %v2649
        %v2651 = vpop.f32.mrf.mxu0
        %v2652 = vadd.f32 %v2563, %v2651
        %2653 = vmatmul.bf16.gmra.mxu0 %v1425
        %v2654 = vpop.f32.mrf.mxu0
        %v2655 = vadd.f32 %v2566, %v2654
        %v2656 = vpop.f32.mrf.mxu0
        %v2657 = vadd.f32 %v2568, %v2656
        %2658 = vmatmul.bf16.gmra.mxu0 %v1433
        %v2659 = vpop.f32.mrf.mxu0
        %v2660 = vadd.f32 %v2571, %v2659
        %v2661 = vpop.f32.mrf.mxu0
        %v2662 = vadd.f32 %v2573, %v2661
        %2663 = vmatmul.bf16.gmra.mxu0 %v1441
        %v2664 = vpop.f32.mrf.mxu0
        %v2665 = vadd.f32 %v2576, %v2664
        %v2666 = vpop.f32.mrf.mxu0
        %v2667 = vadd.f32 %v2578, %v2666
        %2668 = vmatmul.bf16.gmra.mxu0 %v1449
        %v2669 = vpop.f32.mrf.mxu0
        %v2670 = vadd.f32 %v2581, %v2669
        %v2671 = vpop.f32.mrf.mxu0
        %v2672 = vadd.f32 %v2583, %v2671
        %2673 = vdwg.mxu0
        %v2674 = vadd.f32 %v650, %v2595
        %v2675 = vadd.f32 %v651, %v2597
        %v2676 = vadd.f32 %v652, %v2600
        %v2677 = vadd.f32 %v653, %v2602
        %v2678 = vadd.f32 %v654, %v2605
        %v2679 = vadd.f32 %v655, %v2607
        %v2680 = vadd.f32 %v656, %v2610
        %v2681 = vadd.f32 %v657, %v2612
        %v2682 = vadd.f32 %v658, %v2615
        %v2683 = vadd.f32 %v659, %v2617
        %v2684 = vadd.f32 %v660, %v2620
        %v2685 = vadd.f32 %v661, %v2622
        %v2686 = vadd.f32 %v662, %v2625
        %v2687 = vadd.f32 %v663, %v2627
        %v2688 = vadd.f32 %v664, %v2630
        %v2689 = vadd.f32 %v665, %v2632
        %v2690 = vadd.f32 %v666, %v2635
        %v2691 = vadd.f32 %v667, %v2637
        %v2692 = vadd.f32 %v668, %v2640
        %v2693 = vadd.f32 %v669, %v2642
        %v2694 = vadd.f32 %v670, %v2645
        %v2695 = vadd.f32 %v671, %v2647
        %v2696 = vadd.f32 %v672, %v2650
        %v2697 = vadd.f32 %v673, %v2652
        %v2698 = vadd.f32 %v674, %v2655
        %v2699 = vadd.f32 %v675, %v2657
        %v2700 = vadd.f32 %v676, %v2660
        %v2701 = vadd.f32 %v677, %v2662
        %v2702 = vadd.f32 %v678, %v2665
        %v2703 = vadd.f32 %v679, %v2667
        %v2704 = vadd.f32 %v680, %v2670
        %v2705 = vadd.f32 %v681, %v2672
        %2706 = vst [vmem:[#allocation2] sm:$0xff] %v2674
        %2707 = vst [vmem:[#allocation2 + $0x8] sm:$0xff] %v2675
        %2708 = vst [vmem:[#allocation2 + $0x10] sm:$0xff] %v2676
        %2709 = vst [vmem:[#allocation2 + $0x18] sm:$0xff] %v2677
        %2710 = vst [vmem:[#allocation2 + $0x20] sm:$0xff] %v2678
        %2711 = vst [vmem:[#allocation2 + $0x28] sm:$0xff] %v2679
        %2712 = vst [vmem:[#allocation2 + $0x30] sm:$0xff] %v2680
        %2713 = vst [vmem:[#allocation2 + $0x38] sm:$0xff] %v2681
        %2714 = vst [vmem:[#allocation2 + $0x40] sm:$0xff] %v2682
        %2715 = vst [vmem:[#allocation2 + $0x48] sm:$0xff] %v2683
        %2716 = vst [vmem:[#allocation2 + $0x50] sm:$0xff] %v2684
        %2717 = vst [vmem:[#allocation2 + $0x58] sm:$0xff] %v2685
        %2718 = vst [vmem:[#allocation2 + $0x60] sm:$0xff] %v2686
        %2719 = vst [vmem:[#allocation2 + $0x68] sm:$0xff] %v2687
        %2720 = vst [vmem:[#allocation2 + $0x70] sm:$0xff] %v2688
        %2721 = vst [vmem:[#allocation2 + $0x78] sm:$0xff] %v2689
        %2722 = vst [vmem:[#allocation2 + $0x80] sm:$0xff] %v2690
        %2723 = vst [vmem:[#allocation2 + $0x88] sm:$0xff] %v2691
        %2724 = vst [vmem:[#allocation2 + $0x90] sm:$0xff] %v2692
        %2725 = vst [vmem:[#allocation2 + $0x98] sm:$0xff] %v2693
        %2726 = vst [vmem:[#allocation2 + $0xa0] sm:$0xff] %v2694
        %2727 = vst [vmem:[#allocation2 + $0xa8] sm:$0xff] %v2695
        %2728 = vst [vmem:[#allocation2 + $0xb0] sm:$0xff] %v2696
        %2729 = vst [vmem:[#allocation2 + $0xb8] sm:$0xff] %v2697
        %2730 = vst [vmem:[#allocation2 + $0xc0] sm:$0xff] %v2698
        %2731 = vst [vmem:[#allocation2 + $0xc8] sm:$0xff] %v2699
        %2732 = vst [vmem:[#allocation2 + $0xd0] sm:$0xff] %v2700
        %2733 = vst [vmem:[#allocation2 + $0xd8] sm:$0xff] %v2701
        %2734 = vst [vmem:[#allocation2 + $0xe0] sm:$0xff] %v2702
        %2735 = vst [vmem:[#allocation2 + $0xe8] sm:$0xff] %v2703
        %2736 = vst [vmem:[#allocation2 + $0xf0] sm:$0xff] %v2704
        %2737 = vst [vmem:[#allocation2 + $0xf8] sm:$0xff] %v2705
        %p2738 = scmp.eq.s32.totalorder %s24, 1
        // Predicated region
        $region60: #{discriminator_forward.9} parent=50 // pred_check
          %p2739 = pneg %p2738
        $region61: #{discriminator_forward.9} parent=50 // pred_check_branch
          %2741 = sbr.rel (%p2739) target = $region63
        $region62: #{discriminator_forward.9} parent=50 // pred_region
          %v2742 = vld [vmem:[#allocation2] sm:$0xff]
          %v2743 = vld [vmem:[#allocation2 + $0x8] sm:$0xff]
          %v2744 = vld [vmem:[#allocation2 + $0x10] sm:$0xff]
          %v2745 = vld [vmem:[#allocation2 + $0x18] sm:$0xff]
          %v2746 = vld [vmem:[#allocation2 + $0x20] sm:$0xff]
          %v2747 = vld [vmem:[#allocation2 + $0x28] sm:$0xff]
          %v2748 = vld [vmem:[#allocation2 + $0x30] sm:$0xff]
          %v2749 = vld [vmem:[#allocation2 + $0x38] sm:$0xff]
          %v2750 = vld [vmem:[#allocation2 + $0x40] sm:$0xff]
          %v2751 = vld [vmem:[#allocation2 + $0x48] sm:$0xff]
          %v2752 = vld [vmem:[#allocation2 + $0x50] sm:$0xff]
          %v2753 = vld [vmem:[#allocation2 + $0x58] sm:$0xff]
          %v2754 = vld [vmem:[#allocation2 + $0x60] sm:$0xff]
          %v2755 = vld [vmem:[#allocation2 + $0x68] sm:$0xff]
          %v2756 = vld [vmem:[#allocation2 + $0x70] sm:$0xff]
          %v2757 = vld [vmem:[#allocation2 + $0x78] sm:$0xff]
          %v2758 = vld [vmem:[#allocation2 + $0x80] sm:$0xff]
          %v2759 = vld [vmem:[#allocation2 + $0x88] sm:$0xff]
          %v2760 = vld [vmem:[#allocation2 + $0x90] sm:$0xff]
          %v2761 = vld [vmem:[#allocation2 + $0x98] sm:$0xff]
          %v2762 = vld [vmem:[#allocation2 + $0xa0] sm:$0xff]
          %v2763 = vld [vmem:[#allocation2 + $0xa8] sm:$0xff]
          %v2764 = vld [vmem:[#allocation2 + $0xb0] sm:$0xff]
          %v2765 = vld [vmem:[#allocation2 + $0xb8] sm:$0xff]
          %v2766 = vld [vmem:[#allocation2 + $0xc0] sm:$0xff]
          %v2767 = vld [vmem:[#allocation2 + $0xc8] sm:$0xff]
          %v2768 = vld [vmem:[#allocation2 + $0xd0] sm:$0xff]
          %v2769 = vld [vmem:[#allocation2 + $0xd8] sm:$0xff]
          %v2770 = vld [vmem:[#allocation2 + $0xe0] sm:$0xff]
          %v2771 = vld [vmem:[#allocation2 + $0xe8] sm:$0xff]
          %v2772 = vld [vmem:[#allocation2 + $0xf0] sm:$0xff]
          %v2773 = vld [vmem:[#allocation2 + $0xf8] sm:$0xff]
          %v2774 = vld [vmem:[%s592] sm:$0x1]
          %v2776 = vperm.slane %v2774, 0
          %v2778 = vadd.f32 %v2742, %v2776
          %v2779 = vadd.f32 %v2743, %v2776
          %v2780 = vadd.f32 %v2744, %v2776
          %v2781 = vadd.f32 %v2745, %v2776
          %v2782 = vadd.f32 %v2746, %v2776
          %v2783 = vadd.f32 %v2747, %v2776
          %v2784 = vadd.f32 %v2748, %v2776
          %v2785 = vadd.f32 %v2749, %v2776
          %v2786 = vadd.f32 %v2750, %v2776
          %v2787 = vadd.f32 %v2751, %v2776
          %v2788 = vadd.f32 %v2752, %v2776
          %v2789 = vadd.f32 %v2753, %v2776
          %v2790 = vadd.f32 %v2754, %v2776
          %v2791 = vadd.f32 %v2755, %v2776
          %v2792 = vadd.f32 %v2756, %v2776
          %v2793 = vadd.f32 %v2757, %v2776
          %v2794 = vadd.f32 %v2758, %v2776
          %v2795 = vadd.f32 %v2759, %v2776
          %v2796 = vadd.f32 %v2760, %v2776
          %v2797 = vadd.f32 %v2761, %v2776
          %v2798 = vadd.f32 %v2762, %v2776
          %v2799 = vadd.f32 %v2763, %v2776
          %v2800 = vadd.f32 %v2764, %v2776
          %v2801 = vadd.f32 %v2765, %v2776
          %v2802 = vadd.f32 %v2766, %v2776
          %v2803 = vadd.f32 %v2767, %v2776
          %v2804 = vadd.f32 %v2768, %v2776
          %v2805 = vadd.f32 %v2769, %v2776
          %v2806 = vadd.f32 %v2770, %v2776
          %v2807 = vadd.f32 %v2771, %v2776
          %v2808 = vadd.f32 %v2772, %v2776
          %v2809 = vadd.f32 %v2773, %v2776
          %v2810 = vadd.f32 %v2778, %v2779
          %v2811 = vadd.f32 %v2810, %v2780
          %v2812 = vadd.f32 %v2811, %v2781
          %v2813 = vadd.f32 %v2812, %v2782
          %v2814 = vadd.f32 %v2813, %v2783
          %v2815 = vadd.f32 %v2814, %v2784
          %v2816 = vadd.f32 %v2815, %v2785
          %v2817 = vadd.f32 %v2816, %v2786
          %v2818 = vadd.f32 %v2817, %v2787
          %v2819 = vadd.f32 %v2818, %v2788
          %v2820 = vadd.f32 %v2819, %v2789
          %v2821 = vadd.f32 %v2820, %v2790
          %v2822 = vadd.f32 %v2821, %v2791
          %v2823 = vadd.f32 %v2822, %v2792
          %v2824 = vadd.f32 %v2823, %v2793
          %v2825 = vadd.f32 %v2824, %v2794
          %v2826 = vadd.f32 %v2825, %v2795
          %v2827 = vadd.f32 %v2826, %v2796
          %v2828 = vadd.f32 %v2827, %v2797
          %v2829 = vadd.f32 %v2828, %v2798
          %v2830 = vadd.f32 %v2829, %v2799
          %v2831 = vadd.f32 %v2830, %v2800
          %v2832 = vadd.f32 %v2831, %v2801
          %v2833 = vadd.f32 %v2832, %v2802
          %v2834 = vadd.f32 %v2833, %v2803
          %v2835 = vadd.f32 %v2834, %v2804
          %v2836 = vadd.f32 %v2835, %v2805
          %v2837 = vadd.f32 %v2836, %v2806
          %v2838 = vadd.f32 %v2837, %v2807
          %v2839 = vadd.f32 %v2838, %v2808
          %v2840 = vadd.f32 %v2839, %v2809
          %v2841 = vrot.slane %v2840, 4
          %v2842 = vadd.f32 %v2840, %v2841
          %v2843 = vrot.slane %v2842, 2
          %v2844 = vadd.f32 %v2842, %v2843
          %v2845 = vrot.slane %v2844, 1
          %v2846 = vadd.f32 %v2844, %v2845
          %2847 = vst [vmem:[%s607] sm:$0x1] %v2846
          %v2848 = vmul.f32 %v2778, %v2778
          %v2849 = vmul.f32 %v2779, %v2779
          %v2850 = vmul.f32 %v2780, %v2780
          %v2851 = vmul.f32 %v2781, %v2781
          %v2852 = vmul.f32 %v2782, %v2782
          %v2853 = vmul.f32 %v2783, %v2783
          %v2854 = vmul.f32 %v2784, %v2784
          %v2855 = vmul.f32 %v2785, %v2785
          %v2856 = vmul.f32 %v2786, %v2786
          %v2857 = vmul.f32 %v2787, %v2787
          %v2858 = vmul.f32 %v2788, %v2788
          %v2859 = vmul.f32 %v2789, %v2789
          %v2860 = vmul.f32 %v2790, %v2790
          %v2861 = vmul.f32 %v2791, %v2791
          %v2862 = vmul.f32 %v2792, %v2792
          %v2863 = vmul.f32 %v2793, %v2793
          %v2864 = vmul.f32 %v2794, %v2794
          %v2865 = vmul.f32 %v2795, %v2795
          %v2866 = vmul.f32 %v2796, %v2796
          %v2867 = vmul.f32 %v2797, %v2797
          %v2868 = vmul.f32 %v2798, %v2798
          %v2869 = vmul.f32 %v2799, %v2799
          %v2870 = vmul.f32 %v2800, %v2800
          %v2871 = vmul.f32 %v2801, %v2801
          %v2872 = vmul.f32 %v2802, %v2802
          %v2873 = vmul.f32 %v2803, %v2803
          %v2874 = vmul.f32 %v2804, %v2804
          %v2875 = vmul.f32 %v2805, %v2805
          %v2876 = vmul.f32 %v2806, %v2806
          %v2877 = vmul.f32 %v2807, %v2807
          %v2878 = vmul.f32 %v2808, %v2808
          %v2879 = vmul.f32 %v2809, %v2809
          %v2880 = vadd.f32 %v2848, %v2849
          %v2881 = vadd.f32 %v2880, %v2850
          %v2882 = vadd.f32 %v2881, %v2851
          %v2883 = vadd.f32 %v2882, %v2852
          %v2884 = vadd.f32 %v2883, %v2853
          %v2885 = vadd.f32 %v2884, %v2854
          %v2886 = vadd.f32 %v2885, %v2855
          %v2887 = vadd.f32 %v2886, %v2856
          %v2888 = vadd.f32 %v2887, %v2857
          %v2889 = vadd.f32 %v2888, %v2858
          %v2890 = vadd.f32 %v2889, %v2859
          %v2891 = vadd.f32 %v2890, %v2860
          %v2892 = vadd.f32 %v2891, %v2861
          %v2893 = vadd.f32 %v2892, %v2862
          %v2894 = vadd.f32 %v2893, %v2863
          %v2895 = vadd.f32 %v2894, %v2864
          %v2896 = vadd.f32 %v2895, %v2865
          %v2897 = vadd.f32 %v2896, %v2866
          %v2898 = vadd.f32 %v2897, %v2867
          %v2899 = vadd.f32 %v2898, %v2868
          %v2900 = vadd.f32 %v2899, %v2869
          %v2901 = vadd.f32 %v2900, %v2870
          %v2902 = vadd.f32 %v2901, %v2871
          %v2903 = vadd.f32 %v2902, %v2872
          %v2904 = vadd.f32 %v2903, %v2873
          %v2905 = vadd.f32 %v2904, %v2874
          %v2906 = vadd.f32 %v2905, %v2875
          %v2907 = vadd.f32 %v2906, %v2876
          %v2908 = vadd.f32 %v2907, %v2877
          %v2909 = vadd.f32 %v2908, %v2878
          %v2910 = vadd.f32 %v2909, %v2879
          %v2911 = vrot.slane %v2910, 4
          %v2912 = vadd.f32 %v2910, %v2911
          %v2913 = vrot.slane %v2912, 2
          %v2914 = vadd.f32 %v2912, %v2913
          %v2915 = vrot.slane %v2914, 1
          %v2916 = vadd.f32 %v2914, %v2915
          %2917 = vst [vmem:[%s613] sm:$0x1] %v2916
          %v2918 = vpack.c.bf16 %v2778, %v2778
          %v2919 = vpack.c.bf16 %v2779, %v2779
          %v2920 = vpack.c.bf16 %v2780, %v2780
          %v2921 = vpack.c.bf16 %v2781, %v2781
          %v2922 = vpack.c.bf16 %v2782, %v2782
          %v2923 = vpack.c.bf16 %v2783, %v2783
          %v2924 = vpack.c.bf16 %v2784, %v2784
          %v2925 = vpack.c.bf16 %v2785, %v2785
          %v2926 = vpack.c.bf16 %v2786, %v2786
          %v2927 = vpack.c.bf16 %v2787, %v2787
          %v2928 = vpack.c.bf16 %v2788, %v2788
          %v2929 = vpack.c.bf16 %v2789, %v2789
          %v2930 = vpack.c.bf16 %v2790, %v2790
          %v2931 = vpack.c.bf16 %v2791, %v2791
          %v2932 = vpack.c.bf16 %v2792, %v2792
          %v2933 = vpack.c.bf16 %v2793, %v2793
          %v2934 = vpack.c.bf16 %v2794, %v2794
          %v2935 = vpack.c.bf16 %v2795, %v2795
          %v2936 = vpack.c.bf16 %v2796, %v2796
          %v2937 = vpack.c.bf16 %v2797, %v2797
          %v2938 = vpack.c.bf16 %v2798, %v2798
          %v2939 = vpack.c.bf16 %v2799, %v2799
          %v2940 = vpack.c.bf16 %v2800, %v2800
          %v2941 = vpack.c.bf16 %v2801, %v2801
          %v2942 = vpack.c.bf16 %v2802, %v2802
          %v2943 = vpack.c.bf16 %v2803, %v2803
          %v2944 = vpack.c.bf16 %v2804, %v2804
          %v2945 = vpack.c.bf16 %v2805, %v2805
          %v2946 = vpack.c.bf16 %v2806, %v2806
          %v2947 = vpack.c.bf16 %v2807, %v2807
          %v2948 = vpack.c.bf16 %v2808, %v2808
          %v2949 = vpack.c.bf16 %v2809, %v2809
          %2950 = vst [vmem:[%s600] sm:$0xf] %v2918
          %2951 = vst [vmem:[%s600 + $0x4] sm:$0xf] %v2919
          %2952 = vst [vmem:[%s600 + $0x8] sm:$0xf] %v2920
          %2953 = vst [vmem:[%s600 + $0xc] sm:$0xf] %v2921
          %2954 = vst [vmem:[%s600 + $0x10] sm:$0xf] %v2922
          %2955 = vst [vmem:[%s600 + $0x14] sm:$0xf] %v2923
          %2956 = vst [vmem:[%s600 + $0x18] sm:$0xf] %v2924
          %2957 = vst [vmem:[%s600 + $0x1c] sm:$0xf] %v2925
          %2958 = vst [vmem:[%s600 + $0x20] sm:$0xf] %v2926
          %2959 = vst [vmem:[%s600 + $0x24] sm:$0xf] %v2927
          %2960 = vst [vmem:[%s600 + $0x28] sm:$0xf] %v2928
          %2961 = vst [vmem:[%s600 + $0x2c] sm:$0xf] %v2929
          %2962 = vst [vmem:[%s600 + $0x30] sm:$0xf] %v2930
          %2963 = vst [vmem:[%s600 + $0x34] sm:$0xf] %v2931
          %2964 = vst [vmem:[%s600 + $0x38] sm:$0xf] %v2932
          %2965 = vst [vmem:[%s600 + $0x3c] sm:$0xf] %v2933
          %2966 = vst [vmem:[%s600 + $0x40] sm:$0xf] %v2934
          %2967 = vst [vmem:[%s600 + $0x44] sm:$0xf] %v2935
          %2968 = vst [vmem:[%s600 + $0x48] sm:$0xf] %v2936
          %2969 = vst [vmem:[%s600 + $0x4c] sm:$0xf] %v2937
          %2970 = vst [vmem:[%s600 + $0x50] sm:$0xf] %v2938
          %2971 = vst [vmem:[%s600 + $0x54] sm:$0xf] %v2939
          %2972 = vst [vmem:[%s600 + $0x58] sm:$0xf] %v2940
          %2973 = vst [vmem:[%s600 + $0x5c] sm:$0xf] %v2941
          %2974 = vst [vmem:[%s600 + $0x60] sm:$0xf] %v2942
          %2975 = vst [vmem:[%s600 + $0x64] sm:$0xf] %v2943
          %2976 = vst [vmem:[%s600 + $0x68] sm:$0xf] %v2944
          %2977 = vst [vmem:[%s600 + $0x6c] sm:$0xf] %v2945
          %2978 = vst [vmem:[%s600 + $0x70] sm:$0xf] %v2946
          %2979 = vst [vmem:[%s600 + $0x74] sm:$0xf] %v2947
          %2980 = vst [vmem:[%s600 + $0x78] sm:$0xf] %v2948
          %2981 = vst [vmem:[%s600 + $0x7c] sm:$0xf] %v2949
        $region63: #{discriminator_forward.9} parent=50 // pred_fallthru
          _
        %s2982 = smul.u32 32, %s22
        %p2983 = scmp.lt.s32.totalorder %s2982, 63
        %s2984 = scalar_select %p2983, %s2982, 63
        %p2985 = scmp.lt.s32.totalorder %s23, 0
        %s2986 = scalar_select %p2985, %s23, 0
        %s2987 = sadd.s32 %s2986, %s2984
        %s2988 = smul.addr %s2987, 4
        %s2989 = scalar_lea.vmem %s3, %s2988
        %p2990 = scmp.lt.s32.totalorder %s22, 1
        %s2991 = scalar_select %p2990, %s22, 1
        %p2992 = scmp.lt.s32.totalorder %s23, 0
        %s2993 = scalar_select %p2992, %s23, 0
        %s2994 = sadd.s32 %s2993, %s2991
        %s2995 = scalar_lea.vmem %s4, %s2994
        %p2996 = scmp.lt.s32.totalorder %s22, 1
        %s2997 = scalar_select %p2996, %s22, 1
        %p2998 = scmp.lt.s32.totalorder %s23, 0
        %s2999 = scalar_select %p2998, %s23, 0
        %s3000 = sadd.s32 %s2999, %s2997
        %s3001 = scalar_lea.vmem %s5, %s3000
        // Predicated region
        $region64: #{discriminator_forward.9} parent=50 // pred_check
          %p3002 = pneg %p138
        $region65: #{discriminator_forward.9} parent=50 // pred_check_branch
          %3004 = sbr.rel (%p3002) target = $region67
        $region66: #{discriminator_forward.9} parent=50 // pred_region
          %s3005 = smul.u32 32, %s22
        $region67: #{discriminator_forward.9} parent=50 // pred_fallthru
          _
        // Predicated region
        $region68: #{discriminator_forward.9} parent=50 // pred_check
          %p3006 = pneg %p166
        $region69: #{discriminator_forward.9} parent=50 // pred_check_branch
          %3008 = sbr.rel (%p3006) target = $region71
        $region70: #{discriminator_forward.9} parent=50 // pred_region
          _
        $region71: #{discriminator_forward.9} parent=50 // pred_fallthru
          _
        // Predicated region
        $region72: #{discriminator_forward.9} parent=50 // pred_check
          %p3009 = pneg %p194
        $region73: #{discriminator_forward.9} parent=50 // pred_check_branch
          %3011 = sbr.rel (%p3009) target = $region75
        $region74: #{discriminator_forward.9} parent=50 // pred_region
          _
        $region75: #{discriminator_forward.9} parent=50 // pred_fallthru
          _
      $region51: #{discriminator_forward.9} parent=5 // pred_fallthru
        _
      %p3012 = scmp.le.s32.totalorder 2, %s12
      // Predicated region
      $region76: #{discriminator_forward.9} parent=5 // pred_check
        %p3013 = pneg %p3012
      $region77: #{discriminator_forward.9} parent=5 // pred_check_branch
        %3015 = sbr.rel (%p3013) target = $region79
      $region78: #{discriminator_forward.9} parent=5 // pred_region
        %s3016 = ssub.s32 %s12, 2
        // Predicated region
        $region80: #{discriminator_forward.9} parent=78 // pred_check
          %p3017 = pneg %p144
        $region81: #{discriminator_forward.9} parent=78 // pred_check_branch
          %3019 = sbr.rel (%p3017) target = $region83
        $region82: #{discriminator_forward.9} parent=78 // pred_region
          %s3020 = smul.u32 32, %s25
          %p3021 = scmp.lt.s32.totalorder %s3020, 63
          %s3022 = scalar_select %p3021, %s3020, 63
          %p3023 = scmp.lt.s32.totalorder %s26, 0
          %s3024 = scalar_select %p3023, %s26, 0
          %s3025 = sadd.s32 %s3024, %s3022
          %s3026 = smul.addr %s3025, 4
          %s3027 = scalar_lea.vmem %s3, %s3026
        $region83: #{discriminator_forward.9} parent=78 // pred_fallthru
          _
        // Predicated region
        $region84: #{discriminator_forward.9} parent=78 // pred_check
          %p3028 = pneg %p172
        $region85: #{discriminator_forward.9} parent=78 // pred_check_branch
          %3030 = sbr.rel (%p3028) target = $region87
        $region86: #{discriminator_forward.9} parent=78 // pred_region
          %p3031 = scmp.lt.s32.totalorder %s25, 1
          %s3032 = scalar_select %p3031, %s25, 1
          %p3033 = scmp.lt.s32.totalorder %s26, 0
          %s3034 = scalar_select %p3033, %s26, 0
          %s3035 = sadd.s32 %s3034, %s3032
          %s3036 = scalar_lea.vmem %s4, %s3035
        $region87: #{discriminator_forward.9} parent=78 // pred_fallthru
          _
        // Predicated region
        $region88: #{discriminator_forward.9} parent=78 // pred_check
          %p3037 = pneg %p200
        $region89: #{discriminator_forward.9} parent=78 // pred_check_branch
          %3039 = sbr.rel (%p3037) target = $region91
        $region90: #{discriminator_forward.9} parent=78 // pred_region
          %p3040 = scmp.lt.s32.totalorder %s25, 1
          %s3041 = scalar_select %p3040, %s25, 1
          %p3042 = scmp.lt.s32.totalorder %s26, 0
          %s3043 = scalar_select %p3042, %s26, 0
          %s3044 = sadd.s32 %s3043, %s3041
          %s3045 = scalar_lea.vmem %s5, %s3044
        $region91: #{discriminator_forward.9} parent=78 // pred_fallthru
          _
      $region79: #{discriminator_forward.9} parent=5 // pred_fallthru
        _
    $region6: #{discriminator_forward.9} parent=1 // loop_footer
      %s16 = sadd.s32 1, %s12
    $region7: #{discriminator_forward.9} parent=1 // loop_footer_branch
      %11 = sbr.rel target = $region3
    $region8: #{discriminator_forward.9} parent=1 // loop_exit
      _

// kernel: discriminator_forward.10
$region0: #{discriminator_forward.10}
  #allocation0 [shape = 'u32[]', space=smem, size = 0x4, offset = 0x4, fixed_abs, tag = 'smem constant byte address 0x4 - core index']
  #allocation1 [shape = 'u32[72,128]{1,0:T(1,128)}', space=vmem, size = 0x9000, scoped, tag = 'internal scratch']
  %s0 = inlined_call_operand.vmem [shape: bf16[512,128], index: 0, kind: input, shape index: {}]
  %s1 = inlined_call_operand.vmem [shape: f32[1,128], index: 1, kind: input, shape index: {}]
  %s2 = inlined_call_operand.vmem [shape: f32[1,128], index: 2, kind: input, shape index: {}]
  %s3 = inlined_call_operand.vmem [shape: bf16[512,128], index: 3, kind: output, shape index: {}]
  %s4 = sld [smem:[#allocation0]]
  $region22: #{discriminator_forward.10} parent=0
    _
  %s6 = ssub.s32 1, %s4
  %s7 = scalar_select 0, %s6, %s4
  // Predicated region
  $region2: #{discriminator_forward.10} parent=0 // pred_check
    _
  $region3: #{discriminator_forward.10} parent=0 // pred_check_branch
    %9 = sbr.rel (0) target = $region5
  $region4: #{discriminator_forward.10} parent=0 // pred_region
    _
  $region5: #{discriminator_forward.10} parent=0 // pred_fallthru
    _
  // Predicated region
  $region6: #{discriminator_forward.10} parent=0 // pred_check
    _
  $region7: #{discriminator_forward.10} parent=0 // pred_check_branch
    %11 = sbr.rel (0) target = $region9
  $region8: #{discriminator_forward.10} parent=0 // pred_region
    _
  $region9: #{discriminator_forward.10} parent=0 // pred_fallthru
    _
  // Predicated region
  $region10: #{discriminator_forward.10} parent=0 // pred_check
    _
  $region11: #{discriminator_forward.10} parent=0 // pred_check_branch
    %13 = sbr.rel (0) target = $region13
  $region12: #{discriminator_forward.10} parent=0 // pred_region
    _
  $region13: #{discriminator_forward.10} parent=0 // pred_fallthru
    _
  %v14 = vld [vmem:[%s0] sm:$0xf]
  %v15 = vld [vmem:[%s0 + $0x4] sm:$0xf]
  %v16 = vld [vmem:[%s0 + $0x8] sm:$0xf]
  %v17 = vld [vmem:[%s0 + $0xc] sm:$0xf]
  %v18 = vld [vmem:[%s0 + $0x10] sm:$0xf]
  %v19 = vld [vmem:[%s0 + $0x14] sm:$0xf]
  %v20 = vld [vmem:[%s0 + $0x18] sm:$0xf]
  %v21 = vld [vmem:[%s0 + $0x1c] sm:$0xf]
  %v22 = vld [vmem:[%s0 + $0x20] sm:$0xf]
  %v23 = vld [vmem:[%s0 + $0x24] sm:$0xf]
  %v24 = vld [vmem:[%s0 + $0x28] sm:$0xf]
  %v25 = vld [vmem:[%s0 + $0x2c] sm:$0xf]
  %v26 = vld [vmem:[%s0 + $0x30] sm:$0xf]
  %v27 = vld [vmem:[%s0 + $0x34] sm:$0xf]
  %v28 = vld [vmem:[%s0 + $0x38] sm:$0xf]
  %v29 = vld [vmem:[%s0 + $0x3c] sm:$0xf]
  %v30 = vld [vmem:[%s0 + $0x40] sm:$0xf]
  %v31 = vld [vmem:[%s0 + $0x44] sm:$0xf]
  %v32 = vld [vmem:[%s0 + $0x48] sm:$0xf]
  %v33 = vld [vmem:[%s0 + $0x4c] sm:$0xf]
  %v34 = vld [vmem:[%s0 + $0x50] sm:$0xf]
  %v35 = vld [vmem:[%s0 + $0x54] sm:$0xf]
  %v36 = vld [vmem:[%s0 + $0x58] sm:$0xf]
  %v37 = vld [vmem:[%s0 + $0x5c] sm:$0xf]
  %v38 = vld [vmem:[%s0 + $0x60] sm:$0xf]
  %v39 = vld [vmem:[%s0 + $0x64] sm:$0xf]
  %v40 = vld [vmem:[%s0 + $0x68] sm:$0xf]
  %v41 = vld [vmem:[%s0 + $0x6c] sm:$0xf]
  %v42 = vld [vmem:[%s0 + $0x70] sm:$0xf]
  %v43 = vld [vmem:[%s0 + $0x74] sm:$0xf]
  %v44 = vld [vmem:[%s0 + $0x78] sm:$0xf]
  %v45 = vld [vmem:[%s0 + $0x7c] sm:$0xf]
  %v46 = vld [vmem:[%s0 + $0x80] sm:$0xf]
  %v47 = vld [vmem:[%s0 + $0x84] sm:$0xf]
  %v48 = vld [vmem:[%s0 + $0x88] sm:$0xf]
  %v49 = vld [vmem:[%s0 + $0x8c] sm:$0xf]
  %v50 = vld [vmem:[%s0 + $0x90] sm:$0xf]
  %v51 = vld [vmem:[%s0 + $0x94] sm:$0xf]
  %v52 = vld [vmem:[%s0 + $0x98] sm:$0xf]
  %v53 = vld [vmem:[%s0 + $0x9c] sm:$0xf]
  %v54 = vld [vmem:[%s0 + $0xa0] sm:$0xf]
  %v55 = vld [vmem:[%s0 + $0xa4] sm:$0xf]
  %v56 = vld [vmem:[%s0 + $0xa8] sm:$0xf]
  %v57 = vld [vmem:[%s0 + $0xac] sm:$0xf]
  %v58 = vld [vmem:[%s0 + $0xb0] sm:$0xf]
  %v59 = vld [vmem:[%s0 + $0xb4] sm:$0xf]
  %v60 = vld [vmem:[%s0 + $0xb8] sm:$0xf]
  %v61 = vld [vmem:[%s0 + $0xbc] sm:$0xf]
  %v62 = vld [vmem:[%s0 + $0xc0] sm:$0xf]
  %v63 = vld [vmem:[%s0 + $0xc4] sm:$0xf]
  %v64 = vld [vmem:[%s0 + $0xc8] sm:$0xf]
  %v65 = vld [vmem:[%s0 + $0xcc] sm:$0xf]
  %v66 = vld [vmem:[%s0 + $0xd0] sm:$0xf]
  %v67 = vld [vmem:[%s0 + $0xd4] sm:$0xf]
  %v68 = vld [vmem:[%s0 + $0xd8] sm:$0xf]
  %v69 = vld [vmem:[%s0 + $0xdc] sm:$0xf]
  %v70 = vld [vmem:[%s0 + $0xe0] sm:$0xf]
  %v71 = vld [vmem:[%s0 + $0xe4] sm:$0xf]
  %v72 = vld [vmem:[%s0 + $0xe8] sm:$0xf]
  %v73 = vld [vmem:[%s0 + $0xec] sm:$0xf]
  %v74 = vld [vmem:[%s0 + $0xf0] sm:$0xf]
  %v75 = vld [vmem:[%s0 + $0xf4] sm:$0xf]
  %v76 = vld [vmem:[%s0 + $0xf8] sm:$0xf]
  %v77 = vld [vmem:[%s0 + $0xfc] sm:$0xf]
  %v78 = vunpack.c.l.bf16 %v14
  %v79 = vunpack.c.l.bf16 %v15
  %v80 = vunpack.c.l.bf16 %v16
  %v81 = vunpack.c.l.bf16 %v17
  %v82 = vunpack.c.l.bf16 %v18
  %v83 = vunpack.c.l.bf16 %v19
  %v84 = vunpack.c.l.bf16 %v20
  %v85 = vunpack.c.l.bf16 %v21
  %v86 = vunpack.c.l.bf16 %v22
  %v87 = vunpack.c.l.bf16 %v23
  %v88 = vunpack.c.l.bf16 %v24
  %v89 = vunpack.c.l.bf16 %v25
  %v90 = vunpack.c.l.bf16 %v26
  %v91 = vunpack.c.l.bf16 %v27
  %v92 = vunpack.c.l.bf16 %v28
  %v93 = vunpack.c.l.bf16 %v29
  %v94 = vunpack.c.l.bf16 %v30
  %v95 = vunpack.c.l.bf16 %v31
  %v96 = vunpack.c.l.bf16 %v32
  %v97 = vunpack.c.l.bf16 %v33
  %v98 = vunpack.c.l.bf16 %v34
  %v99 = vunpack.c.l.bf16 %v35
  %v100 = vunpack.c.l.bf16 %v36
  %v101 = vunpack.c.l.bf16 %v37
  %v102 = vunpack.c.l.bf16 %v38
  %v103 = vunpack.c.l.bf16 %v39
  %v104 = vunpack.c.l.bf16 %v40
  %v105 = vunpack.c.l.bf16 %v41
  %v106 = vunpack.c.l.bf16 %v42
  %v107 = vunpack.c.l.bf16 %v43
  %v108 = vunpack.c.l.bf16 %v44
  %v109 = vunpack.c.l.bf16 %v45
  %v110 = vunpack.c.l.bf16 %v46
  %v111 = vunpack.c.l.bf16 %v47
  %v112 = vunpack.c.l.bf16 %v48
  %v113 = vunpack.c.l.bf16 %v49
  %v114 = vunpack.c.l.bf16 %v50
  %v115 = vunpack.c.l.bf16 %v51
  %v116 = vunpack.c.l.bf16 %v52
  %v117 = vunpack.c.l.bf16 %v53
  %v118 = vunpack.c.l.bf16 %v54
  %v119 = vunpack.c.l.bf16 %v55
  %v120 = vunpack.c.l.bf16 %v56
  %v121 = vunpack.c.l.bf16 %v57
  %v122 = vunpack.c.l.bf16 %v58
  %v123 = vunpack.c.l.bf16 %v59
  %v124 = vunpack.c.l.bf16 %v60
  %v125 = vunpack.c.l.bf16 %v61
  %v126 = vunpack.c.l.bf16 %v62
  %v127 = vunpack.c.l.bf16 %v63
  %v128 = vunpack.c.l.bf16 %v64
  %v129 = vunpack.c.l.bf16 %v65
  %v130 = vunpack.c.l.bf16 %v66
  %v131 = vunpack.c.l.bf16 %v67
  %v132 = vunpack.c.l.bf16 %v68
  %v133 = vunpack.c.l.bf16 %v69
  %v134 = vunpack.c.l.bf16 %v70
  %v135 = vunpack.c.l.bf16 %v71
  %v136 = vunpack.c.l.bf16 %v72
  %v137 = vunpack.c.l.bf16 %v73
  %v138 = vunpack.c.l.bf16 %v74
  %v139 = vunpack.c.l.bf16 %v75
  %v140 = vunpack.c.l.bf16 %v76
  %v141 = vunpack.c.l.bf16 %v77
  %v142 = vld [vmem:[%s1] sm:$0x1]
  %v144 = vperm.slane %v142, 0
  %v146 = vmul.f32 %v78, %v144
  %v147 = vmul.f32 %v79, %v144
  %v148 = vmul.f32 %v80, %v144
  %v149 = vmul.f32 %v81, %v144
  %v150 = vmul.f32 %v82, %v144
  %v151 = vmul.f32 %v83, %v144
  %v152 = vmul.f32 %v84, %v144
  %v153 = vmul.f32 %v85, %v144
  %v154 = vmul.f32 %v86, %v144
  %v155 = vmul.f32 %v87, %v144
  %v156 = vmul.f32 %v88, %v144
  %v157 = vmul.f32 %v89, %v144
  %v158 = vmul.f32 %v90, %v144
  %v159 = vmul.f32 %v91, %v144
  %v160 = vmul.f32 %v92, %v144
  %v161 = vmul.f32 %v93, %v144
  %v162 = vmul.f32 %v94, %v144
  %v163 = vmul.f32 %v95, %v144
  %v164 = vmul.f32 %v96, %v144
  %v165 = vmul.f32 %v97, %v144
  %v166 = vmul.f32 %v98, %v144
  %v167 = vmul.f32 %v99, %v144
  %v168 = vmul.f32 %v100, %v144
  %v169 = vmul.f32 %v101, %v144
  %v170 = vmul.f32 %v102, %v144
  %v171 = vmul.f32 %v103, %v144
  %v172 = vmul.f32 %v104, %v144
  %v173 = vmul.f32 %v105, %v144
  %v174 = vmul.f32 %v106, %v144
  %v175 = vmul.f32 %v107, %v144
  %v176 = vmul.f32 %v108, %v144
  %v177 = vmul.f32 %v109, %v144
  %v178 = vmul.f32 %v110, %v144
  %v179 = vmul.f32 %v111, %v144
  %v180 = vmul.f32 %v112, %v144
  %v181 = vmul.f32 %v113, %v144
  %v182 = vmul.f32 %v114, %v144
  %v183 = vmul.f32 %v115, %v144
  %v184 = vmul.f32 %v116, %v144
  %v185 = vmul.f32 %v117, %v144
  %v186 = vmul.f32 %v118, %v144
  %v187 = vmul.f32 %v119, %v144
  %v188 = vmul.f32 %v120, %v144
  %v189 = vmul.f32 %v121, %v144
  %v190 = vmul.f32 %v122, %v144
  %v191 = vmul.f32 %v123, %v144
  %v192 = vmul.f32 %v124, %v144
  %v193 = vmul.f32 %v125, %v144
  %v194 = vmul.f32 %v126, %v144
  %v195 = vmul.f32 %v127, %v144
  %v196 = vmul.f32 %v128, %v144
  %v197 = vmul.f32 %v129, %v144
  %v198 = vmul.f32 %v130, %v144
  %v199 = vmul.f32 %v131, %v144
  %v200 = vmul.f32 %v132, %v144
  %v201 = vmul.f32 %v133, %v144
  %v202 = vmul.f32 %v134, %v144
  %v203 = vmul.f32 %v135, %v144
  %v204 = vmul.f32 %v136, %v144
  %v205 = vmul.f32 %v137, %v144
  %v206 = vmul.f32 %v138, %v144
  %v207 = vmul.f32 %v139, %v144
  %v208 = vmul.f32 %v140, %v144
  %v209 = vmul.f32 %v141, %v144
  %v210 = vld [vmem:[%s2] sm:$0x1]
  %v212 = vperm.slane %v210, 0
  %v214 = vadd.f32 %v146, %v212
  %v215 = vadd.f32 %v147, %v212
  %v216 = vadd.f32 %v148, %v212
  %v217 = vadd.f32 %v149, %v212
  %v218 = vadd.f32 %v150, %v212
  %v219 = vadd.f32 %v151, %v212
  %v220 = vadd.f32 %v152, %v212
  %v221 = vadd.f32 %v153, %v212
  %v222 = vadd.f32 %v154, %v212
  %v223 = vadd.f32 %v155, %v212
  %v224 = vadd.f32 %v156, %v212
  %v225 = vadd.f32 %v157, %v212
  %v226 = vadd.f32 %v158, %v212
  %v227 = vadd.f32 %v159, %v212
  %v228 = vadd.f32 %v160, %v212
  %v229 = vadd.f32 %v161, %v212
  %v230 = vadd.f32 %v162, %v212
  %v231 = vadd.f32 %v163, %v212
  %v232 = vadd.f32 %v164, %v212
  %v233 = vadd.f32 %v165, %v212
  %v234 = vadd.f32 %v166, %v212
  %v235 = vadd.f32 %v167, %v212
  %v236 = vadd.f32 %v168, %v212
  %v237 = vadd.f32 %v169, %v212
  %v238 = vadd.f32 %v170, %v212
  %v239 = vadd.f32 %v171, %v212
  %v240 = vadd.f32 %v172, %v212
  %v241 = vadd.f32 %v173, %v212
  %v242 = vadd.f32 %v174, %v212
  %v243 = vadd.f32 %v175, %v212
  %v244 = vadd.f32 %v176, %v212
  %v245 = vadd.f32 %v177, %v212
  %v246 = vadd.f32 %v178, %v212
  %v247 = vadd.f32 %v179, %v212
  %v248 = vadd.f32 %v180, %v212
  %v249 = vadd.f32 %v181, %v212
  %v250 = vadd.f32 %v182, %v212
  %v251 = vadd.f32 %v183, %v212
  %v252 = vadd.f32 %v184, %v212
  %v253 = vadd.f32 %v185, %v212
  %v254 = vadd.f32 %v186, %v212
  %v255 = vadd.f32 %v187, %v212
  %v256 = vadd.f32 %v188, %v212
  %v257 = vadd.f32 %v189, %v212
  %v258 = vadd.f32 %v190, %v212
  %v259 = vadd.f32 %v191, %v212
  %v260 = vadd.f32 %v192, %v212
  %v261 = vadd.f32 %v193, %v212
  %v262 = vadd.f32 %v194, %v212
  %v263 = vadd.f32 %v195, %v212
  %v264 = vadd.f32 %v196, %v212
  %v265 = vadd.f32 %v197, %v212
  %v266 = vadd.f32 %v198, %v212
  %v267 = vadd.f32 %v199, %v212
  %v268 = vadd.f32 %v200, %v212
  %v269 = vadd.f32 %v201, %v212
  %v270 = vadd.f32 %v202, %v212
  %v271 = vadd.f32 %v203, %v212
  %v272 = vadd.f32 %v204, %v212
  %v273 = vadd.f32 %v205, %v212
  %v274 = vadd.f32 %v206, %v212
  %v275 = vadd.f32 %v207, %v212
  %v276 = vadd.f32 %v208, %v212
  %v277 = vadd.f32 %v209, %v212
  %vm278 = vcmp.gt.f32.partialorder %v214, 0.0
  %vm279 = vcmp.gt.f32.partialorder %v215, 0.0
  %vm280 = vcmp.gt.f32.partialorder %v216, 0.0
  %vm281 = vcmp.gt.f32.partialorder %v217, 0.0
  %vm282 = vcmp.gt.f32.partialorder %v218, 0.0
  %vm283 = vcmp.gt.f32.partialorder %v219, 0.0
  %vm284 = vcmp.gt.f32.partialorder %v220, 0.0
  %vm285 = vcmp.gt.f32.partialorder %v221, 0.0
  %vm286 = vcmp.gt.f32.partialorder %v222, 0.0
  %vm287 = vcmp.gt.f32.partialorder %v223, 0.0
  %vm288 = vcmp.gt.f32.partialorder %v224, 0.0
  %vm289 = vcmp.gt.f32.partialorder %v225, 0.0
  %vm290 = vcmp.gt.f32.partialorder %v226, 0.0
  %vm291 = vcmp.gt.f32.partialorder %v227, 0.0
  %vm292 = vcmp.gt.f32.partialorder %v228, 0.0
  %vm293 = vcmp.gt.f32.partialorder %v229, 0.0
  %vm294 = vcmp.gt.f32.partialorder %v230, 0.0
  %vm295 = vcmp.gt.f32.partialorder %v231, 0.0
  %vm296 = vcmp.gt.f32.partialorder %v232, 0.0
  %vm297 = vcmp.gt.f32.partialorder %v233, 0.0
  %vm298 = vcmp.gt.f32.partialorder %v234, 0.0
  %vm299 = vcmp.gt.f32.partialorder %v235, 0.0
  %vm300 = vcmp.gt.f32.partialorder %v236, 0.0
  %vm301 = vcmp.gt.f32.partialorder %v237, 0.0
  %vm302 = vcmp.gt.f32.partialorder %v238, 0.0
  %vm303 = vcmp.gt.f32.partialorder %v239, 0.0
  %vm304 = vcmp.gt.f32.partialorder %v240, 0.0
  %vm305 = vcmp.gt.f32.partialorder %v241, 0.0
  %vm306 = vcmp.gt.f32.partialorder %v242, 0.0
  %vm307 = vcmp.gt.f32.partialorder %v243, 0.0
  %vm308 = vcmp.gt.f32.partialorder %v244, 0.0
  %vm309 = vcmp.gt.f32.partialorder %v245, 0.0
  %vm310 = vcmp.gt.f32.partialorder %v246, 0.0
  %vm311 = vcmp.gt.f32.partialorder %v247, 0.0
  %vm312 = vcmp.gt.f32.partialorder %v248, 0.0
  %vm313 = vcmp.gt.f32.partialorder %v249, 0.0
  %vm314 = vcmp.gt.f32.partialorder %v250, 0.0
  %vm315 = vcmp.gt.f32.partialorder %v251, 0.0
  %vm316 = vcmp.gt.f32.partialorder %v252, 0.0
  %vm317 = vcmp.gt.f32.partialorder %v253, 0.0
  %vm318 = vcmp.gt.f32.partialorder %v254, 0.0
  %vm319 = vcmp.gt.f32.partialorder %v255, 0.0
  %vm320 = vcmp.gt.f32.partialorder %v256, 0.0
  %vm321 = vcmp.gt.f32.partialorder %v257, 0.0
  %vm322 = vcmp.gt.f32.partialorder %v258, 0.0
  %vm323 = vcmp.gt.f32.partialorder %v259, 0.0
  %vm324 = vcmp.gt.f32.partialorder %v260, 0.0
  %vm325 = vcmp.gt.f32.partialorder %v261, 0.0
  %vm326 = vcmp.gt.f32.partialorder %v262, 0.0
  %vm327 = vcmp.gt.f32.partialorder %v263, 0.0
  %vm328 = vcmp.gt.f32.partialorder %v264, 0.0
  %vm329 = vcmp.gt.f32.partialorder %v265, 0.0
  %vm330 = vcmp.gt.f32.partialorder %v266, 0.0
  %vm331 = vcmp.gt.f32.partialorder %v267, 0.0
  %vm332 = vcmp.gt.f32.partialorder %v268, 0.0
  %vm333 = vcmp.gt.f32.partialorder %v269, 0.0
  %vm334 = vcmp.gt.f32.partialorder %v270, 0.0
  %vm335 = vcmp.gt.f32.partialorder %v271, 0.0
  %vm336 = vcmp.gt.f32.partialorder %v272, 0.0
  %vm337 = vcmp.gt.f32.partialorder %v273, 0.0
  %vm338 = vcmp.gt.f32.partialorder %v274, 0.0
  %vm339 = vcmp.gt.f32.partialorder %v275, 0.0
  %vm340 = vcmp.gt.f32.partialorder %v276, 0.0
  %vm341 = vcmp.gt.f32.partialorder %v277, 0.0
  %v342 = vmul.f32 %v214, 0.2
  %v343 = vmul.f32 %v215, 0.2
  %v344 = vmul.f32 %v216, 0.2
  %v345 = vmul.f32 %v217, 0.2
  %v346 = vmul.f32 %v218, 0.2
  %v347 = vmul.f32 %v219, 0.2
  %v348 = vmul.f32 %v220, 0.2
  %v349 = vmul.f32 %v221, 0.2
  %v350 = vmul.f32 %v222, 0.2
  %v351 = vmul.f32 %v223, 0.2
  %v352 = vmul.f32 %v224, 0.2
  %v353 = vmul.f32 %v225, 0.2
  %v354 = vmul.f32 %v226, 0.2
  %v355 = vmul.f32 %v227, 0.2
  %v356 = vmul.f32 %v228, 0.2
  %v357 = vmul.f32 %v229, 0.2
  %v358 = vmul.f32 %v230, 0.2
  %v359 = vmul.f32 %v231, 0.2
  %v360 = vmul.f32 %v232, 0.2
  %v361 = vmul.f32 %v233, 0.2
  %v362 = vmul.f32 %v234, 0.2
  %v363 = vmul.f32 %v235, 0.2
  %v364 = vmul.f32 %v236, 0.2
  %v365 = vmul.f32 %v237, 0.2
  %v366 = vmul.f32 %v238, 0.2
  %v367 = vmul.f32 %v239, 0.2
  %v368 = vmul.f32 %v240, 0.2
  %v369 = vmul.f32 %v241, 0.2
  %v370 = vmul.f32 %v242, 0.2
  %v371 = vmul.f32 %v243, 0.2
  %v372 = vmul.f32 %v244, 0.2
  %v373 = vmul.f32 %v245, 0.2
  %v374 = vmul.f32 %v246, 0.2
  %v375 = vmul.f32 %v247, 0.2
  %v376 = vmul.f32 %v248, 0.2
  %v377 = vmul.f32 %v249, 0.2
  %v378 = vmul.f32 %v250, 0.2
  %v379 = vmul.f32 %v251, 0.2
  %v380 = vmul.f32 %v252, 0.2
  %v381 = vmul.f32 %v253, 0.2
  %v382 = vmul.f32 %v254, 0.2
  %v383 = vmul.f32 %v255, 0.2
  %v384 = vmul.f32 %v256, 0.2
  %v385 = vmul.f32 %v257, 0.2
  %v386 = vmul.f32 %v258, 0.2
  %v387 = vmul.f32 %v259, 0.2
  %v388 = vmul.f32 %v260, 0.2
  %v389 = vmul.f32 %v261, 0.2
  %v390 = vmul.f32 %v262, 0.2
  %v391 = vmul.f32 %v263, 0.2
  %v392 = vmul.f32 %v264, 0.2
  %v393 = vmul.f32 %v265, 0.2
  %v394 = vmul.f32 %v266, 0.2
  %v395 = vmul.f32 %v267, 0.2
  %v396 = vmul.f32 %v268, 0.2
  %v397 = vmul.f32 %v269, 0.2
  %v398 = vmul.f32 %v270, 0.2
  %v399 = vmul.f32 %v271, 0.2
  %v400 = vmul.f32 %v272, 0.2
  %v401 = vmul.f32 %v273, 0.2
  %v402 = vmul.f32 %v274, 0.2
  %v403 = vmul.f32 %v275, 0.2
  %v404 = vmul.f32 %v276, 0.2
  %v405 = vmul.f32 %v277, 0.2
  %v406 = vsel %vm278, %v214, %v342
  %v407 = vsel %vm279, %v215, %v343
  %v408 = vsel %vm280, %v216, %v344
  %v409 = vsel %vm281, %v217, %v345
  %v410 = vsel %vm282, %v218, %v346
  %v411 = vsel %vm283, %v219, %v347
  %v412 = vsel %vm284, %v220, %v348
  %v413 = vsel %vm285, %v221, %v349
  %v414 = vsel %vm286, %v222, %v350
  %v415 = vsel %vm287, %v223, %v351
  %v416 = vsel %vm288, %v224, %v352
  %v417 = vsel %vm289, %v225, %v353
  %v418 = vsel %vm290, %v226, %v354
  %v419 = vsel %vm291, %v227, %v355
  %v420 = vsel %vm292, %v228, %v356
  %v421 = vsel %vm293, %v229, %v357
  %v422 = vsel %vm294, %v230, %v358
  %v423 = vsel %vm295, %v231, %v359
  %v424 = vsel %vm296, %v232, %v360
  %v425 = vsel %vm297, %v233, %v361
  %v426 = vsel %vm298, %v234, %v362
  %v427 = vsel %vm299, %v235, %v363
  %v428 = vsel %vm300, %v236, %v364
  %v429 = vsel %vm301, %v237, %v365
  %v430 = vsel %vm302, %v238, %v366
  %v431 = vsel %vm303, %v239, %v367
  %v432 = vsel %vm304, %v240, %v368
  %v433 = vsel %vm305, %v241, %v369
  %v434 = vsel %vm306, %v242, %v370
  %v435 = vsel %vm307, %v243, %v371
  %v436 = vsel %vm308, %v244, %v372
  %v437 = vsel %vm309, %v245, %v373
  %v438 = vsel %vm310, %v246, %v374
  %v439 = vsel %vm311, %v247, %v375
  %v440 = vsel %vm312, %v248, %v376
  %v441 = vsel %vm313, %v249, %v377
  %v442 = vsel %vm314, %v250, %v378
  %v443 = vsel %vm315, %v251, %v379
  %v444 = vsel %vm316, %v252, %v380
  %v445 = vsel %vm317, %v253, %v381
  %v446 = vsel %vm318, %v254, %v382
  %v447 = vsel %vm319, %v255, %v383
  %v448 = vsel %vm320, %v256, %v384
  %v449 = vsel %vm321, %v257, %v385
  %v450 = vsel %vm322, %v258, %v386
  %v451 = vsel %vm323, %v259, %v387
  %v452 = vsel %vm324, %v260, %v388
  %v453 = vsel %vm325, %v261, %v389
  %v454 = vsel %vm326, %v262, %v390
  %v455 = vsel %vm327, %v263, %v391
  %v456 = vsel %vm328, %v264, %v392
  %v457 = vsel %vm329, %v265, %v393
  %v458 = vsel %vm330, %v266, %v394
  %v459 = vsel %vm331, %v267, %v395
  %v460 = vsel %vm332, %v268, %v396
  %v461 = vsel %vm333, %v269, %v397
  %v462 = vsel %vm334, %v270, %v398
  %v463 = vsel %vm335, %v271, %v399
  %v464 = vsel %vm336, %v272, %v400
  %v465 = vsel %vm337, %v273, %v401
  %v466 = vsel %vm338, %v274, %v402
  %v467 = vsel %vm339, %v275, %v403
  %v468 = vsel %vm340, %v276, %v404
  %v469 = vsel %vm341, %v277, %v405
  %v470 = vpack.c.bf16 %v406, %v406
  %v471 = vpack.c.bf16 %v407, %v407
  %v472 = vpack.c.bf16 %v408, %v408
  %v473 = vpack.c.bf16 %v409, %v409
  %v474 = vpack.c.bf16 %v410, %v410
  %v475 = vpack.c.bf16 %v411, %v411
  %v476 = vpack.c.bf16 %v412, %v412
  %v477 = vpack.c.bf16 %v413, %v413
  %v478 = vpack.c.bf16 %v414, %v414
  %v479 = vpack.c.bf16 %v415, %v415
  %v480 = vpack.c.bf16 %v416, %v416
  %v481 = vpack.c.bf16 %v417, %v417
  %v482 = vpack.c.bf16 %v418, %v418
  %v483 = vpack.c.bf16 %v419, %v419
  %v484 = vpack.c.bf16 %v420, %v420
  %v485 = vpack.c.bf16 %v421, %v421
  %v486 = vpack.c.bf16 %v422, %v422
  %v487 = vpack.c.bf16 %v423, %v423
  %v488 = vpack.c.bf16 %v424, %v424
  %v489 = vpack.c.bf16 %v425, %v425
  %v490 = vpack.c.bf16 %v426, %v426
  %v491 = vpack.c.bf16 %v427, %v427
  %v492 = vpack.c.bf16 %v428, %v428
  %v493 = vpack.c.bf16 %v429, %v429
  %v494 = vpack.c.bf16 %v430, %v430
  %v495 = vpack.c.bf16 %v431, %v431
  %v496 = vpack.c.bf16 %v432, %v432
  %v497 = vpack.c.bf16 %v433, %v433
  %v498 = vpack.c.bf16 %v434, %v434
  %v499 = vpack.c.bf16 %v435, %v435
  %v500 = vpack.c.bf16 %v436, %v436
  %v501 = vpack.c.bf16 %v437, %v437
  %v502 = vpack.c.bf16 %v438, %v438
  %v503 = vpack.c.bf16 %v439, %v439
  %v504 = vpack.c.bf16 %v440, %v440
  %v505 = vpack.c.bf16 %v441, %v441
  %v506 = vpack.c.bf16 %v442, %v442
  %v507 = vpack.c.bf16 %v443, %v443
  %v508 = vpack.c.bf16 %v444, %v444
  %v509 = vpack.c.bf16 %v445, %v445
  %v510 = vpack.c.bf16 %v446, %v446
  %v511 = vpack.c.bf16 %v447, %v447
  %v512 = vpack.c.bf16 %v448, %v448
  %v513 = vpack.c.bf16 %v449, %v449
  %v514 = vpack.c.bf16 %v450, %v450
  %v515 = vpack.c.bf16 %v451, %v451
  %v516 = vpack.c.bf16 %v452, %v452
  %v517 = vpack.c.bf16 %v453, %v453
  %v518 = vpack.c.bf16 %v454, %v454
  %v519 = vpack.c.bf16 %v455, %v455
  %v520 = vpack.c.bf16 %v456, %v456
  %v521 = vpack.c.bf16 %v457, %v457
  %v522 = vpack.c.bf16 %v458, %v458
  %v523 = vpack.c.bf16 %v459, %v459
  %v524 = vpack.c.bf16 %v460, %v460
  %v525 = vpack.c.bf16 %v461, %v461
  %v526 = vpack.c.bf16 %v462, %v462
  %v527 = vpack.c.bf16 %v463, %v463
  %v528 = vpack.c.bf16 %v464, %v464
  %v529 = vpack.c.bf16 %v465, %v465
  %v530 = vpack.c.bf16 %v466, %v466
  %v531 = vpack.c.bf16 %v467, %v467
  %v532 = vpack.c.bf16 %v468, %v468
  %v533 = vpack.c.bf16 %v469, %v469
  %534 = vst [vmem:[%s3] sm:$0xf] %v470
  %535 = vst [vmem:[%s3 + $0x4] sm:$0xf] %v471
  %536 = vst [vmem:[%s3 + $0x8] sm:$0xf] %v472
  %537 = vst [vmem:[%s3 + $0xc] sm:$0xf] %v473
  %538 = vst [vmem:[%s3 + $0x10] sm:$0xf] %v474
  %539 = vst [vmem:[%s3 + $0x14] sm:$0xf] %v475
  %540 = vst [vmem:[%s3 + $0x18] sm:$0xf] %v476
  %541 = vst [vmem:[%s3 + $0x1c] sm:$0xf] %v477
  %542 = vst [vmem:[%s3 + $0x20] sm:$0xf] %v478
  %543 = vst [vmem:[%s3 + $0x24] sm:$0xf] %v479
  %544 = vst [vmem:[%s3 + $0x28] sm:$0xf] %v480
  %545 = vst [vmem:[%s3 + $0x2c] sm:$0xf] %v481
  %546 = vst [vmem:[%s3 + $0x30] sm:$0xf] %v482
  %547 = vst [vmem:[%s3 + $0x34] sm:$0xf] %v483
  %548 = vst [vmem:[%s3 + $0x38] sm:$0xf] %v484
  %549 = vst [vmem:[%s3 + $0x3c] sm:$0xf] %v485
  %550 = vst [vmem:[%s3 + $0x40] sm:$0xf] %v486
  %551 = vst [vmem:[%s3 + $0x44] sm:$0xf] %v487
  %552 = vst [vmem:[%s3 + $0x48] sm:$0xf] %v488
  %553 = vst [vmem:[%s3 + $0x4c] sm:$0xf] %v489
  %554 = vst [vmem:[%s3 + $0x50] sm:$0xf] %v490
  %555 = vst [vmem:[%s3 + $0x54] sm:$0xf] %v491
  %556 = vst [vmem:[%s3 + $0x58] sm:$0xf] %v492
  %557 = vst [vmem:[%s3 + $0x5c] sm:$0xf] %v493
  %558 = vst [vmem:[%s3 + $0x60] sm:$0xf] %v494
  %559 = vst [vmem:[%s3 + $0x64] sm:$0xf] %v495
  %560 = vst [vmem:[%s3 + $0x68] sm:$0xf] %v496
  %561 = vst [vmem:[%s3 + $0x6c] sm:$0xf] %v497
  %562 = vst [vmem:[%s3 + $0x70] sm:$0xf] %v498
  %563 = vst [vmem:[%s3 + $0x74] sm:$0xf] %v499
  %564 = vst [vmem:[%s3 + $0x78] sm:$0xf] %v500
  %565 = vst [vmem:[%s3 + $0x7c] sm:$0xf] %v501
  %566 = vst [vmem:[%s3 + $0x80] sm:$0xf] %v502
  %567 = vst [vmem:[%s3 + $0x84] sm:$0xf] %v503
  %568 = vst [vmem:[%s3 + $0x88] sm:$0xf] %v504
  %569 = vst [vmem:[%s3 + $0x8c] sm:$0xf] %v505
  %570 = vst [vmem:[%s3 + $0x90] sm:$0xf] %v506
  %571 = vst [vmem:[%s3 + $0x94] sm:$0xf] %v507
  %572 = vst [vmem:[%s3 + $0x98] sm:$0xf] %v508
  %573 = vst [vmem:[%s3 + $0x9c] sm:$0xf] %v509
  %574 = vst [vmem:[%s3 + $0xa0] sm:$0xf] %v510
  %575 = vst [vmem:[%s3 + $0xa4] sm:$0xf] %v511
  %576 = vst [vmem:[%s3 + $0xa8] sm:$0xf] %v512
  %577 = vst [vmem:[%s3 + $0xac] sm:$0xf] %v513
  %578 = vst [vmem:[%s3 + $0xb0] sm:$0xf] %v514
  %579 = vst [vmem:[%s3 + $0xb4] sm:$0xf] %v515
  %580 = vst [vmem:[%s3 + $0xb8] sm:$0xf] %v516
  %581 = vst [vmem:[%s3 + $0xbc] sm:$0xf] %v517
  %582 = vst [vmem:[%s3 + $0xc0] sm:$0xf] %v518
  %583 = vst [vmem:[%s3 + $0xc4] sm:$0xf] %v519
  %584 = vst [vmem:[%s3 + $0xc8] sm:$0xf] %v520
  %585 = vst [vmem:[%s3 + $0xcc] sm:$0xf] %v521
  %586 = vst [vmem:[%s3 + $0xd0] sm:$0xf] %v522
  %587 = vst [vmem:[%s3 + $0xd4] sm:$0xf] %v523
  %588 = vst [vmem:[%s3 + $0xd8] sm:$0xf] %v524
  %589 = vst [vmem:[%s3 + $0xdc] sm:$0xf] %v525
  %590 = vst [vmem:[%s3 + $0xe0] sm:$0xf] %v526
  %591 = vst [vmem:[%s3 + $0xe4] sm:$0xf] %v527
  %592 = vst [vmem:[%s3 + $0xe8] sm:$0xf] %v528
  %593 = vst [vmem:[%s3 + $0xec] sm:$0xf] %v529
  %594 = vst [vmem:[%s3 + $0xf0] sm:$0xf] %v530
  %595 = vst [vmem:[%s3 + $0xf4] sm:$0xf] %v531
  %596 = vst [vmem:[%s3 + $0xf8] sm:$0xf] %v532
  %597 = vst [vmem:[%s3 + $0xfc] sm:$0xf] %v533
  // Predicated region
  $region14: #{discriminator_forward.10} parent=0 // pred_check
    _
  $region15: #{discriminator_forward.10} parent=0 // pred_check_branch
    %599 = sbr.rel (0) target = $region17
  $region16: #{discriminator_forward.10} parent=0 // pred_region
    _
  $region17: #{discriminator_forward.10} parent=0 // pred_fallthru
    _
  // Predicated region
  $region18: #{discriminator_forward.10} parent=0 // pred_check
    _
  $region19: #{discriminator_forward.10} parent=0 // pred_check_branch
    %601 = sbr.rel (0) target = $region21
  $region20: #{discriminator_forward.10} parent=0 // pred_region
    _
  $region21: #{discriminator_forward.10} parent=0 // pred_fallthru
    _

// kernel: discriminator_forward.12
$region0: #{discriminator_forward.12}
  #allocation0 [shape = 'u32[]', space=smem, size = 0x4, offset = 0x4, fixed_abs, tag = 'smem constant byte address 0x4 - core index']
  #allocation1 [shape = 'u32[72,128]{1,0:T(1,128)}', space=vmem, size = 0x9000, scoped, tag = 'internal scratch']
  %s0 = inlined_call_operand.vmem [shape: bf16[128,128], index: 0, kind: input, shape index: {}]
  %s1 = inlined_call_operand.vmem [shape: f32[1,128], index: 1, kind: input, shape index: {}]
  %s2 = inlined_call_operand.vmem [shape: f32[1,128], index: 2, kind: input, shape index: {}]
  %s3 = inlined_call_operand.vmem [shape: bf16[128,128], index: 3, kind: output, shape index: {}]
  %s4 = sld [smem:[#allocation0]]
  $region22: #{discriminator_forward.12} parent=0
    _
  %s6 = ssub.s32 1, %s4
  %s7 = scalar_select 0, %s6, %s4
  // Predicated region
  $region2: #{discriminator_forward.12} parent=0 // pred_check
    _
  $region3: #{discriminator_forward.12} parent=0 // pred_check_branch
    %9 = sbr.rel (0) target = $region5
  $region4: #{discriminator_forward.12} parent=0 // pred_region
    _
  $region5: #{discriminator_forward.12} parent=0 // pred_fallthru
    _
  // Predicated region
  $region6: #{discriminator_forward.12} parent=0 // pred_check
    _
  $region7: #{discriminator_forward.12} parent=0 // pred_check_branch
    %11 = sbr.rel (0) target = $region9
  $region8: #{discriminator_forward.12} parent=0 // pred_region
    _
  $region9: #{discriminator_forward.12} parent=0 // pred_fallthru
    _
  // Predicated region
  $region10: #{discriminator_forward.12} parent=0 // pred_check
    _
  $region11: #{discriminator_forward.12} parent=0 // pred_check_branch
    %13 = sbr.rel (0) target = $region13
  $region12: #{discriminator_forward.12} parent=0 // pred_region
    _
  $region13: #{discriminator_forward.12} parent=0 // pred_fallthru
    _
  %v14 = vld [vmem:[%s0] sm:$0xf]
  %v15 = vld [vmem:[%s0 + $0x4] sm:$0xf]
  %v16 = vld [vmem:[%s0 + $0x8] sm:$0xf]
  %v17 = vld [vmem:[%s0 + $0xc] sm:$0xf]
  %v18 = vld [vmem:[%s0 + $0x10] sm:$0xf]
  %v19 = vld [vmem:[%s0 + $0x14] sm:$0xf]
  %v20 = vld [vmem:[%s0 + $0x18] sm:$0xf]
  %v21 = vld [vmem:[%s0 + $0x1c] sm:$0xf]
  %v22 = vld [vmem:[%s0 + $0x20] sm:$0xf]
  %v23 = vld [vmem:[%s0 + $0x24] sm:$0xf]
  %v24 = vld [vmem:[%s0 + $0x28] sm:$0xf]
  %v25 = vld [vmem:[%s0 + $0x2c] sm:$0xf]
  %v26 = vld [vmem:[%s0 + $0x30] sm:$0xf]
  %v27 = vld [vmem:[%s0 + $0x34] sm:$0xf]
  %v28 = vld [vmem:[%s0 + $0x38] sm:$0xf]
  %v29 = vld [vmem:[%s0 + $0x3c] sm:$0xf]
  %v30 = vunpack.c.l.bf16 %v14
  %v31 = vunpack.c.l.bf16 %v15
  %v32 = vunpack.c.l.bf16 %v16
  %v33 = vunpack.c.l.bf16 %v17
  %v34 = vunpack.c.l.bf16 %v18
  %v35 = vunpack.c.l.bf16 %v19
  %v36 = vunpack.c.l.bf16 %v20
  %v37 = vunpack.c.l.bf16 %v21
  %v38 = vunpack.c.l.bf16 %v22
  %v39 = vunpack.c.l.bf16 %v23
  %v40 = vunpack.c.l.bf16 %v24
  %v41 = vunpack.c.l.bf16 %v25
  %v42 = vunpack.c.l.bf16 %v26
  %v43 = vunpack.c.l.bf16 %v27
  %v44 = vunpack.c.l.bf16 %v28
  %v45 = vunpack.c.l.bf16 %v29
  %v46 = vld [vmem:[%s1] sm:$0x1]
  %v48 = vperm.slane %v46, 0
  %v50 = vmul.f32 %v30, %v48
  %v51 = vmul.f32 %v31, %v48
  %v52 = vmul.f32 %v32, %v48
  %v53 = vmul.f32 %v33, %v48
  %v54 = vmul.f32 %v34, %v48
  %v55 = vmul.f32 %v35, %v48
  %v56 = vmul.f32 %v36, %v48
  %v57 = vmul.f32 %v37, %v48
  %v58 = vmul.f32 %v38, %v48
  %v59 = vmul.f32 %v39, %v48
  %v60 = vmul.f32 %v40, %v48
  %v61 = vmul.f32 %v41, %v48
  %v62 = vmul.f32 %v42, %v48
  %v63 = vmul.f32 %v43, %v48
  %v64 = vmul.f32 %v44, %v48
  %v65 = vmul.f32 %v45, %v48
  %v66 = vld [vmem:[%s2] sm:$0x1]
  %v68 = vperm.slane %v66, 0
  %v70 = vadd.f32 %v50, %v68
  %v71 = vadd.f32 %v51, %v68
  %v72 = vadd.f32 %v52, %v68
  %v73 = vadd.f32 %v53, %v68
  %v74 = vadd.f32 %v54, %v68
  %v75 = vadd.f32 %v55, %v68
  %v76 = vadd.f32 %v56, %v68
  %v77 = vadd.f32 %v57, %v68
  %v78 = vadd.f32 %v58, %v68
  %v79 = vadd.f32 %v59, %v68
  %v80 = vadd.f32 %v60, %v68
  %v81 = vadd.f32 %v61, %v68
  %v82 = vadd.f32 %v62, %v68
  %v83 = vadd.f32 %v63, %v68
  %v84 = vadd.f32 %v64, %v68
  %v85 = vadd.f32 %v65, %v68
  %vm86 = vcmp.gt.f32.partialorder %v70, 0.0
  %vm87 = vcmp.gt.f32.partialorder %v71, 0.0
  %vm88 = vcmp.gt.f32.partialorder %v72, 0.0
  %vm89 = vcmp.gt.f32.partialorder %v73, 0.0
  %vm90 = vcmp.gt.f32.partialorder %v74, 0.0
  %vm91 = vcmp.gt.f32.partialorder %v75, 0.0
  %vm92 = vcmp.gt.f32.partialorder %v76, 0.0
  %vm93 = vcmp.gt.f32.partialorder %v77, 0.0
  %vm94 = vcmp.gt.f32.partialorder %v78, 0.0
  %vm95 = vcmp.gt.f32.partialorder %v79, 0.0
  %vm96 = vcmp.gt.f32.partialorder %v80, 0.0
  %vm97 = vcmp.gt.f32.partialorder %v81, 0.0
  %vm98 = vcmp.gt.f32.partialorder %v82, 0.0
  %vm99 = vcmp.gt.f32.partialorder %v83, 0.0
  %vm100 = vcmp.gt.f32.partialorder %v84, 0.0
  %vm101 = vcmp.gt.f32.partialorder %v85, 0.0
  %v102 = vmul.f32 %v70, 0.2
  %v103 = vmul.f32 %v71, 0.2
  %v104 = vmul.f32 %v72, 0.2
  %v105 = vmul.f32 %v73, 0.2
  %v106 = vmul.f32 %v74, 0.2
  %v107 = vmul.f32 %v75, 0.2
  %v108 = vmul.f32 %v76, 0.2
  %v109 = vmul.f32 %v77, 0.2
  %v110 = vmul.f32 %v78, 0.2
  %v111 = vmul.f32 %v79, 0.2
  %v112 = vmul.f32 %v80, 0.2
  %v113 = vmul.f32 %v81, 0.2
  %v114 = vmul.f32 %v82, 0.2
  %v115 = vmul.f32 %v83, 0.2
  %v116 = vmul.f32 %v84, 0.2
  %v117 = vmul.f32 %v85, 0.2
  %v118 = vsel %vm86, %v70, %v102
  %v119 = vsel %vm87, %v71, %v103
  %v120 = vsel %vm88, %v72, %v104
  %v121 = vsel %vm89, %v73, %v105
  %v122 = vsel %vm90, %v74, %v106
  %v123 = vsel %vm91, %v75, %v107
  %v124 = vsel %vm92, %v76, %v108
  %v125 = vsel %vm93, %v77, %v109
  %v126 = vsel %vm94, %v78, %v110
  %v127 = vsel %vm95, %v79, %v111
  %v128 = vsel %vm96, %v80, %v112
  %v129 = vsel %vm97, %v81, %v113
  %v130 = vsel %vm98, %v82, %v114
  %v131 = vsel %vm99, %v83, %v115
  %v132 = vsel %vm100, %v84, %v116
  %v133 = vsel %vm101, %v85, %v117
  %v134 = vpack.c.bf16 %v118, %v118
  %v135 = vpack.c.bf16 %v119, %v119
  %v136 = vpack.c.bf16 %v120, %v120
  %v137 = vpack.c.bf16 %v121, %v121
  %v138 = vpack.c.bf16 %v122, %v122
  %v139 = vpack.c.bf16 %v123, %v123
  %v140 = vpack.c.bf16 %v124, %v124
  %v141 = vpack.c.bf16 %v125, %v125
  %v142 = vpack.c.bf16 %v126, %v126
  %v143 = vpack.c.bf16 %v127, %v127
  %v144 = vpack.c.bf16 %v128, %v128
  %v145 = vpack.c.bf16 %v129, %v129
  %v146 = vpack.c.bf16 %v130, %v130
  %v147 = vpack.c.bf16 %v131, %v131
  %v148 = vpack.c.bf16 %v132, %v132
  %v149 = vpack.c.bf16 %v133, %v133
  %150 = vst [vmem:[%s3] sm:$0xf] %v134
  %151 = vst [vmem:[%s3 + $0x4] sm:$0xf] %v135
  %152 = vst [vmem:[%s3 + $0x8] sm:$0xf] %v136
  %153 = vst [vmem:[%s3 + $0xc] sm:$0xf] %v137
  %154 = vst [vmem:[%s3 + $0x10] sm:$0xf] %v138
  %155 = vst [vmem:[%s3 + $0x14] sm:$0xf] %v139
  %156 = vst [vmem:[%s3 + $0x18] sm:$0xf] %v140
  %157 = vst [vmem:[%s3 + $0x1c] sm:$0xf] %v141
  %158 = vst [vmem:[%s3 + $0x20] sm:$0xf] %v142
  %159 = vst [vmem:[%s3 + $0x24] sm:$0xf] %v143
  %160 = vst [vmem:[%s3 + $0x28] sm:$0xf] %v144
  %161 = vst [vmem:[%s3 + $0x2c] sm:$0xf] %v145
  %162 = vst [vmem:[%s3 + $0x30] sm:$0xf] %v146
  %163 = vst [vmem:[%s3 + $0x34] sm:$0xf] %v147
  %164 = vst [vmem:[%s3 + $0x38] sm:$0xf] %v148
  %165 = vst [vmem:[%s3 + $0x3c] sm:$0xf] %v149
  // Predicated region
  $region14: #{discriminator_forward.12} parent=0 // pred_check
    _
  $region15: #{discriminator_forward.12} parent=0 // pred_check_branch
    %167 = sbr.rel (0) target = $region17
  $region16: #{discriminator_forward.12} parent=0 // pred_region
    _
  $region17: #{discriminator_forward.12} parent=0 // pred_fallthru
    _
  // Predicated region
  $region18: #{discriminator_forward.12} parent=0 // pred_check
    _
  $region19: #{discriminator_forward.12} parent=0 // pred_check_branch
    %169 = sbr.rel (0) target = $region21
  $region20: #{discriminator_forward.12} parent=0 // pred_region
    _
  $region21: #{discriminator_forward.12} parent=0 // pred_fallthru
    _

// kernel: discriminator_forward.11
$region0: #{discriminator_forward.11}
  #allocation0 [shape = 'u32[]', space=smem, size = 0x4, offset = 0x4, fixed_abs, tag = 'smem constant byte address 0x4 - core index']
  #allocation1 [shape = 'u32[72,128]{1,0:T(1,128)}', space=vmem, size = 0x9000, scoped, tag = 'internal scratch']
  #allocation2 [shape = 'f32[64,128]{1,0:T(8,128)}', space=vmem, size = 0x8000, scoped, tag = 'scratch operand']
  %s0 = inlined_call_operand.vmem [shape: bf16[128,2048], index: 0, kind: input, shape index: {}]
  %s1 = inlined_call_operand.vmem [shape: bf16[2048,128], index: 1, kind: input, shape index: {}]
  %s2 = inlined_call_operand.vmem [shape: f32[1,128], index: 2, kind: input, shape index: {}]
  %s3 = inlined_call_operand.vmem [shape: bf16[128,128], index: 3, kind: output, shape index: {0}]
  %s4 = inlined_call_operand.vmem [shape: f32[2,1,128], index: 4, kind: output, shape index: {1}]
  %s5 = inlined_call_operand.vmem [shape: f32[2,1,128], index: 5, kind: output, shape index: {2}]
  %6 = xla_tuple %s3, %s4, %s5
  %s7 = sld [smem:[#allocation0]]
  $region92: #{discriminator_forward.11} parent=0
    _
  %s9 = ssub.s32 1, %s7
  %s10 = scalar_select 0, %s9, %s7
  $region1: #{discriminator_forward.11} parent=0
    #allocation3 [shape = 'u8[262144]{0}', space=vmem, size = 0x40000, scoped, tag = 'input window, operand 0']
    loop: start=0, step=1, limit=6
    $region2: #{discriminator_forward.11} parent=1 // loop_pre_header
      _
    $region3: #{discriminator_forward.11} parent=1 // loop_header
      %s12 = sphi 0, %s16
      %p13 = scmp.ge.s32.totalorder %s12, 6
      %s19 = sphi 0, %s38
      %s20 = sphi 0, %s34
      %s21 = sphi 0, %s30
      %s22 = sphi 0, %s19
      %s23 = sphi 0, %s20
      %s24 = sphi 0, %s21
      %s25 = sphi 0, %s22
      %s26 = sphi 0, %s23
      %s27 = sphi 0, %s24
      %s43 = sphi 0, %s45
      %s46 = sphi 0, %s43
      %s47 = sphi 0, %s46
      %s63 = sphi 0, %s47
      %s71 = sphi 0, %s73
      %s74 = sphi 0, %s71
      %s75 = sphi 0, %s74
      %s91 = sphi 0, %s75
      %s97 = sphi 0, %s99
      %s100 = sphi 0, %s97
      %s101 = sphi 0, %s100
      %s117 = sphi 0, %s101
      %s125 = sphi 0, %s127
      %s128 = sphi 0, %s125
      %s129 = sphi 0, %s128
      %s145 = sphi 0, %s129
      %s153 = sphi 0, %s155
      %s156 = sphi 0, %s153
      %s157 = sphi 0, %s156
      %s173 = sphi 0, %s157
      %s181 = sphi 0, %s183
      %s184 = sphi 0, %s181
      %s185 = sphi 0, %s184
      %s201 = sphi 0, %s185
    $region4: #{discriminator_forward.11} parent=1 // loop_header_branch
      %15 = sbr.rel (%p13) target = $region8
    $region5: #{discriminator_forward.11} parent=1 // loop_body
      %s17 = ssub.s32 %s12, 1
      %s18 = ssub.s32 %s12, 2
      %s28 = sadd.s32 1, %s21
      %p29 = scmp.ge.s32.totalorder %s28, 2
      %s30 = scalar_select %p29, 0, %s28
      %s31 = sadd.s32 1, %s20
      %s32 = scalar_select %p29, %s31, %s20
      %p33 = scmp.ge.s32.totalorder %s32, 1
      %s34 = scalar_select %p33, 0, %s32
      %s35 = sadd.s32 1, %s19
      %s36 = scalar_select %p33, %s35, %s19
      %p37 = scmp.ge.s32.totalorder %s36, 2
      %s38 = scalar_select %p37, 0, %s36
      %s39 = ssub.s32 %s19, %s38
      %s40 = ssub.s32 %s21, %s30
      %s41 = sor.u32 %s39, %s40
      %p42 = scmp.eq.s32.totalorder %s41, 0
      %s44 = sadd.s32 %s43, 1
      %s45 = scalar_select %p42, %s43, %s44
      %p48 = pneg %p42
      %p49 = scmp.eq.s32.totalorder %s12, 3
      %p50 = por %p48, %p49
      %p51 = scmp.ne.s32.totalorder %s43, %s46
      %p52 = scmp.eq.s32.totalorder %s12, 0
      %p53 = por %p51, %p52
      %p54 = scmp.ne.s32.totalorder %s43, %s46
      %p55 = scmp.eq.s32.totalorder %s17, 3
      %p56 = por %p54, %p55
      %p57 = scmp.ne.s32.totalorder %s46, %s47
      %p58 = scmp.eq.s32.totalorder %s17, 0
      %p59 = por %p57, %p58
      %p60 = scmp.ne.s32.totalorder %s46, %s47
      %p61 = scmp.eq.s32.totalorder %s18, 3
      %p62 = por %p60, %p61
      %p64 = scmp.ne.s32.totalorder %s47, %s63
      %p65 = scmp.eq.s32.totalorder %s18, 0
      %p66 = por %p64, %p65
      %s67 = ssub.s32 %s21, %s30
      %s68 = ssub.s32 %s20, %s34
      %s69 = sor.u32 %s67, %s68
      %p70 = scmp.eq.s32.totalorder %s69, 0
      %s72 = sadd.s32 %s71, 1
      %s73 = scalar_select %p70, %s71, %s72
      %p76 = pneg %p70
      %p77 = scmp.eq.s32.totalorder %s12, 3
      %p78 = por %p76, %p77
      %p79 = scmp.ne.s32.totalorder %s71, %s74
      %p80 = scmp.eq.s32.totalorder %s12, 0
      %p81 = por %p79, %p80
      %p82 = scmp.ne.s32.totalorder %s71, %s74
      %p83 = scmp.eq.s32.totalorder %s17, 3
      %p84 = por %p82, %p83
      %p85 = scmp.ne.s32.totalorder %s74, %s75
      %p86 = scmp.eq.s32.totalorder %s17, 0
      %p87 = por %p85, %p86
      %p88 = scmp.ne.s32.totalorder %s74, %s75
      %p89 = scmp.eq.s32.totalorder %s18, 3
      %p90 = por %p88, %p89
      %p92 = scmp.ne.s32.totalorder %s75, %s91
      %p93 = scmp.eq.s32.totalorder %s18, 0
      %p94 = por %p92, %p93
      %s95 = ssub.s32 %s20, %s34
      %p96 = scmp.eq.s32.totalorder %s95, 0
      %s98 = sadd.s32 %s97, 1
      %s99 = scalar_select %p96, %s97, %s98
      %p102 = pneg %p96
      %p103 = scmp.eq.s32.totalorder %s12, 3
      %p104 = por %p102, %p103
      %p105 = scmp.ne.s32.totalorder %s97, %s100
      %p106 = scmp.eq.s32.totalorder %s12, 0
      %p107 = por %p105, %p106
      %p108 = scmp.ne.s32.totalorder %s97, %s100
      %p109 = scmp.eq.s32.totalorder %s17, 3
      %p110 = por %p108, %p109
      %p111 = scmp.ne.s32.totalorder %s100, %s101
      %p112 = scmp.eq.s32.totalorder %s17, 0
      %p113 = por %p111, %p112
      %p114 = scmp.ne.s32.totalorder %s100, %s101
      %p115 = scmp.eq.s32.totalorder %s18, 3
      %p116 = por %p114, %p115
      %p118 = scmp.ne.s32.totalorder %s101, %s117
      %p119 = scmp.eq.s32.totalorder %s18, 0
      %p120 = por %p118, %p119
      %s121 = ssub.s32 %s19, %s38
      %s122 = ssub.s32 %s20, %s34
      %s123 = sor.u32 %s121, %s122
      %p124 = scmp.eq.s32.totalorder %s123, 0
      %s126 = sadd.s32 %s125, 1
      %s127 = scalar_select %p124, %s125, %s126
      %p130 = pneg %p124
      %p131 = scmp.eq.s32.totalorder %s12, 3
      %p132 = por %p130, %p131
      %p133 = scmp.ne.s32.totalorder %s125, %s128
      %p134 = scmp.eq.s32.totalorder %s12, 0
      %p135 = por %p133, %p134
      %p136 = scmp.ne.s32.totalorder %s125, %s128
      %p137 = scmp.eq.s32.totalorder %s17, 3
      %p138 = por %p136, %p137
      %p139 = scmp.ne.s32.totalorder %s128, %s129
      %p140 = scmp.eq.s32.totalorder %s17, 0
      %p141 = por %p139, %p140
      %p142 = scmp.ne.s32.totalorder %s128, %s129
      %p143 = scmp.eq.s32.totalorder %s18, 3
      %p144 = por %p142, %p143
      %p146 = scmp.ne.s32.totalorder %s129, %s145
      %p147 = scmp.eq.s32.totalorder %s18, 0
      %p148 = por %p146, %p147
      %s149 = ssub.s32 %s19, %s38
      %s150 = ssub.s32 %s20, %s34
      %s151 = sor.u32 %s149, %s150
      %p152 = scmp.eq.s32.totalorder %s151, 0
      %s154 = sadd.s32 %s153, 1
      %s155 = scalar_select %p152, %s153, %s154
      %p158 = pneg %p152
      %p159 = scmp.eq.s32.totalorder %s12, 3
      %p160 = por %p158, %p159
      %p161 = scmp.ne.s32.totalorder %s153, %s156
      %p162 = scmp.eq.s32.totalorder %s12, 0
      %p163 = por %p161, %p162
      %p164 = scmp.ne.s32.totalorder %s153, %s156
      %p165 = scmp.eq.s32.totalorder %s17, 3
      %p166 = por %p164, %p165
      %p167 = scmp.ne.s32.totalorder %s156, %s157
      %p168 = scmp.eq.s32.totalorder %s17, 0
      %p169 = por %p167, %p168
      %p170 = scmp.ne.s32.totalorder %s156, %s157
      %p171 = scmp.eq.s32.totalorder %s18, 3
      %p172 = por %p170, %p171
      %p174 = scmp.ne.s32.totalorder %s157, %s173
      %p175 = scmp.eq.s32.totalorder %s18, 0
      %p176 = por %p174, %p175
      %s177 = ssub.s32 %s19, %s38
      %s178 = ssub.s32 %s20, %s34
      %s179 = sor.u32 %s177, %s178
      %p180 = scmp.eq.s32.totalorder %s179, 0
      %s182 = sadd.s32 %s181, 1
      %s183 = scalar_select %p180, %s181, %s182
      %p186 = pneg %p180
      %p187 = scmp.eq.s32.totalorder %s12, 3
      %p188 = por %p186, %p187
      %p189 = scmp.ne.s32.totalorder %s181, %s184
      %p190 = scmp.eq.s32.totalorder %s12, 0
      %p191 = por %p189, %p190
      %p192 = scmp.ne.s32.totalorder %s181, %s184
      %p193 = scmp.eq.s32.totalorder %s17, 3
      %p194 = por %p192, %p193
      %p195 = scmp.ne.s32.totalorder %s184, %s185
      %p196 = scmp.eq.s32.totalorder %s17, 0
      %p197 = por %p195, %p196
      %p198 = scmp.ne.s32.totalorder %s184, %s185
      %p199 = scmp.eq.s32.totalorder %s18, 3
      %p200 = por %p198, %p199
      %p202 = scmp.ne.s32.totalorder %s185, %s201
      %p203 = scmp.eq.s32.totalorder %s18, 0
      %p204 = por %p202, %p203
      %p205 = scmp.le.s32.totalorder 1, %s12
      %p206 = scmp.lt.s32.totalorder %s12, 5
      %p207 = pnand %p205, %p206
      %p208 = pneg %p207
      // Predicated region
      $region9: #{discriminator_forward.11} parent=5 // pred_check
        _
      $region10: #{discriminator_forward.11} parent=5 // pred_check_branch
        %210 = sbr.rel (%p207) target = $region12
      $region11: #{discriminator_forward.11} parent=5 // pred_region
        %s211 = ssub.s32 %s12, 1
        // Predicated region
        $region13: #{discriminator_forward.11} parent=11 // pred_check
          %p212 = pneg %p113
        $region14: #{discriminator_forward.11} parent=11 // pred_check_branch
          %214 = sbr.rel (%p212) target = $region16
        $region15: #{discriminator_forward.11} parent=11 // pred_region
          %p215 = scmp.lt.s32.totalorder %s23, 0
          %s216 = scalar_select %p215, %s23, 0
          %s217 = scalar_lea.vmem %s2, %s216
        $region16: #{discriminator_forward.11} parent=11 // pred_fallthru
          _
      $region12: #{discriminator_forward.11} parent=5 // pred_fallthru
        _
      %p218 = scmp.lt.s32.totalorder %s12, 4
      // Predicated region
      $region17: #{discriminator_forward.11} parent=5 // pred_check
        %p219 = pneg %p218
      $region18: #{discriminator_forward.11} parent=5 // pred_check_branch
        %221 = sbr.rel (%p219) target = $region20
      $region19: #{discriminator_forward.11} parent=5 // pred_region
        // Predicated region
        $region21: #{discriminator_forward.11} parent=19 // pred_check
          %p222 = pneg %p53
        $region22: #{discriminator_forward.11} parent=19 // pred_check_branch
          %224 = sbr.rel (%p222) target = $region24
        $region23: #{discriminator_forward.11} parent=19 // pred_region
          %s225 = sand.u32 %s43, 1
          %s226 = sand.u32 %s43, 1
          %s227 = smul.addr %s226, 256
          %s228 = scalar_lea.vmem [#allocation3], %s227
          %s229 = smul.u32 8, %s19
          %s230 = smul.u32 8, %s21
          %s231 = smul.addr %s229, 16
          %s232 = sadd.s32 %s230, %s231
          %s233 = smul.addr %s232, 4
          %s234 = scalar_lea.vmem %s0, %s233
          // Predicated region
          $region25: #{discriminator_forward.11} parent=23 // pred_check
            _
          $region26: #{discriminator_forward.11} parent=23 // pred_check_branch
            %236 = sbr.rel (0) target = $region28
          $region27: #{discriminator_forward.11} parent=23 // pred_region
            // Predicated region
            $region29: #{discriminator_forward.11} parent=27 // pred_check
              _
            $region30: #{discriminator_forward.11} parent=27 // pred_check_branch
              %238 = sbr.rel (0) target = $region32
            $region31: #{discriminator_forward.11} parent=27 // pred_region
              loop: start=0, step=1, limit=1
              $region33: #{discriminator_forward.11} parent=31 // loop_pre_header
                _
              $region34: #{discriminator_forward.11} parent=31 // loop_header
                %s240 = sphi 0, %s244
                %p241 = scmp.ge.s32.totalorder %s240, 1
                %s245 = sphi %s234, %s234
                %s246 = sphi %s228, %s228
              $region35: #{discriminator_forward.11} parent=31 // loop_header_branch
                %243 = sbr.rel (%p241) target = $region39
              $region36: #{discriminator_forward.11} parent=31 // loop_body
                %v247 = vld [vmem:[%s245] sm:$0xff]
                %248 = vst [vmem:[%s246] sm:$0xff] %v247
                %v249 = vld [vmem:[%s245 + $0x8] sm:$0xff]
                %250 = vst [vmem:[%s246 + $0x8] sm:$0xff] %v249
                %v251 = vld [vmem:[%s245 + $0x10] sm:$0xff]
                %252 = vst [vmem:[%s246 + $0x10] sm:$0xff] %v251
                %v253 = vld [vmem:[%s245 + $0x18] sm:$0xff]
                %254 = vst [vmem:[%s246 + $0x18] sm:$0xff] %v253
                %v255 = vld [vmem:[%s245 + $0x40] sm:$0xff]
                %256 = vst [vmem:[%s246 + $0x20] sm:$0xff] %v255
                %v257 = vld [vmem:[%s245 + $0x48] sm:$0xff]
                %258 = vst [vmem:[%s246 + $0x28] sm:$0xff] %v257
                %v259 = vld [vmem:[%s245 + $0x50] sm:$0xff]
                %260 = vst [vmem:[%s246 + $0x30] sm:$0xff] %v259
                %v261 = vld [vmem:[%s245 + $0x58] sm:$0xff]
                %262 = vst [vmem:[%s246 + $0x38] sm:$0xff] %v261
                %v263 = vld [vmem:[%s245 + $0x80] sm:$0xff]
                %264 = vst [vmem:[%s246 + $0x40] sm:$0xff] %v263
                %v265 = vld [vmem:[%s245 + $0x88] sm:$0xff]
                %266 = vst [vmem:[%s246 + $0x48] sm:$0xff] %v265
                %v267 = vld [vmem:[%s245 + $0x90] sm:$0xff]
                %268 = vst [vmem:[%s246 + $0x50] sm:$0xff] %v267
                %v269 = vld [vmem:[%s245 + $0x98] sm:$0xff]
                %270 = vst [vmem:[%s246 + $0x58] sm:$0xff] %v269
                %v271 = vld [vmem:[%s245 + $0xc0] sm:$0xff]
                %272 = vst [vmem:[%s246 + $0x60] sm:$0xff] %v271
                %v273 = vld [vmem:[%s245 + $0xc8] sm:$0xff]
                %274 = vst [vmem:[%s246 + $0x68] sm:$0xff] %v273
                %v275 = vld [vmem:[%s245 + $0xd0] sm:$0xff]
                %276 = vst [vmem:[%s246 + $0x70] sm:$0xff] %v275
                %v277 = vld [vmem:[%s245 + $0xd8] sm:$0xff]
                %278 = vst [vmem:[%s246 + $0x78] sm:$0xff] %v277
                %v279 = vld [vmem:[%s245 + $0x100] sm:$0xff]
                %280 = vst [vmem:[%s246 + $0x80] sm:$0xff] %v279
                %v281 = vld [vmem:[%s245 + $0x108] sm:$0xff]
                %282 = vst [vmem:[%s246 + $0x88] sm:$0xff] %v281
                %v283 = vld [vmem:[%s245 + $0x110] sm:$0xff]
                %284 = vst [vmem:[%s246 + $0x90] sm:$0xff] %v283
                %v285 = vld [vmem:[%s245 + $0x118] sm:$0xff]
                %286 = vst [vmem:[%s246 + $0x98] sm:$0xff] %v285
                %v287 = vld [vmem:[%s245 + $0x140] sm:$0xff]
                %288 = vst [vmem:[%s246 + $0xa0] sm:$0xff] %v287
                %v289 = vld [vmem:[%s245 + $0x148] sm:$0xff]
                %290 = vst [vmem:[%s246 + $0xa8] sm:$0xff] %v289
                %v291 = vld [vmem:[%s245 + $0x150] sm:$0xff]
                %292 = vst [vmem:[%s246 + $0xb0] sm:$0xff] %v291
                %v293 = vld [vmem:[%s245 + $0x158] sm:$0xff]
                %294 = vst [vmem:[%s246 + $0xb8] sm:$0xff] %v293
                %v295 = vld [vmem:[%s245 + $0x180] sm:$0xff]
                %296 = vst [vmem:[%s246 + $0xc0] sm:$0xff] %v295
                %v297 = vld [vmem:[%s245 + $0x188] sm:$0xff]
                %298 = vst [vmem:[%s246 + $0xc8] sm:$0xff] %v297
                %v299 = vld [vmem:[%s245 + $0x190] sm:$0xff]
                %300 = vst [vmem:[%s246 + $0xd0] sm:$0xff] %v299
                %v301 = vld [vmem:[%s245 + $0x198] sm:$0xff]
                %302 = vst [vmem:[%s246 + $0xd8] sm:$0xff] %v301
                %v303 = vld [vmem:[%s245 + $0x1c0] sm:$0xff]
                %304 = vst [vmem:[%s246 + $0xe0] sm:$0xff] %v303
                %v305 = vld [vmem:[%s245 + $0x1c8] sm:$0xff]
                %306 = vst [vmem:[%s246 + $0xe8] sm:$0xff] %v305
                %v307 = vld [vmem:[%s245 + $0x1d0] sm:$0xff]
                %308 = vst [vmem:[%s246 + $0xf0] sm:$0xff] %v307
                %v309 = vld [vmem:[%s245 + $0x1d8] sm:$0xff]
                %310 = vst [vmem:[%s246 + $0xf8] sm:$0xff] %v309
              $region37: #{discriminator_forward.11} parent=31 // loop_footer
                %s244 = sadd.s32 1, %s240
              $region38: #{discriminator_forward.11} parent=31 // loop_footer_branch
                %239 = sbr.rel target = $region34
              $region39: #{discriminator_forward.11} parent=31 // loop_exit
                _
            $region32: #{discriminator_forward.11} parent=27 // pred_fallthru
              _
            // Predicated region
            $region40: #{discriminator_forward.11} parent=27 // pred_check
              _
            $region41: #{discriminator_forward.11} parent=27 // pred_check_branch
              %312 = sbr.rel target = $region43
            $region42: #{discriminator_forward.11} parent=27 // pred_region
              _
            $region43: #{discriminator_forward.11} parent=27 // pred_fallthru
              _
          $region28: #{discriminator_forward.11} parent=23 // pred_fallthru
            _
          %313 = vnop
        $region24: #{discriminator_forward.11} parent=19 // pred_fallthru
          _
        // Predicated region
        $region44: #{discriminator_forward.11} parent=19 // pred_check
          %p314 = pneg %p81
        $region45: #{discriminator_forward.11} parent=19 // pred_check_branch
          %316 = sbr.rel (%p314) target = $region47
        $region46: #{discriminator_forward.11} parent=19 // pred_region
          %s317 = smul.u32 128, %s21
          %p318 = scmp.lt.s32.totalorder %s317, 255
          %s319 = scalar_select %p318, %s317, 255
          %p320 = scmp.lt.s32.totalorder %s20, 0
          %s321 = scalar_select %p320, %s20, 0
          %s322 = sadd.s32 %s321, %s319
          %s323 = smul.addr %s322, 4
          %s324 = scalar_lea.vmem %s1, %s323
          %s325 = smul.u32 128, %s21
        $region47: #{discriminator_forward.11} parent=19 // pred_fallthru
          _
      $region20: #{discriminator_forward.11} parent=5 // pred_fallthru
        _
      %p326 = scmp.le.s32.totalorder 1, %s12
      %p327 = scmp.lt.s32.totalorder %s12, 5
      %p328 = pnand %p326, %p327
      %p329 = pneg %p328
      // Predicated region
      $region48: #{discriminator_forward.11} parent=5 // pred_check
        _
      $region49: #{discriminator_forward.11} parent=5 // pred_check_branch
        %331 = sbr.rel (%p328) target = $region51
      $region50: #{discriminator_forward.11} parent=5 // pred_region
        %s332 = ssub.s32 %s12, 1
        %s333 = sand.u32 %s46, 1
        %s334 = sand.u32 %s46, 1
        %s335 = smul.addr %s334, 256
        %s336 = scalar_lea.vmem [#allocation3], %s335
        // Predicated region
        $region52: #{discriminator_forward.11} parent=50 // pred_check
          %p337 = pneg %p59
        $region53: #{discriminator_forward.11} parent=50 // pred_check_branch
          %339 = sbr.rel (%p337) target = $region55
        $region54: #{discriminator_forward.11} parent=50 // pred_region
          _
        $region55: #{discriminator_forward.11} parent=50 // pred_fallthru
          _
        %s340 = sand.u32 %s46, 1
        %s341 = sand.u32 %s46, 1
        %s342 = smul.addr %s341, 256
        %s343 = scalar_lea.vmem [#allocation3], %s342
        %p344 = pneg %p59
        %p345 = pneg %p56
        %s346 = smul.u32 128, %s24
        %p347 = scmp.lt.s32.totalorder %s346, 255
        %s348 = scalar_select %p347, %s346, 255
        %p349 = scmp.lt.s32.totalorder %s23, 0
        %s350 = scalar_select %p349, %s23, 0
        %s351 = sadd.s32 %s350, %s348
        %s352 = smul.addr %s351, 4
        %s353 = scalar_lea.vmem %s1, %s352
        %p354 = pneg %p87
        %p355 = pneg %p84
        %p356 = scmp.lt.s32.totalorder %s23, 0
        %s357 = scalar_select %p356, %s23, 0
        %s358 = scalar_lea.vmem %s2, %s357
        %p359 = pneg %p113
        %p360 = pneg %p110
        %p361 = pneg %p141
        %p362 = pneg %p138
        %s363 = smul.u32 8, %s22
        %p364 = scmp.lt.s32.totalorder %s363, 15
        %s365 = scalar_select %p364, %s363, 15
        %p366 = scmp.lt.s32.totalorder %s23, 0
        %s367 = scalar_select %p366, %s23, 0
        %s368 = sadd.s32 %s367, %s365
        %s369 = smul.addr %s368, 4
        %s370 = scalar_lea.vmem %s3, %s369
        %p371 = pneg %p169
        %p372 = pneg %p166
        %p373 = scmp.lt.s32.totalorder %s22, 1
        %s374 = scalar_select %p373, %s22, 1
        %p375 = scmp.lt.s32.totalorder %s23, 0
        %s376 = scalar_select %p375, %s23, 0
        %s377 = sadd.s32 %s376, %s374
        %s378 = scalar_lea.vmem %s4, %s377
        %p379 = pneg %p197
        %p380 = pneg %p194
        %p381 = scmp.lt.s32.totalorder %s22, 1
        %s382 = scalar_select %p381, %s22, 1
        %p383 = scmp.lt.s32.totalorder %s23, 0
        %s384 = scalar_select %p383, %s23, 0
        %s385 = sadd.s32 %s384, %s382
        %s386 = scalar_lea.vmem %s5, %s385
        %s387 = smul.u32 8, %s22
        %s388 = smul.u32 8, %s24
        %s389 = smul.u32 128, %s24
        %p390 = scmp.lt.s32.totalorder %s389, 255
        %s391 = scalar_select %p390, %s389, 255
        %p392 = scmp.lt.s32.totalorder %s23, 0
        %s393 = scalar_select %p392, %s23, 0
        %s394 = sadd.s32 %s393, %s391
        %s395 = smul.addr %s394, 4
        %s396 = scalar_lea.vmem %s1, %s395
        %s397 = smul.u32 128, %s24
        %p398 = scmp.lt.s32.totalorder %s23, 0
        %s399 = scalar_select %p398, %s23, 0
        %s400 = scalar_lea.vmem %s2, %s399
        %s401 = smul.u32 8, %s22
        %p402 = scmp.lt.s32.totalorder %s401, 15
        %s403 = scalar_select %p402, %s401, 15
        %p404 = scmp.lt.s32.totalorder %s23, 0
        %s405 = scalar_select %p404, %s23, 0
        %s406 = sadd.s32 %s405, %s403
        %s407 = smul.addr %s406, 4
        %s408 = scalar_lea.vmem %s3, %s407
        %s409 = smul.u32 8, %s22
        %p410 = scmp.lt.s32.totalorder %s22, 1
        %s411 = scalar_select %p410, %s22, 1
        %p412 = scmp.lt.s32.totalorder %s23, 0
        %s413 = scalar_select %p412, %s23, 0
        %s414 = sadd.s32 %s413, %s411
        %s415 = scalar_lea.vmem %s4, %s414
        %p416 = scmp.lt.s32.totalorder %s22, 1
        %s417 = scalar_select %p416, %s22, 1
        %p418 = scmp.lt.s32.totalorder %s23, 0
        %s419 = scalar_select %p418, %s23, 0
        %s420 = sadd.s32 %s419, %s417
        %s421 = scalar_lea.vmem %s5, %s420
        %p422 = scmp.eq.s32.totalorder %s24, 0
        // Predicated region
        $region56: #{discriminator_forward.11} parent=50 // pred_check
          %p423 = pneg %p422
        $region57: #{discriminator_forward.11} parent=50 // pred_check_branch
          %425 = sbr.rel (%p423) target = $region59
        $region58: #{discriminator_forward.11} parent=50 // pred_region
          %426 = vst [vmem:[#allocation2] sm:$0xff] 0.0
          %427 = vst [vmem:[#allocation2 + $0x8] sm:$0xff] 0.0
          %428 = vst [vmem:[#allocation2 + $0x10] sm:$0xff] 0.0
          %429 = vst [vmem:[#allocation2 + $0x18] sm:$0xff] 0.0
          %430 = vst [vmem:[#allocation2 + $0x20] sm:$0xff] 0.0
          %431 = vst [vmem:[#allocation2 + $0x28] sm:$0xff] 0.0
          %432 = vst [vmem:[#allocation2 + $0x30] sm:$0xff] 0.0
          %433 = vst [vmem:[#allocation2 + $0x38] sm:$0xff] 0.0
        $region59: #{discriminator_forward.11} parent=50 // pred_fallthru
          _
        %v434 = vld [vmem:[#allocation2] sm:$0xff]
        %v435 = vld [vmem:[#allocation2 + $0x8] sm:$0xff]
        %v436 = vld [vmem:[#allocation2 + $0x10] sm:$0xff]
        %v437 = vld [vmem:[#allocation2 + $0x18] sm:$0xff]
        %v438 = vld [vmem:[#allocation2 + $0x20] sm:$0xff]
        %v439 = vld [vmem:[#allocation2 + $0x28] sm:$0xff]
        %v440 = vld [vmem:[#allocation2 + $0x30] sm:$0xff]
        %v441 = vld [vmem:[#allocation2 + $0x38] sm:$0xff]
        %v442 = vld [vmem:[%s336] sm:$0xff]
        %v443 = vld [vmem:[%s336 + $0x8] sm:$0xff]
        %v444 = vld [vmem:[%s336 + $0x10] sm:$0xff]
        %v445 = vld [vmem:[%s336 + $0x18] sm:$0xff]
        %v446 = vld [vmem:[%s336 + $0x20] sm:$0xff]
        %v447 = vld [vmem:[%s336 + $0x28] sm:$0xff]
        %v448 = vld [vmem:[%s336 + $0x30] sm:$0xff]
        %v449 = vld [vmem:[%s336 + $0x38] sm:$0xff]
        %v450 = vld [vmem:[%s336 + $0x40] sm:$0xff]
        %v451 = vld [vmem:[%s336 + $0x48] sm:$0xff]
        %v452 = vld [vmem:[%s336 + $0x50] sm:$0xff]
        %v453 = vld [vmem:[%s336 + $0x58] sm:$0xff]
        %v454 = vld [vmem:[%s336 + $0x60] sm:$0xff]
        %v455 = vld [vmem:[%s336 + $0x68] sm:$0xff]
        %v456 = vld [vmem:[%s336 + $0x70] sm:$0xff]
        %v457 = vld [vmem:[%s336 + $0x78] sm:$0xff]
        %v458 = vld [vmem:[%s336 + $0x80] sm:$0xff]
        %v459 = vld [vmem:[%s336 + $0x88] sm:$0xff]
        %v460 = vld [vmem:[%s336 + $0x90] sm:$0xff]
        %v461 = vld [vmem:[%s336 + $0x98] sm:$0xff]
        %v462 = vld [vmem:[%s336 + $0xa0] sm:$0xff]
        %v463 = vld [vmem:[%s336 + $0xa8] sm:$0xff]
        %v464 = vld [vmem:[%s336 + $0xb0] sm:$0xff]
        %v465 = vld [vmem:[%s336 + $0xb8] sm:$0xff]
        %v466 = vld [vmem:[%s336 + $0xc0] sm:$0xff]
        %v467 = vld [vmem:[%s336 + $0xc8] sm:$0xff]
        %v468 = vld [vmem:[%s336 + $0xd0] sm:$0xff]
        %v469 = vld [vmem:[%s336 + $0xd8] sm:$0xff]
        %v470 = vld [vmem:[%s336 + $0xe0] sm:$0xff]
        %v471 = vld [vmem:[%s336 + $0xe8] sm:$0xff]
        %v472 = vld [vmem:[%s336 + $0xf0] sm:$0xff]
        %v473 = vld [vmem:[%s336 + $0xf8] sm:$0xff]
        %v474 = vld [vmem:[%s396] sm:$0xf]
        %v475 = vld [vmem:[%s396 + $0x4] sm:$0xf]
        %v476 = vld [vmem:[%s396 + $0x8] sm:$0xf]
        %v477 = vld [vmem:[%s396 + $0xc] sm:$0xf]
        %v478 = vld [vmem:[%s396 + $0x10] sm:$0xf]
        %v479 = vld [vmem:[%s396 + $0x14] sm:$0xf]
        %v480 = vld [vmem:[%s396 + $0x18] sm:$0xf]
        %v481 = vld [vmem:[%s396 + $0x1c] sm:$0xf]
        %v482 = vld [vmem:[%s396 + $0x20] sm:$0xf]
        %v483 = vld [vmem:[%s396 + $0x24] sm:$0xf]
        %v484 = vld [vmem:[%s396 + $0x28] sm:$0xf]
        %v485 = vld [vmem:[%s396 + $0x2c] sm:$0xf]
        %v486 = vld [vmem:[%s396 + $0x30] sm:$0xf]
        %v487 = vld [vmem:[%s396 + $0x34] sm:$0xf]
        %v488 = vld [vmem:[%s396 + $0x38] sm:$0xf]
        %v489 = vld [vmem:[%s396 + $0x3c] sm:$0xf]
        %v490 = vld [vmem:[%s396 + $0x40] sm:$0xf]
        %v491 = vld [vmem:[%s396 + $0x44] sm:$0xf]
        %v492 = vld [vmem:[%s396 + $0x48] sm:$0xf]
        %v493 = vld [vmem:[%s396 + $0x4c] sm:$0xf]
        %v494 = vld [vmem:[%s396 + $0x50] sm:$0xf]
        %v495 = vld [vmem:[%s396 + $0x54] sm:$0xf]
        %v496 = vld [vmem:[%s396 + $0x58] sm:$0xf]
        %v497 = vld [vmem:[%s396 + $0x5c] sm:$0xf]
        %v498 = vld [vmem:[%s396 + $0x60] sm:$0xf]
        %v499 = vld [vmem:[%s396 + $0x64] sm:$0xf]
        %v500 = vld [vmem:[%s396 + $0x68] sm:$0xf]
        %v501 = vld [vmem:[%s396 + $0x6c] sm:$0xf]
        %v502 = vld [vmem:[%s396 + $0x70] sm:$0xf]
        %v503 = vld [vmem:[%s396 + $0x74] sm:$0xf]
        %v504 = vld [vmem:[%s396 + $0x78] sm:$0xf]
        %v505 = vld [vmem:[%s396 + $0x7c] sm:$0xf]
        %v506 = vld [vmem:[%s396 + $0x80] sm:$0xf]
        %v507 = vld [vmem:[%s396 + $0x84] sm:$0xf]
        %v508 = vld [vmem:[%s396 + $0x88] sm:$0xf]
        %v509 = vld [vmem:[%s396 + $0x8c] sm:$0xf]
        %v510 = vld [vmem:[%s396 + $0x90] sm:$0xf]
        %v511 = vld [vmem:[%s396 + $0x94] sm:$0xf]
        %v512 = vld [vmem:[%s396 + $0x98] sm:$0xf]
        %v513 = vld [vmem:[%s396 + $0x9c] sm:$0xf]
        %v514 = vld [vmem:[%s396 + $0xa0] sm:$0xf]
        %v515 = vld [vmem:[%s396 + $0xa4] sm:$0xf]
        %v516 = vld [vmem:[%s396 + $0xa8] sm:$0xf]
        %v517 = vld [vmem:[%s396 + $0xac] sm:$0xf]
        %v518 = vld [vmem:[%s396 + $0xb0] sm:$0xf]
        %v519 = vld [vmem:[%s396 + $0xb4] sm:$0xf]
        %v520 = vld [vmem:[%s396 + $0xb8] sm:$0xf]
        %v521 = vld [vmem:[%s396 + $0xbc] sm:$0xf]
        %v522 = vld [vmem:[%s396 + $0xc0] sm:$0xf]
        %v523 = vld [vmem:[%s396 + $0xc4] sm:$0xf]
        %v524 = vld [vmem:[%s396 + $0xc8] sm:$0xf]
        %v525 = vld [vmem:[%s396 + $0xcc] sm:$0xf]
        %v526 = vld [vmem:[%s396 + $0xd0] sm:$0xf]
        %v527 = vld [vmem:[%s396 + $0xd4] sm:$0xf]
        %v528 = vld [vmem:[%s396 + $0xd8] sm:$0xf]
        %v529 = vld [vmem:[%s396 + $0xdc] sm:$0xf]
        %v530 = vld [vmem:[%s396 + $0xe0] sm:$0xf]
        %v531 = vld [vmem:[%s396 + $0xe4] sm:$0xf]
        %v532 = vld [vmem:[%s396 + $0xe8] sm:$0xf]
        %v533 = vld [vmem:[%s396 + $0xec] sm:$0xf]
        %v534 = vld [vmem:[%s396 + $0xf0] sm:$0xf]
        %v535 = vld [vmem:[%s396 + $0xf4] sm:$0xf]
        %v536 = vld [vmem:[%s396 + $0xf8] sm:$0xf]
        %v537 = vld [vmem:[%s396 + $0xfc] sm:$0xf]
        %v538 = vld [vmem:[%s396 + $0x100] sm:$0xf]
        %v539 = vld [vmem:[%s396 + $0x104] sm:$0xf]
        %v540 = vld [vmem:[%s396 + $0x108] sm:$0xf]
        %v541 = vld [vmem:[%s396 + $0x10c] sm:$0xf]
        %v542 = vld [vmem:[%s396 + $0x110] sm:$0xf]
        %v543 = vld [vmem:[%s396 + $0x114] sm:$0xf]
        %v544 = vld [vmem:[%s396 + $0x118] sm:$0xf]
        %v545 = vld [vmem:[%s396 + $0x11c] sm:$0xf]
        %v546 = vld [vmem:[%s396 + $0x120] sm:$0xf]
        %v547 = vld [vmem:[%s396 + $0x124] sm:$0xf]
        %v548 = vld [vmem:[%s396 + $0x128] sm:$0xf]
        %v549 = vld [vmem:[%s396 + $0x12c] sm:$0xf]
        %v550 = vld [vmem:[%s396 + $0x130] sm:$0xf]
        %v551 = vld [vmem:[%s396 + $0x134] sm:$0xf]
        %v552 = vld [vmem:[%s396 + $0x138] sm:$0xf]
        %v553 = vld [vmem:[%s396 + $0x13c] sm:$0xf]
        %v554 = vld [vmem:[%s396 + $0x140] sm:$0xf]
        %v555 = vld [vmem:[%s396 + $0x144] sm:$0xf]
        %v556 = vld [vmem:[%s396 + $0x148] sm:$0xf]
        %v557 = vld [vmem:[%s396 + $0x14c] sm:$0xf]
        %v558 = vld [vmem:[%s396 + $0x150] sm:$0xf]
        %v559 = vld [vmem:[%s396 + $0x154] sm:$0xf]
        %v560 = vld [vmem:[%s396 + $0x158] sm:$0xf]
        %v561 = vld [vmem:[%s396 + $0x15c] sm:$0xf]
        %v562 = vld [vmem:[%s396 + $0x160] sm:$0xf]
        %v563 = vld [vmem:[%s396 + $0x164] sm:$0xf]
        %v564 = vld [vmem:[%s396 + $0x168] sm:$0xf]
        %v565 = vld [vmem:[%s396 + $0x16c] sm:$0xf]
        %v566 = vld [vmem:[%s396 + $0x170] sm:$0xf]
        %v567 = vld [vmem:[%s396 + $0x174] sm:$0xf]
        %v568 = vld [vmem:[%s396 + $0x178] sm:$0xf]
        %v569 = vld [vmem:[%s396 + $0x17c] sm:$0xf]
        %v570 = vld [vmem:[%s396 + $0x180] sm:$0xf]
        %v571 = vld [vmem:[%s396 + $0x184] sm:$0xf]
        %v572 = vld [vmem:[%s396 + $0x188] sm:$0xf]
        %v573 = vld [vmem:[%s396 + $0x18c] sm:$0xf]
        %v574 = vld [vmem:[%s396 + $0x190] sm:$0xf]
        %v575 = vld [vmem:[%s396 + $0x194] sm:$0xf]
        %v576 = vld [vmem:[%s396 + $0x198] sm:$0xf]
        %v577 = vld [vmem:[%s396 + $0x19c] sm:$0xf]
        %v578 = vld [vmem:[%s396 + $0x1a0] sm:$0xf]
        %v579 = vld [vmem:[%s396 + $0x1a4] sm:$0xf]
        %v580 = vld [vmem:[%s396 + $0x1a8] sm:$0xf]
        %v581 = vld [vmem:[%s396 + $0x1ac] sm:$0xf]
        %v582 = vld [vmem:[%s396 + $0x1b0] sm:$0xf]
        %v583 = vld [vmem:[%s396 + $0x1b4] sm:$0xf]
        %v584 = vld [vmem:[%s396 + $0x1b8] sm:$0xf]
        %v585 = vld [vmem:[%s396 + $0x1bc] sm:$0xf]
        %v586 = vld [vmem:[%s396 + $0x1c0] sm:$0xf]
        %v587 = vld [vmem:[%s396 + $0x1c4] sm:$0xf]
        %v588 = vld [vmem:[%s396 + $0x1c8] sm:$0xf]
        %v589 = vld [vmem:[%s396 + $0x1cc] sm:$0xf]
        %v590 = vld [vmem:[%s396 + $0x1d0] sm:$0xf]
        %v591 = vld [vmem:[%s396 + $0x1d4] sm:$0xf]
        %v592 = vld [vmem:[%s396 + $0x1d8] sm:$0xf]
        %v593 = vld [vmem:[%s396 + $0x1dc] sm:$0xf]
        %v594 = vld [vmem:[%s396 + $0x1e0] sm:$0xf]
        %v595 = vld [vmem:[%s396 + $0x1e4] sm:$0xf]
        %v596 = vld [vmem:[%s396 + $0x1e8] sm:$0xf]
        %v597 = vld [vmem:[%s396 + $0x1ec] sm:$0xf]
        %v598 = vld [vmem:[%s396 + $0x1f0] sm:$0xf]
        %v599 = vld [vmem:[%s396 + $0x1f4] sm:$0xf]
        %v600 = vld [vmem:[%s396 + $0x1f8] sm:$0xf]
        %v601 = vld [vmem:[%s396 + $0x1fc] sm:$0xf]
        %v634 = vunpack.c.l.b16 %v442
        %v635 = vunpack.c.h.b16 %v442
        %v636 = vunpack.c.l.b16 %v443
        %v637 = vunpack.c.h.b16 %v443
        %v638 = vunpack.c.l.b16 %v444
        %v639 = vunpack.c.h.b16 %v444
        %v640 = vunpack.c.l.b16 %v445
        %v641 = vunpack.c.h.b16 %v445
        %v642 = vunpack.c.l.b16 %v446
        %v643 = vunpack.c.h.b16 %v446
        %v644 = vunpack.c.l.b16 %v447
        %v645 = vunpack.c.h.b16 %v447
        %v646 = vunpack.c.l.b16 %v448
        %v647 = vunpack.c.h.b16 %v448
        %v648 = vunpack.c.l.b16 %v449
        %v649 = vunpack.c.h.b16 %v449
        %v650 = vunpack.c.l.b16 %v450
        %v651 = vunpack.c.h.b16 %v450
        %v652 = vunpack.c.l.b16 %v451
        %v653 = vunpack.c.h.b16 %v451
        %v654 = vunpack.c.l.b16 %v452
        %v655 = vunpack.c.h.b16 %v452
        %v656 = vunpack.c.l.b16 %v453
        %v657 = vunpack.c.h.b16 %v453
        %v658 = vunpack.c.l.b16 %v454
        %v659 = vunpack.c.h.b16 %v454
        %v660 = vunpack.c.l.b16 %v455
        %v661 = vunpack.c.h.b16 %v455
        %v662 = vunpack.c.l.b16 %v456
        %v663 = vunpack.c.h.b16 %v456
        %v664 = vunpack.c.l.b16 %v457
        %v665 = vunpack.c.h.b16 %v457
        %v666 = vunpack.c.l.b16 %v458
        %v667 = vunpack.c.h.b16 %v458
        %v668 = vunpack.c.l.b16 %v459
        %v669 = vunpack.c.h.b16 %v459
        %v670 = vunpack.c.l.b16 %v460
        %v671 = vunpack.c.h.b16 %v460
        %v672 = vunpack.c.l.b16 %v461
        %v673 = vunpack.c.h.b16 %v461
        %v674 = vunpack.c.l.b16 %v462
        %v675 = vunpack.c.h.b16 %v462
        %v676 = vunpack.c.l.b16 %v463
        %v677 = vunpack.c.h.b16 %v463
        %v678 = vunpack.c.l.b16 %v464
        %v679 = vunpack.c.h.b16 %v464
        %v680 = vunpack.c.l.b16 %v465
        %v681 = vunpack.c.h.b16 %v465
        %v682 = vunpack.c.l.b16 %v466
        %v683 = vunpack.c.h.b16 %v466
        %v684 = vunpack.c.l.b16 %v467
        %v685 = vunpack.c.h.b16 %v467
        %v686 = vunpack.c.l.b16 %v468
        %v687 = vunpack.c.h.b16 %v468
        %v688 = vunpack.c.l.b16 %v469
        %v689 = vunpack.c.h.b16 %v469
        %v690 = vunpack.c.l.b16 %v470
        %v691 = vunpack.c.h.b16 %v470
        %v692 = vunpack.c.l.b16 %v471
        %v693 = vunpack.c.h.b16 %v471
        %v694 = vunpack.c.l.b16 %v472
        %v695 = vunpack.c.h.b16 %v472
        %v696 = vunpack.c.l.b16 %v473
        %v697 = vunpack.c.h.b16 %v473
        %v698 = vpack.c.b16 %v642, %v634
        %v699 = vpack.c.b16 %v643, %v635
        %v700 = vpack.c.b16 %v644, %v636
        %v701 = vpack.c.b16 %v645, %v637
        %v702 = vpack.c.b16 %v646, %v638
        %v703 = vpack.c.b16 %v647, %v639
        %v704 = vpack.c.b16 %v648, %v640
        %v705 = vpack.c.b16 %v649, %v641
        %v706 = vpack.c.b16 %v658, %v650
        %v707 = vpack.c.b16 %v659, %v651
        %v708 = vpack.c.b16 %v660, %v652
        %v709 = vpack.c.b16 %v661, %v653
        %v710 = vpack.c.b16 %v662, %v654
        %v711 = vpack.c.b16 %v663, %v655
        %v712 = vpack.c.b16 %v664, %v656
        %v713 = vpack.c.b16 %v665, %v657
        %v714 = vpack.c.b16 %v674, %v666
        %v715 = vpack.c.b16 %v675, %v667
        %v716 = vpack.c.b16 %v676, %v668
        %v717 = vpack.c.b16 %v677, %v669
        %v718 = vpack.c.b16 %v678, %v670
        %v719 = vpack.c.b16 %v679, %v671
        %v720 = vpack.c.b16 %v680, %v672
        %v721 = vpack.c.b16 %v681, %v673
        %v722 = vpack.c.b16 %v690, %v682
        %v723 = vpack.c.b16 %v691, %v683
        %v724 = vpack.c.b16 %v692, %v684
        %v725 = vpack.c.b16 %v693, %v685
        %v726 = vpack.c.b16 %v694, %v686
        %v727 = vpack.c.b16 %v695, %v687
        %v728 = vpack.c.b16 %v696, %v688
        %v729 = vpack.c.b16 %v697, %v689
        %v890 = vunpack.c.l.b16 %v474
        %v891 = vunpack.c.l.b16 %v475
        %v892 = vunpack.c.l.b16 %v476
        %v893 = vunpack.c.l.b16 %v477
        %v894 = vunpack.c.l.b16 %v478
        %v895 = vunpack.c.l.b16 %v479
        %v896 = vunpack.c.l.b16 %v480
        %v897 = vunpack.c.l.b16 %v481
        %v898 = vunpack.c.l.b16 %v482
        %v899 = vunpack.c.l.b16 %v483
        %v900 = vunpack.c.l.b16 %v484
        %v901 = vunpack.c.l.b16 %v485
        %v902 = vunpack.c.l.b16 %v486
        %v903 = vunpack.c.l.b16 %v487
        %v904 = vunpack.c.l.b16 %v488
        %v905 = vunpack.c.l.b16 %v489
        %v906 = vunpack.c.l.b16 %v490
        %v907 = vunpack.c.l.b16 %v491
        %v908 = vunpack.c.l.b16 %v492
        %v909 = vunpack.c.l.b16 %v493
        %v910 = vunpack.c.l.b16 %v494
        %v911 = vunpack.c.l.b16 %v495
        %v912 = vunpack.c.l.b16 %v496
        %v913 = vunpack.c.l.b16 %v497
        %v914 = vunpack.c.l.b16 %v498
        %v915 = vunpack.c.l.b16 %v499
        %v916 = vunpack.c.l.b16 %v500
        %v917 = vunpack.c.l.b16 %v501
        %v918 = vunpack.c.l.b16 %v502
        %v919 = vunpack.c.l.b16 %v503
        %v920 = vunpack.c.l.b16 %v504
        %v921 = vunpack.c.l.b16 %v505
        %v922 = vunpack.c.l.b16 %v506
        %v923 = vunpack.c.l.b16 %v507
        %v924 = vunpack.c.l.b16 %v508
        %v925 = vunpack.c.l.b16 %v509
        %v926 = vunpack.c.l.b16 %v510
        %v927 = vunpack.c.l.b16 %v511
        %v928 = vunpack.c.l.b16 %v512
        %v929 = vunpack.c.l.b16 %v513
        %v930 = vunpack.c.l.b16 %v514
        %v931 = vunpack.c.l.b16 %v515
        %v932 = vunpack.c.l.b16 %v516
        %v933 = vunpack.c.l.b16 %v517
        %v934 = vunpack.c.l.b16 %v518
        %v935 = vunpack.c.l.b16 %v519
        %v936 = vunpack.c.l.b16 %v520
        %v937 = vunpack.c.l.b16 %v521
        %v938 = vunpack.c.l.b16 %v522
        %v939 = vunpack.c.l.b16 %v523
        %v940 = vunpack.c.l.b16 %v524
        %v941 = vunpack.c.l.b16 %v525
        %v942 = vunpack.c.l.b16 %v526
        %v943 = vunpack.c.l.b16 %v527
        %v944 = vunpack.c.l.b16 %v528
        %v945 = vunpack.c.l.b16 %v529
        %v946 = vunpack.c.l.b16 %v530
        %v947 = vunpack.c.l.b16 %v531
        %v948 = vunpack.c.l.b16 %v532
        %v949 = vunpack.c.l.b16 %v533
        %v950 = vunpack.c.l.b16 %v534
        %v951 = vunpack.c.l.b16 %v535
        %v952 = vunpack.c.l.b16 %v536
        %v953 = vunpack.c.l.b16 %v537
        %v954 = vunpack.c.l.b16 %v538
        %v955 = vunpack.c.l.b16 %v539
        %v956 = vunpack.c.l.b16 %v540
        %v957 = vunpack.c.l.b16 %v541
        %v958 = vunpack.c.l.b16 %v542
        %v959 = vunpack.c.l.b16 %v543
        %v960 = vunpack.c.l.b16 %v544
        %v961 = vunpack.c.l.b16 %v545
        %v962 = vunpack.c.l.b16 %v546
        %v963 = vunpack.c.l.b16 %v547
        %v964 = vunpack.c.l.b16 %v548
        %v965 = vunpack.c.l.b16 %v549
        %v966 = vunpack.c.l.b16 %v550
        %v967 = vunpack.c.l.b16 %v551
        %v968 = vunpack.c.l.b16 %v552
        %v969 = vunpack.c.l.b16 %v553
        %v970 = vunpack.c.l.b16 %v554
        %v971 = vunpack.c.l.b16 %v555
        %v972 = vunpack.c.l.b16 %v556
        %v973 = vunpack.c.l.b16 %v557
        %v974 = vunpack.c.l.b16 %v558
        %v975 = vunpack.c.l.b16 %v559
        %v976 = vunpack.c.l.b16 %v560
        %v977 = vunpack.c.l.b16 %v561
        %v978 = vunpack.c.l.b16 %v562
        %v979 = vunpack.c.l.b16 %v563
        %v980 = vunpack.c.l.b16 %v564
        %v981 = vunpack.c.l.b16 %v565
        %v982 = vunpack.c.l.b16 %v566
        %v983 = vunpack.c.l.b16 %v567
        %v984 = vunpack.c.l.b16 %v568
        %v985 = vunpack.c.l.b16 %v569
        %v986 = vunpack.c.l.b16 %v570
        %v987 = vunpack.c.l.b16 %v571
        %v988 = vunpack.c.l.b16 %v572
        %v989 = vunpack.c.l.b16 %v573
        %v990 = vunpack.c.l.b16 %v574
        %v991 = vunpack.c.l.b16 %v575
        %v992 = vunpack.c.l.b16 %v576
        %v993 = vunpack.c.l.b16 %v577
        %v994 = vunpack.c.l.b16 %v578
        %v995 = vunpack.c.l.b16 %v579
        %v996 = vunpack.c.l.b16 %v580
        %v997 = vunpack.c.l.b16 %v581
        %v998 = vunpack.c.l.b16 %v582
        %v999 = vunpack.c.l.b16 %v583
        %v1000 = vunpack.c.l.b16 %v584
        %v1001 = vunpack.c.l.b16 %v585
        %v1002 = vunpack.c.l.b16 %v586
        %v1003 = vunpack.c.l.b16 %v587
        %v1004 = vunpack.c.l.b16 %v588
        %v1005 = vunpack.c.l.b16 %v589
        %v1006 = vunpack.c.l.b16 %v590
        %v1007 = vunpack.c.l.b16 %v591
        %v1008 = vunpack.c.l.b16 %v592
        %v1009 = vunpack.c.l.b16 %v593
        %v1010 = vunpack.c.l.b16 %v594
        %v1011 = vunpack.c.l.b16 %v595
        %v1012 = vunpack.c.l.b16 %v596
        %v1013 = vunpack.c.l.b16 %v597
        %v1014 = vunpack.c.l.b16 %v598
        %v1015 = vunpack.c.l.b16 %v599
        %v1016 = vunpack.c.l.b16 %v600
        %v1017 = vunpack.c.l.b16 %v601
        %v1018 = vpack.c.b16 %v891, %v890
        %v1019 = vpack.c.b16 %v893, %v892
        %v1020 = vpack.c.b16 %v895, %v894
        %v1021 = vpack.c.b16 %v897, %v896
        %v1022 = vpack.c.b16 %v899, %v898
        %v1023 = vpack.c.b16 %v901, %v900
        %v1024 = vpack.c.b16 %v903, %v902
        %v1025 = vpack.c.b16 %v905, %v904
        %v1026 = vpack.c.b16 %v907, %v906
        %v1027 = vpack.c.b16 %v909, %v908
        %v1028 = vpack.c.b16 %v911, %v910
        %v1029 = vpack.c.b16 %v913, %v912
        %v1030 = vpack.c.b16 %v915, %v914
        %v1031 = vpack.c.b16 %v917, %v916
        %v1032 = vpack.c.b16 %v919, %v918
        %v1033 = vpack.c.b16 %v921, %v920
        %v1034 = vpack.c.b16 %v923, %v922
        %v1035 = vpack.c.b16 %v925, %v924
        %v1036 = vpack.c.b16 %v927, %v926
        %v1037 = vpack.c.b16 %v929, %v928
        %v1038 = vpack.c.b16 %v931, %v930
        %v1039 = vpack.c.b16 %v933, %v932
        %v1040 = vpack.c.b16 %v935, %v934
        %v1041 = vpack.c.b16 %v937, %v936
        %v1042 = vpack.c.b16 %v939, %v938
        %v1043 = vpack.c.b16 %v941, %v940
        %v1044 = vpack.c.b16 %v943, %v942
        %v1045 = vpack.c.b16 %v945, %v944
        %v1046 = vpack.c.b16 %v947, %v946
        %v1047 = vpack.c.b16 %v949, %v948
        %v1048 = vpack.c.b16 %v951, %v950
        %v1049 = vpack.c.b16 %v953, %v952
        %v1050 = vpack.c.b16 %v955, %v954
        %v1051 = vpack.c.b16 %v957, %v956
        %v1052 = vpack.c.b16 %v959, %v958
        %v1053 = vpack.c.b16 %v961, %v960
        %v1054 = vpack.c.b16 %v963, %v962
        %v1055 = vpack.c.b16 %v965, %v964
        %v1056 = vpack.c.b16 %v967, %v966
        %v1057 = vpack.c.b16 %v969, %v968
        %v1058 = vpack.c.b16 %v971, %v970
        %v1059 = vpack.c.b16 %v973, %v972
        %v1060 = vpack.c.b16 %v975, %v974
        %v1061 = vpack.c.b16 %v977, %v976
        %v1062 = vpack.c.b16 %v979, %v978
        %v1063 = vpack.c.b16 %v981, %v980
        %v1064 = vpack.c.b16 %v983, %v982
        %v1065 = vpack.c.b16 %v985, %v984
        %v1066 = vpack.c.b16 %v987, %v986
        %v1067 = vpack.c.b16 %v989, %v988
        %v1068 = vpack.c.b16 %v991, %v990
        %v1069 = vpack.c.b16 %v993, %v992
        %v1070 = vpack.c.b16 %v995, %v994
        %v1071 = vpack.c.b16 %v997, %v996
        %v1072 = vpack.c.b16 %v999, %v998
        %v1073 = vpack.c.b16 %v1001, %v1000
        %v1074 = vpack.c.b16 %v1003, %v1002
        %v1075 = vpack.c.b16 %v1005, %v1004
        %v1076 = vpack.c.b16 %v1007, %v1006
        %v1077 = vpack.c.b16 %v1009, %v1008
        %v1078 = vpack.c.b16 %v1011, %v1010
        %v1079 = vpack.c.b16 %v1013, %v1012
        %v1080 = vpack.c.b16 %v1015, %v1014
        %v1081 = vpack.c.b16 %v1017, %v1016
        %1146 = vmatpush.bf16.msra.mxu0 %v1025
        %1147 = vmatpush.bf16.msra.mxu0 %v1024
        %1148 = vmatpush.bf16.msra.mxu0 %v1023
        %1149 = vmatpush.bf16.msra.mxu0 %v1022
        %1150 = vmatpush.bf16.msra.mxu0 %v1021
        %1151 = vmatpush.bf16.msra.mxu0 %v1020
        %1152 = vmatpush.bf16.msra.mxu0 %v1019
        %1153 = vmatpush.bf16.msra.mxu0 %v1018
        %1154 = vmatmul.bf16.gmra.mxu0 %v698
        %v1155 = vpop.f32.mrf.mxu0
        %v1156 = vadd.f32 0.0, %v1155
        %v1157 = vpop.f32.mrf.mxu0
        %v1158 = vadd.f32 0.0, %v1157
        %1159 = vmatmul.bf16.gmra.mxu0 %v706
        %v1160 = vpop.f32.mrf.mxu0
        %v1161 = vadd.f32 0.0, %v1160
        %v1162 = vpop.f32.mrf.mxu0
        %v1163 = vadd.f32 0.0, %v1162
        %1164 = vmatmul.bf16.gmra.mxu0 %v714
        %v1165 = vpop.f32.mrf.mxu0
        %v1166 = vadd.f32 0.0, %v1165
        %v1167 = vpop.f32.mrf.mxu0
        %v1168 = vadd.f32 0.0, %v1167
        %1169 = vmatmul.bf16.gmra.mxu0 %v722
        %v1170 = vpop.f32.mrf.mxu0
        %v1171 = vadd.f32 0.0, %v1170
        %v1172 = vpop.f32.mrf.mxu0
        %v1173 = vadd.f32 0.0, %v1172
        %1174 = vdwg.mxu0
        %1175 = vmatpush.bf16.msra.mxu0 %v1033
        %1176 = vmatpush.bf16.msra.mxu0 %v1032
        %1177 = vmatpush.bf16.msra.mxu0 %v1031
        %1178 = vmatpush.bf16.msra.mxu0 %v1030
        %1179 = vmatpush.bf16.msra.mxu0 %v1029
        %1180 = vmatpush.bf16.msra.mxu0 %v1028
        %1181 = vmatpush.bf16.msra.mxu0 %v1027
        %1182 = vmatpush.bf16.msra.mxu0 %v1026
        %1183 = vmatmul.bf16.gmra.mxu0 %v699
        %v1184 = vpop.f32.mrf.mxu0
        %v1185 = vadd.f32 %v1156, %v1184
        %v1186 = vpop.f32.mrf.mxu0
        %v1187 = vadd.f32 %v1158, %v1186
        %1188 = vmatmul.bf16.gmra.mxu0 %v707
        %v1189 = vpop.f32.mrf.mxu0
        %v1190 = vadd.f32 %v1161, %v1189
        %v1191 = vpop.f32.mrf.mxu0
        %v1192 = vadd.f32 %v1163, %v1191
        %1193 = vmatmul.bf16.gmra.mxu0 %v715
        %v1194 = vpop.f32.mrf.mxu0
        %v1195 = vadd.f32 %v1166, %v1194
        %v1196 = vpop.f32.mrf.mxu0
        %v1197 = vadd.f32 %v1168, %v1196
        %1198 = vmatmul.bf16.gmra.mxu0 %v723
        %v1199 = vpop.f32.mrf.mxu0
        %v1200 = vadd.f32 %v1171, %v1199
        %v1201 = vpop.f32.mrf.mxu0
        %v1202 = vadd.f32 %v1173, %v1201
        %1203 = vdwg.mxu0
        %1204 = vmatpush.bf16.msra.mxu0 %v1041
        %1205 = vmatpush.bf16.msra.mxu0 %v1040
        %1206 = vmatpush.bf16.msra.mxu0 %v1039
        %1207 = vmatpush.bf16.msra.mxu0 %v1038
        %1208 = vmatpush.bf16.msra.mxu0 %v1037
        %1209 = vmatpush.bf16.msra.mxu0 %v1036
        %1210 = vmatpush.bf16.msra.mxu0 %v1035
        %1211 = vmatpush.bf16.msra.mxu0 %v1034
        %1212 = vmatmul.bf16.gmra.mxu0 %v700
        %v1213 = vpop.f32.mrf.mxu0
        %v1214 = vadd.f32 %v1185, %v1213
        %v1215 = vpop.f32.mrf.mxu0
        %v1216 = vadd.f32 %v1187, %v1215
        %1217 = vmatmul.bf16.gmra.mxu0 %v708
        %v1218 = vpop.f32.mrf.mxu0
        %v1219 = vadd.f32 %v1190, %v1218
        %v1220 = vpop.f32.mrf.mxu0
        %v1221 = vadd.f32 %v1192, %v1220
        %1222 = vmatmul.bf16.gmra.mxu0 %v716
        %v1223 = vpop.f32.mrf.mxu0
        %v1224 = vadd.f32 %v1195, %v1223
        %v1225 = vpop.f32.mrf.mxu0
        %v1226 = vadd.f32 %v1197, %v1225
        %1227 = vmatmul.bf16.gmra.mxu0 %v724
        %v1228 = vpop.f32.mrf.mxu0
        %v1229 = vadd.f32 %v1200, %v1228
        %v1230 = vpop.f32.mrf.mxu0
        %v1231 = vadd.f32 %v1202, %v1230
        %1232 = vdwg.mxu0
        %1233 = vmatpush.bf16.msra.mxu0 %v1049
        %1234 = vmatpush.bf16.msra.mxu0 %v1048
        %1235 = vmatpush.bf16.msra.mxu0 %v1047
        %1236 = vmatpush.bf16.msra.mxu0 %v1046
        %1237 = vmatpush.bf16.msra.mxu0 %v1045
        %1238 = vmatpush.bf16.msra.mxu0 %v1044
        %1239 = vmatpush.bf16.msra.mxu0 %v1043
        %1240 = vmatpush.bf16.msra.mxu0 %v1042
        %1241 = vmatmul.bf16.gmra.mxu0 %v701
        %v1242 = vpop.f32.mrf.mxu0
        %v1243 = vadd.f32 %v1214, %v1242
        %v1244 = vpop.f32.mrf.mxu0
        %v1245 = vadd.f32 %v1216, %v1244
        %1246 = vmatmul.bf16.gmra.mxu0 %v709
        %v1247 = vpop.f32.mrf.mxu0
        %v1248 = vadd.f32 %v1219, %v1247
        %v1249 = vpop.f32.mrf.mxu0
        %v1250 = vadd.f32 %v1221, %v1249
        %1251 = vmatmul.bf16.gmra.mxu0 %v717
        %v1252 = vpop.f32.mrf.mxu0
        %v1253 = vadd.f32 %v1224, %v1252
        %v1254 = vpop.f32.mrf.mxu0
        %v1255 = vadd.f32 %v1226, %v1254
        %1256 = vmatmul.bf16.gmra.mxu0 %v725
        %v1257 = vpop.f32.mrf.mxu0
        %v1258 = vadd.f32 %v1229, %v1257
        %v1259 = vpop.f32.mrf.mxu0
        %v1260 = vadd.f32 %v1231, %v1259
        %1261 = vdwg.mxu0
        %1262 = vmatpush.bf16.msra.mxu0 %v1057
        %1263 = vmatpush.bf16.msra.mxu0 %v1056
        %1264 = vmatpush.bf16.msra.mxu0 %v1055
        %1265 = vmatpush.bf16.msra.mxu0 %v1054
        %1266 = vmatpush.bf16.msra.mxu0 %v1053
        %1267 = vmatpush.bf16.msra.mxu0 %v1052
        %1268 = vmatpush.bf16.msra.mxu0 %v1051
        %1269 = vmatpush.bf16.msra.mxu0 %v1050
        %1270 = vmatmul.bf16.gmra.mxu0 %v702
        %v1271 = vpop.f32.mrf.mxu0
        %v1272 = vadd.f32 %v1243, %v1271
        %v1273 = vpop.f32.mrf.mxu0
        %v1274 = vadd.f32 %v1245, %v1273
        %1275 = vmatmul.bf16.gmra.mxu0 %v710
        %v1276 = vpop.f32.mrf.mxu0
        %v1277 = vadd.f32 %v1248, %v1276
        %v1278 = vpop.f32.mrf.mxu0
        %v1279 = vadd.f32 %v1250, %v1278
        %1280 = vmatmul.bf16.gmra.mxu0 %v718
        %v1281 = vpop.f32.mrf.mxu0
        %v1282 = vadd.f32 %v1253, %v1281
        %v1283 = vpop.f32.mrf.mxu0
        %v1284 = vadd.f32 %v1255, %v1283
        %1285 = vmatmul.bf16.gmra.mxu0 %v726
        %v1286 = vpop.f32.mrf.mxu0
        %v1287 = vadd.f32 %v1258, %v1286
        %v1288 = vpop.f32.mrf.mxu0
        %v1289 = vadd.f32 %v1260, %v1288
        %1290 = vdwg.mxu0
        %1291 = vmatpush.bf16.msra.mxu0 %v1065
        %1292 = vmatpush.bf16.msra.mxu0 %v1064
        %1293 = vmatpush.bf16.msra.mxu0 %v1063
        %1294 = vmatpush.bf16.msra.mxu0 %v1062
        %1295 = vmatpush.bf16.msra.mxu0 %v1061
        %1296 = vmatpush.bf16.msra.mxu0 %v1060
        %1297 = vmatpush.bf16.msra.mxu0 %v1059
        %1298 = vmatpush.bf16.msra.mxu0 %v1058
        %1299 = vmatmul.bf16.gmra.mxu0 %v703
        %v1300 = vpop.f32.mrf.mxu0
        %v1301 = vadd.f32 %v1272, %v1300
        %v1302 = vpop.f32.mrf.mxu0
        %v1303 = vadd.f32 %v1274, %v1302
        %1304 = vmatmul.bf16.gmra.mxu0 %v711
        %v1305 = vpop.f32.mrf.mxu0
        %v1306 = vadd.f32 %v1277, %v1305
        %v1307 = vpop.f32.mrf.mxu0
        %v1308 = vadd.f32 %v1279, %v1307
        %1309 = vmatmul.bf16.gmra.mxu0 %v719
        %v1310 = vpop.f32.mrf.mxu0
        %v1311 = vadd.f32 %v1282, %v1310
        %v1312 = vpop.f32.mrf.mxu0
        %v1313 = vadd.f32 %v1284, %v1312
        %1314 = vmatmul.bf16.gmra.mxu0 %v727
        %v1315 = vpop.f32.mrf.mxu0
        %v1316 = vadd.f32 %v1287, %v1315
        %v1317 = vpop.f32.mrf.mxu0
        %v1318 = vadd.f32 %v1289, %v1317
        %1319 = vdwg.mxu0
        %1320 = vmatpush.bf16.msra.mxu0 %v1073
        %1321 = vmatpush.bf16.msra.mxu0 %v1072
        %1322 = vmatpush.bf16.msra.mxu0 %v1071
        %1323 = vmatpush.bf16.msra.mxu0 %v1070
        %1324 = vmatpush.bf16.msra.mxu0 %v1069
        %1325 = vmatpush.bf16.msra.mxu0 %v1068
        %1326 = vmatpush.bf16.msra.mxu0 %v1067
        %1327 = vmatpush.bf16.msra.mxu0 %v1066
        %1328 = vmatmul.bf16.gmra.mxu0 %v704
        %v1329 = vpop.f32.mrf.mxu0
        %v1330 = vadd.f32 %v1301, %v1329
        %v1331 = vpop.f32.mrf.mxu0
        %v1332 = vadd.f32 %v1303, %v1331
        %1333 = vmatmul.bf16.gmra.mxu0 %v712
        %v1334 = vpop.f32.mrf.mxu0
        %v1335 = vadd.f32 %v1306, %v1334
        %v1336 = vpop.f32.mrf.mxu0
        %v1337 = vadd.f32 %v1308, %v1336
        %1338 = vmatmul.bf16.gmra.mxu0 %v720
        %v1339 = vpop.f32.mrf.mxu0
        %v1340 = vadd.f32 %v1311, %v1339
        %v1341 = vpop.f32.mrf.mxu0
        %v1342 = vadd.f32 %v1313, %v1341
        %1343 = vmatmul.bf16.gmra.mxu0 %v728
        %v1344 = vpop.f32.mrf.mxu0
        %v1345 = vadd.f32 %v1316, %v1344
        %v1346 = vpop.f32.mrf.mxu0
        %v1347 = vadd.f32 %v1318, %v1346
        %1348 = vdwg.mxu0
        %1349 = vmatpush.bf16.msra.mxu0 %v1081
        %1350 = vmatpush.bf16.msra.mxu0 %v1080
        %1351 = vmatpush.bf16.msra.mxu0 %v1079
        %1352 = vmatpush.bf16.msra.mxu0 %v1078
        %1353 = vmatpush.bf16.msra.mxu0 %v1077
        %1354 = vmatpush.bf16.msra.mxu0 %v1076
        %1355 = vmatpush.bf16.msra.mxu0 %v1075
        %1356 = vmatpush.bf16.msra.mxu0 %v1074
        %1357 = vmatmul.bf16.gmra.mxu0 %v705
        %v1358 = vpop.f32.mrf.mxu0
        %v1359 = vadd.f32 %v1330, %v1358
        %v1360 = vpop.f32.mrf.mxu0
        %v1361 = vadd.f32 %v1332, %v1360
        %1362 = vmatmul.bf16.gmra.mxu0 %v713
        %v1363 = vpop.f32.mrf.mxu0
        %v1364 = vadd.f32 %v1335, %v1363
        %v1365 = vpop.f32.mrf.mxu0
        %v1366 = vadd.f32 %v1337, %v1365
        %1367 = vmatmul.bf16.gmra.mxu0 %v721
        %v1368 = vpop.f32.mrf.mxu0
        %v1369 = vadd.f32 %v1340, %v1368
        %v1370 = vpop.f32.mrf.mxu0
        %v1371 = vadd.f32 %v1342, %v1370
        %1372 = vmatmul.bf16.gmra.mxu0 %v729
        %v1373 = vpop.f32.mrf.mxu0
        %v1374 = vadd.f32 %v1345, %v1373
        %v1375 = vpop.f32.mrf.mxu0
        %v1376 = vadd.f32 %v1347, %v1375
        %1377 = vdwg.mxu0
        %v1378 = vadd.f32 %v434, %v1359
        %v1379 = vadd.f32 %v435, %v1361
        %v1380 = vadd.f32 %v436, %v1364
        %v1381 = vadd.f32 %v437, %v1366
        %v1382 = vadd.f32 %v438, %v1369
        %v1383 = vadd.f32 %v439, %v1371
        %v1384 = vadd.f32 %v440, %v1374
        %v1385 = vadd.f32 %v441, %v1376
        %1386 = vst [vmem:[#allocation2] sm:$0xff] %v1378
        %1387 = vst [vmem:[#allocation2 + $0x8] sm:$0xff] %v1379
        %1388 = vst [vmem:[#allocation2 + $0x10] sm:$0xff] %v1380
        %1389 = vst [vmem:[#allocation2 + $0x18] sm:$0xff] %v1381
        %1390 = vst [vmem:[#allocation2 + $0x20] sm:$0xff] %v1382
        %1391 = vst [vmem:[#allocation2 + $0x28] sm:$0xff] %v1383
        %1392 = vst [vmem:[#allocation2 + $0x30] sm:$0xff] %v1384
        %1393 = vst [vmem:[#allocation2 + $0x38] sm:$0xff] %v1385
        %p1394 = scmp.eq.s32.totalorder %s24, 1
        // Predicated region
        $region60: #{discriminator_forward.11} parent=50 // pred_check
          %p1395 = pneg %p1394
        $region61: #{discriminator_forward.11} parent=50 // pred_check_branch
          %1397 = sbr.rel (%p1395) target = $region63
        $region62: #{discriminator_forward.11} parent=50 // pred_region
          %v1398 = vld [vmem:[#allocation2] sm:$0xff]
          %v1399 = vld [vmem:[#allocation2 + $0x8] sm:$0xff]
          %v1400 = vld [vmem:[#allocation2 + $0x10] sm:$0xff]
          %v1401 = vld [vmem:[#allocation2 + $0x18] sm:$0xff]
          %v1402 = vld [vmem:[#allocation2 + $0x20] sm:$0xff]
          %v1403 = vld [vmem:[#allocation2 + $0x28] sm:$0xff]
          %v1404 = vld [vmem:[#allocation2 + $0x30] sm:$0xff]
          %v1405 = vld [vmem:[#allocation2 + $0x38] sm:$0xff]
          %v1406 = vld [vmem:[%s400] sm:$0x1]
          %v1408 = vperm.slane %v1406, 0
          %v1410 = vadd.f32 %v1398, %v1408
          %v1411 = vadd.f32 %v1399, %v1408
          %v1412 = vadd.f32 %v1400, %v1408
          %v1413 = vadd.f32 %v1401, %v1408
          %v1414 = vadd.f32 %v1402, %v1408
          %v1415 = vadd.f32 %v1403, %v1408
          %v1416 = vadd.f32 %v1404, %v1408
          %v1417 = vadd.f32 %v1405, %v1408
          %v1418 = vadd.f32 %v1410, %v1411
          %v1419 = vadd.f32 %v1418, %v1412
          %v1420 = vadd.f32 %v1419, %v1413
          %v1421 = vadd.f32 %v1420, %v1414
          %v1422 = vadd.f32 %v1421, %v1415
          %v1423 = vadd.f32 %v1422, %v1416
          %v1424 = vadd.f32 %v1423, %v1417
          %v1425 = vrot.slane %v1424, 4
          %v1426 = vadd.f32 %v1424, %v1425
          %v1427 = vrot.slane %v1426, 2
          %v1428 = vadd.f32 %v1426, %v1427
          %v1429 = vrot.slane %v1428, 1
          %v1430 = vadd.f32 %v1428, %v1429
          %1431 = vst [vmem:[%s415] sm:$0x1] %v1430
          %v1432 = vmul.f32 %v1410, %v1410
          %v1433 = vmul.f32 %v1411, %v1411
          %v1434 = vmul.f32 %v1412, %v1412
          %v1435 = vmul.f32 %v1413, %v1413
          %v1436 = vmul.f32 %v1414, %v1414
          %v1437 = vmul.f32 %v1415, %v1415
          %v1438 = vmul.f32 %v1416, %v1416
          %v1439 = vmul.f32 %v1417, %v1417
          %v1440 = vadd.f32 %v1432, %v1433
          %v1441 = vadd.f32 %v1440, %v1434
          %v1442 = vadd.f32 %v1441, %v1435
          %v1443 = vadd.f32 %v1442, %v1436
          %v1444 = vadd.f32 %v1443, %v1437
          %v1445 = vadd.f32 %v1444, %v1438
          %v1446 = vadd.f32 %v1445, %v1439
          %v1447 = vrot.slane %v1446, 4
          %v1448 = vadd.f32 %v1446, %v1447
          %v1449 = vrot.slane %v1448, 2
          %v1450 = vadd.f32 %v1448, %v1449
          %v1451 = vrot.slane %v1450, 1
          %v1452 = vadd.f32 %v1450, %v1451
          %1453 = vst [vmem:[%s421] sm:$0x1] %v1452
          %v1454 = vpack.c.bf16 %v1410, %v1410
          %v1455 = vpack.c.bf16 %v1411, %v1411
          %v1456 = vpack.c.bf16 %v1412, %v1412
          %v1457 = vpack.c.bf16 %v1413, %v1413
          %v1458 = vpack.c.bf16 %v1414, %v1414
          %v1459 = vpack.c.bf16 %v1415, %v1415
          %v1460 = vpack.c.bf16 %v1416, %v1416
          %v1461 = vpack.c.bf16 %v1417, %v1417
          %1462 = vst [vmem:[%s408] sm:$0xf] %v1454
          %1463 = vst [vmem:[%s408 + $0x4] sm:$0xf] %v1455
          %1464 = vst [vmem:[%s408 + $0x8] sm:$0xf] %v1456
          %1465 = vst [vmem:[%s408 + $0xc] sm:$0xf] %v1457
          %1466 = vst [vmem:[%s408 + $0x10] sm:$0xf] %v1458
          %1467 = vst [vmem:[%s408 + $0x14] sm:$0xf] %v1459
          %1468 = vst [vmem:[%s408 + $0x18] sm:$0xf] %v1460
          %1469 = vst [vmem:[%s408 + $0x1c] sm:$0xf] %v1461
        $region63: #{discriminator_forward.11} parent=50 // pred_fallthru
          _
        %s1470 = smul.u32 8, %s22
        %p1471 = scmp.lt.s32.totalorder %s1470, 15
        %s1472 = scalar_select %p1471, %s1470, 15
        %p1473 = scmp.lt.s32.totalorder %s23, 0
        %s1474 = scalar_select %p1473, %s23, 0
        %s1475 = sadd.s32 %s1474, %s1472
        %s1476 = smul.addr %s1475, 4
        %s1477 = scalar_lea.vmem %s3, %s1476
        %p1478 = scmp.lt.s32.totalorder %s22, 1
        %s1479 = scalar_select %p1478, %s22, 1
        %p1480 = scmp.lt.s32.totalorder %s23, 0
        %s1481 = scalar_select %p1480, %s23, 0
        %s1482 = sadd.s32 %s1481, %s1479
        %s1483 = scalar_lea.vmem %s4, %s1482
        %p1484 = scmp.lt.s32.totalorder %s22, 1
        %s1485 = scalar_select %p1484, %s22, 1
        %p1486 = scmp.lt.s32.totalorder %s23, 0
        %s1487 = scalar_select %p1486, %s23, 0
        %s1488 = sadd.s32 %s1487, %s1485
        %s1489 = scalar_lea.vmem %s5, %s1488
        // Predicated region
        $region64: #{discriminator_forward.11} parent=50 // pred_check
          %p1490 = pneg %p138
        $region65: #{discriminator_forward.11} parent=50 // pred_check_branch
          %1492 = sbr.rel (%p1490) target = $region67
        $region66: #{discriminator_forward.11} parent=50 // pred_region
          %s1493 = smul.u32 8, %s22
        $region67: #{discriminator_forward.11} parent=50 // pred_fallthru
          _
        // Predicated region
        $region68: #{discriminator_forward.11} parent=50 // pred_check
          %p1494 = pneg %p166
        $region69: #{discriminator_forward.11} parent=50 // pred_check_branch
          %1496 = sbr.rel (%p1494) target = $region71
        $region70: #{discriminator_forward.11} parent=50 // pred_region
          _
        $region71: #{discriminator_forward.11} parent=50 // pred_fallthru
          _
        // Predicated region
        $region72: #{discriminator_forward.11} parent=50 // pred_check
          %p1497 = pneg %p194
        $region73: #{discriminator_forward.11} parent=50 // pred_check_branch
          %1499 = sbr.rel (%p1497) target = $region75
        $region74: #{discriminator_forward.11} parent=50 // pred_region
          _
        $region75: #{discriminator_forward.11} parent=50 // pred_fallthru
          _
      $region51: #{discriminator_forward.11} parent=5 // pred_fallthru
        _
      %p1500 = scmp.le.s32.totalorder 2, %s12
      // Predicated region
      $region76: #{discriminator_forward.11} parent=5 // pred_check
        %p1501 = pneg %p1500
      $region77: #{discriminator_forward.11} parent=5 // pred_check_branch
        %1503 = sbr.rel (%p1501) target = $region79
      $region78: #{discriminator_forward.11} parent=5 // pred_region
        %s1504 = ssub.s32 %s12, 2
        // Predicated region
        $region80: #{discriminator_forward.11} parent=78 // pred_check
          %p1505 = pneg %p144
        $region81: #{discriminator_forward.11} parent=78 // pred_check_branch
          %1507 = sbr.rel (%p1505) target = $region83
        $region82: #{discriminator_forward.11} parent=78 // pred_region
          %s1508 = smul.u32 8, %s25
          %p1509 = scmp.lt.s32.totalorder %s1508, 15
          %s1510 = scalar_select %p1509, %s1508, 15
          %p1511 = scmp.lt.s32.totalorder %s26, 0
          %s1512 = scalar_select %p1511, %s26, 0
          %s1513 = sadd.s32 %s1512, %s1510
          %s1514 = smul.addr %s1513, 4
          %s1515 = scalar_lea.vmem %s3, %s1514
        $region83: #{discriminator_forward.11} parent=78 // pred_fallthru
          _
        // Predicated region
        $region84: #{discriminator_forward.11} parent=78 // pred_check
          %p1516 = pneg %p172
        $region85: #{discriminator_forward.11} parent=78 // pred_check_branch
          %1518 = sbr.rel (%p1516) target = $region87
        $region86: #{discriminator_forward.11} parent=78 // pred_region
          %p1519 = scmp.lt.s32.totalorder %s25, 1
          %s1520 = scalar_select %p1519, %s25, 1
          %p1521 = scmp.lt.s32.totalorder %s26, 0
          %s1522 = scalar_select %p1521, %s26, 0
          %s1523 = sadd.s32 %s1522, %s1520
          %s1524 = scalar_lea.vmem %s4, %s1523
        $region87: #{discriminator_forward.11} parent=78 // pred_fallthru
          _
        // Predicated region
        $region88: #{discriminator_forward.11} parent=78 // pred_check
          %p1525 = pneg %p200
        $region89: #{discriminator_forward.11} parent=78 // pred_check_branch
          %1527 = sbr.rel (%p1525) target = $region91
        $region90: #{discriminator_forward.11} parent=78 // pred_region
          %p1528 = scmp.lt.s32.totalorder %s25, 1
          %s1529 = scalar_select %p1528, %s25, 1
          %p1530 = scmp.lt.s32.totalorder %s26, 0
          %s1531 = scalar_select %p1530, %s26, 0
          %s1532 = sadd.s32 %s1531, %s1529
          %s1533 = scalar_lea.vmem %s5, %s1532
        $region91: #{discriminator_forward.11} parent=78 // pred_fallthru
          _
      $region79: #{discriminator_forward.11} parent=5 // pred_fallthru
        _
    $region6: #{discriminator_forward.11} parent=1 // loop_footer
      %s16 = sadd.s32 1, %s12
    $region7: #{discriminator_forward.11} parent=1 // loop_footer_branch
      %11 = sbr.rel target = $region3
    $region8: #{discriminator_forward.11} parent=1 // loop_exit
      _

// kernel: discriminator_forward.14
$region0: #{discriminator_forward.14}
  #allocation0 [shape = 'u32[]', space=smem, size = 0x4, offset = 0x4, fixed_abs, tag = 'smem constant byte address 0x4 - core index']
  #allocation1 [shape = 'u32[72,128]{1,0:T(1,128)}', space=vmem, size = 0x9000, scoped, tag = 'internal scratch']
  %s0 = inlined_call_operand.vmem [shape: bf16[32,128], index: 0, kind: input, shape index: {}]
  %s1 = inlined_call_operand.vmem [shape: f32[1,128], index: 1, kind: input, shape index: {}]
  %s2 = inlined_call_operand.vmem [shape: f32[1,128], index: 2, kind: input, shape index: {}]
  %s3 = inlined_call_operand.vmem [shape: bf16[32,128], index: 3, kind: output, shape index: {}]
  %s4 = sld [smem:[#allocation0]]
  $region22: #{discriminator_forward.14} parent=0
    _
  %s6 = ssub.s32 1, %s4
  %s7 = scalar_select 0, %s6, %s4
  // Predicated region
  $region2: #{discriminator_forward.14} parent=0 // pred_check
    _
  $region3: #{discriminator_forward.14} parent=0 // pred_check_branch
    %9 = sbr.rel (0) target = $region5
  $region4: #{discriminator_forward.14} parent=0 // pred_region
    _
  $region5: #{discriminator_forward.14} parent=0 // pred_fallthru
    _
  // Predicated region
  $region6: #{discriminator_forward.14} parent=0 // pred_check
    _
  $region7: #{discriminator_forward.14} parent=0 // pred_check_branch
    %11 = sbr.rel (0) target = $region9
  $region8: #{discriminator_forward.14} parent=0 // pred_region
    _
  $region9: #{discriminator_forward.14} parent=0 // pred_fallthru
    _
  // Predicated region
  $region10: #{discriminator_forward.14} parent=0 // pred_check
    _
  $region11: #{discriminator_forward.14} parent=0 // pred_check_branch
    %13 = sbr.rel (0) target = $region13
  $region12: #{discriminator_forward.14} parent=0 // pred_region
    _
  $region13: #{discriminator_forward.14} parent=0 // pred_fallthru
    _
  %v14 = vld [vmem:[%s0] sm:$0xf]
  %v15 = vld [vmem:[%s0 + $0x4] sm:$0xf]
  %v16 = vld [vmem:[%s0 + $0x8] sm:$0xf]
  %v17 = vld [vmem:[%s0 + $0xc] sm:$0xf]
  %v18 = vunpack.c.l.bf16 %v14
  %v19 = vunpack.c.l.bf16 %v15
  %v20 = vunpack.c.l.bf16 %v16
  %v21 = vunpack.c.l.bf16 %v17
  %v22 = vld [vmem:[%s1] sm:$0x1]
  %v24 = vperm.slane %v22, 0
  %v26 = vmul.f32 %v18, %v24
  %v27 = vmul.f32 %v19, %v24
  %v28 = vmul.f32 %v20, %v24
  %v29 = vmul.f32 %v21, %v24
  %v30 = vld [vmem:[%s2] sm:$0x1]
  %v32 = vperm.slane %v30, 0
  %v34 = vadd.f32 %v26, %v32
  %v35 = vadd.f32 %v27, %v32
  %v36 = vadd.f32 %v28, %v32
  %v37 = vadd.f32 %v29, %v32
  %vm38 = vcmp.gt.f32.partialorder %v34, 0.0
  %vm39 = vcmp.gt.f32.partialorder %v35, 0.0
  %vm40 = vcmp.gt.f32.partialorder %v36, 0.0
  %vm41 = vcmp.gt.f32.partialorder %v37, 0.0
  %v42 = vmul.f32 %v34, 0.2
  %v43 = vmul.f32 %v35, 0.2
  %v44 = vmul.f32 %v36, 0.2
  %v45 = vmul.f32 %v37, 0.2
  %v46 = vsel %vm38, %v34, %v42
  %v47 = vsel %vm39, %v35, %v43
  %v48 = vsel %vm40, %v36, %v44
  %v49 = vsel %vm41, %v37, %v45
  %v50 = vpack.c.bf16 %v46, %v46
  %v51 = vpack.c.bf16 %v47, %v47
  %v52 = vpack.c.bf16 %v48, %v48
  %v53 = vpack.c.bf16 %v49, %v49
  %54 = vst [vmem:[%s3] sm:$0xf] %v50
  %55 = vst [vmem:[%s3 + $0x4] sm:$0xf] %v51
  %56 = vst [vmem:[%s3 + $0x8] sm:$0xf] %v52
  %57 = vst [vmem:[%s3 + $0xc] sm:$0xf] %v53
  // Predicated region
  $region14: #{discriminator_forward.14} parent=0 // pred_check
    _
  $region15: #{discriminator_forward.14} parent=0 // pred_check_branch
    %59 = sbr.rel (0) target = $region17
  $region16: #{discriminator_forward.14} parent=0 // pred_region
    _
  $region17: #{discriminator_forward.14} parent=0 // pred_fallthru
    _
  // Predicated region
  $region18: #{discriminator_forward.14} parent=0 // pred_check
    _
  $region19: #{discriminator_forward.14} parent=0 // pred_check_branch
    %61 = sbr.rel (0) target = $region21
  $region20: #{discriminator_forward.14} parent=0 // pred_region
    _
  $region21: #{discriminator_forward.14} parent=0 // pred_fallthru
    _

// kernel: discriminator_forward.13
$region0: #{discriminator_forward.13}
  #allocation0 [shape = 'u32[]', space=smem, size = 0x4, offset = 0x4, fixed_abs, tag = 'smem constant byte address 0x4 - core index']
  #allocation1 [shape = 'u32[72,128]{1,0:T(1,128)}', space=vmem, size = 0x9000, scoped, tag = 'internal scratch']
  #allocation2 [shape = 'f32[16,128]{1,0:T(8,128)}', space=vmem, size = 0x2000, scoped, tag = 'scratch operand']
  %s0 = inlined_call_operand.vmem [shape: bf16[32,2048], index: 0, kind: input, shape index: {}]
  %s1 = inlined_call_operand.vmem [shape: bf16[2048,128], index: 1, kind: input, shape index: {}]
  %s2 = inlined_call_operand.vmem [shape: f32[1,128], index: 2, kind: input, shape index: {}]
  %s3 = inlined_call_operand.vmem [shape: bf16[32,128], index: 3, kind: output, shape index: {0}]
  %s4 = inlined_call_operand.vmem [shape: f32[2,1,128], index: 4, kind: output, shape index: {1}]
  %s5 = inlined_call_operand.vmem [shape: f32[2,1,128], index: 5, kind: output, shape index: {2}]
  %6 = xla_tuple %s3, %s4, %s5
  %s7 = sld [smem:[#allocation0]]
  $region69: #{discriminator_forward.13} parent=0
    _
  %s9 = ssub.s32 1, %s7
  %s10 = scalar_select 0, %s9, %s7
  loop: start=0, step=1, limit=4
  $region2: #{discriminator_forward.13} parent=0 // loop_pre_header
    _
  $region3: #{discriminator_forward.13} parent=0 // loop_header
    %s12 = sphi 0, %s16
    %p13 = scmp.ge.s32.totalorder %s12, 4
    %s19 = sphi 0, %s38
    %s20 = sphi 0, %s34
    %s21 = sphi 0, %s30
    %s22 = sphi 0, %s19
    %s23 = sphi 0, %s20
    %s24 = sphi 0, %s21
    %s25 = sphi 0, %s22
    %s26 = sphi 0, %s23
    %s27 = sphi 0, %s24
    %s43 = sphi 0, %s45
    %s46 = sphi 0, %s43
    %s47 = sphi 0, %s46
    %s63 = sphi 0, %s47
    %s71 = sphi 0, %s73
    %s74 = sphi 0, %s71
    %s75 = sphi 0, %s74
    %s91 = sphi 0, %s75
    %s97 = sphi 0, %s99
    %s100 = sphi 0, %s97
    %s101 = sphi 0, %s100
    %s117 = sphi 0, %s101
    %s125 = sphi 0, %s127
    %s128 = sphi 0, %s125
    %s129 = sphi 0, %s128
    %s145 = sphi 0, %s129
    %s153 = sphi 0, %s155
    %s156 = sphi 0, %s153
    %s157 = sphi 0, %s156
    %s173 = sphi 0, %s157
    %s181 = sphi 0, %s183
    %s184 = sphi 0, %s181
    %s185 = sphi 0, %s184
    %s201 = sphi 0, %s185
  $region4: #{discriminator_forward.13} parent=0 // loop_header_branch
    %15 = sbr.rel (%p13) target = $region8
  $region5: #{discriminator_forward.13} parent=0 // loop_body
    %s17 = ssub.s32 %s12, 1
    %s18 = ssub.s32 %s12, 2
    %s28 = sadd.s32 1, %s21
    %p29 = scmp.ge.s32.totalorder %s28, 1
    %s30 = scalar_select %p29, 0, %s28
    %s31 = sadd.s32 1, %s20
    %s32 = scalar_select %p29, %s31, %s20
    %p33 = scmp.ge.s32.totalorder %s32, 1
    %s34 = scalar_select %p33, 0, %s32
    %s35 = sadd.s32 1, %s19
    %s36 = scalar_select %p33, %s35, %s19
    %p37 = scmp.ge.s32.totalorder %s36, 2
    %s38 = scalar_select %p37, 0, %s36
    %s39 = ssub.s32 %s19, %s38
    %s40 = ssub.s32 %s21, %s30
    %s41 = sor.u32 %s39, %s40
    %p42 = scmp.eq.s32.totalorder %s41, 0
    %s44 = sadd.s32 %s43, 1
    %s45 = scalar_select %p42, %s43, %s44
    %p48 = pneg %p42
    %p49 = scmp.eq.s32.totalorder %s12, 1
    %p50 = por %p48, %p49
    %p51 = scmp.ne.s32.totalorder %s43, %s46
    %p52 = scmp.eq.s32.totalorder %s12, 0
    %p53 = por %p51, %p52
    %p54 = scmp.ne.s32.totalorder %s43, %s46
    %p55 = scmp.eq.s32.totalorder %s17, 1
    %p56 = por %p54, %p55
    %p57 = scmp.ne.s32.totalorder %s46, %s47
    %p58 = scmp.eq.s32.totalorder %s17, 0
    %p59 = por %p57, %p58
    %p60 = scmp.ne.s32.totalorder %s46, %s47
    %p61 = scmp.eq.s32.totalorder %s18, 1
    %p62 = por %p60, %p61
    %p64 = scmp.ne.s32.totalorder %s47, %s63
    %p65 = scmp.eq.s32.totalorder %s18, 0
    %p66 = por %p64, %p65
    %s67 = ssub.s32 %s21, %s30
    %s68 = ssub.s32 %s20, %s34
    %s69 = sor.u32 %s67, %s68
    %p70 = scmp.eq.s32.totalorder %s69, 0
    %s72 = sadd.s32 %s71, 1
    %s73 = scalar_select %p70, %s71, %s72
    %p76 = pneg %p70
    %p77 = scmp.eq.s32.totalorder %s12, 1
    %p78 = por %p76, %p77
    %p79 = scmp.ne.s32.totalorder %s71, %s74
    %p80 = scmp.eq.s32.totalorder %s12, 0
    %p81 = por %p79, %p80
    %p82 = scmp.ne.s32.totalorder %s71, %s74
    %p83 = scmp.eq.s32.totalorder %s17, 1
    %p84 = por %p82, %p83
    %p85 = scmp.ne.s32.totalorder %s74, %s75
    %p86 = scmp.eq.s32.totalorder %s17, 0
    %p87 = por %p85, %p86
    %p88 = scmp.ne.s32.totalorder %s74, %s75
    %p89 = scmp.eq.s32.totalorder %s18, 1
    %p90 = por %p88, %p89
    %p92 = scmp.ne.s32.totalorder %s75, %s91
    %p93 = scmp.eq.s32.totalorder %s18, 0
    %p94 = por %p92, %p93
    %s95 = ssub.s32 %s20, %s34
    %p96 = scmp.eq.s32.totalorder %s95, 0
    %s98 = sadd.s32 %s97, 1
    %s99 = scalar_select %p96, %s97, %s98
    %p102 = pneg %p96
    %p103 = scmp.eq.s32.totalorder %s12, 1
    %p104 = por %p102, %p103
    %p105 = scmp.ne.s32.totalorder %s97, %s100
    %p106 = scmp.eq.s32.totalorder %s12, 0
    %p107 = por %p105, %p106
    %p108 = scmp.ne.s32.totalorder %s97, %s100
    %p109 = scmp.eq.s32.totalorder %s17, 1
    %p110 = por %p108, %p109
    %p111 = scmp.ne.s32.totalorder %s100, %s101
    %p112 = scmp.eq.s32.totalorder %s17, 0
    %p113 = por %p111, %p112
    %p114 = scmp.ne.s32.totalorder %s100, %s101
    %p115 = scmp.eq.s32.totalorder %s18, 1
    %p116 = por %p114, %p115
    %p118 = scmp.ne.s32.totalorder %s101, %s117
    %p119 = scmp.eq.s32.totalorder %s18, 0
    %p120 = por %p118, %p119
    %s121 = ssub.s32 %s19, %s38
    %s122 = ssub.s32 %s20, %s34
    %s123 = sor.u32 %s121, %s122
    %p124 = scmp.eq.s32.totalorder %s123, 0
    %s126 = sadd.s32 %s125, 1
    %s127 = scalar_select %p124, %s125, %s126
    %p130 = pneg %p124
    %p131 = scmp.eq.s32.totalorder %s12, 1
    %p132 = por %p130, %p131
    %p133 = scmp.ne.s32.totalorder %s125, %s128
    %p134 = scmp.eq.s32.totalorder %s12, 0
    %p135 = por %p133, %p134
    %p136 = scmp.ne.s32.totalorder %s125, %s128
    %p137 = scmp.eq.s32.totalorder %s17, 1
    %p138 = por %p136, %p137
    %p139 = scmp.ne.s32.totalorder %s128, %s129
    %p140 = scmp.eq.s32.totalorder %s17, 0
    %p141 = por %p139, %p140
    %p142 = scmp.ne.s32.totalorder %s128, %s129
    %p143 = scmp.eq.s32.totalorder %s18, 1
    %p144 = por %p142, %p143
    %p146 = scmp.ne.s32.totalorder %s129, %s145
    %p147 = scmp.eq.s32.totalorder %s18, 0
    %p148 = por %p146, %p147
    %s149 = ssub.s32 %s19, %s38
    %s150 = ssub.s32 %s20, %s34
    %s151 = sor.u32 %s149, %s150
    %p152 = scmp.eq.s32.totalorder %s151, 0
    %s154 = sadd.s32 %s153, 1
    %s155 = scalar_select %p152, %s153, %s154
    %p158 = pneg %p152
    %p159 = scmp.eq.s32.totalorder %s12, 1
    %p160 = por %p158, %p159
    %p161 = scmp.ne.s32.totalorder %s153, %s156
    %p162 = scmp.eq.s32.totalorder %s12, 0
    %p163 = por %p161, %p162
    %p164 = scmp.ne.s32.totalorder %s153, %s156
    %p165 = scmp.eq.s32.totalorder %s17, 1
    %p166 = por %p164, %p165
    %p167 = scmp.ne.s32.totalorder %s156, %s157
    %p168 = scmp.eq.s32.totalorder %s17, 0
    %p169 = por %p167, %p168
    %p170 = scmp.ne.s32.totalorder %s156, %s157
    %p171 = scmp.eq.s32.totalorder %s18, 1
    %p172 = por %p170, %p171
    %p174 = scmp.ne.s32.totalorder %s157, %s173
    %p175 = scmp.eq.s32.totalorder %s18, 0
    %p176 = por %p174, %p175
    %s177 = ssub.s32 %s19, %s38
    %s178 = ssub.s32 %s20, %s34
    %s179 = sor.u32 %s177, %s178
    %p180 = scmp.eq.s32.totalorder %s179, 0
    %s182 = sadd.s32 %s181, 1
    %s183 = scalar_select %p180, %s181, %s182
    %p186 = pneg %p180
    %p187 = scmp.eq.s32.totalorder %s12, 1
    %p188 = por %p186, %p187
    %p189 = scmp.ne.s32.totalorder %s181, %s184
    %p190 = scmp.eq.s32.totalorder %s12, 0
    %p191 = por %p189, %p190
    %p192 = scmp.ne.s32.totalorder %s181, %s184
    %p193 = scmp.eq.s32.totalorder %s17, 1
    %p194 = por %p192, %p193
    %p195 = scmp.ne.s32.totalorder %s184, %s185
    %p196 = scmp.eq.s32.totalorder %s17, 0
    %p197 = por %p195, %p196
    %p198 = scmp.ne.s32.totalorder %s184, %s185
    %p199 = scmp.eq.s32.totalorder %s18, 1
    %p200 = por %p198, %p199
    %p202 = scmp.ne.s32.totalorder %s185, %s201
    %p203 = scmp.eq.s32.totalorder %s18, 0
    %p204 = por %p202, %p203
    %p205 = scmp.le.s32.totalorder 1, %s12
    %p206 = scmp.lt.s32.totalorder %s12, 3
    %p207 = pnand %p205, %p206
    %p208 = pneg %p207
    // Predicated region
    $region9: #{discriminator_forward.13} parent=5 // pred_check
      _
    $region10: #{discriminator_forward.13} parent=5 // pred_check_branch
      %210 = sbr.rel (%p207) target = $region12
    $region11: #{discriminator_forward.13} parent=5 // pred_region
      %s211 = ssub.s32 %s12, 1
      // Predicated region
      $region13: #{discriminator_forward.13} parent=11 // pred_check
        %p212 = pneg %p87
      $region14: #{discriminator_forward.13} parent=11 // pred_check_branch
        %214 = sbr.rel (%p212) target = $region16
      $region15: #{discriminator_forward.13} parent=11 // pred_region
        %s215 = smul.u32 256, %s24
        %p216 = scmp.lt.s32.totalorder %s215, 255
        %s217 = scalar_select %p216, %s215, 255
        %p218 = scmp.lt.s32.totalorder %s23, 0
        %s219 = scalar_select %p218, %s23, 0
        %s220 = sadd.s32 %s219, %s217
        %s221 = smul.addr %s220, 4
        %s222 = scalar_lea.vmem %s1, %s221
        %s223 = smul.u32 256, %s24
      $region16: #{discriminator_forward.13} parent=11 // pred_fallthru
        _
      // Predicated region
      $region17: #{discriminator_forward.13} parent=11 // pred_check
        %p224 = pneg %p113
      $region18: #{discriminator_forward.13} parent=11 // pred_check_branch
        %226 = sbr.rel (%p224) target = $region20
      $region19: #{discriminator_forward.13} parent=11 // pred_region
        %p227 = scmp.lt.s32.totalorder %s23, 0
        %s228 = scalar_select %p227, %s23, 0
        %s229 = scalar_lea.vmem %s2, %s228
      $region20: #{discriminator_forward.13} parent=11 // pred_fallthru
        _
    $region12: #{discriminator_forward.13} parent=5 // pred_fallthru
      _
    %p230 = scmp.lt.s32.totalorder %s12, 2
    // Predicated region
    $region21: #{discriminator_forward.13} parent=5 // pred_check
      %p231 = pneg %p230
    $region22: #{discriminator_forward.13} parent=5 // pred_check_branch
      %233 = sbr.rel (%p231) target = $region24
    $region23: #{discriminator_forward.13} parent=5 // pred_region
      // Predicated region
      $region25: #{discriminator_forward.13} parent=23 // pred_check
        %p234 = pneg %p53
      $region26: #{discriminator_forward.13} parent=23 // pred_check_branch
        %236 = sbr.rel (%p234) target = $region28
      $region27: #{discriminator_forward.13} parent=23 // pred_region
        %s237 = smul.u32 2, %s19
        %s238 = smul.u32 16, %s21
        %p239 = scmp.lt.s32.totalorder %s237, 3
        %s240 = scalar_select %p239, %s237, 3
        %p241 = scmp.lt.s32.totalorder %s238, 15
        %s242 = scalar_select %p241, %s238, 15
        %s243 = smul.addr %s240, 16
        %s244 = sadd.s32 %s242, %s243
        %s245 = smul.addr %s244, 4
        %s246 = scalar_lea.vmem %s0, %s245
        %s247 = smul.u32 2, %s19
        %s248 = smul.u32 16, %s21
      $region28: #{discriminator_forward.13} parent=23 // pred_fallthru
        _
    $region24: #{discriminator_forward.13} parent=5 // pred_fallthru
      _
    %p249 = scmp.le.s32.totalorder 1, %s12
    %p250 = scmp.lt.s32.totalorder %s12, 3
    %p251 = pnand %p249, %p250
    %p252 = pneg %p251
    // Predicated region
    $region29: #{discriminator_forward.13} parent=5 // pred_check
      _
    $region30: #{discriminator_forward.13} parent=5 // pred_check_branch
      %254 = sbr.rel (%p251) target = $region32
    $region31: #{discriminator_forward.13} parent=5 // pred_region
      %s255 = ssub.s32 %s12, 1
      %s256 = smul.u32 2, %s22
      %s257 = smul.u32 16, %s24
      %p258 = scmp.lt.s32.totalorder %s256, 3
      %s259 = scalar_select %p258, %s256, 3
      %p260 = scmp.lt.s32.totalorder %s257, 15
      %s261 = scalar_select %p260, %s257, 15
      %s262 = smul.addr %s259, 16
      %s263 = sadd.s32 %s261, %s262
      %s264 = smul.addr %s263, 4
      %s265 = scalar_lea.vmem %s0, %s264
      %p266 = pneg %p59
      %p267 = pneg %p56
      %s268 = smul.u32 256, %s24
      %p269 = scmp.lt.s32.totalorder %s268, 255
      %s270 = scalar_select %p269, %s268, 255
      %p271 = scmp.lt.s32.totalorder %s23, 0
      %s272 = scalar_select %p271, %s23, 0
      %s273 = sadd.s32 %s272, %s270
      %s274 = smul.addr %s273, 4
      %s275 = scalar_lea.vmem %s1, %s274
      %p276 = pneg %p87
      %p277 = pneg %p84
      %p278 = scmp.lt.s32.totalorder %s23, 0
      %s279 = scalar_select %p278, %s23, 0
      %s280 = scalar_lea.vmem %s2, %s279
      %p281 = pneg %p113
      %p282 = pneg %p110
      %p283 = pneg %p141
      %p284 = pneg %p138
      %s285 = smul.u32 2, %s22
      %p286 = scmp.lt.s32.totalorder %s285, 3
      %s287 = scalar_select %p286, %s285, 3
      %p288 = scmp.lt.s32.totalorder %s23, 0
      %s289 = scalar_select %p288, %s23, 0
      %s290 = sadd.s32 %s289, %s287
      %s291 = smul.addr %s290, 4
      %s292 = scalar_lea.vmem %s3, %s291
      %p293 = pneg %p169
      %p294 = pneg %p166
      %p295 = scmp.lt.s32.totalorder %s22, 1
      %s296 = scalar_select %p295, %s22, 1
      %p297 = scmp.lt.s32.totalorder %s23, 0
      %s298 = scalar_select %p297, %s23, 0
      %s299 = sadd.s32 %s298, %s296
      %s300 = scalar_lea.vmem %s4, %s299
      %p301 = pneg %p197
      %p302 = pneg %p194
      %p303 = scmp.lt.s32.totalorder %s22, 1
      %s304 = scalar_select %p303, %s22, 1
      %p305 = scmp.lt.s32.totalorder %s23, 0
      %s306 = scalar_select %p305, %s23, 0
      %s307 = sadd.s32 %s306, %s304
      %s308 = scalar_lea.vmem %s5, %s307
      %s309 = smul.u32 2, %s22
      %s310 = smul.u32 16, %s24
      %p311 = scmp.lt.s32.totalorder %s309, 3
      %s312 = scalar_select %p311, %s309, 3
      %p313 = scmp.lt.s32.totalorder %s310, 15
      %s314 = scalar_select %p313, %s310, 15
      %s315 = smul.addr %s312, 16
      %s316 = sadd.s32 %s314, %s315
      %s317 = smul.addr %s316, 4
      %s318 = scalar_lea.vmem %s0, %s317
      %s319 = smul.u32 2, %s22
      %s320 = smul.u32 16, %s24
      %s321 = smul.u32 256, %s24
      %p322 = scmp.lt.s32.totalorder %s321, 255
      %s323 = scalar_select %p322, %s321, 255
      %p324 = scmp.lt.s32.totalorder %s23, 0
      %s325 = scalar_select %p324, %s23, 0
      %s326 = sadd.s32 %s325, %s323
      %s327 = smul.addr %s326, 4
      %s328 = scalar_lea.vmem %s1, %s327
      %s329 = smul.u32 256, %s24
      %p330 = scmp.lt.s32.totalorder %s23, 0
      %s331 = scalar_select %p330, %s23, 0
      %s332 = scalar_lea.vmem %s2, %s331
      %s333 = smul.u32 2, %s22
      %p334 = scmp.lt.s32.totalorder %s333, 3
      %s335 = scalar_select %p334, %s333, 3
      %p336 = scmp.lt.s32.totalorder %s23, 0
      %s337 = scalar_select %p336, %s23, 0
      %s338 = sadd.s32 %s337, %s335
      %s339 = smul.addr %s338, 4
      %s340 = scalar_lea.vmem %s3, %s339
      %s341 = smul.u32 2, %s22
      %p342 = scmp.lt.s32.totalorder %s22, 1
      %s343 = scalar_select %p342, %s22, 1
      %p344 = scmp.lt.s32.totalorder %s23, 0
      %s345 = scalar_select %p344, %s23, 0
      %s346 = sadd.s32 %s345, %s343
      %s347 = scalar_lea.vmem %s4, %s346
      %p348 = scmp.lt.s32.totalorder %s22, 1
      %s349 = scalar_select %p348, %s22, 1
      %p350 = scmp.lt.s32.totalorder %s23, 0
      %s351 = scalar_select %p350, %s23, 0
      %s352 = sadd.s32 %s351, %s349
      %s353 = scalar_lea.vmem %s5, %s352
      %p354 = scmp.eq.s32.totalorder %s24, 0
      // Predicated region
      $region33: #{discriminator_forward.13} parent=31 // pred_check
        %p355 = pneg %p354
      $region34: #{discriminator_forward.13} parent=31 // pred_check_branch
        %357 = sbr.rel (%p355) target = $region36
      $region35: #{discriminator_forward.13} parent=31 // pred_region
        %358 = vst [vmem:[#allocation2] sm:$0xff] 0.0
        %359 = vst [vmem:[#allocation2 + $0x8] sm:$0xff] 0.0
      $region36: #{discriminator_forward.13} parent=31 // pred_fallthru
        _
      %v360 = vld [vmem:[#allocation2] sm:$0xff]
      %v361 = vld [vmem:[#allocation2 + $0x8] sm:$0xff]
      %v362 = vld [vmem:[%s318] sm:$0xff]
      %v363 = vld [vmem:[%s318 + $0x8] sm:$0xff]
      %v364 = vld [vmem:[%s318 + $0x10] sm:$0xff]
      %v365 = vld [vmem:[%s318 + $0x18] sm:$0xff]
      %v366 = vld [vmem:[%s318 + $0x20] sm:$0xff]
      %v367 = vld [vmem:[%s318 + $0x28] sm:$0xff]
      %v368 = vld [vmem:[%s318 + $0x30] sm:$0xff]
      %v369 = vld [vmem:[%s318 + $0x38] sm:$0xff]
      %v370 = vld [vmem:[%s318 + $0x40] sm:$0xff]
      %v371 = vld [vmem:[%s318 + $0x48] sm:$0xff]
      %v372 = vld [vmem:[%s318 + $0x50] sm:$0xff]
      %v373 = vld [vmem:[%s318 + $0x58] sm:$0xff]
      %v374 = vld [vmem:[%s318 + $0x60] sm:$0xff]
      %v375 = vld [vmem:[%s318 + $0x68] sm:$0xff]
      %v376 = vld [vmem:[%s318 + $0x70] sm:$0xff]
      %v377 = vld [vmem:[%s318 + $0x78] sm:$0xff]
      %v378 = vld [vmem:[%s328] sm:$0xf]
      %v379 = vld [vmem:[%s328 + $0x4] sm:$0xf]
      %v380 = vld [vmem:[%s328 + $0x8] sm:$0xf]
      %v381 = vld [vmem:[%s328 + $0xc] sm:$0xf]
      %v382 = vld [vmem:[%s328 + $0x10] sm:$0xf]
      %v383 = vld [vmem:[%s328 + $0x14] sm:$0xf]
      %v384 = vld [vmem:[%s328 + $0x18] sm:$0xf]
      %v385 = vld [vmem:[%s328 + $0x1c] sm:$0xf]
      %v386 = vld [vmem:[%s328 + $0x20] sm:$0xf]
      %v387 = vld [vmem:[%s328 + $0x24] sm:$0xf]
      %v388 = vld [vmem:[%s328 + $0x28] sm:$0xf]
      %v389 = vld [vmem:[%s328 + $0x2c] sm:$0xf]
      %v390 = vld [vmem:[%s328 + $0x30] sm:$0xf]
      %v391 = vld [vmem:[%s328 + $0x34] sm:$0xf]
      %v392 = vld [vmem:[%s328 + $0x38] sm:$0xf]
      %v393 = vld [vmem:[%s328 + $0x3c] sm:$0xf]
      %v394 = vld [vmem:[%s328 + $0x40] sm:$0xf]
      %v395 = vld [vmem:[%s328 + $0x44] sm:$0xf]
      %v396 = vld [vmem:[%s328 + $0x48] sm:$0xf]
      %v397 = vld [vmem:[%s328 + $0x4c] sm:$0xf]
      %v398 = vld [vmem:[%s328 + $0x50] sm:$0xf]
      %v399 = vld [vmem:[%s328 + $0x54] sm:$0xf]
      %v400 = vld [vmem:[%s328 + $0x58] sm:$0xf]
      %v401 = vld [vmem:[%s328 + $0x5c] sm:$0xf]
      %v402 = vld [vmem:[%s328 + $0x60] sm:$0xf]
      %v403 = vld [vmem:[%s328 + $0x64] sm:$0xf]
      %v404 = vld [vmem:[%s328 + $0x68] sm:$0xf]
      %v405 = vld [vmem:[%s328 + $0x6c] sm:$0xf]
      %v406 = vld [vmem:[%s328 + $0x70] sm:$0xf]
      %v407 = vld [vmem:[%s328 + $0x74] sm:$0xf]
      %v408 = vld [vmem:[%s328 + $0x78] sm:$0xf]
      %v409 = vld [vmem:[%s328 + $0x7c] sm:$0xf]
      %v410 = vld [vmem:[%s328 + $0x80] sm:$0xf]
      %v411 = vld [vmem:[%s328 + $0x84] sm:$0xf]
      %v412 = vld [vmem:[%s328 + $0x88] sm:$0xf]
      %v413 = vld [vmem:[%s328 + $0x8c] sm:$0xf]
      %v414 = vld [vmem:[%s328 + $0x90] sm:$0xf]
      %v415 = vld [vmem:[%s328 + $0x94] sm:$0xf]
      %v416 = vld [vmem:[%s328 + $0x98] sm:$0xf]
      %v417 = vld [vmem:[%s328 + $0x9c] sm:$0xf]
      %v418 = vld [vmem:[%s328 + $0xa0] sm:$0xf]
      %v419 = vld [vmem:[%s328 + $0xa4] sm:$0xf]
      %v420 = vld [vmem:[%s328 + $0xa8] sm:$0xf]
      %v421 = vld [vmem:[%s328 + $0xac] sm:$0xf]
      %v422 = vld [vmem:[%s328 + $0xb0] sm:$0xf]
      %v423 = vld [vmem:[%s328 + $0xb4] sm:$0xf]
      %v424 = vld [vmem:[%s328 + $0xb8] sm:$0xf]
      %v425 = vld [vmem:[%s328 + $0xbc] sm:$0xf]
      %v426 = vld [vmem:[%s328 + $0xc0] sm:$0xf]
      %v427 = vld [vmem:[%s328 + $0xc4] sm:$0xf]
      %v428 = vld [vmem:[%s328 + $0xc8] sm:$0xf]
      %v429 = vld [vmem:[%s328 + $0xcc] sm:$0xf]
      %v430 = vld [vmem:[%s328 + $0xd0] sm:$0xf]
      %v431 = vld [vmem:[%s328 + $0xd4] sm:$0xf]
      %v432 = vld [vmem:[%s328 + $0xd8] sm:$0xf]
      %v433 = vld [vmem:[%s328 + $0xdc] sm:$0xf]
      %v434 = vld [vmem:[%s328 + $0xe0] sm:$0xf]
      %v435 = vld [vmem:[%s328 + $0xe4] sm:$0xf]
      %v436 = vld [vmem:[%s328 + $0xe8] sm:$0xf]
      %v437 = vld [vmem:[%s328 + $0xec] sm:$0xf]
      %v438 = vld [vmem:[%s328 + $0xf0] sm:$0xf]
      %v439 = vld [vmem:[%s328 + $0xf4] sm:$0xf]
      %v440 = vld [vmem:[%s328 + $0xf8] sm:$0xf]
      %v441 = vld [vmem:[%s328 + $0xfc] sm:$0xf]
      %v442 = vld [vmem:[%s328 + $0x100] sm:$0xf]
      %v443 = vld [vmem:[%s328 + $0x104] sm:$0xf]
      %v444 = vld [vmem:[%s328 + $0x108] sm:$0xf]
      %v445 = vld [vmem:[%s328 + $0x10c] sm:$0xf]
      %v446 = vld [vmem:[%s328 + $0x110] sm:$0xf]
      %v447 = vld [vmem:[%s328 + $0x114] sm:$0xf]
      %v448 = vld [vmem:[%s328 + $0x118] sm:$0xf]
      %v449 = vld [vmem:[%s328 + $0x11c] sm:$0xf]
      %v450 = vld [vmem:[%s328 + $0x120] sm:$0xf]
      %v451 = vld [vmem:[%s328 + $0x124] sm:$0xf]
      %v452 = vld [vmem:[%s328 + $0x128] sm:$0xf]
      %v453 = vld [vmem:[%s328 + $0x12c] sm:$0xf]
      %v454 = vld [vmem:[%s328 + $0x130] sm:$0xf]
      %v455 = vld [vmem:[%s328 + $0x134] sm:$0xf]
      %v456 = vld [vmem:[%s328 + $0x138] sm:$0xf]
      %v457 = vld [vmem:[%s328 + $0x13c] sm:$0xf]
      %v458 = vld [vmem:[%s328 + $0x140] sm:$0xf]
      %v459 = vld [vmem:[%s328 + $0x144] sm:$0xf]
      %v460 = vld [vmem:[%s328 + $0x148] sm:$0xf]
      %v461 = vld [vmem:[%s328 + $0x14c] sm:$0xf]
      %v462 = vld [vmem:[%s328 + $0x150] sm:$0xf]
      %v463 = vld [vmem:[%s328 + $0x154] sm:$0xf]
      %v464 = vld [vmem:[%s328 + $0x158] sm:$0xf]
      %v465 = vld [vmem:[%s328 + $0x15c] sm:$0xf]
      %v466 = vld [vmem:[%s328 + $0x160] sm:$0xf]
      %v467 = vld [vmem:[%s328 + $0x164] sm:$0xf]
      %v468 = vld [vmem:[%s328 + $0x168] sm:$0xf]
      %v469 = vld [vmem:[%s328 + $0x16c] sm:$0xf]
      %v470 = vld [vmem:[%s328 + $0x170] sm:$0xf]
      %v471 = vld [vmem:[%s328 + $0x174] sm:$0xf]
      %v472 = vld [vmem:[%s328 + $0x178] sm:$0xf]
      %v473 = vld [vmem:[%s328 + $0x17c] sm:$0xf]
      %v474 = vld [vmem:[%s328 + $0x180] sm:$0xf]
      %v475 = vld [vmem:[%s328 + $0x184] sm:$0xf]
      %v476 = vld [vmem:[%s328 + $0x188] sm:$0xf]
      %v477 = vld [vmem:[%s328 + $0x18c] sm:$0xf]
      %v478 = vld [vmem:[%s328 + $0x190] sm:$0xf]
      %v479 = vld [vmem:[%s328 + $0x194] sm:$0xf]
      %v480 = vld [vmem:[%s328 + $0x198] sm:$0xf]
      %v481 = vld [vmem:[%s328 + $0x19c] sm:$0xf]
      %v482 = vld [vmem:[%s328 + $0x1a0] sm:$0xf]
      %v483 = vld [vmem:[%s328 + $0x1a4] sm:$0xf]
      %v484 = vld [vmem:[%s328 + $0x1a8] sm:$0xf]
      %v485 = vld [vmem:[%s328 + $0x1ac] sm:$0xf]
      %v486 = vld [vmem:[%s328 + $0x1b0] sm:$0xf]
      %v487 = vld [vmem:[%s328 + $0x1b4] sm:$0xf]
      %v488 = vld [vmem:[%s328 + $0x1b8] sm:$0xf]
      %v489 = vld [vmem:[%s328 + $0x1bc] sm:$0xf]
      %v490 = vld [vmem:[%s328 + $0x1c0] sm:$0xf]
      %v491 = vld [vmem:[%s328 + $0x1c4] sm:$0xf]
      %v492 = vld [vmem:[%s328 + $0x1c8] sm:$0xf]
      %v493 = vld [vmem:[%s328 + $0x1cc] sm:$0xf]
      %v494 = vld [vmem:[%s328 + $0x1d0] sm:$0xf]
      %v495 = vld [vmem:[%s328 + $0x1d4] sm:$0xf]
      %v496 = vld [vmem:[%s328 + $0x1d8] sm:$0xf]
      %v497 = vld [vmem:[%s328 + $0x1dc] sm:$0xf]
      %v498 = vld [vmem:[%s328 + $0x1e0] sm:$0xf]
      %v499 = vld [vmem:[%s328 + $0x1e4] sm:$0xf]
      %v500 = vld [vmem:[%s328 + $0x1e8] sm:$0xf]
      %v501 = vld [vmem:[%s328 + $0x1ec] sm:$0xf]
      %v502 = vld [vmem:[%s328 + $0x1f0] sm:$0xf]
      %v503 = vld [vmem:[%s328 + $0x1f4] sm:$0xf]
      %v504 = vld [vmem:[%s328 + $0x1f8] sm:$0xf]
      %v505 = vld [vmem:[%s328 + $0x1fc] sm:$0xf]
      %v506 = vld [vmem:[%s328 + $0x200] sm:$0xf]
      %v507 = vld [vmem:[%s328 + $0x204] sm:$0xf]
      %v508 = vld [vmem:[%s328 + $0x208] sm:$0xf]
      %v509 = vld [vmem:[%s328 + $0x20c] sm:$0xf]
      %v510 = vld [vmem:[%s328 + $0x210] sm:$0xf]
      %v511 = vld [vmem:[%s328 + $0x214] sm:$0xf]
      %v512 = vld [vmem:[%s328 + $0x218] sm:$0xf]
      %v513 = vld [vmem:[%s328 + $0x21c] sm:$0xf]
      %v514 = vld [vmem:[%s328 + $0x220] sm:$0xf]
      %v515 = vld [vmem:[%s328 + $0x224] sm:$0xf]
      %v516 = vld [vmem:[%s328 + $0x228] sm:$0xf]
      %v517 = vld [vmem:[%s328 + $0x22c] sm:$0xf]
      %v518 = vld [vmem:[%s328 + $0x230] sm:$0xf]
      %v519 = vld [vmem:[%s328 + $0x234] sm:$0xf]
      %v520 = vld [vmem:[%s328 + $0x238] sm:$0xf]
      %v521 = vld [vmem:[%s328 + $0x23c] sm:$0xf]
      %v522 = vld [vmem:[%s328 + $0x240] sm:$0xf]
      %v523 = vld [vmem:[%s328 + $0x244] sm:$0xf]
      %v524 = vld [vmem:[%s328 + $0x248] sm:$0xf]
      %v525 = vld [vmem:[%s328 + $0x24c] sm:$0xf]
      %v526 = vld [vmem:[%s328 + $0x250] sm:$0xf]
      %v527 = vld [vmem:[%s328 + $0x254] sm:$0xf]
      %v528 = vld [vmem:[%s328 + $0x258] sm:$0xf]
      %v529 = vld [vmem:[%s328 + $0x25c] sm:$0xf]
      %v530 = vld [vmem:[%s328 + $0x260] sm:$0xf]
      %v531 = vld [vmem:[%s328 + $0x264] sm:$0xf]
      %v532 = vld [vmem:[%s328 + $0x268] sm:$0xf]
      %v533 = vld [vmem:[%s328 + $0x26c] sm:$0xf]
      %v534 = vld [vmem:[%s328 + $0x270] sm:$0xf]
      %v535 = vld [vmem:[%s328 + $0x274] sm:$0xf]
      %v536 = vld [vmem:[%s328 + $0x278] sm:$0xf]
      %v537 = vld [vmem:[%s328 + $0x27c] sm:$0xf]
      %v538 = vld [vmem:[%s328 + $0x280] sm:$0xf]
      %v539 = vld [vmem:[%s328 + $0x284] sm:$0xf]
      %v540 = vld [vmem:[%s328 + $0x288] sm:$0xf]
      %v541 = vld [vmem:[%s328 + $0x28c] sm:$0xf]
      %v542 = vld [vmem:[%s328 + $0x290] sm:$0xf]
      %v543 = vld [vmem:[%s328 + $0x294] sm:$0xf]
      %v544 = vld [vmem:[%s328 + $0x298] sm:$0xf]
      %v545 = vld [vmem:[%s328 + $0x29c] sm:$0xf]
      %v546 = vld [vmem:[%s328 + $0x2a0] sm:$0xf]
      %v547 = vld [vmem:[%s328 + $0x2a4] sm:$0xf]
      %v548 = vld [vmem:[%s328 + $0x2a8] sm:$0xf]
      %v549 = vld [vmem:[%s328 + $0x2ac] sm:$0xf]
      %v550 = vld [vmem:[%s328 + $0x2b0] sm:$0xf]
      %v551 = vld [vmem:[%s328 + $0x2b4] sm:$0xf]
      %v552 = vld [vmem:[%s328 + $0x2b8] sm:$0xf]
      %v553 = vld [vmem:[%s328 + $0x2bc] sm:$0xf]
      %v554 = vld [vmem:[%s328 + $0x2c0] sm:$0xf]
      %v555 = vld [vmem:[%s328 + $0x2c4] sm:$0xf]
      %v556 = vld [vmem:[%s328 + $0x2c8] sm:$0xf]
      %v557 = vld [vmem:[%s328 + $0x2cc] sm:$0xf]
      %v558 = vld [vmem:[%s328 + $0x2d0] sm:$0xf]
      %v559 = vld [vmem:[%s328 + $0x2d4] sm:$0xf]
      %v560 = vld [vmem:[%s328 + $0x2d8] sm:$0xf]
      %v561 = vld [vmem:[%s328 + $0x2dc] sm:$0xf]
      %v562 = vld [vmem:[%s328 + $0x2e0] sm:$0xf]
      %v563 = vld [vmem:[%s328 + $0x2e4] sm:$0xf]
      %v564 = vld [vmem:[%s328 + $0x2e8] sm:$0xf]
      %v565 = vld [vmem:[%s328 + $0x2ec] sm:$0xf]
      %v566 = vld [vmem:[%s328 + $0x2f0] sm:$0xf]
      %v567 = vld [vmem:[%s328 + $0x2f4] sm:$0xf]
      %v568 = vld [vmem:[%s328 + $0x2f8] sm:$0xf]
      %v569 = vld [vmem:[%s328 + $0x2fc] sm:$0xf]
      %v570 = vld [vmem:[%s328 + $0x300] sm:$0xf]
      %v571 = vld [vmem:[%s328 + $0x304] sm:$0xf]
      %v572 = vld [vmem:[%s328 + $0x308] sm:$0xf]
      %v573 = vld [vmem:[%s328 + $0x30c] sm:$0xf]
      %v574 = vld [vmem:[%s328 + $0x310] sm:$0xf]
      %v575 = vld [vmem:[%s328 + $0x314] sm:$0xf]
      %v576 = vld [vmem:[%s328 + $0x318] sm:$0xf]
      %v577 = vld [vmem:[%s328 + $0x31c] sm:$0xf]
      %v578 = vld [vmem:[%s328 + $0x320] sm:$0xf]
      %v579 = vld [vmem:[%s328 + $0x324] sm:$0xf]
      %v580 = vld [vmem:[%s328 + $0x328] sm:$0xf]
      %v581 = vld [vmem:[%s328 + $0x32c] sm:$0xf]
      %v582 = vld [vmem:[%s328 + $0x330] sm:$0xf]
      %v583 = vld [vmem:[%s328 + $0x334] sm:$0xf]
      %v584 = vld [vmem:[%s328 + $0x338] sm:$0xf]
      %v585 = vld [vmem:[%s328 + $0x33c] sm:$0xf]
      %v586 = vld [vmem:[%s328 + $0x340] sm:$0xf]
      %v587 = vld [vmem:[%s328 + $0x344] sm:$0xf]
      %v588 = vld [vmem:[%s328 + $0x348] sm:$0xf]
      %v589 = vld [vmem:[%s328 + $0x34c] sm:$0xf]
      %v590 = vld [vmem:[%s328 + $0x350] sm:$0xf]
      %v591 = vld [vmem:[%s328 + $0x354] sm:$0xf]
      %v592 = vld [vmem:[%s328 + $0x358] sm:$0xf]
      %v593 = vld [vmem:[%s328 + $0x35c] sm:$0xf]
      %v594 = vld [vmem:[%s328 + $0x360] sm:$0xf]
      %v595 = vld [vmem:[%s328 + $0x364] sm:$0xf]
      %v596 = vld [vmem:[%s328 + $0x368] sm:$0xf]
      %v597 = vld [vmem:[%s328 + $0x36c] sm:$0xf]
      %v598 = vld [vmem:[%s328 + $0x370] sm:$0xf]
      %v599 = vld [vmem:[%s328 + $0x374] sm:$0xf]
      %v600 = vld [vmem:[%s328 + $0x378] sm:$0xf]
      %v601 = vld [vmem:[%s328 + $0x37c] sm:$0xf]
      %v602 = vld [vmem:[%s328 + $0x380] sm:$0xf]
      %v603 = vld [vmem:[%s328 + $0x384] sm:$0xf]
      %v604 = vld [vmem:[%s328 + $0x388] sm:$0xf]
      %v605 = vld [vmem:[%s328 + $0x38c] sm:$0xf]
      %v606 = vld [vmem:[%s328 + $0x390] sm:$0xf]
      %v607 = vld [vmem:[%s328 + $0x394] sm:$0xf]
      %v608 = vld [vmem:[%s328 + $0x398] sm:$0xf]
      %v609 = vld [vmem:[%s328 + $0x39c] sm:$0xf]
      %v610 = vld [vmem:[%s328 + $0x3a0] sm:$0xf]
      %v611 = vld [vmem:[%s328 + $0x3a4] sm:$0xf]
      %v612 = vld [vmem:[%s328 + $0x3a8] sm:$0xf]
      %v613 = vld [vmem:[%s328 + $0x3ac] sm:$0xf]
      %v614 = vld [vmem:[%s328 + $0x3b0] sm:$0xf]
      %v615 = vld [vmem:[%s328 + $0x3b4] sm:$0xf]
      %v616 = vld [vmem:[%s328 + $0x3b8] sm:$0xf]
      %v617 = vld [vmem:[%s328 + $0x3bc] sm:$0xf]
      %v618 = vld [vmem:[%s328 + $0x3c0] sm:$0xf]
      %v619 = vld [vmem:[%s328 + $0x3c4] sm:$0xf]
      %v620 = vld [vmem:[%s328 + $0x3c8] sm:$0xf]
      %v621 = vld [vmem:[%s328 + $0x3cc] sm:$0xf]
      %v622 = vld [vmem:[%s328 + $0x3d0] sm:$0xf]
      %v623 = vld [vmem:[%s328 + $0x3d4] sm:$0xf]
      %v624 = vld [vmem:[%s328 + $0x3d8] sm:$0xf]
      %v625 = vld [vmem:[%s328 + $0x3dc] sm:$0xf]
      %v626 = vld [vmem:[%s328 + $0x3e0] sm:$0xf]
      %v627 = vld [vmem:[%s328 + $0x3e4] sm:$0xf]
      %v628 = vld [vmem:[%s328 + $0x3e8] sm:$0xf]
      %v629 = vld [vmem:[%s328 + $0x3ec] sm:$0xf]
      %v630 = vld [vmem:[%s328 + $0x3f0] sm:$0xf]
      %v631 = vld [vmem:[%s328 + $0x3f4] sm:$0xf]
      %v632 = vld [vmem:[%s328 + $0x3f8] sm:$0xf]
      %v633 = vld [vmem:[%s328 + $0x3fc] sm:$0xf]
      %v650 = vunpack.c.l.b16 %v362
      %v651 = vunpack.c.h.b16 %v362
      %v652 = vunpack.c.l.b16 %v363
      %v653 = vunpack.c.h.b16 %v363
      %v654 = vunpack.c.l.b16 %v364
      %v655 = vunpack.c.h.b16 %v364
      %v656 = vunpack.c.l.b16 %v365
      %v657 = vunpack.c.h.b16 %v365
      %v658 = vunpack.c.l.b16 %v366
      %v659 = vunpack.c.h.b16 %v366
      %v660 = vunpack.c.l.b16 %v367
      %v661 = vunpack.c.h.b16 %v367
      %v662 = vunpack.c.l.b16 %v368
      %v663 = vunpack.c.h.b16 %v368
      %v664 = vunpack.c.l.b16 %v369
      %v665 = vunpack.c.h.b16 %v369
      %v666 = vunpack.c.l.b16 %v370
      %v667 = vunpack.c.h.b16 %v370
      %v668 = vunpack.c.l.b16 %v371
      %v669 = vunpack.c.h.b16 %v371
      %v670 = vunpack.c.l.b16 %v372
      %v671 = vunpack.c.h.b16 %v372
      %v672 = vunpack.c.l.b16 %v373
      %v673 = vunpack.c.h.b16 %v373
      %v674 = vunpack.c.l.b16 %v374
      %v675 = vunpack.c.h.b16 %v374
      %v676 = vunpack.c.l.b16 %v375
      %v677 = vunpack.c.h.b16 %v375
      %v678 = vunpack.c.l.b16 %v376
      %v679 = vunpack.c.h.b16 %v376
      %v680 = vunpack.c.l.b16 %v377
      %v681 = vunpack.c.h.b16 %v377
      %v682 = vpack.c.b16 %v666, %v650
      %v683 = vpack.c.b16 %v667, %v651
      %v684 = vpack.c.b16 %v668, %v652
      %v685 = vpack.c.b16 %v669, %v653
      %v686 = vpack.c.b16 %v670, %v654
      %v687 = vpack.c.b16 %v671, %v655
      %v688 = vpack.c.b16 %v672, %v656
      %v689 = vpack.c.b16 %v673, %v657
      %v690 = vpack.c.b16 %v674, %v658
      %v691 = vpack.c.b16 %v675, %v659
      %v692 = vpack.c.b16 %v676, %v660
      %v693 = vpack.c.b16 %v677, %v661
      %v694 = vpack.c.b16 %v678, %v662
      %v695 = vpack.c.b16 %v679, %v663
      %v696 = vpack.c.b16 %v680, %v664
      %v697 = vpack.c.b16 %v681, %v665
      %v970 = vunpack.c.l.b16 %v378
      %v971 = vunpack.c.l.b16 %v379
      %v972 = vunpack.c.l.b16 %v380
      %v973 = vunpack.c.l.b16 %v381
      %v974 = vunpack.c.l.b16 %v382
      %v975 = vunpack.c.l.b16 %v383
      %v976 = vunpack.c.l.b16 %v384
      %v977 = vunpack.c.l.b16 %v385
      %v978 = vunpack.c.l.b16 %v386
      %v979 = vunpack.c.l.b16 %v387
      %v980 = vunpack.c.l.b16 %v388
      %v981 = vunpack.c.l.b16 %v389
      %v982 = vunpack.c.l.b16 %v390
      %v983 = vunpack.c.l.b16 %v391
      %v984 = vunpack.c.l.b16 %v392
      %v985 = vunpack.c.l.b16 %v393
      %v986 = vunpack.c.l.b16 %v394
      %v987 = vunpack.c.l.b16 %v395
      %v988 = vunpack.c.l.b16 %v396
      %v989 = vunpack.c.l.b16 %v397
      %v990 = vunpack.c.l.b16 %v398
      %v991 = vunpack.c.l.b16 %v399
      %v992 = vunpack.c.l.b16 %v400
      %v993 = vunpack.c.l.b16 %v401
      %v994 = vunpack.c.l.b16 %v402
      %v995 = vunpack.c.l.b16 %v403
      %v996 = vunpack.c.l.b16 %v404
      %v997 = vunpack.c.l.b16 %v405
      %v998 = vunpack.c.l.b16 %v406
      %v999 = vunpack.c.l.b16 %v407
      %v1000 = vunpack.c.l.b16 %v408
      %v1001 = vunpack.c.l.b16 %v409
      %v1002 = vunpack.c.l.b16 %v410
      %v1003 = vunpack.c.l.b16 %v411
      %v1004 = vunpack.c.l.b16 %v412
      %v1005 = vunpack.c.l.b16 %v413
      %v1006 = vunpack.c.l.b16 %v414
      %v1007 = vunpack.c.l.b16 %v415
      %v1008 = vunpack.c.l.b16 %v416
      %v1009 = vunpack.c.l.b16 %v417
      %v1010 = vunpack.c.l.b16 %v418
      %v1011 = vunpack.c.l.b16 %v419
      %v1012 = vunpack.c.l.b16 %v420
      %v1013 = vunpack.c.l.b16 %v421
      %v1014 = vunpack.c.l.b16 %v422
      %v1015 = vunpack.c.l.b16 %v423
      %v1016 = vunpack.c.l.b16 %v424
      %v1017 = vunpack.c.l.b16 %v425
      %v1018 = vunpack.c.l.b16 %v426
      %v1019 = vunpack.c.l.b16 %v427
      %v1020 = vunpack.c.l.b16 %v428
      %v1021 = vunpack.c.l.b16 %v429
      %v1022 = vunpack.c.l.b16 %v430
      %v1023 = vunpack.c.l.b16 %v431
      %v1024 = vunpack.c.l.b16 %v432
      %v1025 = vunpack.c.l.b16 %v433
      %v1026 = vunpack.c.l.b16 %v434
      %v1027 = vunpack.c.l.b16 %v435
      %v1028 = vunpack.c.l.b16 %v436
      %v1029 = vunpack.c.l.b16 %v437
      %v1030 = vunpack.c.l.b16 %v438
      %v1031 = vunpack.c.l.b16 %v439
      %v1032 = vunpack.c.l.b16 %v440
      %v1033 = vunpack.c.l.b16 %v441
      %v1034 = vunpack.c.l.b16 %v442
      %v1035 = vunpack.c.l.b16 %v443
      %v1036 = vunpack.c.l.b16 %v444
      %v1037 = vunpack.c.l.b16 %v445
      %v1038 = vunpack.c.l.b16 %v446
      %v1039 = vunpack.c.l.b16 %v447
      %v1040 = vunpack.c.l.b16 %v448
      %v1041 = vunpack.c.l.b16 %v449
      %v1042 = vunpack.c.l.b16 %v450
      %v1043 = vunpack.c.l.b16 %v451
      %v1044 = vunpack.c.l.b16 %v452
      %v1045 = vunpack.c.l.b16 %v453
      %v1046 = vunpack.c.l.b16 %v454
      %v1047 = vunpack.c.l.b16 %v455
      %v1048 = vunpack.c.l.b16 %v456
      %v1049 = vunpack.c.l.b16 %v457
      %v1050 = vunpack.c.l.b16 %v458
      %v1051 = vunpack.c.l.b16 %v459
      %v1052 = vunpack.c.l.b16 %v460
      %v1053 = vunpack.c.l.b16 %v461
      %v1054 = vunpack.c.l.b16 %v462
      %v1055 = vunpack.c.l.b16 %v463
      %v1056 = vunpack.c.l.b16 %v464
      %v1057 = vunpack.c.l.b16 %v465
      %v1058 = vunpack.c.l.b16 %v466
      %v1059 = vunpack.c.l.b16 %v467
      %v1060 = vunpack.c.l.b16 %v468
      %v1061 = vunpack.c.l.b16 %v469
      %v1062 = vunpack.c.l.b16 %v470
      %v1063 = vunpack.c.l.b16 %v471
      %v1064 = vunpack.c.l.b16 %v472
      %v1065 = vunpack.c.l.b16 %v473
      %v1066 = vunpack.c.l.b16 %v474
      %v1067 = vunpack.c.l.b16 %v475
      %v1068 = vunpack.c.l.b16 %v476
      %v1069 = vunpack.c.l.b16 %v477
      %v1070 = vunpack.c.l.b16 %v478
      %v1071 = vunpack.c.l.b16 %v479
      %v1072 = vunpack.c.l.b16 %v480
      %v1073 = vunpack.c.l.b16 %v481
      %v1074 = vunpack.c.l.b16 %v482
      %v1075 = vunpack.c.l.b16 %v483
      %v1076 = vunpack.c.l.b16 %v484
      %v1077 = vunpack.c.l.b16 %v485
      %v1078 = vunpack.c.l.b16 %v486
      %v1079 = vunpack.c.l.b16 %v487
      %v1080 = vunpack.c.l.b16 %v488
      %v1081 = vunpack.c.l.b16 %v489
      %v1082 = vunpack.c.l.b16 %v490
      %v1083 = vunpack.c.l.b16 %v491
      %v1084 = vunpack.c.l.b16 %v492
      %v1085 = vunpack.c.l.b16 %v493
      %v1086 = vunpack.c.l.b16 %v494
      %v1087 = vunpack.c.l.b16 %v495
      %v1088 = vunpack.c.l.b16 %v496
      %v1089 = vunpack.c.l.b16 %v497
      %v1090 = vunpack.c.l.b16 %v498
      %v1091 = vunpack.c.l.b16 %v499
      %v1092 = vunpack.c.l.b16 %v500
      %v1093 = vunpack.c.l.b16 %v501
      %v1094 = vunpack.c.l.b16 %v502
      %v1095 = vunpack.c.l.b16 %v503
      %v1096 = vunpack.c.l.b16 %v504
      %v1097 = vunpack.c.l.b16 %v505
      %v1098 = vunpack.c.l.b16 %v506
      %v1099 = vunpack.c.l.b16 %v507
      %v1100 = vunpack.c.l.b16 %v508
      %v1101 = vunpack.c.l.b16 %v509
      %v1102 = vunpack.c.l.b16 %v510
      %v1103 = vunpack.c.l.b16 %v511
      %v1104 = vunpack.c.l.b16 %v512
      %v1105 = vunpack.c.l.b16 %v513
      %v1106 = vunpack.c.l.b16 %v514
      %v1107 = vunpack.c.l.b16 %v515
      %v1108 = vunpack.c.l.b16 %v516
      %v1109 = vunpack.c.l.b16 %v517
      %v1110 = vunpack.c.l.b16 %v518
      %v1111 = vunpack.c.l.b16 %v519
      %v1112 = vunpack.c.l.b16 %v520
      %v1113 = vunpack.c.l.b16 %v521
      %v1114 = vunpack.c.l.b16 %v522
      %v1115 = vunpack.c.l.b16 %v523
      %v1116 = vunpack.c.l.b16 %v524
      %v1117 = vunpack.c.l.b16 %v525
      %v1118 = vunpack.c.l.b16 %v526
      %v1119 = vunpack.c.l.b16 %v527
      %v1120 = vunpack.c.l.b16 %v528
      %v1121 = vunpack.c.l.b16 %v529
      %v1122 = vunpack.c.l.b16 %v530
      %v1123 = vunpack.c.l.b16 %v531
      %v1124 = vunpack.c.l.b16 %v532
      %v1125 = vunpack.c.l.b16 %v533
      %v1126 = vunpack.c.l.b16 %v534
      %v1127 = vunpack.c.l.b16 %v535
      %v1128 = vunpack.c.l.b16 %v536
      %v1129 = vunpack.c.l.b16 %v537
      %v1130 = vunpack.c.l.b16 %v538
      %v1131 = vunpack.c.l.b16 %v539
      %v1132 = vunpack.c.l.b16 %v540
      %v1133 = vunpack.c.l.b16 %v541
      %v1134 = vunpack.c.l.b16 %v542
      %v1135 = vunpack.c.l.b16 %v543
      %v1136 = vunpack.c.l.b16 %v544
      %v1137 = vunpack.c.l.b16 %v545
      %v1138 = vunpack.c.l.b16 %v546
      %v1139 = vunpack.c.l.b16 %v547
      %v1140 = vunpack.c.l.b16 %v548
      %v1141 = vunpack.c.l.b16 %v549
      %v1142 = vunpack.c.l.b16 %v550
      %v1143 = vunpack.c.l.b16 %v551
      %v1144 = vunpack.c.l.b16 %v552
      %v1145 = vunpack.c.l.b16 %v553
      %v1146 = vunpack.c.l.b16 %v554
      %v1147 = vunpack.c.l.b16 %v555
      %v1148 = vunpack.c.l.b16 %v556
      %v1149 = vunpack.c.l.b16 %v557
      %v1150 = vunpack.c.l.b16 %v558
      %v1151 = vunpack.c.l.b16 %v559
      %v1152 = vunpack.c.l.b16 %v560
      %v1153 = vunpack.c.l.b16 %v561
      %v1154 = vunpack.c.l.b16 %v562
      %v1155 = vunpack.c.l.b16 %v563
      %v1156 = vunpack.c.l.b16 %v564
      %v1157 = vunpack.c.l.b16 %v565
      %v1158 = vunpack.c.l.b16 %v566
      %v1159 = vunpack.c.l.b16 %v567
      %v1160 = vunpack.c.l.b16 %v568
      %v1161 = vunpack.c.l.b16 %v569
      %v1162 = vunpack.c.l.b16 %v570
      %v1163 = vunpack.c.l.b16 %v571
      %v1164 = vunpack.c.l.b16 %v572
      %v1165 = vunpack.c.l.b16 %v573
      %v1166 = vunpack.c.l.b16 %v574
      %v1167 = vunpack.c.l.b16 %v575
      %v1168 = vunpack.c.l.b16 %v576
      %v1169 = vunpack.c.l.b16 %v577
      %v1170 = vunpack.c.l.b16 %v578
      %v1171 = vunpack.c.l.b16 %v579
      %v1172 = vunpack.c.l.b16 %v580
      %v1173 = vunpack.c.l.b16 %v581
      %v1174 = vunpack.c.l.b16 %v582
      %v1175 = vunpack.c.l.b16 %v583
      %v1176 = vunpack.c.l.b16 %v584
      %v1177 = vunpack.c.l.b16 %v585
      %v1178 = vunpack.c.l.b16 %v586
      %v1179 = vunpack.c.l.b16 %v587
      %v1180 = vunpack.c.l.b16 %v588
      %v1181 = vunpack.c.l.b16 %v589
      %v1182 = vunpack.c.l.b16 %v590
      %v1183 = vunpack.c.l.b16 %v591
      %v1184 = vunpack.c.l.b16 %v592
      %v1185 = vunpack.c.l.b16 %v593
      %v1186 = vunpack.c.l.b16 %v594
      %v1187 = vunpack.c.l.b16 %v595
      %v1188 = vunpack.c.l.b16 %v596
      %v1189 = vunpack.c.l.b16 %v597
      %v1190 = vunpack.c.l.b16 %v598
      %v1191 = vunpack.c.l.b16 %v599
      %v1192 = vunpack.c.l.b16 %v600
      %v1193 = vunpack.c.l.b16 %v601
      %v1194 = vunpack.c.l.b16 %v602
      %v1195 = vunpack.c.l.b16 %v603
      %v1196 = vunpack.c.l.b16 %v604
      %v1197 = vunpack.c.l.b16 %v605
      %v1198 = vunpack.c.l.b16 %v606
      %v1199 = vunpack.c.l.b16 %v607
      %v1200 = vunpack.c.l.b16 %v608
      %v1201 = vunpack.c.l.b16 %v609
      %v1202 = vunpack.c.l.b16 %v610
      %v1203 = vunpack.c.l.b16 %v611
      %v1204 = vunpack.c.l.b16 %v612
      %v1205 = vunpack.c.l.b16 %v613
      %v1206 = vunpack.c.l.b16 %v614
      %v1207 = vunpack.c.l.b16 %v615
      %v1208 = vunpack.c.l.b16 %v616
      %v1209 = vunpack.c.l.b16 %v617
      %v1210 = vunpack.c.l.b16 %v618
      %v1211 = vunpack.c.l.b16 %v619
      %v1212 = vunpack.c.l.b16 %v620
      %v1213 = vunpack.c.l.b16 %v621
      %v1214 = vunpack.c.l.b16 %v622
      %v1215 = vunpack.c.l.b16 %v623
      %v1216 = vunpack.c.l.b16 %v624
      %v1217 = vunpack.c.l.b16 %v625
      %v1218 = vunpack.c.l.b16 %v626
      %v1219 = vunpack.c.l.b16 %v627
      %v1220 = vunpack.c.l.b16 %v628
      %v1221 = vunpack.c.l.b16 %v629
      %v1222 = vunpack.c.l.b16 %v630
      %v1223 = vunpack.c.l.b16 %v631
      %v1224 = vunpack.c.l.b16 %v632
      %v1225 = vunpack.c.l.b16 %v633
      %v1226 = vpack.c.b16 %v971, %v970
      %v1227 = vpack.c.b16 %v973, %v972
      %v1228 = vpack.c.b16 %v975, %v974
      %v1229 = vpack.c.b16 %v977, %v976
      %v1230 = vpack.c.b16 %v979, %v978
      %v1231 = vpack.c.b16 %v981, %v980
      %v1232 = vpack.c.b16 %v983, %v982
      %v1233 = vpack.c.b16 %v985, %v984
      %v1234 = vpack.c.b16 %v987, %v986
      %v1235 = vpack.c.b16 %v989, %v988
      %v1236 = vpack.c.b16 %v991, %v990
      %v1237 = vpack.c.b16 %v993, %v992
      %v1238 = vpack.c.b16 %v995, %v994
      %v1239 = vpack.c.b16 %v997, %v996
      %v1240 = vpack.c.b16 %v999, %v998
      %v1241 = vpack.c.b16 %v1001, %v1000
      %v1242 = vpack.c.b16 %v1003, %v1002
      %v1243 = vpack.c.b16 %v1005, %v1004
      %v1244 = vpack.c.b16 %v1007, %v1006
      %v1245 = vpack.c.b16 %v1009, %v1008
      %v1246 = vpack.c.b16 %v1011, %v1010
      %v1247 = vpack.c.b16 %v1013, %v1012
      %v1248 = vpack.c.b16 %v1015, %v1014
      %v1249 = vpack.c.b16 %v1017, %v1016
      %v1250 = vpack.c.b16 %v1019, %v1018
      %v1251 = vpack.c.b16 %v1021, %v1020
      %v1252 = vpack.c.b16 %v1023, %v1022
      %v1253 = vpack.c.b16 %v1025, %v1024
      %v1254 = vpack.c.b16 %v1027, %v1026
      %v1255 = vpack.c.b16 %v1029, %v1028
      %v1256 = vpack.c.b16 %v1031, %v1030
      %v1257 = vpack.c.b16 %v1033, %v1032
      %v1258 = vpack.c.b16 %v1035, %v1034
      %v1259 = vpack.c.b16 %v1037, %v1036
      %v1260 = vpack.c.b16 %v1039, %v1038
      %v1261 = vpack.c.b16 %v1041, %v1040
      %v1262 = vpack.c.b16 %v1043, %v1042
      %v1263 = vpack.c.b16 %v1045, %v1044
      %v1264 = vpack.c.b16 %v1047, %v1046
      %v1265 = vpack.c.b16 %v1049, %v1048
      %v1266 = vpack.c.b16 %v1051, %v1050
      %v1267 = vpack.c.b16 %v1053, %v1052
      %v1268 = vpack.c.b16 %v1055, %v1054
      %v1269 = vpack.c.b16 %v1057, %v1056
      %v1270 = vpack.c.b16 %v1059, %v1058
      %v1271 = vpack.c.b16 %v1061, %v1060
      %v1272 = vpack.c.b16 %v1063, %v1062
      %v1273 = vpack.c.b16 %v1065, %v1064
      %v1274 = vpack.c.b16 %v1067, %v1066
      %v1275 = vpack.c.b16 %v1069, %v1068
      %v1276 = vpack.c.b16 %v1071, %v1070
      %v1277 = vpack.c.b16 %v1073, %v1072
      %v1278 = vpack.c.b16 %v1075, %v1074
      %v1279 = vpack.c.b16 %v1077, %v1076
      %v1280 = vpack.c.b16 %v1079, %v1078
      %v1281 = vpack.c.b16 %v1081, %v1080
      %v1282 = vpack.c.b16 %v1083, %v1082
      %v1283 = vpack.c.b16 %v1085, %v1084
      %v1284 = vpack.c.b16 %v1087, %v1086
      %v1285 = vpack.c.b16 %v1089, %v1088
      %v1286 = vpack.c.b16 %v1091, %v1090
      %v1287 = vpack.c.b16 %v1093, %v1092
      %v1288 = vpack.c.b16 %v1095, %v1094
      %v1289 = vpack.c.b16 %v1097, %v1096
      %v1290 = vpack.c.b16 %v1099, %v1098
      %v1291 = vpack.c.b16 %v1101, %v1100
      %v1292 = vpack.c.b16 %v1103, %v1102
      %v1293 = vpack.c.b16 %v1105, %v1104
      %v1294 = vpack.c.b16 %v1107, %v1106
      %v1295 = vpack.c.b16 %v1109, %v1108
      %v1296 = vpack.c.b16 %v1111, %v1110
      %v1297 = vpack.c.b16 %v1113, %v1112
      %v1298 = vpack.c.b16 %v1115, %v1114
      %v1299 = vpack.c.b16 %v1117, %v1116
      %v1300 = vpack.c.b16 %v1119, %v1118
      %v1301 = vpack.c.b16 %v1121, %v1120
      %v1302 = vpack.c.b16 %v1123, %v1122
      %v1303 = vpack.c.b16 %v1125, %v1124
      %v1304 = vpack.c.b16 %v1127, %v1126
      %v1305 = vpack.c.b16 %v1129, %v1128
      %v1306 = vpack.c.b16 %v1131, %v1130
      %v1307 = vpack.c.b16 %v1133, %v1132
      %v1308 = vpack.c.b16 %v1135, %v1134
      %v1309 = vpack.c.b16 %v1137, %v1136
      %v1310 = vpack.c.b16 %v1139, %v1138
      %v1311 = vpack.c.b16 %v1141, %v1140
      %v1312 = vpack.c.b16 %v1143, %v1142
      %v1313 = vpack.c.b16 %v1145, %v1144
      %v1314 = vpack.c.b16 %v1147, %v1146
      %v1315 = vpack.c.b16 %v1149, %v1148
      %v1316 = vpack.c.b16 %v1151, %v1150
      %v1317 = vpack.c.b16 %v1153, %v1152
      %v1318 = vpack.c.b16 %v1155, %v1154
      %v1319 = vpack.c.b16 %v1157, %v1156
      %v1320 = vpack.c.b16 %v1159, %v1158
      %v1321 = vpack.c.b16 %v1161, %v1160
      %v1322 = vpack.c.b16 %v1163, %v1162
      %v1323 = vpack.c.b16 %v1165, %v1164
      %v1324 = vpack.c.b16 %v1167, %v1166
      %v1325 = vpack.c.b16 %v1169, %v1168
      %v1326 = vpack.c.b16 %v1171, %v1170
      %v1327 = vpack.c.b16 %v1173, %v1172
      %v1328 = vpack.c.b16 %v1175, %v1174
      %v1329 = vpack.c.b16 %v1177, %v1176
      %v1330 = vpack.c.b16 %v1179, %v1178
      %v1331 = vpack.c.b16 %v1181, %v1180
      %v1332 = vpack.c.b16 %v1183, %v1182
      %v1333 = vpack.c.b16 %v1185, %v1184
      %v1334 = vpack.c.b16 %v1187, %v1186
      %v1335 = vpack.c.b16 %v1189, %v1188
      %v1336 = vpack.c.b16 %v1191, %v1190
      %v1337 = vpack.c.b16 %v1193, %v1192
      %v1338 = vpack.c.b16 %v1195, %v1194
      %v1339 = vpack.c.b16 %v1197, %v1196
      %v1340 = vpack.c.b16 %v1199, %v1198
      %v1341 = vpack.c.b16 %v1201, %v1200
      %v1342 = vpack.c.b16 %v1203, %v1202
      %v1343 = vpack.c.b16 %v1205, %v1204
      %v1344 = vpack.c.b16 %v1207, %v1206
      %v1345 = vpack.c.b16 %v1209, %v1208
      %v1346 = vpack.c.b16 %v1211, %v1210
      %v1347 = vpack.c.b16 %v1213, %v1212
      %v1348 = vpack.c.b16 %v1215, %v1214
      %v1349 = vpack.c.b16 %v1217, %v1216
      %v1350 = vpack.c.b16 %v1219, %v1218
      %v1351 = vpack.c.b16 %v1221, %v1220
      %v1352 = vpack.c.b16 %v1223, %v1222
      %v1353 = vpack.c.b16 %v1225, %v1224
      %1482 = vmatpush.bf16.msra.mxu0 %v1233
      %1483 = vmatpush.bf16.msra.mxu0 %v1232
      %1484 = vmatpush.bf16.msra.mxu0 %v1231
      %1485 = vmatpush.bf16.msra.mxu0 %v1230
      %1486 = vmatpush.bf16.msra.mxu0 %v1229
      %1487 = vmatpush.bf16.msra.mxu0 %v1228
      %1488 = vmatpush.bf16.msra.mxu0 %v1227
      %1489 = vmatpush.bf16.msra.mxu0 %v1226
      %1490 = vmatmul.bf16.gmra.mxu0 %v682
      %v1491 = vpop.f32.mrf.mxu0
      %v1492 = vadd.f32 0.0, %v1491
      %v1493 = vpop.f32.mrf.mxu0
      %v1494 = vadd.f32 0.0, %v1493
      %1495 = vdwg.mxu0
      %1496 = vmatpush.bf16.msra.mxu0 %v1241
      %1497 = vmatpush.bf16.msra.mxu0 %v1240
      %1498 = vmatpush.bf16.msra.mxu0 %v1239
      %1499 = vmatpush.bf16.msra.mxu0 %v1238
      %1500 = vmatpush.bf16.msra.mxu0 %v1237
      %1501 = vmatpush.bf16.msra.mxu0 %v1236
      %1502 = vmatpush.bf16.msra.mxu0 %v1235
      %1503 = vmatpush.bf16.msra.mxu0 %v1234
      %1504 = vmatmul.bf16.gmra.mxu0 %v683
      %v1505 = vpop.f32.mrf.mxu0
      %v1506 = vadd.f32 %v1492, %v1505
      %v1507 = vpop.f32.mrf.mxu0
      %v1508 = vadd.f32 %v1494, %v1507
      %1509 = vdwg.mxu0
      %1510 = vmatpush.bf16.msra.mxu0 %v1249
      %1511 = vmatpush.bf16.msra.mxu0 %v1248
      %1512 = vmatpush.bf16.msra.mxu0 %v1247
      %1513 = vmatpush.bf16.msra.mxu0 %v1246
      %1514 = vmatpush.bf16.msra.mxu0 %v1245
      %1515 = vmatpush.bf16.msra.mxu0 %v1244
      %1516 = vmatpush.bf16.msra.mxu0 %v1243
      %1517 = vmatpush.bf16.msra.mxu0 %v1242
      %1518 = vmatmul.bf16.gmra.mxu0 %v684
      %v1519 = vpop.f32.mrf.mxu0
      %v1520 = vadd.f32 %v1506, %v1519
      %v1521 = vpop.f32.mrf.mxu0
      %v1522 = vadd.f32 %v1508, %v1521
      %1523 = vdwg.mxu0
      %1524 = vmatpush.bf16.msra.mxu0 %v1257
      %1525 = vmatpush.bf16.msra.mxu0 %v1256
      %1526 = vmatpush.bf16.msra.mxu0 %v1255
      %1527 = vmatpush.bf16.msra.mxu0 %v1254
      %1528 = vmatpush.bf16.msra.mxu0 %v1253
      %1529 = vmatpush.bf16.msra.mxu0 %v1252
      %1530 = vmatpush.bf16.msra.mxu0 %v1251
      %1531 = vmatpush.bf16.msra.mxu0 %v1250
      %1532 = vmatmul.bf16.gmra.mxu0 %v685
      %v1533 = vpop.f32.mrf.mxu0
      %v1534 = vadd.f32 %v1520, %v1533
      %v1535 = vpop.f32.mrf.mxu0
      %v1536 = vadd.f32 %v1522, %v1535
      %1537 = vdwg.mxu0
      %1538 = vmatpush.bf16.msra.mxu0 %v1265
      %1539 = vmatpush.bf16.msra.mxu0 %v1264
      %1540 = vmatpush.bf16.msra.mxu0 %v1263
      %1541 = vmatpush.bf16.msra.mxu0 %v1262
      %1542 = vmatpush.bf16.msra.mxu0 %v1261
      %1543 = vmatpush.bf16.msra.mxu0 %v1260
      %1544 = vmatpush.bf16.msra.mxu0 %v1259
      %1545 = vmatpush.bf16.msra.mxu0 %v1258
      %1546 = vmatmul.bf16.gmra.mxu0 %v686
      %v1547 = vpop.f32.mrf.mxu0
      %v1548 = vadd.f32 %v1534, %v1547
      %v1549 = vpop.f32.mrf.mxu0
      %v1550 = vadd.f32 %v1536, %v1549
      %1551 = vdwg.mxu0
      %1552 = vmatpush.bf16.msra.mxu0 %v1273
      %1553 = vmatpush.bf16.msra.mxu0 %v1272
      %1554 = vmatpush.bf16.msra.mxu0 %v1271
      %1555 = vmatpush.bf16.msra.mxu0 %v1270
      %1556 = vmatpush.bf16.msra.mxu0 %v1269
      %1557 = vmatpush.bf16.msra.mxu0 %v1268
      %1558 = vmatpush.bf16.msra.mxu0 %v1267
      %1559 = vmatpush.bf16.msra.mxu0 %v1266
      %1560 = vmatmul.bf16.gmra.mxu0 %v687
      %v1561 = vpop.f32.mrf.mxu0
      %v1562 = vadd.f32 %v1548, %v1561
      %v1563 = vpop.f32.mrf.mxu0
      %v1564 = vadd.f32 %v1550, %v1563
      %1565 = vdwg.mxu0
      %1566 = vmatpush.bf16.msra.mxu0 %v1281
      %1567 = vmatpush.bf16.msra.mxu0 %v1280
      %1568 = vmatpush.bf16.msra.mxu0 %v1279
      %1569 = vmatpush.bf16.msra.mxu0 %v1278
      %1570 = vmatpush.bf16.msra.mxu0 %v1277
      %1571 = vmatpush.bf16.msra.mxu0 %v1276
      %1572 = vmatpush.bf16.msra.mxu0 %v1275
      %1573 = vmatpush.bf16.msra.mxu0 %v1274
      %1574 = vmatmul.bf16.gmra.mxu0 %v688
      %v1575 = vpop.f32.mrf.mxu0
      %v1576 = vadd.f32 %v1562, %v1575
      %v1577 = vpop.f32.mrf.mxu0
      %v1578 = vadd.f32 %v1564, %v1577
      %1579 = vdwg.mxu0
      %1580 = vmatpush.bf16.msra.mxu0 %v1289
      %1581 = vmatpush.bf16.msra.mxu0 %v1288
      %1582 = vmatpush.bf16.msra.mxu0 %v1287
      %1583 = vmatpush.bf16.msra.mxu0 %v1286
      %1584 = vmatpush.bf16.msra.mxu0 %v1285
      %1585 = vmatpush.bf16.msra.mxu0 %v1284
      %1586 = vmatpush.bf16.msra.mxu0 %v1283
      %1587 = vmatpush.bf16.msra.mxu0 %v1282
      %1588 = vmatmul.bf16.gmra.mxu0 %v689
      %v1589 = vpop.f32.mrf.mxu0
      %v1590 = vadd.f32 %v1576, %v1589
      %v1591 = vpop.f32.mrf.mxu0
      %v1592 = vadd.f32 %v1578, %v1591
      %1593 = vdwg.mxu0
      %1594 = vmatpush.bf16.msra.mxu0 %v1297
      %1595 = vmatpush.bf16.msra.mxu0 %v1296
      %1596 = vmatpush.bf16.msra.mxu0 %v1295
      %1597 = vmatpush.bf16.msra.mxu0 %v1294
      %1598 = vmatpush.bf16.msra.mxu0 %v1293
      %1599 = vmatpush.bf16.msra.mxu0 %v1292
      %1600 = vmatpush.bf16.msra.mxu0 %v1291
      %1601 = vmatpush.bf16.msra.mxu0 %v1290
      %1602 = vmatmul.bf16.gmra.mxu0 %v690
      %v1603 = vpop.f32.mrf.mxu0
      %v1604 = vadd.f32 %v1590, %v1603
      %v1605 = vpop.f32.mrf.mxu0
      %v1606 = vadd.f32 %v1592, %v1605
      %1607 = vdwg.mxu0
      %1608 = vmatpush.bf16.msra.mxu0 %v1305
      %1609 = vmatpush.bf16.msra.mxu0 %v1304
      %1610 = vmatpush.bf16.msra.mxu0 %v1303
      %1611 = vmatpush.bf16.msra.mxu0 %v1302
      %1612 = vmatpush.bf16.msra.mxu0 %v1301
      %1613 = vmatpush.bf16.msra.mxu0 %v1300
      %1614 = vmatpush.bf16.msra.mxu0 %v1299
      %1615 = vmatpush.bf16.msra.mxu0 %v1298
      %1616 = vmatmul.bf16.gmra.mxu0 %v691
      %v1617 = vpop.f32.mrf.mxu0
      %v1618 = vadd.f32 %v1604, %v1617
      %v1619 = vpop.f32.mrf.mxu0
      %v1620 = vadd.f32 %v1606, %v1619
      %1621 = vdwg.mxu0
      %1622 = vmatpush.bf16.msra.mxu0 %v1313
      %1623 = vmatpush.bf16.msra.mxu0 %v1312
      %1624 = vmatpush.bf16.msra.mxu0 %v1311
      %1625 = vmatpush.bf16.msra.mxu0 %v1310
      %1626 = vmatpush.bf16.msra.mxu0 %v1309
      %1627 = vmatpush.bf16.msra.mxu0 %v1308
      %1628 = vmatpush.bf16.msra.mxu0 %v1307
      %1629 = vmatpush.bf16.msra.mxu0 %v1306
      %1630 = vmatmul.bf16.gmra.mxu0 %v692
      %v1631 = vpop.f32.mrf.mxu0
      %v1632 = vadd.f32 %v1618, %v1631
      %v1633 = vpop.f32.mrf.mxu0
      %v1634 = vadd.f32 %v1620, %v1633
      %1635 = vdwg.mxu0
      %1636 = vmatpush.bf16.msra.mxu0 %v1321
      %1637 = vmatpush.bf16.msra.mxu0 %v1320
      %1638 = vmatpush.bf16.msra.mxu0 %v1319
      %1639 = vmatpush.bf16.msra.mxu0 %v1318
      %1640 = vmatpush.bf16.msra.mxu0 %v1317
      %1641 = vmatpush.bf16.msra.mxu0 %v1316
      %1642 = vmatpush.bf16.msra.mxu0 %v1315
      %1643 = vmatpush.bf16.msra.mxu0 %v1314
      %1644 = vmatmul.bf16.gmra.mxu0 %v693
      %v1645 = vpop.f32.mrf.mxu0
      %v1646 = vadd.f32 %v1632, %v1645
      %v1647 = vpop.f32.mrf.mxu0
      %v1648 = vadd.f32 %v1634, %v1647
      %1649 = vdwg.mxu0
      %1650 = vmatpush.bf16.msra.mxu0 %v1329
      %1651 = vmatpush.bf16.msra.mxu0 %v1328
      %1652 = vmatpush.bf16.msra.mxu0 %v1327
      %1653 = vmatpush.bf16.msra.mxu0 %v1326
      %1654 = vmatpush.bf16.msra.mxu0 %v1325
      %1655 = vmatpush.bf16.msra.mxu0 %v1324
      %1656 = vmatpush.bf16.msra.mxu0 %v1323
      %1657 = vmatpush.bf16.msra.mxu0 %v1322
      %1658 = vmatmul.bf16.gmra.mxu0 %v694
      %v1659 = vpop.f32.mrf.mxu0
      %v1660 = vadd.f32 %v1646, %v1659
      %v1661 = vpop.f32.mrf.mxu0
      %v1662 = vadd.f32 %v1648, %v1661
      %1663 = vdwg.mxu0
      %1664 = vmatpush.bf16.msra.mxu0 %v1337
      %1665 = vmatpush.bf16.msra.mxu0 %v1336
      %1666 = vmatpush.bf16.msra.mxu0 %v1335
      %1667 = vmatpush.bf16.msra.mxu0 %v1334
      %1668 = vmatpush.bf16.msra.mxu0 %v1333
      %1669 = vmatpush.bf16.msra.mxu0 %v1332
      %1670 = vmatpush.bf16.msra.mxu0 %v1331
      %1671 = vmatpush.bf16.msra.mxu0 %v1330
      %1672 = vmatmul.bf16.gmra.mxu0 %v695
      %v1673 = vpop.f32.mrf.mxu0
      %v1674 = vadd.f32 %v1660, %v1673
      %v1675 = vpop.f32.mrf.mxu0
      %v1676 = vadd.f32 %v1662, %v1675
      %1677 = vdwg.mxu0
      %1678 = vmatpush.bf16.msra.mxu0 %v1345
      %1679 = vmatpush.bf16.msra.mxu0 %v1344
      %1680 = vmatpush.bf16.msra.mxu0 %v1343
      %1681 = vmatpush.bf16.msra.mxu0 %v1342
      %1682 = vmatpush.bf16.msra.mxu0 %v1341
      %1683 = vmatpush.bf16.msra.mxu0 %v1340
      %1684 = vmatpush.bf16.msra.mxu0 %v1339
      %1685 = vmatpush.bf16.msra.mxu0 %v1338
      %1686 = vmatmul.bf16.gmra.mxu0 %v696
      %v1687 = vpop.f32.mrf.mxu0
      %v1688 = vadd.f32 %v1674, %v1687
      %v1689 = vpop.f32.mrf.mxu0
      %v1690 = vadd.f32 %v1676, %v1689
      %1691 = vdwg.mxu0
      %1692 = vmatpush.bf16.msra.mxu0 %v1353
      %1693 = vmatpush.bf16.msra.mxu0 %v1352
      %1694 = vmatpush.bf16.msra.mxu0 %v1351
      %1695 = vmatpush.bf16.msra.mxu0 %v1350
      %1696 = vmatpush.bf16.msra.mxu0 %v1349
      %1697 = vmatpush.bf16.msra.mxu0 %v1348
      %1698 = vmatpush.bf16.msra.mxu0 %v1347
      %1699 = vmatpush.bf16.msra.mxu0 %v1346
      %1700 = vmatmul.bf16.gmra.mxu0 %v697
      %v1701 = vpop.f32.mrf.mxu0
      %v1702 = vadd.f32 %v1688, %v1701
      %v1703 = vpop.f32.mrf.mxu0
      %v1704 = vadd.f32 %v1690, %v1703
      %1705 = vdwg.mxu0
      %v1706 = vadd.f32 %v360, %v1702
      %v1707 = vadd.f32 %v361, %v1704
      %1708 = vst [vmem:[#allocation2] sm:$0xff] %v1706
      %1709 = vst [vmem:[#allocation2 + $0x8] sm:$0xff] %v1707
      // Predicated region
      $region37: #{discriminator_forward.13} parent=31 // pred_check
        %p1710 = pneg %p354
      $region38: #{discriminator_forward.13} parent=31 // pred_check_branch
        %1712 = sbr.rel (%p1710) target = $region40
      $region39: #{discriminator_forward.13} parent=31 // pred_region
        %v1713 = vld [vmem:[#allocation2] sm:$0xff]
        %v1714 = vld [vmem:[#allocation2 + $0x8] sm:$0xff]
        %v1715 = vld [vmem:[%s332] sm:$0x1]
        %v1717 = vperm.slane %v1715, 0
        %v1719 = vadd.f32 %v1713, %v1717
        %v1720 = vadd.f32 %v1714, %v1717
        %v1721 = vadd.f32 %v1719, %v1720
        %v1722 = vrot.slane %v1721, 4
        %v1723 = vadd.f32 %v1721, %v1722
        %v1724 = vrot.slane %v1723, 2
        %v1725 = vadd.f32 %v1723, %v1724
        %v1726 = vrot.slane %v1725, 1
        %v1727 = vadd.f32 %v1725, %v1726
        %1728 = vst [vmem:[%s347] sm:$0x1] %v1727
        %v1729 = vmul.f32 %v1719, %v1719
        %v1730 = vmul.f32 %v1720, %v1720
        %v1731 = vadd.f32 %v1729, %v1730
        %v1732 = vrot.slane %v1731, 4
        %v1733 = vadd.f32 %v1731, %v1732
        %v1734 = vrot.slane %v1733, 2
        %v1735 = vadd.f32 %v1733, %v1734
        %v1736 = vrot.slane %v1735, 1
        %v1737 = vadd.f32 %v1735, %v1736
        %1738 = vst [vmem:[%s353] sm:$0x1] %v1737
        %v1739 = vpack.c.bf16 %v1719, %v1719
        %v1740 = vpack.c.bf16 %v1720, %v1720
        %1741 = vst [vmem:[%s340] sm:$0xf] %v1739
        %1742 = vst [vmem:[%s340 + $0x4] sm:$0xf] %v1740
      $region40: #{discriminator_forward.13} parent=31 // pred_fallthru
        _
      %s1743 = smul.u32 2, %s22
      %p1744 = scmp.lt.s32.totalorder %s1743, 3
      %s1745 = scalar_select %p1744, %s1743, 3
      %p1746 = scmp.lt.s32.totalorder %s23, 0
      %s1747 = scalar_select %p1746, %s23, 0
      %s1748 = sadd.s32 %s1747, %s1745
      %s1749 = smul.addr %s1748, 4
      %s1750 = scalar_lea.vmem %s3, %s1749
      %p1751 = scmp.lt.s32.totalorder %s22, 1
      %s1752 = scalar_select %p1751, %s22, 1
      %p1753 = scmp.lt.s32.totalorder %s23, 0
      %s1754 = scalar_select %p1753, %s23, 0
      %s1755 = sadd.s32 %s1754, %s1752
      %s1756 = scalar_lea.vmem %s4, %s1755
      %p1757 = scmp.lt.s32.totalorder %s22, 1
      %s1758 = scalar_select %p1757, %s22, 1
      %p1759 = scmp.lt.s32.totalorder %s23, 0
      %s1760 = scalar_select %p1759, %s23, 0
      %s1761 = sadd.s32 %s1760, %s1758
      %s1762 = scalar_lea.vmem %s5, %s1761
      // Predicated region
      $region41: #{discriminator_forward.13} parent=31 // pred_check
        %p1763 = pneg %p138
      $region42: #{discriminator_forward.13} parent=31 // pred_check_branch
        %1765 = sbr.rel (%p1763) target = $region44
      $region43: #{discriminator_forward.13} parent=31 // pred_region
        %s1766 = smul.u32 2, %s22
      $region44: #{discriminator_forward.13} parent=31 // pred_fallthru
        _
      // Predicated region
      $region45: #{discriminator_forward.13} parent=31 // pred_check
        %p1767 = pneg %p166
      $region46: #{discriminator_forward.13} parent=31 // pred_check_branch
        %1769 = sbr.rel (%p1767) target = $region48
      $region47: #{discriminator_forward.13} parent=31 // pred_region
        _
      $region48: #{discriminator_forward.13} parent=31 // pred_fallthru
        _
      // Predicated region
      $region49: #{discriminator_forward.13} parent=31 // pred_check
        %p1770 = pneg %p194
      $region50: #{discriminator_forward.13} parent=31 // pred_check_branch
        %1772 = sbr.rel (%p1770) target = $region52
      $region51: #{discriminator_forward.13} parent=31 // pred_region
        _
      $region52: #{discriminator_forward.13} parent=31 // pred_fallthru
        _
    $region32: #{discriminator_forward.13} parent=5 // pred_fallthru
      _
    %p1773 = scmp.le.s32.totalorder 2, %s12
    // Predicated region
    $region53: #{discriminator_forward.13} parent=5 // pred_check
      %p1774 = pneg %p1773
    $region54: #{discriminator_forward.13} parent=5 // pred_check_branch
      %1776 = sbr.rel (%p1774) target = $region56
    $region55: #{discriminator_forward.13} parent=5 // pred_region
      %s1777 = ssub.s32 %s12, 2
      // Predicated region
      $region57: #{discriminator_forward.13} parent=55 // pred_check
        %p1778 = pneg %p144
      $region58: #{discriminator_forward.13} parent=55 // pred_check_branch
        %1780 = sbr.rel (%p1778) target = $region60
      $region59: #{discriminator_forward.13} parent=55 // pred_region
        %s1781 = smul.u32 2, %s25
        %p1782 = scmp.lt.s32.totalorder %s1781, 3
        %s1783 = scalar_select %p1782, %s1781, 3
        %p1784 = scmp.lt.s32.totalorder %s26, 0
        %s1785 = scalar_select %p1784, %s26, 0
        %s1786 = sadd.s32 %s1785, %s1783
        %s1787 = smul.addr %s1786, 4
        %s1788 = scalar_lea.vmem %s3, %s1787
      $region60: #{discriminator_forward.13} parent=55 // pred_fallthru
        _
      // Predicated region
      $region61: #{discriminator_forward.13} parent=55 // pred_check
        %p1789 = pneg %p172
      $region62: #{discriminator_forward.13} parent=55 // pred_check_branch
        %1791 = sbr.rel (%p1789) target = $region64
      $region63: #{discriminator_forward.13} parent=55 // pred_region
        %p1792 = scmp.lt.s32.totalorder %s25, 1
        %s1793 = scalar_select %p1792, %s25, 1
        %p1794 = scmp.lt.s32.totalorder %s26, 0
        %s1795 = scalar_select %p1794, %s26, 0
        %s1796 = sadd.s32 %s1795, %s1793
        %s1797 = scalar_lea.vmem %s4, %s1796
      $region64: #{discriminator_forward.13} parent=55 // pred_fallthru
        _
      // Predicated region
      $region65: #{discriminator_forward.13} parent=55 // pred_check
        %p1798 = pneg %p200
      $region66: #{discriminator_forward.13} parent=55 // pred_check_branch
        %1800 = sbr.rel (%p1798) target = $region68
      $region67: #{discriminator_forward.13} parent=55 // pred_region
        %p1801 = scmp.lt.s32.totalorder %s25, 1
        %s1802 = scalar_select %p1801, %s25, 1
        %p1803 = scmp.lt.s32.totalorder %s26, 0
        %s1804 = scalar_select %p1803, %s26, 0
        %s1805 = sadd.s32 %s1804, %s1802
        %s1806 = scalar_lea.vmem %s5, %s1805
      $region68: #{discriminator_forward.13} parent=55 // pred_fallthru
        _
    $region56: #{discriminator_forward.13} parent=5 // pred_fallthru
      _
  $region6: #{discriminator_forward.13} parent=0 // loop_footer
    %s16 = sadd.s32 1, %s12
  $region7: #{discriminator_forward.13} parent=0 // loop_footer_branch
    %11 = sbr.rel target = $region3
  $region8: #{discriminator_forward.13} parent=0 // loop_exit
    _

// kernel: discriminator_forward.15
$region0: #{discriminator_forward.15}
  #allocation0 [shape = 'u32[]', space=smem, size = 0x4, offset = 0x4, fixed_abs, tag = 'smem constant byte address 0x4 - core index']
  #allocation1 [shape = 'u32[72,128]{1,0:T(1,128)}', space=vmem, size = 0x9000, scoped, tag = 'internal scratch']
  #allocation2 [shape = 'f32[2,128]{1,0:T(2,128)}', space=vmem, size = 0x400, scoped, tag = 'scratch operand']
  %s0 = inlined_call_operand.vmem [shape: bf16[2,2048], index: 0, kind: input, shape index: {}]
  %s1 = inlined_call_operand.vmem [shape: bf16[2048,128], index: 1, kind: input, shape index: {}]
  %s2 = inlined_call_operand.vmem [shape: f32[1,128], index: 2, kind: input, shape index: {}]
  %s3 = inlined_call_operand.vmem [shape: f32[2,128], index: 3, kind: output, shape index: {}]
  %s4 = sld [smem:[#allocation0]]
  $region30: #{discriminator_forward.15} parent=0
    _
  %s6 = ssub.s32 1, %s4
  %s7 = scalar_select 0, %s6, %s4
  // Predicated region
  $region2: #{discriminator_forward.15} parent=0 // pred_check
    _
  $region3: #{discriminator_forward.15} parent=0 // pred_check_branch
    %9 = sbr.rel (0) target = $region5
  $region4: #{discriminator_forward.15} parent=0 // pred_region
    _
  $region5: #{discriminator_forward.15} parent=0 // pred_fallthru
    _
  // Predicated region
  $region6: #{discriminator_forward.15} parent=0 // pred_check
    _
  $region7: #{discriminator_forward.15} parent=0 // pred_check_branch
    %11 = sbr.rel (0) target = $region9
  $region8: #{discriminator_forward.15} parent=0 // pred_region
    _
  $region9: #{discriminator_forward.15} parent=0 // pred_fallthru
    _
  // Predicated region
  $region10: #{discriminator_forward.15} parent=0 // pred_check
    _
  $region11: #{discriminator_forward.15} parent=0 // pred_check_branch
    %13 = sbr.rel (0) target = $region13
  $region12: #{discriminator_forward.15} parent=0 // pred_region
    _
  $region13: #{discriminator_forward.15} parent=0 // pred_fallthru
    _
  %p14 = scmp.eq.s32.totalorder 0, 0
  // Predicated region
  $region14: #{discriminator_forward.15} parent=0 // pred_check
    %p15 = pneg %p14
  $region15: #{discriminator_forward.15} parent=0 // pred_check_branch
    %17 = sbr.rel (%p15) target = $region17
  $region16: #{discriminator_forward.15} parent=0 // pred_region
    %18 = vst [vmem:[#allocation2] sm:$0x3] 0.0
  $region17: #{discriminator_forward.15} parent=0 // pred_fallthru
    _
  %v19 = vld [vmem:[#allocation2] sm:$0x3]
  %v20 = vld [vmem:[%s0] sm:$0xff]
  %v21 = vld [vmem:[%s0 + $0x8] sm:$0xff]
  %v22 = vld [vmem:[%s1] sm:$0xf]
  %v23 = vld [vmem:[%s1 + $0x4] sm:$0xf]
  %v24 = vld [vmem:[%s1 + $0x8] sm:$0xf]
  %v25 = vld [vmem:[%s1 + $0xc] sm:$0xf]
  %v26 = vld [vmem:[%s1 + $0x10] sm:$0xf]
  %v27 = vld [vmem:[%s1 + $0x14] sm:$0xf]
  %v28 = vld [vmem:[%s1 + $0x18] sm:$0xf]
  %v29 = vld [vmem:[%s1 + $0x1c] sm:$0xf]
  %v30 = vld [vmem:[%s1 + $0x20] sm:$0xf]
  %v31 = vld [vmem:[%s1 + $0x24] sm:$0xf]
  %v32 = vld [vmem:[%s1 + $0x28] sm:$0xf]
  %v33 = vld [vmem:[%s1 + $0x2c] sm:$0xf]
  %v34 = vld [vmem:[%s1 + $0x30] sm:$0xf]
  %v35 = vld [vmem:[%s1 + $0x34] sm:$0xf]
  %v36 = vld [vmem:[%s1 + $0x38] sm:$0xf]
  %v37 = vld [vmem:[%s1 + $0x3c] sm:$0xf]
  %v38 = vld [vmem:[%s1 + $0x40] sm:$0xf]
  %v39 = vld [vmem:[%s1 + $0x44] sm:$0xf]
  %v40 = vld [vmem:[%s1 + $0x48] sm:$0xf]
  %v41 = vld [vmem:[%s1 + $0x4c] sm:$0xf]
  %v42 = vld [vmem:[%s1 + $0x50] sm:$0xf]
  %v43 = vld [vmem:[%s1 + $0x54] sm:$0xf]
  %v44 = vld [vmem:[%s1 + $0x58] sm:$0xf]
  %v45 = vld [vmem:[%s1 + $0x5c] sm:$0xf]
  %v46 = vld [vmem:[%s1 + $0x60] sm:$0xf]
  %v47 = vld [vmem:[%s1 + $0x64] sm:$0xf]
  %v48 = vld [vmem:[%s1 + $0x68] sm:$0xf]
  %v49 = vld [vmem:[%s1 + $0x6c] sm:$0xf]
  %v50 = vld [vmem:[%s1 + $0x70] sm:$0xf]
  %v51 = vld [vmem:[%s1 + $0x74] sm:$0xf]
  %v52 = vld [vmem:[%s1 + $0x78] sm:$0xf]
  %v53 = vld [vmem:[%s1 + $0x7c] sm:$0xf]
  %v54 = vld [vmem:[%s1 + $0x80] sm:$0xf]
  %v55 = vld [vmem:[%s1 + $0x84] sm:$0xf]
  %v56 = vld [vmem:[%s1 + $0x88] sm:$0xf]
  %v57 = vld [vmem:[%s1 + $0x8c] sm:$0xf]
  %v58 = vld [vmem:[%s1 + $0x90] sm:$0xf]
  %v59 = vld [vmem:[%s1 + $0x94] sm:$0xf]
  %v60 = vld [vmem:[%s1 + $0x98] sm:$0xf]
  %v61 = vld [vmem:[%s1 + $0x9c] sm:$0xf]
  %v62 = vld [vmem:[%s1 + $0xa0] sm:$0xf]
  %v63 = vld [vmem:[%s1 + $0xa4] sm:$0xf]
  %v64 = vld [vmem:[%s1 + $0xa8] sm:$0xf]
  %v65 = vld [vmem:[%s1 + $0xac] sm:$0xf]
  %v66 = vld [vmem:[%s1 + $0xb0] sm:$0xf]
  %v67 = vld [vmem:[%s1 + $0xb4] sm:$0xf]
  %v68 = vld [vmem:[%s1 + $0xb8] sm:$0xf]
  %v69 = vld [vmem:[%s1 + $0xbc] sm:$0xf]
  %v70 = vld [vmem:[%s1 + $0xc0] sm:$0xf]
  %v71 = vld [vmem:[%s1 + $0xc4] sm:$0xf]
  %v72 = vld [vmem:[%s1 + $0xc8] sm:$0xf]
  %v73 = vld [vmem:[%s1 + $0xcc] sm:$0xf]
  %v74 = vld [vmem:[%s1 + $0xd0] sm:$0xf]
  %v75 = vld [vmem:[%s1 + $0xd4] sm:$0xf]
  %v76 = vld [vmem:[%s1 + $0xd8] sm:$0xf]
  %v77 = vld [vmem:[%s1 + $0xdc] sm:$0xf]
  %v78 = vld [vmem:[%s1 + $0xe0] sm:$0xf]
  %v79 = vld [vmem:[%s1 + $0xe4] sm:$0xf]
  %v80 = vld [vmem:[%s1 + $0xe8] sm:$0xf]
  %v81 = vld [vmem:[%s1 + $0xec] sm:$0xf]
  %v82 = vld [vmem:[%s1 + $0xf0] sm:$0xf]
  %v83 = vld [vmem:[%s1 + $0xf4] sm:$0xf]
  %v84 = vld [vmem:[%s1 + $0xf8] sm:$0xf]
  %v85 = vld [vmem:[%s1 + $0xfc] sm:$0xf]
  %v86 = vld [vmem:[%s1 + $0x100] sm:$0xf]
  %v87 = vld [vmem:[%s1 + $0x104] sm:$0xf]
  %v88 = vld [vmem:[%s1 + $0x108] sm:$0xf]
  %v89 = vld [vmem:[%s1 + $0x10c] sm:$0xf]
  %v90 = vld [vmem:[%s1 + $0x110] sm:$0xf]
  %v91 = vld [vmem:[%s1 + $0x114] sm:$0xf]
  %v92 = vld [vmem:[%s1 + $0x118] sm:$0xf]
  %v93 = vld [vmem:[%s1 + $0x11c] sm:$0xf]
  %v94 = vld [vmem:[%s1 + $0x120] sm:$0xf]
  %v95 = vld [vmem:[%s1 + $0x124] sm:$0xf]
  %v96 = vld [vmem:[%s1 + $0x128] sm:$0xf]
  %v97 = vld [vmem:[%s1 + $0x12c] sm:$0xf]
  %v98 = vld [vmem:[%s1 + $0x130] sm:$0xf]
  %v99 = vld [vmem:[%s1 + $0x134] sm:$0xf]
  %v100 = vld [vmem:[%s1 + $0x138] sm:$0xf]
  %v101 = vld [vmem:[%s1 + $0x13c] sm:$0xf]
  %v102 = vld [vmem:[%s1 + $0x140] sm:$0xf]
  %v103 = vld [vmem:[%s1 + $0x144] sm:$0xf]
  %v104 = vld [vmem:[%s1 + $0x148] sm:$0xf]
  %v105 = vld [vmem:[%s1 + $0x14c] sm:$0xf]
  %v106 = vld [vmem:[%s1 + $0x150] sm:$0xf]
  %v107 = vld [vmem:[%s1 + $0x154] sm:$0xf]
  %v108 = vld [vmem:[%s1 + $0x158] sm:$0xf]
  %v109 = vld [vmem:[%s1 + $0x15c] sm:$0xf]
  %v110 = vld [vmem:[%s1 + $0x160] sm:$0xf]
  %v111 = vld [vmem:[%s1 + $0x164] sm:$0xf]
  %v112 = vld [vmem:[%s1 + $0x168] sm:$0xf]
  %v113 = vld [vmem:[%s1 + $0x16c] sm:$0xf]
  %v114 = vld [vmem:[%s1 + $0x170] sm:$0xf]
  %v115 = vld [vmem:[%s1 + $0x174] sm:$0xf]
  %v116 = vld [vmem:[%s1 + $0x178] sm:$0xf]
  %v117 = vld [vmem:[%s1 + $0x17c] sm:$0xf]
  %v118 = vld [vmem:[%s1 + $0x180] sm:$0xf]
  %v119 = vld [vmem:[%s1 + $0x184] sm:$0xf]
  %v120 = vld [vmem:[%s1 + $0x188] sm:$0xf]
  %v121 = vld [vmem:[%s1 + $0x18c] sm:$0xf]
  %v122 = vld [vmem:[%s1 + $0x190] sm:$0xf]
  %v123 = vld [vmem:[%s1 + $0x194] sm:$0xf]
  %v124 = vld [vmem:[%s1 + $0x198] sm:$0xf]
  %v125 = vld [vmem:[%s1 + $0x19c] sm:$0xf]
  %v126 = vld [vmem:[%s1 + $0x1a0] sm:$0xf]
  %v127 = vld [vmem:[%s1 + $0x1a4] sm:$0xf]
  %v128 = vld [vmem:[%s1 + $0x1a8] sm:$0xf]
  %v129 = vld [vmem:[%s1 + $0x1ac] sm:$0xf]
  %v130 = vld [vmem:[%s1 + $0x1b0] sm:$0xf]
  %v131 = vld [vmem:[%s1 + $0x1b4] sm:$0xf]
  %v132 = vld [vmem:[%s1 + $0x1b8] sm:$0xf]
  %v133 = vld [vmem:[%s1 + $0x1bc] sm:$0xf]
  %v134 = vld [vmem:[%s1 + $0x1c0] sm:$0xf]
  %v135 = vld [vmem:[%s1 + $0x1c4] sm:$0xf]
  %v136 = vld [vmem:[%s1 + $0x1c8] sm:$0xf]
  %v137 = vld [vmem:[%s1 + $0x1cc] sm:$0xf]
  %v138 = vld [vmem:[%s1 + $0x1d0] sm:$0xf]
  %v139 = vld [vmem:[%s1 + $0x1d4] sm:$0xf]
  %v140 = vld [vmem:[%s1 + $0x1d8] sm:$0xf]
  %v141 = vld [vmem:[%s1 + $0x1dc] sm:$0xf]
  %v142 = vld [vmem:[%s1 + $0x1e0] sm:$0xf]
  %v143 = vld [vmem:[%s1 + $0x1e4] sm:$0xf]
  %v144 = vld [vmem:[%s1 + $0x1e8] sm:$0xf]
  %v145 = vld [vmem:[%s1 + $0x1ec] sm:$0xf]
  %v146 = vld [vmem:[%s1 + $0x1f0] sm:$0xf]
  %v147 = vld [vmem:[%s1 + $0x1f4] sm:$0xf]
  %v148 = vld [vmem:[%s1 + $0x1f8] sm:$0xf]
  %v149 = vld [vmem:[%s1 + $0x1fc] sm:$0xf]
  %v150 = vld [vmem:[%s1 + $0x200] sm:$0xf]
  %v151 = vld [vmem:[%s1 + $0x204] sm:$0xf]
  %v152 = vld [vmem:[%s1 + $0x208] sm:$0xf]
  %v153 = vld [vmem:[%s1 + $0x20c] sm:$0xf]
  %v154 = vld [vmem:[%s1 + $0x210] sm:$0xf]
  %v155 = vld [vmem:[%s1 + $0x214] sm:$0xf]
  %v156 = vld [vmem:[%s1 + $0x218] sm:$0xf]
  %v157 = vld [vmem:[%s1 + $0x21c] sm:$0xf]
  %v158 = vld [vmem:[%s1 + $0x220] sm:$0xf]
  %v159 = vld [vmem:[%s1 + $0x224] sm:$0xf]
  %v160 = vld [vmem:[%s1 + $0x228] sm:$0xf]
  %v161 = vld [vmem:[%s1 + $0x22c] sm:$0xf]
  %v162 = vld [vmem:[%s1 + $0x230] sm:$0xf]
  %v163 = vld [vmem:[%s1 + $0x234] sm:$0xf]
  %v164 = vld [vmem:[%s1 + $0x238] sm:$0xf]
  %v165 = vld [vmem:[%s1 + $0x23c] sm:$0xf]
  %v166 = vld [vmem:[%s1 + $0x240] sm:$0xf]
  %v167 = vld [vmem:[%s1 + $0x244] sm:$0xf]
  %v168 = vld [vmem:[%s1 + $0x248] sm:$0xf]
  %v169 = vld [vmem:[%s1 + $0x24c] sm:$0xf]
  %v170 = vld [vmem:[%s1 + $0x250] sm:$0xf]
  %v171 = vld [vmem:[%s1 + $0x254] sm:$0xf]
  %v172 = vld [vmem:[%s1 + $0x258] sm:$0xf]
  %v173 = vld [vmem:[%s1 + $0x25c] sm:$0xf]
  %v174 = vld [vmem:[%s1 + $0x260] sm:$0xf]
  %v175 = vld [vmem:[%s1 + $0x264] sm:$0xf]
  %v176 = vld [vmem:[%s1 + $0x268] sm:$0xf]
  %v177 = vld [vmem:[%s1 + $0x26c] sm:$0xf]
  %v178 = vld [vmem:[%s1 + $0x270] sm:$0xf]
  %v179 = vld [vmem:[%s1 + $0x274] sm:$0xf]
  %v180 = vld [vmem:[%s1 + $0x278] sm:$0xf]
  %v181 = vld [vmem:[%s1 + $0x27c] sm:$0xf]
  %v182 = vld [vmem:[%s1 + $0x280] sm:$0xf]
  %v183 = vld [vmem:[%s1 + $0x284] sm:$0xf]
  %v184 = vld [vmem:[%s1 + $0x288] sm:$0xf]
  %v185 = vld [vmem:[%s1 + $0x28c] sm:$0xf]
  %v186 = vld [vmem:[%s1 + $0x290] sm:$0xf]
  %v187 = vld [vmem:[%s1 + $0x294] sm:$0xf]
  %v188 = vld [vmem:[%s1 + $0x298] sm:$0xf]
  %v189 = vld [vmem:[%s1 + $0x29c] sm:$0xf]
  %v190 = vld [vmem:[%s1 + $0x2a0] sm:$0xf]
  %v191 = vld [vmem:[%s1 + $0x2a4] sm:$0xf]
  %v192 = vld [vmem:[%s1 + $0x2a8] sm:$0xf]
  %v193 = vld [vmem:[%s1 + $0x2ac] sm:$0xf]
  %v194 = vld [vmem:[%s1 + $0x2b0] sm:$0xf]
  %v195 = vld [vmem:[%s1 + $0x2b4] sm:$0xf]
  %v196 = vld [vmem:[%s1 + $0x2b8] sm:$0xf]
  %v197 = vld [vmem:[%s1 + $0x2bc] sm:$0xf]
  %v198 = vld [vmem:[%s1 + $0x2c0] sm:$0xf]
  %v199 = vld [vmem:[%s1 + $0x2c4] sm:$0xf]
  %v200 = vld [vmem:[%s1 + $0x2c8] sm:$0xf]
  %v201 = vld [vmem:[%s1 + $0x2cc] sm:$0xf]
  %v202 = vld [vmem:[%s1 + $0x2d0] sm:$0xf]
  %v203 = vld [vmem:[%s1 + $0x2d4] sm:$0xf]
  %v204 = vld [vmem:[%s1 + $0x2d8] sm:$0xf]
  %v205 = vld [vmem:[%s1 + $0x2dc] sm:$0xf]
  %v206 = vld [vmem:[%s1 + $0x2e0] sm:$0xf]
  %v207 = vld [vmem:[%s1 + $0x2e4] sm:$0xf]
  %v208 = vld [vmem:[%s1 + $0x2e8] sm:$0xf]
  %v209 = vld [vmem:[%s1 + $0x2ec] sm:$0xf]
  %v210 = vld [vmem:[%s1 + $0x2f0] sm:$0xf]
  %v211 = vld [vmem:[%s1 + $0x2f4] sm:$0xf]
  %v212 = vld [vmem:[%s1 + $0x2f8] sm:$0xf]
  %v213 = vld [vmem:[%s1 + $0x2fc] sm:$0xf]
  %v214 = vld [vmem:[%s1 + $0x300] sm:$0xf]
  %v215 = vld [vmem:[%s1 + $0x304] sm:$0xf]
  %v216 = vld [vmem:[%s1 + $0x308] sm:$0xf]
  %v217 = vld [vmem:[%s1 + $0x30c] sm:$0xf]
  %v218 = vld [vmem:[%s1 + $0x310] sm:$0xf]
  %v219 = vld [vmem:[%s1 + $0x314] sm:$0xf]
  %v220 = vld [vmem:[%s1 + $0x318] sm:$0xf]
  %v221 = vld [vmem:[%s1 + $0x31c] sm:$0xf]
  %v222 = vld [vmem:[%s1 + $0x320] sm:$0xf]
  %v223 = vld [vmem:[%s1 + $0x324] sm:$0xf]
  %v224 = vld [vmem:[%s1 + $0x328] sm:$0xf]
  %v225 = vld [vmem:[%s1 + $0x32c] sm:$0xf]
  %v226 = vld [vmem:[%s1 + $0x330] sm:$0xf]
  %v227 = vld [vmem:[%s1 + $0x334] sm:$0xf]
  %v228 = vld [vmem:[%s1 + $0x338] sm:$0xf]
  %v229 = vld [vmem:[%s1 + $0x33c] sm:$0xf]
  %v230 = vld [vmem:[%s1 + $0x340] sm:$0xf]
  %v231 = vld [vmem:[%s1 + $0x344] sm:$0xf]
  %v232 = vld [vmem:[%s1 + $0x348] sm:$0xf]
  %v233 = vld [vmem:[%s1 + $0x34c] sm:$0xf]
  %v234 = vld [vmem:[%s1 + $0x350] sm:$0xf]
  %v235 = vld [vmem:[%s1 + $0x354] sm:$0xf]
  %v236 = vld [vmem:[%s1 + $0x358] sm:$0xf]
  %v237 = vld [vmem:[%s1 + $0x35c] sm:$0xf]
  %v238 = vld [vmem:[%s1 + $0x360] sm:$0xf]
  %v239 = vld [vmem:[%s1 + $0x364] sm:$0xf]
  %v240 = vld [vmem:[%s1 + $0x368] sm:$0xf]
  %v241 = vld [vmem:[%s1 + $0x36c] sm:$0xf]
  %v242 = vld [vmem:[%s1 + $0x370] sm:$0xf]
  %v243 = vld [vmem:[%s1 + $0x374] sm:$0xf]
  %v244 = vld [vmem:[%s1 + $0x378] sm:$0xf]
  %v245 = vld [vmem:[%s1 + $0x37c] sm:$0xf]
  %v246 = vld [vmem:[%s1 + $0x380] sm:$0xf]
  %v247 = vld [vmem:[%s1 + $0x384] sm:$0xf]
  %v248 = vld [vmem:[%s1 + $0x388] sm:$0xf]
  %v249 = vld [vmem:[%s1 + $0x38c] sm:$0xf]
  %v250 = vld [vmem:[%s1 + $0x390] sm:$0xf]
  %v251 = vld [vmem:[%s1 + $0x394] sm:$0xf]
  %v252 = vld [vmem:[%s1 + $0x398] sm:$0xf]
  %v253 = vld [vmem:[%s1 + $0x39c] sm:$0xf]
  %v254 = vld [vmem:[%s1 + $0x3a0] sm:$0xf]
  %v255 = vld [vmem:[%s1 + $0x3a4] sm:$0xf]
  %v256 = vld [vmem:[%s1 + $0x3a8] sm:$0xf]
  %v257 = vld [vmem:[%s1 + $0x3ac] sm:$0xf]
  %v258 = vld [vmem:[%s1 + $0x3b0] sm:$0xf]
  %v259 = vld [vmem:[%s1 + $0x3b4] sm:$0xf]
  %v260 = vld [vmem:[%s1 + $0x3b8] sm:$0xf]
  %v261 = vld [vmem:[%s1 + $0x3bc] sm:$0xf]
  %v262 = vld [vmem:[%s1 + $0x3c0] sm:$0xf]
  %v263 = vld [vmem:[%s1 + $0x3c4] sm:$0xf]
  %v264 = vld [vmem:[%s1 + $0x3c8] sm:$0xf]
  %v265 = vld [vmem:[%s1 + $0x3cc] sm:$0xf]
  %v266 = vld [vmem:[%s1 + $0x3d0] sm:$0xf]
  %v267 = vld [vmem:[%s1 + $0x3d4] sm:$0xf]
  %v268 = vld [vmem:[%s1 + $0x3d8] sm:$0xf]
  %v269 = vld [vmem:[%s1 + $0x3dc] sm:$0xf]
  %v270 = vld [vmem:[%s1 + $0x3e0] sm:$0xf]
  %v271 = vld [vmem:[%s1 + $0x3e4] sm:$0xf]
  %v272 = vld [vmem:[%s1 + $0x3e8] sm:$0xf]
  %v273 = vld [vmem:[%s1 + $0x3ec] sm:$0xf]
  %v274 = vld [vmem:[%s1 + $0x3f0] sm:$0xf]
  %v275 = vld [vmem:[%s1 + $0x3f4] sm:$0xf]
  %v276 = vld [vmem:[%s1 + $0x3f8] sm:$0xf]
  %v277 = vld [vmem:[%s1 + $0x3fc] sm:$0xf]
  %279 = vst [vmem:[#allocation1] ss:$9 sm:$0xff] %v20
  %v280 = vld [vmem:[#allocation1] sm:$0xff]
  %v281 = vld [vmem:[#allocation1 + $0x9] sm:$0xff]
  %v282 = vld [vmem:[#allocation1 + $0x12] sm:$0xff]
  %v283 = vld [vmem:[#allocation1 + $0x1b] sm:$0xff]
  %v284 = vld [vmem:[#allocation1 + $0x24] sm:$0xff]
  %v285 = vld [vmem:[#allocation1 + $0x2d] sm:$0xff]
  %v286 = vld [vmem:[#allocation1 + $0x36] sm:$0xff]
  %v287 = vld [vmem:[#allocation1 + $0x3f] sm:$0xff]
  %289 = vst [vmem:[#allocation1] ss:$9 sm:$0xff] %v21
  %v290 = vld [vmem:[#allocation1] sm:$0xff]
  %v291 = vld [vmem:[#allocation1 + $0x9] sm:$0xff]
  %v292 = vld [vmem:[#allocation1 + $0x12] sm:$0xff]
  %v293 = vld [vmem:[#allocation1 + $0x1b] sm:$0xff]
  %v294 = vld [vmem:[#allocation1 + $0x24] sm:$0xff]
  %v295 = vld [vmem:[#allocation1 + $0x2d] sm:$0xff]
  %v296 = vld [vmem:[#allocation1 + $0x36] sm:$0xff]
  %v297 = vld [vmem:[#allocation1 + $0x3f] sm:$0xff]
  %v570 = vunpack.c.l.b16 %v22
  %v571 = vunpack.c.l.b16 %v23
  %v572 = vunpack.c.l.b16 %v24
  %v573 = vunpack.c.l.b16 %v25
  %v574 = vunpack.c.l.b16 %v26
  %v575 = vunpack.c.l.b16 %v27
  %v576 = vunpack.c.l.b16 %v28
  %v577 = vunpack.c.l.b16 %v29
  %v578 = vunpack.c.l.b16 %v30
  %v579 = vunpack.c.l.b16 %v31
  %v580 = vunpack.c.l.b16 %v32
  %v581 = vunpack.c.l.b16 %v33
  %v582 = vunpack.c.l.b16 %v34
  %v583 = vunpack.c.l.b16 %v35
  %v584 = vunpack.c.l.b16 %v36
  %v585 = vunpack.c.l.b16 %v37
  %v586 = vunpack.c.l.b16 %v38
  %v587 = vunpack.c.l.b16 %v39
  %v588 = vunpack.c.l.b16 %v40
  %v589 = vunpack.c.l.b16 %v41
  %v590 = vunpack.c.l.b16 %v42
  %v591 = vunpack.c.l.b16 %v43
  %v592 = vunpack.c.l.b16 %v44
  %v593 = vunpack.c.l.b16 %v45
  %v594 = vunpack.c.l.b16 %v46
  %v595 = vunpack.c.l.b16 %v47
  %v596 = vunpack.c.l.b16 %v48
  %v597 = vunpack.c.l.b16 %v49
  %v598 = vunpack.c.l.b16 %v50
  %v599 = vunpack.c.l.b16 %v51
  %v600 = vunpack.c.l.b16 %v52
  %v601 = vunpack.c.l.b16 %v53
  %v602 = vunpack.c.l.b16 %v54
  %v603 = vunpack.c.l.b16 %v55
  %v604 = vunpack.c.l.b16 %v56
  %v605 = vunpack.c.l.b16 %v57
  %v606 = vunpack.c.l.b16 %v58
  %v607 = vunpack.c.l.b16 %v59
  %v608 = vunpack.c.l.b16 %v60
  %v609 = vunpack.c.l.b16 %v61
  %v610 = vunpack.c.l.b16 %v62
  %v611 = vunpack.c.l.b16 %v63
  %v612 = vunpack.c.l.b16 %v64
  %v613 = vunpack.c.l.b16 %v65
  %v614 = vunpack.c.l.b16 %v66
  %v615 = vunpack.c.l.b16 %v67
  %v616 = vunpack.c.l.b16 %v68
  %v617 = vunpack.c.l.b16 %v69
  %v618 = vunpack.c.l.b16 %v70
  %v619 = vunpack.c.l.b16 %v71
  %v620 = vunpack.c.l.b16 %v72
  %v621 = vunpack.c.l.b16 %v73
  %v622 = vunpack.c.l.b16 %v74
  %v623 = vunpack.c.l.b16 %v75
  %v624 = vunpack.c.l.b16 %v76
  %v625 = vunpack.c.l.b16 %v77
  %v626 = vunpack.c.l.b16 %v78
  %v627 = vunpack.c.l.b16 %v79
  %v628 = vunpack.c.l.b16 %v80
  %v629 = vunpack.c.l.b16 %v81
  %v630 = vunpack.c.l.b16 %v82
  %v631 = vunpack.c.l.b16 %v83
  %v632 = vunpack.c.l.b16 %v84
  %v633 = vunpack.c.l.b16 %v85
  %v634 = vunpack.c.l.b16 %v86
  %v635 = vunpack.c.l.b16 %v87
  %v636 = vunpack.c.l.b16 %v88
  %v637 = vunpack.c.l.b16 %v89
  %v638 = vunpack.c.l.b16 %v90
  %v639 = vunpack.c.l.b16 %v91
  %v640 = vunpack.c.l.b16 %v92
  %v641 = vunpack.c.l.b16 %v93
  %v642 = vunpack.c.l.b16 %v94
  %v643 = vunpack.c.l.b16 %v95
  %v644 = vunpack.c.l.b16 %v96
  %v645 = vunpack.c.l.b16 %v97
  %v646 = vunpack.c.l.b16 %v98
  %v647 = vunpack.c.l.b16 %v99
  %v648 = vunpack.c.l.b16 %v100
  %v649 = vunpack.c.l.b16 %v101
  %v650 = vunpack.c.l.b16 %v102
  %v651 = vunpack.c.l.b16 %v103
  %v652 = vunpack.c.l.b16 %v104
  %v653 = vunpack.c.l.b16 %v105
  %v654 = vunpack.c.l.b16 %v106
  %v655 = vunpack.c.l.b16 %v107
  %v656 = vunpack.c.l.b16 %v108
  %v657 = vunpack.c.l.b16 %v109
  %v658 = vunpack.c.l.b16 %v110
  %v659 = vunpack.c.l.b16 %v111
  %v660 = vunpack.c.l.b16 %v112
  %v661 = vunpack.c.l.b16 %v113
  %v662 = vunpack.c.l.b16 %v114
  %v663 = vunpack.c.l.b16 %v115
  %v664 = vunpack.c.l.b16 %v116
  %v665 = vunpack.c.l.b16 %v117
  %v666 = vunpack.c.l.b16 %v118
  %v667 = vunpack.c.l.b16 %v119
  %v668 = vunpack.c.l.b16 %v120
  %v669 = vunpack.c.l.b16 %v121
  %v670 = vunpack.c.l.b16 %v122
  %v671 = vunpack.c.l.b16 %v123
  %v672 = vunpack.c.l.b16 %v124
  %v673 = vunpack.c.l.b16 %v125
  %v674 = vunpack.c.l.b16 %v126
  %v675 = vunpack.c.l.b16 %v127
  %v676 = vunpack.c.l.b16 %v128
  %v677 = vunpack.c.l.b16 %v129
  %v678 = vunpack.c.l.b16 %v130
  %v679 = vunpack.c.l.b16 %v131
  %v680 = vunpack.c.l.b16 %v132
  %v681 = vunpack.c.l.b16 %v133
  %v682 = vunpack.c.l.b16 %v134
  %v683 = vunpack.c.l.b16 %v135
  %v684 = vunpack.c.l.b16 %v136
  %v685 = vunpack.c.l.b16 %v137
  %v686 = vunpack.c.l.b16 %v138
  %v687 = vunpack.c.l.b16 %v139
  %v688 = vunpack.c.l.b16 %v140
  %v689 = vunpack.c.l.b16 %v141
  %v690 = vunpack.c.l.b16 %v142
  %v691 = vunpack.c.l.b16 %v143
  %v692 = vunpack.c.l.b16 %v144
  %v693 = vunpack.c.l.b16 %v145
  %v694 = vunpack.c.l.b16 %v146
  %v695 = vunpack.c.l.b16 %v147
  %v696 = vunpack.c.l.b16 %v148
  %v697 = vunpack.c.l.b16 %v149
  %v698 = vunpack.c.l.b16 %v150
  %v699 = vunpack.c.l.b16 %v151
  %v700 = vunpack.c.l.b16 %v152
  %v701 = vunpack.c.l.b16 %v153
  %v702 = vunpack.c.l.b16 %v154
  %v703 = vunpack.c.l.b16 %v155
  %v704 = vunpack.c.l.b16 %v156
  %v705 = vunpack.c.l.b16 %v157
  %v706 = vunpack.c.l.b16 %v158
  %v707 = vunpack.c.l.b16 %v159
  %v708 = vunpack.c.l.b16 %v160
  %v709 = vunpack.c.l.b16 %v161
  %v710 = vunpack.c.l.b16 %v162
  %v711 = vunpack.c.l.b16 %v163
  %v712 = vunpack.c.l.b16 %v164
  %v713 = vunpack.c.l.b16 %v165
  %v714 = vunpack.c.l.b16 %v166
  %v715 = vunpack.c.l.b16 %v167
  %v716 = vunpack.c.l.b16 %v168
  %v717 = vunpack.c.l.b16 %v169
  %v718 = vunpack.c.l.b16 %v170
  %v719 = vunpack.c.l.b16 %v171
  %v720 = vunpack.c.l.b16 %v172
  %v721 = vunpack.c.l.b16 %v173
  %v722 = vunpack.c.l.b16 %v174
  %v723 = vunpack.c.l.b16 %v175
  %v724 = vunpack.c.l.b16 %v176
  %v725 = vunpack.c.l.b16 %v177
  %v726 = vunpack.c.l.b16 %v178
  %v727 = vunpack.c.l.b16 %v179
  %v728 = vunpack.c.l.b16 %v180
  %v729 = vunpack.c.l.b16 %v181
  %v730 = vunpack.c.l.b16 %v182
  %v731 = vunpack.c.l.b16 %v183
  %v732 = vunpack.c.l.b16 %v184
  %v733 = vunpack.c.l.b16 %v185
  %v734 = vunpack.c.l.b16 %v186
  %v735 = vunpack.c.l.b16 %v187
  %v736 = vunpack.c.l.b16 %v188
  %v737 = vunpack.c.l.b16 %v189
  %v738 = vunpack.c.l.b16 %v190
  %v739 = vunpack.c.l.b16 %v191
  %v740 = vunpack.c.l.b16 %v192
  %v741 = vunpack.c.l.b16 %v193
  %v742 = vunpack.c.l.b16 %v194
  %v743 = vunpack.c.l.b16 %v195
  %v744 = vunpack.c.l.b16 %v196
  %v745 = vunpack.c.l.b16 %v197
  %v746 = vunpack.c.l.b16 %v198
  %v747 = vunpack.c.l.b16 %v199
  %v748 = vunpack.c.l.b16 %v200
  %v749 = vunpack.c.l.b16 %v201
  %v750 = vunpack.c.l.b16 %v202
  %v751 = vunpack.c.l.b16 %v203
  %v752 = vunpack.c.l.b16 %v204
  %v753 = vunpack.c.l.b16 %v205
  %v754 = vunpack.c.l.b16 %v206
  %v755 = vunpack.c.l.b16 %v207
  %v756 = vunpack.c.l.b16 %v208
  %v757 = vunpack.c.l.b16 %v209
  %v758 = vunpack.c.l.b16 %v210
  %v759 = vunpack.c.l.b16 %v211
  %v760 = vunpack.c.l.b16 %v212
  %v761 = vunpack.c.l.b16 %v213
  %v762 = vunpack.c.l.b16 %v214
  %v763 = vunpack.c.l.b16 %v215
  %v764 = vunpack.c.l.b16 %v216
  %v765 = vunpack.c.l.b16 %v217
  %v766 = vunpack.c.l.b16 %v218
  %v767 = vunpack.c.l.b16 %v219
  %v768 = vunpack.c.l.b16 %v220
  %v769 = vunpack.c.l.b16 %v221
  %v770 = vunpack.c.l.b16 %v222
  %v771 = vunpack.c.l.b16 %v223
  %v772 = vunpack.c.l.b16 %v224
  %v773 = vunpack.c.l.b16 %v225
  %v774 = vunpack.c.l.b16 %v226
  %v775 = vunpack.c.l.b16 %v227
  %v776 = vunpack.c.l.b16 %v228
  %v777 = vunpack.c.l.b16 %v229
  %v778 = vunpack.c.l.b16 %v230
  %v779 = vunpack.c.l.b16 %v231
  %v780 = vunpack.c.l.b16 %v232
  %v781 = vunpack.c.l.b16 %v233
  %v782 = vunpack.c.l.b16 %v234
  %v783 = vunpack.c.l.b16 %v235
  %v784 = vunpack.c.l.b16 %v236
  %v785 = vunpack.c.l.b16 %v237
  %v786 = vunpack.c.l.b16 %v238
  %v787 = vunpack.c.l.b16 %v239
  %v788 = vunpack.c.l.b16 %v240
  %v789 = vunpack.c.l.b16 %v241
  %v790 = vunpack.c.l.b16 %v242
  %v791 = vunpack.c.l.b16 %v243
  %v792 = vunpack.c.l.b16 %v244
  %v793 = vunpack.c.l.b16 %v245
  %v794 = vunpack.c.l.b16 %v246
  %v795 = vunpack.c.l.b16 %v247
  %v796 = vunpack.c.l.b16 %v248
  %v797 = vunpack.c.l.b16 %v249
  %v798 = vunpack.c.l.b16 %v250
  %v799 = vunpack.c.l.b16 %v251
  %v800 = vunpack.c.l.b16 %v252
  %v801 = vunpack.c.l.b16 %v253
  %v802 = vunpack.c.l.b16 %v254
  %v803 = vunpack.c.l.b16 %v255
  %v804 = vunpack.c.l.b16 %v256
  %v805 = vunpack.c.l.b16 %v257
  %v806 = vunpack.c.l.b16 %v258
  %v807 = vunpack.c.l.b16 %v259
  %v808 = vunpack.c.l.b16 %v260
  %v809 = vunpack.c.l.b16 %v261
  %v810 = vunpack.c.l.b16 %v262
  %v811 = vunpack.c.l.b16 %v263
  %v812 = vunpack.c.l.b16 %v264
  %v813 = vunpack.c.l.b16 %v265
  %v814 = vunpack.c.l.b16 %v266
  %v815 = vunpack.c.l.b16 %v267
  %v816 = vunpack.c.l.b16 %v268
  %v817 = vunpack.c.l.b16 %v269
  %v818 = vunpack.c.l.b16 %v270
  %v819 = vunpack.c.l.b16 %v271
  %v820 = vunpack.c.l.b16 %v272
  %v821 = vunpack.c.l.b16 %v273
  %v822 = vunpack.c.l.b16 %v274
  %v823 = vunpack.c.l.b16 %v275
  %v824 = vunpack.c.l.b16 %v276
  %v825 = vunpack.c.l.b16 %v277
  %v826 = vpack.c.b16 %v571, %v570
  %v827 = vpack.c.b16 %v573, %v572
  %v828 = vpack.c.b16 %v575, %v574
  %v829 = vpack.c.b16 %v577, %v576
  %v830 = vpack.c.b16 %v579, %v578
  %v831 = vpack.c.b16 %v581, %v580
  %v832 = vpack.c.b16 %v583, %v582
  %v833 = vpack.c.b16 %v585, %v584
  %v834 = vpack.c.b16 %v587, %v586
  %v835 = vpack.c.b16 %v589, %v588
  %v836 = vpack.c.b16 %v591, %v590
  %v837 = vpack.c.b16 %v593, %v592
  %v838 = vpack.c.b16 %v595, %v594
  %v839 = vpack.c.b16 %v597, %v596
  %v840 = vpack.c.b16 %v599, %v598
  %v841 = vpack.c.b16 %v601, %v600
  %v842 = vpack.c.b16 %v603, %v602
  %v843 = vpack.c.b16 %v605, %v604
  %v844 = vpack.c.b16 %v607, %v606
  %v845 = vpack.c.b16 %v609, %v608
  %v846 = vpack.c.b16 %v611, %v610
  %v847 = vpack.c.b16 %v613, %v612
  %v848 = vpack.c.b16 %v615, %v614
  %v849 = vpack.c.b16 %v617, %v616
  %v850 = vpack.c.b16 %v619, %v618
  %v851 = vpack.c.b16 %v621, %v620
  %v852 = vpack.c.b16 %v623, %v622
  %v853 = vpack.c.b16 %v625, %v624
  %v854 = vpack.c.b16 %v627, %v626
  %v855 = vpack.c.b16 %v629, %v628
  %v856 = vpack.c.b16 %v631, %v630
  %v857 = vpack.c.b16 %v633, %v632
  %v858 = vpack.c.b16 %v635, %v634
  %v859 = vpack.c.b16 %v637, %v636
  %v860 = vpack.c.b16 %v639, %v638
  %v861 = vpack.c.b16 %v641, %v640
  %v862 = vpack.c.b16 %v643, %v642
  %v863 = vpack.c.b16 %v645, %v644
  %v864 = vpack.c.b16 %v647, %v646
  %v865 = vpack.c.b16 %v649, %v648
  %v866 = vpack.c.b16 %v651, %v650
  %v867 = vpack.c.b16 %v653, %v652
  %v868 = vpack.c.b16 %v655, %v654
  %v869 = vpack.c.b16 %v657, %v656
  %v870 = vpack.c.b16 %v659, %v658
  %v871 = vpack.c.b16 %v661, %v660
  %v872 = vpack.c.b16 %v663, %v662
  %v873 = vpack.c.b16 %v665, %v664
  %v874 = vpack.c.b16 %v667, %v666
  %v875 = vpack.c.b16 %v669, %v668
  %v876 = vpack.c.b16 %v671, %v670
  %v877 = vpack.c.b16 %v673, %v672
  %v878 = vpack.c.b16 %v675, %v674
  %v879 = vpack.c.b16 %v677, %v676
  %v880 = vpack.c.b16 %v679, %v678
  %v881 = vpack.c.b16 %v681, %v680
  %v882 = vpack.c.b16 %v683, %v682
  %v883 = vpack.c.b16 %v685, %v684
  %v884 = vpack.c.b16 %v687, %v686
  %v885 = vpack.c.b16 %v689, %v688
  %v886 = vpack.c.b16 %v691, %v690
  %v887 = vpack.c.b16 %v693, %v692
  %v888 = vpack.c.b16 %v695, %v694
  %v889 = vpack.c.b16 %v697, %v696
  %v890 = vpack.c.b16 %v699, %v698
  %v891 = vpack.c.b16 %v701, %v700
  %v892 = vpack.c.b16 %v703, %v702
  %v893 = vpack.c.b16 %v705, %v704
  %v894 = vpack.c.b16 %v707, %v706
  %v895 = vpack.c.b16 %v709, %v708
  %v896 = vpack.c.b16 %v711, %v710
  %v897 = vpack.c.b16 %v713, %v712
  %v898 = vpack.c.b16 %v715, %v714
  %v899 = vpack.c.b16 %v717, %v716
  %v900 = vpack.c.b16 %v719, %v718
  %v901 = vpack.c.b16 %v721, %v720
  %v902 = vpack.c.b16 %v723, %v722
  %v903 = vpack.c.b16 %v725, %v724
  %v904 = vpack.c.b16 %v727, %v726
  %v905 = vpack.c.b16 %v729, %v728
  %v906 = vpack.c.b16 %v731, %v730
  %v907 = vpack.c.b16 %v733, %v732
  %v908 = vpack.c.b16 %v735, %v734
  %v909 = vpack.c.b16 %v737, %v736
  %v910 = vpack.c.b16 %v739, %v738
  %v911 = vpack.c.b16 %v741, %v740
  %v912 = vpack.c.b16 %v743, %v742
  %v913 = vpack.c.b16 %v745, %v744
  %v914 = vpack.c.b16 %v747, %v746
  %v915 = vpack.c.b16 %v749, %v748
  %v916 = vpack.c.b16 %v751, %v750
  %v917 = vpack.c.b16 %v753, %v752
  %v918 = vpack.c.b16 %v755, %v754
  %v919 = vpack.c.b16 %v757, %v756
  %v920 = vpack.c.b16 %v759, %v758
  %v921 = vpack.c.b16 %v761, %v760
  %v922 = vpack.c.b16 %v763, %v762
  %v923 = vpack.c.b16 %v765, %v764
  %v924 = vpack.c.b16 %v767, %v766
  %v925 = vpack.c.b16 %v769, %v768
  %v926 = vpack.c.b16 %v771, %v770
  %v927 = vpack.c.b16 %v773, %v772
  %v928 = vpack.c.b16 %v775, %v774
  %v929 = vpack.c.b16 %v777, %v776
  %v930 = vpack.c.b16 %v779, %v778
  %v931 = vpack.c.b16 %v781, %v780
  %v932 = vpack.c.b16 %v783, %v782
  %v933 = vpack.c.b16 %v785, %v784
  %v934 = vpack.c.b16 %v787, %v786
  %v935 = vpack.c.b16 %v789, %v788
  %v936 = vpack.c.b16 %v791, %v790
  %v937 = vpack.c.b16 %v793, %v792
  %v938 = vpack.c.b16 %v795, %v794
  %v939 = vpack.c.b16 %v797, %v796
  %v940 = vpack.c.b16 %v799, %v798
  %v941 = vpack.c.b16 %v801, %v800
  %v942 = vpack.c.b16 %v803, %v802
  %v943 = vpack.c.b16 %v805, %v804
  %v944 = vpack.c.b16 %v807, %v806
  %v945 = vpack.c.b16 %v809, %v808
  %v946 = vpack.c.b16 %v811, %v810
  %v947 = vpack.c.b16 %v813, %v812
  %v948 = vpack.c.b16 %v815, %v814
  %v949 = vpack.c.b16 %v817, %v816
  %v950 = vpack.c.b16 %v819, %v818
  %v951 = vpack.c.b16 %v821, %v820
  %v952 = vpack.c.b16 %v823, %v822
  %v953 = vpack.c.b16 %v825, %v824
  %1082 = vmatpush.bf16.msra.mxu0 %v833
  %1083 = vmatpush.bf16.msra.mxu0 %v832
  %1084 = vmatpush.bf16.msra.mxu0 %v831
  %1085 = vmatpush.bf16.msra.mxu0 %v830
  %1086 = vmatpush.bf16.msra.mxu0 %v829
  %1087 = vmatpush.bf16.msra.mxu0 %v828
  %1088 = vmatpush.bf16.msra.mxu0 %v827
  %1089 = vmatpush.bf16.msra.mxu0 %v826
  %1090 = vmatmul.bf16.gmra.mxu0 %v280
  %v1091 = vpop.f32.mrf.mxu0
  %v1092 = vadd.f32 0.0, %v1091
  %v1093 = vpop.f32.mrf.mxu0
  %1094 = vdwg.mxu0
  %1095 = vmatpush.bf16.msra.mxu0 %v841
  %1096 = vmatpush.bf16.msra.mxu0 %v840
  %1097 = vmatpush.bf16.msra.mxu0 %v839
  %1098 = vmatpush.bf16.msra.mxu0 %v838
  %1099 = vmatpush.bf16.msra.mxu0 %v837
  %1100 = vmatpush.bf16.msra.mxu0 %v836
  %1101 = vmatpush.bf16.msra.mxu0 %v835
  %1102 = vmatpush.bf16.msra.mxu0 %v834
  %1103 = vmatmul.bf16.gmra.mxu0 %v281
  %v1104 = vpop.f32.mrf.mxu0
  %v1105 = vadd.f32 %v1092, %v1104
  %v1106 = vpop.f32.mrf.mxu0
  %1107 = vdwg.mxu0
  %1108 = vmatpush.bf16.msra.mxu0 %v849
  %1109 = vmatpush.bf16.msra.mxu0 %v848
  %1110 = vmatpush.bf16.msra.mxu0 %v847
  %1111 = vmatpush.bf16.msra.mxu0 %v846
  %1112 = vmatpush.bf16.msra.mxu0 %v845
  %1113 = vmatpush.bf16.msra.mxu0 %v844
  %1114 = vmatpush.bf16.msra.mxu0 %v843
  %1115 = vmatpush.bf16.msra.mxu0 %v842
  %1116 = vmatmul.bf16.gmra.mxu0 %v282
  %v1117 = vpop.f32.mrf.mxu0
  %v1118 = vadd.f32 %v1105, %v1117
  %v1119 = vpop.f32.mrf.mxu0
  %1120 = vdwg.mxu0
  %1121 = vmatpush.bf16.msra.mxu0 %v857
  %1122 = vmatpush.bf16.msra.mxu0 %v856
  %1123 = vmatpush.bf16.msra.mxu0 %v855
  %1124 = vmatpush.bf16.msra.mxu0 %v854
  %1125 = vmatpush.bf16.msra.mxu0 %v853
  %1126 = vmatpush.bf16.msra.mxu0 %v852
  %1127 = vmatpush.bf16.msra.mxu0 %v851
  %1128 = vmatpush.bf16.msra.mxu0 %v850
  %1129 = vmatmul.bf16.gmra.mxu0 %v283
  %v1130 = vpop.f32.mrf.mxu0
  %v1131 = vadd.f32 %v1118, %v1130
  %v1132 = vpop.f32.mrf.mxu0
  %1133 = vdwg.mxu0
  %1134 = vmatpush.bf16.msra.mxu0 %v865
  %1135 = vmatpush.bf16.msra.mxu0 %v864
  %1136 = vmatpush.bf16.msra.mxu0 %v863
  %1137 = vmatpush.bf16.msra.mxu0 %v862
  %1138 = vmatpush.bf16.msra.mxu0 %v861
  %1139 = vmatpush.bf16.msra.mxu0 %v860
  %1140 = vmatpush.bf16.msra.mxu0 %v859
  %1141 = vmatpush.bf16.msra.mxu0 %v858
  %1142 = vmatmul.bf16.gmra.mxu0 %v284
  %v1143 = vpop.f32.mrf.mxu0
  %v1144 = vadd.f32 %v1131, %v1143
  %v1145 = vpop.f32.mrf.mxu0
  %1146 = vdwg.mxu0
  %1147 = vmatpush.bf16.msra.mxu0 %v873
  %1148 = vmatpush.bf16.msra.mxu0 %v872
  %1149 = vmatpush.bf16.msra.mxu0 %v871
  %1150 = vmatpush.bf16.msra.mxu0 %v870
  %1151 = vmatpush.bf16.msra.mxu0 %v869
  %1152 = vmatpush.bf16.msra.mxu0 %v868
  %1153 = vmatpush.bf16.msra.mxu0 %v867
  %1154 = vmatpush.bf16.msra.mxu0 %v866
  %1155 = vmatmul.bf16.gmra.mxu0 %v285
  %v1156 = vpop.f32.mrf.mxu0
  %v1157 = vadd.f32 %v1144, %v1156
  %v1158 = vpop.f32.mrf.mxu0
  %1159 = vdwg.mxu0
  %1160 = vmatpush.bf16.msra.mxu0 %v881
  %1161 = vmatpush.bf16.msra.mxu0 %v880
  %1162 = vmatpush.bf16.msra.mxu0 %v879
  %1163 = vmatpush.bf16.msra.mxu0 %v878
  %1164 = vmatpush.bf16.msra.mxu0 %v877
  %1165 = vmatpush.bf16.msra.mxu0 %v876
  %1166 = vmatpush.bf16.msra.mxu0 %v875
  %1167 = vmatpush.bf16.msra.mxu0 %v874
  %1168 = vmatmul.bf16.gmra.mxu0 %v286
  %v1169 = vpop.f32.mrf.mxu0
  %v1170 = vadd.f32 %v1157, %v1169
  %v1171 = vpop.f32.mrf.mxu0
  %1172 = vdwg.mxu0
  %1173 = vmatpush.bf16.msra.mxu0 %v889
  %1174 = vmatpush.bf16.msra.mxu0 %v888
  %1175 = vmatpush.bf16.msra.mxu0 %v887
  %1176 = vmatpush.bf16.msra.mxu0 %v886
  %1177 = vmatpush.bf16.msra.mxu0 %v885
  %1178 = vmatpush.bf16.msra.mxu0 %v884
  %1179 = vmatpush.bf16.msra.mxu0 %v883
  %1180 = vmatpush.bf16.msra.mxu0 %v882
  %1181 = vmatmul.bf16.gmra.mxu0 %v287
  %v1182 = vpop.f32.mrf.mxu0
  %v1183 = vadd.f32 %v1170, %v1182
  %v1184 = vpop.f32.mrf.mxu0
  %1185 = vdwg.mxu0
  %1186 = vmatpush.bf16.msra.mxu0 %v897
  %1187 = vmatpush.bf16.msra.mxu0 %v896
  %1188 = vmatpush.bf16.msra.mxu0 %v895
  %1189 = vmatpush.bf16.msra.mxu0 %v894
  %1190 = vmatpush.bf16.msra.mxu0 %v893
  %1191 = vmatpush.bf16.msra.mxu0 %v892
  %1192 = vmatpush.bf16.msra.mxu0 %v891
  %1193 = vmatpush.bf16.msra.mxu0 %v890
  %1194 = vmatmul.bf16.gmra.mxu0 %v290
  %v1195 = vpop.f32.mrf.mxu0
  %v1196 = vadd.f32 %v1183, %v1195
  %v1197 = vpop.f32.mrf.mxu0
  %1198 = vdwg.mxu0
  %1199 = vmatpush.bf16.msra.mxu0 %v905
  %1200 = vmatpush.bf16.msra.mxu0 %v904
  %1201 = vmatpush.bf16.msra.mxu0 %v903
  %1202 = vmatpush.bf16.msra.mxu0 %v902
  %1203 = vmatpush.bf16.msra.mxu0 %v901
  %1204 = vmatpush.bf16.msra.mxu0 %v900
  %1205 = vmatpush.bf16.msra.mxu0 %v899
  %1206 = vmatpush.bf16.msra.mxu0 %v898
  %1207 = vmatmul.bf16.gmra.mxu0 %v291
  %v1208 = vpop.f32.mrf.mxu0
  %v1209 = vadd.f32 %v1196, %v1208
  %v1210 = vpop.f32.mrf.mxu0
  %1211 = vdwg.mxu0
  %1212 = vmatpush.bf16.msra.mxu0 %v913
  %1213 = vmatpush.bf16.msra.mxu0 %v912
  %1214 = vmatpush.bf16.msra.mxu0 %v911
  %1215 = vmatpush.bf16.msra.mxu0 %v910
  %1216 = vmatpush.bf16.msra.mxu0 %v909
  %1217 = vmatpush.bf16.msra.mxu0 %v908
  %1218 = vmatpush.bf16.msra.mxu0 %v907
  %1219 = vmatpush.bf16.msra.mxu0 %v906
  %1220 = vmatmul.bf16.gmra.mxu0 %v292
  %v1221 = vpop.f32.mrf.mxu0
  %v1222 = vadd.f32 %v1209, %v1221
  %v1223 = vpop.f32.mrf.mxu0
  %1224 = vdwg.mxu0
  %1225 = vmatpush.bf16.msra.mxu0 %v921
  %1226 = vmatpush.bf16.msra.mxu0 %v920
  %1227 = vmatpush.bf16.msra.mxu0 %v919
  %1228 = vmatpush.bf16.msra.mxu0 %v918
  %1229 = vmatpush.bf16.msra.mxu0 %v917
  %1230 = vmatpush.bf16.msra.mxu0 %v916
  %1231 = vmatpush.bf16.msra.mxu0 %v915
  %1232 = vmatpush.bf16.msra.mxu0 %v914
  %1233 = vmatmul.bf16.gmra.mxu0 %v293
  %v1234 = vpop.f32.mrf.mxu0
  %v1235 = vadd.f32 %v1222, %v1234
  %v1236 = vpop.f32.mrf.mxu0
  %1237 = vdwg.mxu0
  %1238 = vmatpush.bf16.msra.mxu0 %v929
  %1239 = vmatpush.bf16.msra.mxu0 %v928
  %1240 = vmatpush.bf16.msra.mxu0 %v927
  %1241 = vmatpush.bf16.msra.mxu0 %v926
  %1242 = vmatpush.bf16.msra.mxu0 %v925
  %1243 = vmatpush.bf16.msra.mxu0 %v924
  %1244 = vmatpush.bf16.msra.mxu0 %v923
  %1245 = vmatpush.bf16.msra.mxu0 %v922
  %1246 = vmatmul.bf16.gmra.mxu0 %v294
  %v1247 = vpop.f32.mrf.mxu0
  %v1248 = vadd.f32 %v1235, %v1247
  %v1249 = vpop.f32.mrf.mxu0
  %1250 = vdwg.mxu0
  %1251 = vmatpush.bf16.msra.mxu0 %v937
  %1252 = vmatpush.bf16.msra.mxu0 %v936
  %1253 = vmatpush.bf16.msra.mxu0 %v935
  %1254 = vmatpush.bf16.msra.mxu0 %v934
  %1255 = vmatpush.bf16.msra.mxu0 %v933
  %1256 = vmatpush.bf16.msra.mxu0 %v932
  %1257 = vmatpush.bf16.msra.mxu0 %v931
  %1258 = vmatpush.bf16.msra.mxu0 %v930
  %1259 = vmatmul.bf16.gmra.mxu0 %v295
  %v1260 = vpop.f32.mrf.mxu0
  %v1261 = vadd.f32 %v1248, %v1260
  %v1262 = vpop.f32.mrf.mxu0
  %1263 = vdwg.mxu0
  %1264 = vmatpush.bf16.msra.mxu0 %v945
  %1265 = vmatpush.bf16.msra.mxu0 %v944
  %1266 = vmatpush.bf16.msra.mxu0 %v943
  %1267 = vmatpush.bf16.msra.mxu0 %v942
  %1268 = vmatpush.bf16.msra.mxu0 %v941
  %1269 = vmatpush.bf16.msra.mxu0 %v940
  %1270 = vmatpush.bf16.msra.mxu0 %v939
  %1271 = vmatpush.bf16.msra.mxu0 %v938
  %1272 = vmatmul.bf16.gmra.mxu0 %v296
  %v1273 = vpop.f32.mrf.mxu0
  %v1274 = vadd.f32 %v1261, %v1273
  %v1275 = vpop.f32.mrf.mxu0
  %1276 = vdwg.mxu0
  %1277 = vmatpush.bf16.msra.mxu0 %v953
  %1278 = vmatpush.bf16.msra.mxu0 %v952
  %1279 = vmatpush.bf16.msra.mxu0 %v951
  %1280 = vmatpush.bf16.msra.mxu0 %v950
  %1281 = vmatpush.bf16.msra.mxu0 %v949
  %1282 = vmatpush.bf16.msra.mxu0 %v948
  %1283 = vmatpush.bf16.msra.mxu0 %v947
  %1284 = vmatpush.bf16.msra.mxu0 %v946
  %1285 = vmatmul.bf16.gmra.mxu0 %v297
  %v1286 = vpop.f32.mrf.mxu0
  %v1287 = vadd.f32 %v1274, %v1286
  %v1288 = vpop.f32.mrf.mxu0
  %1289 = vdwg.mxu0
  %v1290 = vadd.f32 %v19, %v1287
  %1291 = vst [vmem:[#allocation2] sm:$0x3] %v1290
  // Predicated region
  $region18: #{discriminator_forward.15} parent=0 // pred_check
    %p1292 = pneg %p14
  $region19: #{discriminator_forward.15} parent=0 // pred_check_branch
    %1294 = sbr.rel (%p1292) target = $region21
  $region20: #{discriminator_forward.15} parent=0 // pred_region
    %v1295 = vld [vmem:[#allocation2] sm:$0x3]
    %v1296 = vld [vmem:[%s2] sm:$0x1]
    %v1298 = vperm.slane %v1296, 0
    %v1300 = vadd.f32 %v1295, %v1298
    %v1301 = vxor.u32 %v1300, 2147483648
    %v1302 = vmul.f32 %v1301, 1.442695
    %v1303 = vpow.pop %v1302
    %v1304 = vadd.f32 %v1303, 1.0
    %v1305 = vrcp.pop %v1304
    %v1306 = vmul.f32 %v1304, %v1305
    %v1307 = vsub.f32 1.0, %v1306
    %v1308 = vmul.f32 %v1305, %v1307
    %v1309 = vadd.f32 %v1305, %v1308
    %vm1310 = vweird.f32 %v1304
    %vm1311 = vweird.f32 %v1305
    %vm1312 = vmor %vm1310, %vm1311
    %v1313 = vsel %vm1312, %v1305, %v1309
    %v1314 = vand.u32 2147483647, %v1304
    %vm1315 = vcmp.eq.f32.partialorder %v1314, 8.507059e+37
    %v1316 = vand.u32 %v1304, 2147483648
    %v1317 = vor.u32 1.1754944e-38, %v1316
    %v1318 = vsel %vm1315, %v1317, %v1313
    %v1319 = vmul.f32 1.0, %v1318
    %1320 = vst [vmem:[%s3] sm:$0x3] %v1319
  $region21: #{discriminator_forward.15} parent=0 // pred_fallthru
    _
  // Predicated region
  $region22: #{discriminator_forward.15} parent=0 // pred_check
    _
  $region23: #{discriminator_forward.15} parent=0 // pred_check_branch
    %1322 = sbr.rel (0) target = $region25
  $region24: #{discriminator_forward.15} parent=0 // pred_region
    _
  $region25: #{discriminator_forward.15} parent=0 // pred_fallthru
    _
  // Predicated region
  $region26: #{discriminator_forward.15} parent=0 // pred_check
    _
  $region27: #{discriminator_forward.15} parent=0 // pred_check_branch
    %1324 = sbr.rel (0) target = $region29
  $region28: #{discriminator_forward.15} parent=0 // pred_region
    _
  $region29: #{discriminator_forward.15} parent=0 // pred_fallthru
    _

</llo_original>
